<compile_context>
chip_gen: v5e
topology: v5e:2x2
jax: 0.10.0
libtpu: 0.0.40
codegen_flags: <defaults>
</compile_context>

<pallas_src>
import functools
import math

import jax
import jax.numpy as jnp
from jax.experimental import pallas as pl
from jax.experimental.pallas import tpu as pltpu

# ----------------------------- synthetic config ------------------------------
D_MODEL = 32        # d_model
N_HEADS = 4
N_QUERY = 8         # n_query (small synthetic value; module default is 300)
N_CLS = 2           # n_cls
FFN_DIM = 64
N_ENC = 1           # encoder layers
N_DEC = 2           # decoder layers -> hs has N_DEC entries
BACKBONE_OUT = 8    # backbone.out_ch
PATCH = 4           # backbone = 4x4 stride-4 "patchify" conv
EPS_SIG = 1e-5      # inverse_sigmoid eps
LN_EPS = 1e-5
HEAD_LANES = 128    # lane-dense packed head-output width

# MXU operands in bf16 (full rate on all gens); accumulation + VPU math in f32.
MXU_DTYPE = jnp.bfloat16


# ============================ in-kernel helpers ===============================
def _mdot(a, b):
    """MXU matmul: bf16 operands, f32 accumulate (casts are no-ops on bf16)."""
    return jnp.dot(a.astype(MXU_DTYPE), b.astype(MXU_DTYPE),
                   preferred_element_type=jnp.float32)


def _ln(x, g, b):
    mu = jnp.mean(x, axis=-1, keepdims=True)
    var = jnp.mean(jnp.square(x - mu), axis=-1, keepdims=True)
    return (x - mu) * jax.lax.rsqrt(var + LN_EPS) * g + b


def _sigmoid(x):
    # Overflow-safe sigmoid (no inf intermediates for very negative inputs).
    e = jnp.exp(-jnp.abs(x))
    return jnp.where(x >= 0.0, 1.0 / (1.0 + e), e / (1.0 + e))


def _mha_block(q_in, k_in, v_in, w, b, bias, n_heads, scale):
    """Multi-head attention on one batch element, fully in VMEM.

    w: (4, D, D) bf16 stacked [Wq, Wk, Wv, Wo]; b: (4, 1, D) f32.
    bias: None or (1, Lk) additive key-padding bias.
    K is transposed once (not per head); head outputs are concatenated and
    fed through a single output-projection matmul.
    """
    D = q_in.shape[-1]
    dh = D // n_heads
    q = (_mdot(q_in, w[0]) + b[0]).astype(MXU_DTYPE)     # (Lq, D) bf16, cast once
    k = _mdot(k_in, w[1]) + b[1]                         # (Lk, D) f32
    v = (_mdot(v_in, w[2]) + b[2]).astype(MXU_DTYPE)     # (Lk, D) bf16, cast once
    kT = jnp.transpose(k)                                # (D, Lk), one XLU transpose

    heads = []
    for h in range(n_heads):
        sl = slice(h * dh, (h + 1) * dh)
        s = _mdot(q[:, sl], kT[sl, :]) * scale           # (Lq, Lk), f32
        if bias is not None:
            s = s + bias                                 # broadcast over rows
        m = jnp.max(s, axis=-1, keepdims=True)
        p = jnp.exp(s - m)
        inv = pl.reciprocal(jnp.sum(p, axis=-1, keepdims=True), approx=True)
        heads.append(_mdot(p, v[:, sl]) * inv)           # (Lq, dh)
    o = jnp.concatenate(heads, axis=-1)                  # (Lq, D)
    return _mdot(o, w[3]) + b[3]                         # single Wo matmul


# =============================== Pallas kernels ===============================
def _stem_kernel(p_ref, wb_ref, bb_ref, wp_ref, bp_ref, q_ref, rw_ref, rb_ref,
                 f_ref, ref_ref):
    """Backbone patchify-conv (+ReLU) -> 1x1 input_proj; reference points."""
    feat = jnp.maximum(_mdot(p_ref[...], wb_ref[...]) + bb_ref[...], 0.0)
    f_ref[...] = (_mdot(feat, wp_ref[...]) + bp_ref[...]).astype(f_ref.dtype)
    t = _mdot(q_ref[...], rw_ref[...]) + rb_ref[...]
    ref_ref[...] = _sigmoid(t).astype(ref_ref.dtype)


def _encoder_kernel(src_ref, pos_ref, bias_ref,
                    aw_ref, ab_ref, lng_ref, lnb_ref,
                    w1_ref, b1_ref, w2_ref, b2_ref,
                    out_ref, *, n_heads):
    """All encoder layers; grid = (batch, layer).  The output block index is
    constant along the layer axis, so it acts as the VMEM-resident carry."""
    layer = pl.program_id(1)

    @pl.when(layer == 0)
    def _():
        out_ref[0] = src_ref[0]            # seed the carry with the input

    x = out_ref[0]                         # (L, D) f32, resident across layers
    pos = pos_ref[0]
    bias = bias_ref[0]                     # (1, L)
    aw = aw_ref[0]                         # (4, D, D) bf16 (this layer)
    ab = ab_ref[0]
    lng = lng_ref[0]
    lnb = lnb_ref[0]
    scale = 1.0 / math.sqrt(x.shape[-1] // n_heads)

    sp = x + pos
    attn = _mha_block(sp, sp, x, aw, ab, bias, n_heads, scale)
    x = _ln(x + attn, lng[0], lnb[0])

    h = jnp.maximum(_mdot(x, w1_ref[0]) + b1_ref[0], 0.0)
    y = _mdot(h, w2_ref[0]) + b2_ref[0]
    out_ref[0] = _ln(x + y, lng[1], lnb[1]).astype(out_ref.dtype)


def _decoder_kernel(qpos_ref, mem_ref, mpos_ref, bias_ref,
                    sw_ref, sb_ref, cw_ref, cb_ref, lng_ref, lnb_ref,
                    w1_ref, b1_ref, w2_ref, b2_ref, flng_ref, flnb_ref,
                    hs_ref, x_carry, *, n_heads):
    """All decoder layers; grid = (batch, layer).  The decoder state is
    carried across layers in a VMEM scratch; each layer writes its own
    (final-LN'ed) h into the (n_layers, B, Q, D) output."""
    layer = pl.program_id(1)

    @pl.when(layer == 0)
    def _():
        x_carry[...] = jnp.zeros_like(x_carry)   # tgt starts at zeros

    tgt = x_carry[...]                     # (Q, D)
    qpos = qpos_ref[...]                   # (Q, D)
    mem = mem_ref[0]                       # (L, D)
    mpos = mpos_ref[0]
    bias = bias_ref[0]                     # (1, L)
    lng = lng_ref[0]
    lnb = lnb_ref[0]
    scale = 1.0 / math.sqrt(tgt.shape[-1] // n_heads)

    # self-attention (no key padding on queries)
    sp = tgt + qpos
    sa = _mha_block(sp, sp, tgt, sw_ref[0], sb_ref[0], None, n_heads, scale)
    x = _ln(tgt + sa, lng[0], lnb[0])

    # cross-attention over encoder memory
    ca = _mha_block(x + qpos, mem + mpos, mem, cw_ref[0], cb_ref[0], bias,
                    n_heads, scale)
    x = _ln(x + ca, lng[1], lnb[1])

    # FFN
    h = jnp.maximum(_mdot(x, w1_ref[0]) + b1_ref[0], 0.0)
    y = _mdot(h, w2_ref[0]) + b2_ref[0]
    x = _ln(x + y, lng[2], lnb[2])

    x_carry[...] = x
    hs_ref[0, 0] = _ln(x, flng_ref[...], flnb_ref[...]).astype(hs_ref.dtype)


def _head_kernel(h_ref, ref_ref, w1_ref, b1_ref, w2_ref, b2_ref, w3_ref, b3_ref,
                 wc_ref, bc_ref, out_ref):
    """Fused detection head.  Writes one lane-dense (M, 128) slab:
    cols [0:N_CLS] = logits, cols [N_CLS:N_CLS+4] = boxes, rest zero."""
    x = h_ref[...]                                                  # (M, D)
    t = jnp.maximum(_mdot(x, w1_ref[...]) + b1_ref[...], 0.0)
    t = jnp.maximum(_mdot(t, w2_ref[...]) + b2_ref[...], 0.0)
    t = _mdot(t, w3_ref[...]) + b3_ref[...]                         # (M, 4)

    # inverse_sigmoid(ref); cols 2,3 of ref are pre-padded with 0.5 so the
    # added term is exactly 0 there -> matches `tmp[..., :2] += inverse_sigmoid(ref)`.
    r = jnp.clip(ref_ref[...], 0.0, 1.0)
    r1 = jnp.maximum(r, EPS_SIG)
    r2 = jnp.maximum(1.0 - r, EPS_SIG)
    t = t + jnp.log(r1) - jnp.log(r2)

    boxes = _sigmoid(t)                                             # (M, 4)
    logits = _mdot(x, wc_ref[...]) + bc_ref[...]                    # (M, N_CLS)
    pad = jnp.zeros((x.shape[0], HEAD_LANES - 4 - N_CLS), jnp.float32)
    out_ref[...] = jnp.concatenate([logits, boxes, pad],
                                   axis=-1).astype(out_ref.dtype)


# ============================== kernel wrappers ===============================
_VMEM = pl.BlockSpec(memory_space=pltpu.MemorySpace.VMEM)


def stem(patches, p, tr):
    M = patches.shape[0]
    return pl.pallas_call(
        _stem_kernel,
        out_shape=(jax.ShapeDtypeStruct((M, D_MODEL), jnp.float32),
                   jax.ShapeDtypeStruct((N_QUERY, 2), jnp.float32)),
        in_specs=[_VMEM] * 8,
        out_specs=(_VMEM, _VMEM),
    )(patches, p["backbone_w"], p["backbone_b"], p["proj_w"], p["proj_b"],
      p["query"], tr["ref_w"], tr["ref_b"])


def encoder_forward(src, pos, bias, ep):
    """Single pallas_call covering every encoder layer."""
    B, L, D = src.shape
    n_layers = ep["attn_w"].shape[0]
    return pl.pallas_call(
        functools.partial(_encoder_kernel, n_heads=N_HEADS),
        grid=(B, n_layers),
        in_specs=[
            pl.BlockSpec((1, L, D), lambda b, l: (b, 0, 0)),         # src
            pl.BlockSpec((1, L, D), lambda b, l: (b, 0, 0)),         # pos
            pl.BlockSpec((1, 1, L), lambda b, l: (b, 0, 0)),         # key-pad bias
            pl.BlockSpec((1, 4, D, D), lambda b, l: (l, 0, 0, 0)),   # attn W (layer l)
            pl.BlockSpec((1, 4, 1, D), lambda b, l: (l, 0, 0, 0)),   # attn b
            pl.BlockSpec((1, 2, 1, D), lambda b, l: (l, 0, 0, 0)),   # ln gamma
            pl.BlockSpec((1, 2, 1, D), lambda b, l: (l, 0, 0, 0)),   # ln beta
            pl.BlockSpec((1, D, FFN_DIM), lambda b, l: (l, 0, 0)),
            pl.BlockSpec((1, 1, FFN_DIM), lambda b, l: (l, 0, 0)),
            pl.BlockSpec((1, FFN_DIM, D), lambda b, l: (l, 0, 0)),
            pl.BlockSpec((1, 1, D), lambda b, l: (l, 0, 0)),
        ],
        out_specs=pl.BlockSpec((1, L, D), lambda b, l: (b, 0, 0)),   # carry / result
        out_shape=jax.ShapeDtypeStruct((B, L, D), jnp.float32),
        compiler_params=pltpu.CompilerParams(
            dimension_semantics=("parallel", "arbitrary")),
    )(src, pos, bias, ep["attn_w"], ep["attn_b"], ep["ln_g"], ep["ln_b"],
      ep["ffn_w1"], ep["ffn_b1"], ep["ffn_w2"], ep["ffn_b2"])


def decoder_forward(query_pos, memory, mem_pos, bias, dp, fln_g, fln_b):
    """Single pallas_call covering every decoder layer.
    Returns hs: (n_layers, B, Q, D) post-final-LN layer outputs."""
    B, L, D = memory.shape
    n_layers = dp["self_w"].shape[0]
    Q = query_pos.shape[0]
    return pl.pallas_call(
        functools.partial(_decoder_kernel, n_heads=N_HEADS),
        grid=(B, n_layers),
        in_specs=[
            pl.BlockSpec((Q, D), lambda b, l: (0, 0)),               # query_pos (shared)
            pl.BlockSpec((1, L, D), lambda b, l: (b, 0, 0)),         # memory
            pl.BlockSpec((1, L, D), lambda b, l: (b, 0, 0)),         # mem pos
            pl.BlockSpec((1, 1, L), lambda b, l: (b, 0, 0)),         # key-pad bias
            pl.BlockSpec((1, 4, D, D), lambda b, l: (l, 0, 0, 0)),   # self-attn W
            pl.BlockSpec((1, 4, 1, D), lambda b, l: (l, 0, 0, 0)),   # self-attn b
            pl.BlockSpec((1, 4, D, D), lambda b, l: (l, 0, 0, 0)),   # cross-attn W
            pl.BlockSpec((1, 4, 1, D), lambda b, l: (l, 0, 0, 0)),   # cross-attn b
            pl.BlockSpec((1, 3, 1, D), lambda b, l: (l, 0, 0, 0)),   # ln gamma (1,2,3)
            pl.BlockSpec((1, 3, 1, D), lambda b, l: (l, 0, 0, 0)),   # ln beta
            pl.BlockSpec((1, D, FFN_DIM), lambda b, l: (l, 0, 0)),
            pl.BlockSpec((1, 1, FFN_DIM), lambda b, l: (l, 0, 0)),
            pl.BlockSpec((1, FFN_DIM, D), lambda b, l: (l, 0, 0)),
            pl.BlockSpec((1, 1, D), lambda b, l: (l, 0, 0)),
            pl.BlockSpec((1, D), lambda b, l: (0, 0)),               # final ln gamma
            pl.BlockSpec((1, D), lambda b, l: (0, 0)),               # final ln beta
        ],
        out_specs=pl.BlockSpec((1, 1, Q, D), lambda b, l: (l, b, 0, 0)),
        out_shape=jax.ShapeDtypeStruct((n_layers, B, Q, D), jnp.float32),
        scratch_shapes=[pltpu.VMEM((Q, D), jnp.float32)],            # x carry
        compiler_params=pltpu.CompilerParams(
            dimension_semantics=("parallel", "arbitrary")),
    )(query_pos, memory, mem_pos, bias,
      dp["self_w"], dp["self_b"], dp["cross_w"], dp["cross_b"],
      dp["ln_g"], dp["ln_b"],
      dp["ffn_w1"], dp["ffn_b1"], dp["ffn_w2"], dp["ffn_b2"],
      fln_g, fln_b)


def detr_head(h2d, ref4, p):
    """h2d: (M, D), ref4: (M, 4) -> (logits (M, N_CLS), boxes (M, 4))."""
    M, _ = h2d.shape
    slab = pl.pallas_call(
        _head_kernel,
        out_shape=jax.ShapeDtypeStruct((M, HEAD_LANES), jnp.float32),
        in_specs=[_VMEM] * 10,
        out_specs=_VMEM,
    )(h2d, ref4,
      p["box_w1"], p["box_b1"], p["box_w2"], p["box_b2"],
      p["box_w3"], p["box_b3"], p["cls_w"], p["cls_b"])
    return slab[:, :N_CLS], slab[:, N_CLS:N_CLS + 4]


# ============================ glue (non-hot-path) =============================
def sine_pos_embedding(mask, d_model, temperature=10000.0):
    """DETR sine embedding. mask: (B, Hf, Wf) float (1 == pad) -> (B, Hf, Wf, d_model)."""
    eps = 1e-6
    scale = 2.0 * math.pi
    not_mask = 1.0 - mask
    y_embed = jnp.cumsum(not_mask, axis=1)
    x_embed = jnp.cumsum(not_mask, axis=2)
    y_embed = y_embed / (y_embed[:, -1:, :] + eps) * scale
    x_embed = x_embed / (x_embed[:, :, -1:] + eps) * scale
    npf = d_model // 2
    dim_t = temperature ** (2.0 * (jnp.arange(npf) // 2) / npf)
    pos_x = x_embed[..., None] / dim_t
    pos_y = y_embed[..., None] / dim_t
    pos_x = jnp.stack([jnp.sin(pos_x[..., 0::2]), jnp.cos(pos_x[..., 1::2])],
                      axis=-1).reshape(*mask.shape, npf)
    pos_y = jnp.stack([jnp.sin(pos_y[..., 0::2]), jnp.cos(pos_y[..., 1::2])],
                      axis=-1).reshape(*mask.shape, npf)
    return jnp.concatenate([pos_y, pos_x], axis=-1).astype(jnp.float32)


# ================================ forward pass ================================
def conditional_detr_forward(params, img, mask, training=False):
    """img: (B, 3, H, W) NCHW float; mask: (B, H, W) float (1.0 == padded)."""
    B, C, H, W = img.shape
    x = jnp.transpose(img, (0, 2, 3, 1)).astype(jnp.float32)           # -> NHWC
    Hf, Wf = H // PATCH, W // PATCH
    L = Hf * Wf
    tr = params["transformer"]

    # backbone: 4x4 stride-4 conv as im2col (glue) + fused Pallas stem kernel,
    # which also runs input_proj (1x1 conv) and the reference-point projection.
    patches = (x.reshape(B, Hf, PATCH, Wf, PATCH, C)
                .transpose(0, 1, 3, 2, 4, 5)
                .reshape(B * L, PATCH * PATCH * C))
    f2d, ref = stem(patches, params, tr)
    f = f2d.reshape(B, L, D_MODEL)

    # F.interpolate(mask.unsqueeze(1), feature.shape[2:], mode='nearest')
    hi = jnp.floor(jnp.arange(Hf) * (H / Hf)).astype(jnp.int32)
    wi = jnp.floor(jnp.arange(Wf) * (W / Wf)).astype(jnp.int32)
    m = mask.astype(jnp.float32)[:, hi][:, :, wi]                       # (B, Hf, Wf)

    pos_embed = sine_pos_embedding(m, D_MODEL).reshape(B, L, D_MODEL)
    # additive key-padding bias, shared by all heads (True/1.0 == padded)
    key_pad_bias = jnp.where(m.reshape(B, 1, L) > 0.5, -1e9, 0.0).astype(jnp.float32)

    memory = encoder_forward(f, pos_embed, key_pad_bias, tr["encoder"])
    hs = decoder_forward(params["query"], memory, pos_embed, key_pad_bias,
                         tr["decoder"], tr["final_ln_g"], tr["final_ln_b"])
    # hs: (N_DEC, B, Q, D)

    # columns 2,3 padded with 0.5 so inverse_sigmoid adds exactly 0 there
    ref4 = jnp.concatenate(
        [jnp.broadcast_to(ref[None], (B, N_QUERY, 2)),
         jnp.full((B, N_QUERY, 2), 0.5, jnp.float32)], axis=-1
    ).reshape(B * N_QUERY, 4)

    if training:
        n = hs.shape[0]
        M = B * N_QUERY
        h_all = hs.reshape(n * M, D_MODEL)
        ref_all = jnp.tile(ref4, (n, 1))
        logits, boxes = detr_head(h_all, ref_all, params)               # one call
        outs = []
        for i in range(n):
            outs.append({
                "pred_logits": logits[i * M:(i + 1) * M].reshape(B, N_QUERY, N_CLS),
                "pred_boxes": boxes[i * M:(i + 1) * M].reshape(B, N_QUERY, 4)})
        return {"model": outs}

    logits, boxes = detr_head(hs[-1].reshape(B * N_QUERY, D_MODEL), ref4, params)
    return {"pred_logits": logits.reshape(B, N_QUERY, N_CLS),
            "pred_boxes": boxes.reshape(B, N_QUERY, 4)}


# ============================== parameter init ================================
def init_params(key):
    kit = iter(jax.random.split(key, 256))

    def w(shape, std=0.02, dtype=MXU_DTYPE):
        return (std * jax.random.normal(next(kit), shape)).astype(dtype)

    def zeros(shape, dtype=jnp.float32):
        return jnp.zeros(shape, dtype)

    def ones(shape):
        return jnp.ones(shape, jnp.float32)

    def stack_w(n, *shape):
        # per-layer stacked matmul weights, stored in bf16 (MXU operand dtype)
        return (0.02 * jax.random.normal(next(kit), (n, *shape))).astype(MXU_DTYPE)

    enc = dict(
        attn_w=stack_w(N_ENC, 4, D_MODEL, D_MODEL),      # [Wq, Wk, Wv, Wo] per layer
        attn_b=zeros((N_ENC, 4, 1, D_MODEL)),
        ln_g=ones((N_ENC, 2, 1, D_MODEL)),
        ln_b=zeros((N_ENC, 2, 1, D_MODEL)),
        ffn_w1=stack_w(N_ENC, D_MODEL, FFN_DIM),
        ffn_b1=zeros((N_ENC, 1, FFN_DIM)),
        ffn_w2=stack_w(N_ENC, FFN_DIM, D_MODEL),
        ffn_b2=zeros((N_ENC, 1, D_MODEL)))

    dec = dict(
        self_w=stack_w(N_DEC, 4, D_MODEL, D_MODEL),
        self_b=zeros((N_DEC, 4, 1, D_MODEL)),
        cross_w=stack_w(N_DEC, 4, D_MODEL, D_MODEL),
        cross_b=zeros((N_DEC, 4, 1, D_MODEL)),
        ln_g=ones((N_DEC, 3, 1, D_MODEL)),
        ln_b=zeros((N_DEC, 3, 1, D_MODEL)),
        ffn_w1=stack_w(N_DEC, D_MODEL, FFN_DIM),
        ffn_b1=zeros((N_DEC, 1, FFN_DIM)),
        ffn_w2=stack_w(N_DEC, FFN_DIM, D_MODEL),
        ffn_b2=zeros((N_DEC, 1, D_MODEL)))

    prior_prob = 0.01
    bias_value = -math.log((1 - prior_prob) / prior_prob)   # cls_embed.bias init

    return dict(
        backbone_w=w((PATCH * PATCH * 3, BACKBONE_OUT)),
        backbone_b=zeros((1, BACKBONE_OUT)),
        proj_w=w((BACKBONE_OUT, D_MODEL)),                   # input_proj 1x1 conv
        proj_b=zeros((1, D_MODEL)),
        query=w((N_QUERY, D_MODEL), std=0.02, dtype=jnp.float32),  # nn.Embedding
        transformer=dict(
            encoder=enc,
            decoder=dec,
            final_ln_g=ones((1, D_MODEL)), final_ln_b=zeros((1, D_MODEL)),
            ref_w=w((D_MODEL, 2)), ref_b=zeros((1, 2))),
        # box_embed MLP (3 layers); last layer weight/bias == 0 per __init__.
        box_w1=w((D_MODEL, D_MODEL)), box_b1=zeros((1, D_MODEL)),
        box_w2=w((D_MODEL, D_MODEL)), box_b2=zeros((1, D_MODEL)),
        box_w3=zeros((D_MODEL, 4), MXU_DTYPE), box_b3=zeros((1, 4)),
        cls_w=w((D_MODEL, N_CLS)),
        cls_b=jnp.full((1, N_CLS), bias_value, jnp.float32),
    )


# ==================================== main ====================================
if __name__ == "__main__":
    key = jax.random.PRNGKey(0)
    pkey, ikey = jax.random.split(key)
    params = init_params(pkey)

    B, H, W = 2, 32, 32
    img = jax.random.normal(ikey, (B, 3, H, W), jnp.float32)
    mask = jnp.zeros((B, H, W), jnp.float32)
    mask = mask.at[1, :, W - 8:].set(1.0)   # right quarter of image 1 is padding

    fwd = jax.jit(conditional_detr_forward, static_argnames=("training",))
    out = fwd(params, img, mask, training=False)
    out = jax.tree_util.tree_map(jax.block_until_ready, out)

    assert out["pred_logits"].shape == (B, N_QUERY, N_CLS)
    assert out["pred_boxes"].shape == (B, N_QUERY, 4)
    assert bool(jnp.all(jnp.isfinite(out["pred_logits"])))
    assert bool(jnp.all((out["pred_boxes"] >= 0.0) & (out["pred_boxes"] <= 1.0)))
    print("KERNEL_OK")
</pallas_src>

<mosaic_0001>
module attributes {stable_mosaic.version = 11 : i64} {
  func.func @_stem_kernel(%arg0: memref<128x48xf32, #tpu.memory_space<vmem>>, %arg1: memref<48x8xbf16, #tpu.memory_space<vmem>>, %arg2: memref<1x8xf32, #tpu.memory_space<vmem>>, %arg3: memref<8x32xbf16, #tpu.memory_space<vmem>>, %arg4: memref<1x32xf32, #tpu.memory_space<vmem>>, %arg5: memref<8x32xf32, #tpu.memory_space<vmem>>, %arg6: memref<32x2xbf16, #tpu.memory_space<vmem>>, %arg7: memref<1x2xf32, #tpu.memory_space<vmem>>, %arg8: memref<128x32xf32, #tpu.memory_space<vmem>>, %arg9: memref<8x2xf32, #tpu.memory_space<vmem>>) attributes {dimension_semantics = [], scalar_prefetch = 0 : i64, scratch_operands = 0 : i64, tpu.core_type = #tpu.core_type<tc>} {
    %c0 = arith.constant 0 : index
    %c0_0 = arith.constant 0 : index
    %0 = vector.load %arg0[%c0, %c0_0] : memref<128x48xf32, #tpu.memory_space<vmem>>, vector<128x48xf32>
    %c0_1 = arith.constant 0 : index
    %c0_2 = arith.constant 0 : index
    %1 = vector.load %arg1[%c0_1, %c0_2] : memref<48x8xbf16, #tpu.memory_space<vmem>>, vector<48x8xbf16>
    %2 = arith.truncf %0 : vector<128x48xf32> to vector<128x48xbf16>
    %cst = arith.constant dense<0.000000e+00> : vector<128x8xf32>
    %3 = tpu.matmul %2, %1, %cst {dimension_numbers = #tpu.dot_dimension_numbers<[1], [0], [0], [1], [0, 0, 1, 1], [], []>} : vector<128x48xbf16>, vector<48x8xbf16>, vector<128x8xf32> -> vector<128x8xf32>
    %c0_3 = arith.constant 0 : index
    %c0_4 = arith.constant 0 : index
    %4 = vector.load %arg2[%c0_3, %c0_4] : memref<1x8xf32, #tpu.memory_space<vmem>>, vector<1x8xf32>
    %5 = vector.broadcast %4 : vector<1x8xf32> to vector<128x8xf32>
    %6 = arith.addf %3, %5 : vector<128x8xf32>
    %cst_5 = arith.constant 0.000000e+00 : f32
    %7 = vector.broadcast %cst_5 : f32 to vector<128x8xf32>
    %8 = arith.maximumf %6, %7 : vector<128x8xf32>
    %c0_6 = arith.constant 0 : index
    %c0_7 = arith.constant 0 : index
    %9 = vector.load %arg3[%c0_6, %c0_7] : memref<8x32xbf16, #tpu.memory_space<vmem>>, vector<8x32xbf16>
    %10 = arith.truncf %8 : vector<128x8xf32> to vector<128x8xbf16>
    %cst_8 = arith.constant dense<0.000000e+00> : vector<128x32xf32>
    %11 = tpu.matmul %10, %9, %cst_8 {dimension_numbers = #tpu.dot_dimension_numbers<[1], [0], [0], [1], [0, 0, 1, 1], [], []>} : vector<128x8xbf16>, vector<8x32xbf16>, vector<128x32xf32> -> vector<128x32xf32>
    %c0_9 = arith.constant 0 : index
    %c0_10 = arith.constant 0 : index
    %12 = vector.load %arg4[%c0_9, %c0_10] : memref<1x32xf32, #tpu.memory_space<vmem>>, vector<1x32xf32>
    %13 = vector.broadcast %12 : vector<1x32xf32> to vector<128x32xf32>
    %14 = arith.addf %11, %13 : vector<128x32xf32>
    %c0_11 = arith.constant 0 : index
    %c0_12 = arith.constant 0 : index
    %15 = vector.load %arg8[%c0_11, %c0_12] : memref<128x32xf32, #tpu.memory_space<vmem>>, vector<128x32xf32>
    tpu.vector_store %arg8[%c0_11, %c0_12], %14 {strides = array<i32>} : memref<128x32xf32, #tpu.memory_space<vmem>>, vector<128x32xf32>,
    %c0_13 = arith.constant 0 : index
    %c0_14 = arith.constant 0 : index
    %16 = vector.load %arg5[%c0_13, %c0_14] : memref<8x32xf32, #tpu.memory_space<vmem>>, vector<8x32xf32>
    %c0_15 = arith.constant 0 : index
    %c0_16 = arith.constant 0 : index
    %17 = vector.load %arg6[%c0_15, %c0_16] : memref<32x2xbf16, #tpu.memory_space<vmem>>, vector<32x2xbf16>
    %18 = arith.truncf %16 : vector<8x32xf32> to vector<8x32xbf16>
    %cst_17 = arith.constant dense<0.000000e+00> : vector<8x2xf32>
    %19 = tpu.matmul %18, %17, %cst_17 {dimension_numbers = #tpu.dot_dimension_numbers<[1], [0], [0], [1], [0, 0, 1, 1], [], []>} : vector<8x32xbf16>, vector<32x2xbf16>, vector<8x2xf32> -> vector<8x2xf32>
    %c0_18 = arith.constant 0 : index
    %c0_19 = arith.constant 0 : index
    %20 = vector.load %arg7[%c0_18, %c0_19] : memref<1x2xf32, #tpu.memory_space<vmem>>, vector<1x2xf32>
    %21 = vector.broadcast %20 : vector<1x2xf32> to vector<8x2xf32>
    %22 = arith.addf %19, %21 : vector<8x2xf32>
    %23 = math.absf %22 : vector<8x2xf32>
    %cst_20 = arith.constant 0.000000e+00 : f32
    %24 = vector.broadcast %cst_20 : f32 to vector<8x2xf32>
    %25 = arith.subf %24, %23 : vector<8x2xf32>
    %26 = math.exp %25 : vector<8x2xf32>
    %cst_21 = arith.constant 0.000000e+00 : f32
    %27 = vector.broadcast %cst_21 : f32 to vector<8x2xf32>
    %28 = arith.cmpf oge, %22, %27 : vector<8x2xf32>
    %cst_22 = arith.constant 1.000000e+00 : f32
    %29 = vector.broadcast %cst_22 : f32 to vector<8x2xf32>
    %30 = arith.addf %29, %26 : vector<8x2xf32>
    %cst_23 = arith.constant 1.000000e+00 : f32
    %31 = vector.broadcast %cst_23 : f32 to vector<8x2xf32>
    %32 = arith.divf %31, %30 : vector<8x2xf32>
    %cst_24 = arith.constant 1.000000e+00 : f32
    %33 = vector.broadcast %cst_24 : f32 to vector<8x2xf32>
    %34 = arith.addf %33, %26 : vector<8x2xf32>
    %35 = arith.divf %26, %34 : vector<8x2xf32>
    %36 = arith.select %28, %32, %35 : vector<8x2xi1>, vector<8x2xf32>
    %c0_25 = arith.constant 0 : index
    %c0_26 = arith.constant 0 : index
    %37 = vector.load %arg9[%c0_25, %c0_26] : memref<8x2xf32, #tpu.memory_space<vmem>>, vector<8x2xf32>
    tpu.vector_store %arg9[%c0_25, %c0_26], %36 {strides = array<i32>} : memref<8x2xf32, #tpu.memory_space<vmem>>, vector<8x2xf32>,
    return
  }
}

module attributes {stable_mosaic.version = 11 : i64} {
  func.func @_head_kernel(%arg0: memref<16x32xf32, #tpu.memory_space<vmem>>, %arg1: memref<16x4xf32, #tpu.memory_space<vmem>>, %arg2: memref<32x32xbf16, #tpu.memory_space<vmem>>, %arg3: memref<1x32xf32, #tpu.memory_space<vmem>>, %arg4: memref<32x32xbf16, #tpu.memory_space<vmem>>, %arg5: memref<1x32xf32, #tpu.memory_space<vmem>>, %arg6: memref<32x4xbf16, #tpu.memory_space<vmem>>, %arg7: memref<1x4xf32, #tpu.memory_space<vmem>>, %arg8: memref<32x2xbf16, #tpu.memory_space<vmem>>, %arg9: memref<1x2xf32, #tpu.memory_space<vmem>>, %arg10: memref<16x128xf32, #tpu.memory_space<vmem>>) attributes {dimension_semantics = [], scalar_prefetch = 0 : i64, scratch_operands = 0 : i64, tpu.core_type = #tpu.core_type<tc>} {
    %c0 = arith.constant 0 : index
    %c0_0 = arith.constant 0 : index
    %0 = vector.load %arg0[%c0, %c0_0] : memref<16x32xf32, #tpu.memory_space<vmem>>, vector<16x32xf32>
    %c0_1 = arith.constant 0 : index
    %c0_2 = arith.constant 0 : index
    %1 = vector.load %arg2[%c0_1, %c0_2] : memref<32x32xbf16, #tpu.memory_space<vmem>>, vector<32x32xbf16>
    %2 = arith.truncf %0 : vector<16x32xf32> to vector<16x32xbf16>
    %cst = arith.constant dense<0.000000e+00> : vector<16x32xf32>
    %3 = tpu.matmul %2, %1, %cst {dimension_numbers = #tpu.dot_dimension_numbers<[1], [0], [0], [1], [0, 0, 1, 1], [], []>} : vector<16x32xbf16>, vector<32x32xbf16>, vector<16x32xf32> -> vector<16x32xf32>
    %c0_3 = arith.constant 0 : index
    %c0_4 = arith.constant 0 : index
    %4 = vector.load %arg3[%c0_3, %c0_4] : memref<1x32xf32, #tpu.memory_space<vmem>>, vector<1x32xf32>
    %5 = vector.broadcast %4 : vector<1x32xf32> to vector<16x32xf32>
    %6 = arith.addf %3, %5 : vector<16x32xf32>
    %cst_5 = arith.constant 0.000000e+00 : f32
    %7 = vector.broadcast %cst_5 : f32 to vector<16x32xf32>
    %8 = arith.maximumf %6, %7 : vector<16x32xf32>
    %c0_6 = arith.constant 0 : index
    %c0_7 = arith.constant 0 : index
    %9 = vector.load %arg4[%c0_6, %c0_7] : memref<32x32xbf16, #tpu.memory_space<vmem>>, vector<32x32xbf16>
    %10 = arith.truncf %8 : vector<16x32xf32> to vector<16x32xbf16>
    %cst_8 = arith.constant dense<0.000000e+00> : vector<16x32xf32>
    %11 = tpu.matmul %10, %9, %cst_8 {dimension_numbers = #tpu.dot_dimension_numbers<[1], [0], [0], [1], [0, 0, 1, 1], [], []>} : vector<16x32xbf16>, vector<32x32xbf16>, vector<16x32xf32> -> vector<16x32xf32>
    %c0_9 = arith.constant 0 : index
    %c0_10 = arith.constant 0 : index
    %12 = vector.load %arg5[%c0_9, %c0_10] : memref<1x32xf32, #tpu.memory_space<vmem>>, vector<1x32xf32>
    %13 = vector.broadcast %12 : vector<1x32xf32> to vector<16x32xf32>
    %14 = arith.addf %11, %13 : vector<16x32xf32>
    %cst_11 = arith.constant 0.000000e+00 : f32
    %15 = vector.broadcast %cst_11 : f32 to vector<16x32xf32>
    %16 = arith.maximumf %14, %15 : vector<16x32xf32>
    %c0_12 = arith.constant 0 : index
    %c0_13 = arith.constant 0 : index
    %17 = vector.load %arg6[%c0_12, %c0_13] : memref<32x4xbf16, #tpu.memory_space<vmem>>, vector<32x4xbf16>
    %18 = arith.truncf %16 : vector<16x32xf32> to vector<16x32xbf16>
    %cst_14 = arith.constant dense<0.000000e+00> : vector<16x4xf32>
    %19 = tpu.matmul %18, %17, %cst_14 {dimension_numbers = #tpu.dot_dimension_numbers<[1], [0], [0], [1], [0, 0, 1, 1], [], []>} : vector<16x32xbf16>, vector<32x4xbf16>, vector<16x4xf32> -> vector<16x4xf32>
    %c0_15 = arith.constant 0 : index
    %c0_16 = arith.constant 0 : index
    %20 = vector.load %arg7[%c0_15, %c0_16] : memref<1x4xf32, #tpu.memory_space<vmem>>, vector<1x4xf32>
    %21 = vector.broadcast %20 : vector<1x4xf32> to vector<16x4xf32>
    %22 = arith.addf %19, %21 : vector<16x4xf32>
    %c0_17 = arith.constant 0 : index
    %c0_18 = arith.constant 0 : index
    %23 = vector.load %arg1[%c0_17, %c0_18] : memref<16x4xf32, #tpu.memory_space<vmem>>, vector<16x4xf32>
    %cst_19 = arith.constant 0.000000e+00 : f32
    %cst_20 = arith.constant 1.000000e+00 : f32
    %24 = vector.broadcast %cst_19 : f32 to vector<16x4xf32>
    %25 = arith.maximumf %24, %23 : vector<16x4xf32>
    %26 = vector.broadcast %cst_20 : f32 to vector<16x4xf32>
    %27 = arith.minimumf %26, %25 : vector<16x4xf32>
    %cst_21 = arith.constant 9.99999974E-6 : f32
    %28 = vector.broadcast %cst_21 : f32 to vector<16x4xf32>
    %29 = arith.maximumf %27, %28 : vector<16x4xf32>
    %cst_22 = arith.constant 1.000000e+00 : f32
    %30 = vector.broadcast %cst_22 : f32 to vector<16x4xf32>
    %31 = arith.subf %30, %27 : vector<16x4xf32>
    %cst_23 = arith.constant 9.99999974E-6 : f32
    %32 = vector.broadcast %cst_23 : f32 to vector<16x4xf32>
    %33 = arith.maximumf %31, %32 : vector<16x4xf32>
    %34 = math.log %29 : vector<16x4xf32>
    %35 = arith.addf %22, %34 : vector<16x4xf32>
    %36 = math.log %33 : vector<16x4xf32>
    %37 = arith.subf %35, %36 : vector<16x4xf32>
    %38 = math.absf %37 : vector<16x4xf32>
    %cst_24 = arith.constant 0.000000e+00 : f32
    %39 = vector.broadcast %cst_24 : f32 to vector<16x4xf32>
    %40 = arith.subf %39, %38 : vector<16x4xf32>
    %41 = math.exp %40 : vector<16x4xf32>
    %cst_25 = arith.constant 0.000000e+00 : f32
    %42 = vector.broadcast %cst_25 : f32 to vector<16x4xf32>
    %43 = arith.cmpf oge, %37, %42 : vector<16x4xf32>
    %cst_26 = arith.constant 1.000000e+00 : f32
    %44 = vector.broadcast %cst_26 : f32 to vector<16x4xf32>
    %45 = arith.addf %44, %41 : vector<16x4xf32>
    %cst_27 = arith.constant 1.000000e+00 : f32
    %46 = vector.broadcast %cst_27 : f32 to vector<16x4xf32>
    %47 = arith.divf %46, %45 : vector<16x4xf32>
    %cst_28 = arith.constant 1.000000e+00 : f32
    %48 = vector.broadcast %cst_28 : f32 to vector<16x4xf32>
    %49 = arith.addf %48, %41 : vector<16x4xf32>
    %50 = arith.divf %41, %49 : vector<16x4xf32>
    %51 = arith.select %43, %47, %50 : vector<16x4xi1>, vector<16x4xf32>
    %c0_29 = arith.constant 0 : index
    %c0_30 = arith.constant 0 : index
    %52 = vector.load %arg8[%c0_29, %c0_30] : memref<32x2xbf16, #tpu.memory_space<vmem>>, vector<32x2xbf16>
    %53 = arith.truncf %0 : vector<16x32xf32> to vector<16x32xbf16>
    %cst_31 = arith.constant dense<0.000000e+00> : vector<16x2xf32>
    %54 = tpu.matmul %53, %52, %cst_31 {dimension_numbers = #tpu.dot_dimension_numbers<[1], [0], [0], [1], [0, 0, 1, 1], [], []>} : vector<16x32xbf16>, vector<32x2xbf16>, vector<16x2xf32> -> vector<16x2xf32>
    %c0_32 = arith.constant 0 : index
    %c0_33 = arith.constant 0 : index
    %55 = vector.load %arg9[%c0_32, %c0_33] : memref<1x2xf32, #tpu.memory_space<vmem>>, vector<1x2xf32>
    %56 = vector.broadcast %55 : vector<1x2xf32> to vector<16x2xf32>
    %57 = arith.addf %54, %56 : vector<16x2xf32>
    %cst_34 = arith.constant 0.000000e+00 : f32
    %58 = vector.broadcast %cst_34 : f32 to vector<16x122xf32>
    %59 = tpu.concatenate %57, %51, %58 in 1 : vector<16x2xf32>, vector<16x4xf32>, vector<16x122xf32> -> vector<16x128xf32>
    %c0_35 = arith.constant 0 : index
    %c0_36 = arith.constant 0 : index
    %60 = vector.load %arg10[%c0_35, %c0_36] : memref<16x128xf32, #tpu.memory_space<vmem>>, vector<16x128xf32>
    tpu.vector_store %arg10[%c0_35, %c0_36], %59 {strides = array<i32>} : memref<16x128xf32, #tpu.memory_space<vmem>>, vector<16x128xf32>,
    return
  }
}

module attributes {stable_mosaic.version = 11 : i64} {
  func.func @_decoder_kernel(%arg0: i32, %arg1: i32, %arg2: memref<8x32xf32, #tpu.memory_space<vmem>>, %arg3: memref<1x64x32xf32, #tpu.memory_space<vmem>>, %arg4: memref<1x64x32xf32, #tpu.memory_space<vmem>>, %arg5: memref<1x1x64xf32, #tpu.memory_space<vmem>>, %arg6: memref<1x4x32x32xbf16, #tpu.memory_space<vmem>>, %arg7: memref<1x4x1x32xf32, #tpu.memory_space<vmem>>, %arg8: memref<1x4x32x32xbf16, #tpu.memory_space<vmem>>, %arg9: memref<1x4x1x32xf32, #tpu.memory_space<vmem>>, %arg10: memref<1x3x1x32xf32, #tpu.memory_space<vmem>>, %arg11: memref<1x3x1x32xf32, #tpu.memory_space<vmem>>, %arg12: memref<1x32x64xbf16, #tpu.memory_space<vmem>>, %arg13: memref<1x1x64xf32, #tpu.memory_space<vmem>>, %arg14: memref<1x64x32xbf16, #tpu.memory_space<vmem>>, %arg15: memref<1x1x32xf32, #tpu.memory_space<vmem>>, %arg16: memref<1x32xf32, #tpu.memory_space<vmem>>, %arg17: memref<1x32xf32, #tpu.memory_space<vmem>>, %arg18: memref<1x1x8x32xf32, #tpu.memory_space<vmem>>, %arg19: memref<8x32xf32, #tpu.memory_space<vmem>>) attributes {dimension_semantics = [#tpu.dimension_semantics<parallel>, #tpu.dimension_semantics<arbitrary>], iteration_bounds = array<i64: 2, 2>, scalar_prefetch = 0 : i64, scratch_operands = 1 : i64, tpu.core_type = #tpu.core_type<tc>, window_params = [{pipeline_mode = #tpu.pipeline_mode<synchronous>, transform_indices = @transform_0, window_bounds = array<i64: 8, 32>}, {transform_indices = @transform_1, window_bounds = array<i64: 1, 64, 32>}, {transform_indices = @transform_2, window_bounds = array<i64: 1, 64, 32>}, {transform_indices = @transform_3, window_bounds = array<i64: 1, 1, 64>}, {transform_indices = @transform_4, window_bounds = array<i64: 1, 4, 32, 32>}, {transform_indices = @transform_5, window_bounds = array<i64: 1, 4, 1, 32>}, {transform_indices = @transform_6, window_bounds = array<i64: 1, 4, 32, 32>}, {transform_indices = @transform_7, window_bounds = array<i64: 1, 4, 1, 32>}, {transform_indices = @transform_8, window_bounds = array<i64: 1, 3, 1, 32>}, {transform_indices = @transform_9, window_bounds = array<i64: 1, 3, 1, 32>}, {transform_indices = @transform_10, window_bounds = array<i64: 1, 32, 64>}, {transform_indices = @transform_11, window_bounds = array<i64: 1, 1, 64>}, {transform_indices = @transform_12, window_bounds = array<i64: 1, 64, 32>}, {transform_indices = @transform_13, window_bounds = array<i64: 1, 1, 32>}, {pipeline_mode = #tpu.pipeline_mode<synchronous>, transform_indices = @transform_14, window_bounds = array<i64: 1, 32>}, {pipeline_mode = #tpu.pipeline_mode<synchronous>, transform_indices = @transform_15, window_bounds = array<i64: 1, 32>}, {transform_indices = @transform_16, window_bounds = array<i64: 1, 1, 8, 32>}]} {
    %c0_i32 = arith.constant 0 : i32
    %0 = arith.cmpi eq, %arg1, %c0_i32 : i32
    %1 = arith.extui %0 : i1 to i32
    %c0_i32_0 = arith.constant 0 : i32
    %2 = arith.cmpi ne, %1, %c0_i32_0 : i32
    scf.if %2 {
      %cst_129 = arith.constant 0.000000e+00 : f32
      %385 = vector.broadcast %cst_129 : f32 to vector<8x32xf32>
      %c0_130 = arith.constant 0 : index
      %c0_131 = arith.constant 0 : index
      %386 = vector.load %arg19[%c0_130, %c0_131] : memref<8x32xf32, #tpu.memory_space<vmem>>, vector<8x32xf32>
      tpu.vector_store %arg19[%c0_130, %c0_131], %385 {strides = array<i32>} : memref<8x32xf32, #tpu.memory_space<vmem>>, vector<8x32xf32>,
    } else {
    }
    %c0 = arith.constant 0 : index
    %c0_1 = arith.constant 0 : index
    %3 = vector.load %arg19[%c0, %c0_1] : memref<8x32xf32, #tpu.memory_space<vmem>>, vector<8x32xf32>
    %c0_2 = arith.constant 0 : index
    %c0_3 = arith.constant 0 : index
    %4 = vector.load %arg2[%c0_2, %c0_3] : memref<8x32xf32, #tpu.memory_space<vmem>>, vector<8x32xf32>
    %c0_4 = arith.constant 0 : index
    %c0_5 = arith.constant 0 : index
    %c0_6 = arith.constant 0 : index
    %5 = vector.load %arg3[%c0_4, %c0_5, %c0_6] : memref<1x64x32xf32, #tpu.memory_space<vmem>>, vector<1x64x32xf32>
    %6 = vector.shape_cast %5 : vector<1x64x32xf32> to vector<64x32xf32>
    %c0_7 = arith.constant 0 : index
    %c0_8 = arith.constant 0 : index
    %c0_9 = arith.constant 0 : index
    %7 = vector.load %arg4[%c0_7, %c0_8, %c0_9] : memref<1x64x32xf32, #tpu.memory_space<vmem>>, vector<1x64x32xf32>
    %8 = vector.shape_cast %7 : vector<1x64x32xf32> to vector<64x32xf32>
    %c0_10 = arith.constant 0 : index
    %c0_11 = arith.constant 0 : index
    %c0_12 = arith.constant 0 : index
    %9 = vector.load %arg5[%c0_10, %c0_11, %c0_12] : memref<1x1x64xf32, #tpu.memory_space<vmem>>, vector<1x1x64xf32>
    %10 = vector.shape_cast %9 : vector<1x1x64xf32> to vector<1x64xf32>
    %c0_13 = arith.constant 0 : index
    %c0_14 = arith.constant 0 : index
    %c0_15 = arith.constant 0 : index
    %c0_16 = arith.constant 0 : index
    %11 = vector.load %arg10[%c0_13, %c0_14, %c0_15, %c0_16] : memref<1x3x1x32xf32, #tpu.memory_space<vmem>>, vector<1x3x1x32xf32>
    %12 = vector.shape_cast %11 : vector<1x3x1x32xf32> to vector<3x1x32xf32>
    %c0_17 = arith.constant 0 : index
    %c0_18 = arith.constant 0 : index
    %c0_19 = arith.constant 0 : index
    %c0_20 = arith.constant 0 : index
    %13 = vector.load %arg11[%c0_17, %c0_18, %c0_19, %c0_20] : memref<1x3x1x32xf32, #tpu.memory_space<vmem>>, vector<1x3x1x32xf32>
    %14 = vector.shape_cast %13 : vector<1x3x1x32xf32> to vector<3x1x32xf32>
    %15 = arith.addf %3, %4 : vector<8x32xf32>
    %c0_21 = arith.constant 0 : index
    %c0_22 = arith.constant 0 : index
    %c0_23 = arith.constant 0 : index
    %c0_24 = arith.constant 0 : index
    %16 = vector.load %arg6[%c0_21, %c0_22, %c0_23, %c0_24] : memref<1x4x32x32xbf16, #tpu.memory_space<vmem>>, vector<1x4x32x32xbf16>
    %17 = vector.shape_cast %16 : vector<1x4x32x32xbf16> to vector<4x32x32xbf16>
    %c0_25 = arith.constant 0 : index
    %c0_26 = arith.constant 0 : index
    %c0_27 = arith.constant 0 : index
    %c0_28 = arith.constant 0 : index
    %18 = vector.load %arg7[%c0_25, %c0_26, %c0_27, %c0_28] : memref<1x4x1x32xf32, #tpu.memory_space<vmem>>, vector<1x4x1x32xf32>
    %19 = vector.shape_cast %18 : vector<1x4x1x32xf32> to vector<4x1x32xf32>
    %20 = vector.extract_strided_slice %17 {offsets = [0, 0, 0], sizes = [1, 32, 32], strides = [1, 1, 1]} : vector<4x32x32xbf16> to vector<1x32x32xbf16>
    %21 = vector.shape_cast %20 : vector<1x32x32xbf16> to vector<32x32xbf16>
    %22 = arith.truncf %15 : vector<8x32xf32> to vector<8x32xbf16>
    %cst = arith.constant dense<0.000000e+00> : vector<8x32xf32>
    %23 = tpu.matmul %22, %21, %cst {dimension_numbers = #tpu.dot_dimension_numbers<[1], [0], [0], [1], [0, 0, 1, 1], [], []>} : vector<8x32xbf16>, vector<32x32xbf16>, vector<8x32xf32> -> vector<8x32xf32>
    %24 = vector.extract_strided_slice %19 {offsets = [0, 0, 0], sizes = [1, 1, 32], strides = [1, 1, 1]} : vector<4x1x32xf32> to vector<1x1x32xf32>
    %25 = vector.shape_cast %24 : vector<1x1x32xf32> to vector<1x32xf32>
    %26 = vector.broadcast %25 : vector<1x32xf32> to vector<8x32xf32>
    %27 = arith.addf %23, %26 : vector<8x32xf32>
    %28 = arith.truncf %27 : vector<8x32xf32> to vector<8x32xbf16>
    %29 = vector.extract_strided_slice %17 {offsets = [1, 0, 0], sizes = [1, 32, 32], strides = [1, 1, 1]} : vector<4x32x32xbf16> to vector<1x32x32xbf16>
    %30 = vector.shape_cast %29 : vector<1x32x32xbf16> to vector<32x32xbf16>
    %31 = arith.truncf %15 : vector<8x32xf32> to vector<8x32xbf16>
    %cst_29 = arith.constant dense<0.000000e+00> : vector<8x32xf32>
    %32 = tpu.matmul %31, %30, %cst_29 {dimension_numbers = #tpu.dot_dimension_numbers<[1], [0], [0], [1], [0, 0, 1, 1], [], []>} : vector<8x32xbf16>, vector<32x32xbf16>, vector<8x32xf32> -> vector<8x32xf32>
    %33 = vector.extract_strided_slice %19 {offsets = [1, 0, 0], sizes = [1, 1, 32], strides = [1, 1, 1]} : vector<4x1x32xf32> to vector<1x1x32xf32>
    %34 = vector.shape_cast %33 : vector<1x1x32xf32> to vector<1x32xf32>
    %35 = vector.broadcast %34 : vector<1x32xf32> to vector<8x32xf32>
    %36 = arith.addf %32, %35 : vector<8x32xf32>
    %37 = vector.extract_strided_slice %17 {offsets = [2, 0, 0], sizes = [1, 32, 32], strides = [1, 1, 1]} : vector<4x32x32xbf16> to vector<1x32x32xbf16>
    %38 = vector.shape_cast %37 : vector<1x32x32xbf16> to vector<32x32xbf16>
    %39 = arith.truncf %3 : vector<8x32xf32> to vector<8x32xbf16>
    %cst_30 = arith.constant dense<0.000000e+00> : vector<8x32xf32>
    %40 = tpu.matmul %39, %38, %cst_30 {dimension_numbers = #tpu.dot_dimension_numbers<[1], [0], [0], [1], [0, 0, 1, 1], [], []>} : vector<8x32xbf16>, vector<32x32xbf16>, vector<8x32xf32> -> vector<8x32xf32>
    %41 = vector.extract_strided_slice %19 {offsets = [2, 0, 0], sizes = [1, 1, 32], strides = [1, 1, 1]} : vector<4x1x32xf32> to vector<1x1x32xf32>
    %42 = vector.shape_cast %41 : vector<1x1x32xf32> to vector<1x32xf32>
    %43 = vector.broadcast %42 : vector<1x32xf32> to vector<8x32xf32>
    %44 = arith.addf %40, %43 : vector<8x32xf32>
    %45 = arith.truncf %44 : vector<8x32xf32> to vector<8x32xbf16>
    %46 = tpu.transpose %36, [1, 0] : vector<8x32xf32> -> vector<32x8xf32>
    %47 = vector.extract_strided_slice %28 {offsets = [0, 0], sizes = [8, 8], strides = [1, 1]} : vector<8x32xbf16> to vector<8x8xbf16>
    %48 = vector.extract_strided_slice %46 {offsets = [0, 0], sizes = [8, 8], strides = [1, 1]} : vector<32x8xf32> to vector<8x8xf32>
    %49 = arith.truncf %48 : vector<8x8xf32> to vector<8x8xbf16>
    %cst_31 = arith.constant dense<0.000000e+00> : vector<8x8xf32>
    %50 = tpu.matmul %47, %49, %cst_31 {dimension_numbers = #tpu.dot_dimension_numbers<[1], [0], [0], [1], [0, 0, 1, 1], [], []>} : vector<8x8xbf16>, vector<8x8xbf16>, vector<8x8xf32> -> vector<8x8xf32>
    %cst_32 = arith.constant 0.353553385 : f32
    %51 = vector.broadcast %cst_32 : f32 to vector<8x8xf32>
    %52 = arith.mulf %50, %51 : vector<8x8xf32>
    %cst_33 = arith.constant dense<0xFF800000> : vector<8xf32>
    %53 = vector.multi_reduction <maximumf>, %52, %cst_33 [1] : vector<8x8xf32> to vector<8xf32>
    %54 = vector.shape_cast %53 : vector<8xf32> to vector<8x1xf32>
    %55 = vector.broadcast %54 : vector<8x1xf32> to vector<8x8xf32>
    %56 = arith.subf %52, %55 : vector<8x8xf32>
    %57 = math.exp %56 : vector<8x8xf32>
    %cst_34 = arith.constant dense<0.000000e+00> : vector<8xf32>
    %58 = vector.multi_reduction <add>, %57, %cst_34 [1] : vector<8x8xf32> to vector<8xf32>
    %59 = vector.shape_cast %58 : vector<8xf32> to vector<8x1xf32>
    %60 = tpu.reciprocal %59 {approx = true} : vector<8x1xf32> -> vector<8x1xf32>
    %61 = vector.extract_strided_slice %45 {offsets = [0, 0], sizes = [8, 8], strides = [1, 1]} : vector<8x32xbf16> to vector<8x8xbf16>
    %62 = arith.truncf %57 : vector<8x8xf32> to vector<8x8xbf16>
    %cst_35 = arith.constant dense<0.000000e+00> : vector<8x8xf32>
    %63 = tpu.matmul %62, %61, %cst_35 {dimension_numbers = #tpu.dot_dimension_numbers<[1], [0], [0], [1], [0, 0, 1, 1], [], []>} : vector<8x8xbf16>, vector<8x8xbf16>, vector<8x8xf32> -> vector<8x8xf32>
    %64 = vector.broadcast %60 : vector<8x1xf32> to vector<8x8xf32>
    %65 = arith.mulf %63, %64 : vector<8x8xf32>
    %66 = vector.extract_strided_slice %28 {offsets = [0, 8], sizes = [8, 8], strides = [1, 1]} : vector<8x32xbf16> to vector<8x8xbf16>
    %67 = vector.extract_strided_slice %46 {offsets = [8, 0], sizes = [8, 8], strides = [1, 1]} : vector<32x8xf32> to vector<8x8xf32>
    %68 = arith.truncf %67 : vector<8x8xf32> to vector<8x8xbf16>
    %cst_36 = arith.constant dense<0.000000e+00> : vector<8x8xf32>
    %69 = tpu.matmul %66, %68, %cst_36 {dimension_numbers = #tpu.dot_dimension_numbers<[1], [0], [0], [1], [0, 0, 1, 1], [], []>} : vector<8x8xbf16>, vector<8x8xbf16>, vector<8x8xf32> -> vector<8x8xf32>
    %cst_37 = arith.constant 0.353553385 : f32
    %70 = vector.broadcast %cst_37 : f32 to vector<8x8xf32>
    %71 = arith.mulf %69, %70 : vector<8x8xf32>
    %cst_38 = arith.constant dense<0xFF800000> : vector<8xf32>
    %72 = vector.multi_reduction <maximumf>, %71, %cst_38 [1] : vector<8x8xf32> to vector<8xf32>
    %73 = vector.shape_cast %72 : vector<8xf32> to vector<8x1xf32>
    %74 = vector.broadcast %73 : vector<8x1xf32> to vector<8x8xf32>
    %75 = arith.subf %71, %74 : vector<8x8xf32>
    %76 = math.exp %75 : vector<8x8xf32>
    %cst_39 = arith.constant dense<0.000000e+00> : vector<8xf32>
    %77 = vector.multi_reduction <add>, %76, %cst_39 [1] : vector<8x8xf32> to vector<8xf32>
    %78 = vector.shape_cast %77 : vector<8xf32> to vector<8x1xf32>
    %79 = tpu.reciprocal %78 {approx = true} : vector<8x1xf32> -> vector<8x1xf32>
    %80 = vector.extract_strided_slice %45 {offsets = [0, 8], sizes = [8, 8], strides = [1, 1]} : vector<8x32xbf16> to vector<8x8xbf16>
    %81 = arith.truncf %76 : vector<8x8xf32> to vector<8x8xbf16>
    %cst_40 = arith.constant dense<0.000000e+00> : vector<8x8xf32>
    %82 = tpu.matmul %81, %80, %cst_40 {dimension_numbers = #tpu.dot_dimension_numbers<[1], [0], [0], [1], [0, 0, 1, 1], [], []>} : vector<8x8xbf16>, vector<8x8xbf16>, vector<8x8xf32> -> vector<8x8xf32>
    %83 = vector.broadcast %79 : vector<8x1xf32> to vector<8x8xf32>
    %84 = arith.mulf %82, %83 : vector<8x8xf32>
    %85 = vector.extract_strided_slice %28 {offsets = [0, 16], sizes = [8, 8], strides = [1, 1]} : vector<8x32xbf16> to vector<8x8xbf16>
    %86 = vector.extract_strided_slice %46 {offsets = [16, 0], sizes = [8, 8], strides = [1, 1]} : vector<32x8xf32> to vector<8x8xf32>
    %87 = arith.truncf %86 : vector<8x8xf32> to vector<8x8xbf16>
    %cst_41 = arith.constant dense<0.000000e+00> : vector<8x8xf32>
    %88 = tpu.matmul %85, %87, %cst_41 {dimension_numbers = #tpu.dot_dimension_numbers<[1], [0], [0], [1], [0, 0, 1, 1], [], []>} : vector<8x8xbf16>, vector<8x8xbf16>, vector<8x8xf32> -> vector<8x8xf32>
    %cst_42 = arith.constant 0.353553385 : f32
    %89 = vector.broadcast %cst_42 : f32 to vector<8x8xf32>
    %90 = arith.mulf %88, %89 : vector<8x8xf32>
    %cst_43 = arith.constant dense<0xFF800000> : vector<8xf32>
    %91 = vector.multi_reduction <maximumf>, %90, %cst_43 [1] : vector<8x8xf32> to vector<8xf32>
    %92 = vector.shape_cast %91 : vector<8xf32> to vector<8x1xf32>
    %93 = vector.broadcast %92 : vector<8x1xf32> to vector<8x8xf32>
    %94 = arith.subf %90, %93 : vector<8x8xf32>
    %95 = math.exp %94 : vector<8x8xf32>
    %cst_44 = arith.constant dense<0.000000e+00> : vector<8xf32>
    %96 = vector.multi_reduction <add>, %95, %cst_44 [1] : vector<8x8xf32> to vector<8xf32>
    %97 = vector.shape_cast %96 : vector<8xf32> to vector<8x1xf32>
    %98 = tpu.reciprocal %97 {approx = true} : vector<8x1xf32> -> vector<8x1xf32>
    %99 = vector.extract_strided_slice %45 {offsets = [0, 16], sizes = [8, 8], strides = [1, 1]} : vector<8x32xbf16> to vector<8x8xbf16>
    %100 = arith.truncf %95 : vector<8x8xf32> to vector<8x8xbf16>
    %cst_45 = arith.constant dense<0.000000e+00> : vector<8x8xf32>
    %101 = tpu.matmul %100, %99, %cst_45 {dimension_numbers = #tpu.dot_dimension_numbers<[1], [0], [0], [1], [0, 0, 1, 1], [], []>} : vector<8x8xbf16>, vector<8x8xbf16>, vector<8x8xf32> -> vector<8x8xf32>
    %102 = vector.broadcast %98 : vector<8x1xf32> to vector<8x8xf32>
    %103 = arith.mulf %101, %102 : vector<8x8xf32>
    %104 = vector.extract_strided_slice %28 {offsets = [0, 24], sizes = [8, 8], strides = [1, 1]} : vector<8x32xbf16> to vector<8x8xbf16>
    %105 = vector.extract_strided_slice %46 {offsets = [24, 0], sizes = [8, 8], strides = [1, 1]} : vector<32x8xf32> to vector<8x8xf32>
    %106 = arith.truncf %105 : vector<8x8xf32> to vector<8x8xbf16>
    %cst_46 = arith.constant dense<0.000000e+00> : vector<8x8xf32>
    %107 = tpu.matmul %104, %106, %cst_46 {dimension_numbers = #tpu.dot_dimension_numbers<[1], [0], [0], [1], [0, 0, 1, 1], [], []>} : vector<8x8xbf16>, vector<8x8xbf16>, vector<8x8xf32> -> vector<8x8xf32>
    %cst_47 = arith.constant 0.353553385 : f32
    %108 = vector.broadcast %cst_47 : f32 to vector<8x8xf32>
    %109 = arith.mulf %107, %108 : vector<8x8xf32>
    %cst_48 = arith.constant dense<0xFF800000> : vector<8xf32>
    %110 = vector.multi_reduction <maximumf>, %109, %cst_48 [1] : vector<8x8xf32> to vector<8xf32>
    %111 = vector.shape_cast %110 : vector<8xf32> to vector<8x1xf32>
    %112 = vector.broadcast %111 : vector<8x1xf32> to vector<8x8xf32>
    %113 = arith.subf %109, %112 : vector<8x8xf32>
    %114 = math.exp %113 : vector<8x8xf32>
    %cst_49 = arith.constant dense<0.000000e+00> : vector<8xf32>
    %115 = vector.multi_reduction <add>, %114, %cst_49 [1] : vector<8x8xf32> to vector<8xf32>
    %116 = vector.shape_cast %115 : vector<8xf32> to vector<8x1xf32>
    %117 = tpu.reciprocal %116 {approx = true} : vector<8x1xf32> -> vector<8x1xf32>
    %118 = vector.extract_strided_slice %45 {offsets = [0, 24], sizes = [8, 8], strides = [1, 1]} : vector<8x32xbf16> to vector<8x8xbf16>
    %119 = arith.truncf %114 : vector<8x8xf32> to vector<8x8xbf16>
    %cst_50 = arith.constant dense<0.000000e+00> : vector<8x8xf32>
    %120 = tpu.matmul %119, %118, %cst_50 {dimension_numbers = #tpu.dot_dimension_numbers<[1], [0], [0], [1], [0, 0, 1, 1], [], []>} : vector<8x8xbf16>, vector<8x8xbf16>, vector<8x8xf32> -> vector<8x8xf32>
    %121 = vector.broadcast %117 : vector<8x1xf32> to vector<8x8xf32>
    %122 = arith.mulf %120, %121 : vector<8x8xf32>
    %123 = tpu.concatenate %65, %84, %103, %122 in 1 : vector<8x8xf32>, vector<8x8xf32>, vector<8x8xf32>, vector<8x8xf32> -> vector<8x32xf32>
    %124 = vector.extract_strided_slice %17 {offsets = [3, 0, 0], sizes = [1, 32, 32], strides = [1, 1, 1]} : vector<4x32x32xbf16> to vector<1x32x32xbf16>
    %125 = vector.shape_cast %124 : vector<1x32x32xbf16> to vector<32x32xbf16>
    %126 = arith.truncf %123 : vector<8x32xf32> to vector<8x32xbf16>
    %cst_51 = arith.constant dense<0.000000e+00> : vector<8x32xf32>
    %127 = tpu.matmul %126, %125, %cst_51 {dimension_numbers = #tpu.dot_dimension_numbers<[1], [0], [0], [1], [0, 0, 1, 1], [], []>} : vector<8x32xbf16>, vector<32x32xbf16>, vector<8x32xf32> -> vector<8x32xf32>
    %128 = vector.extract_strided_slice %19 {offsets = [3, 0, 0], sizes = [1, 1, 32], strides = [1, 1, 1]} : vector<4x1x32xf32> to vector<1x1x32xf32>
    %129 = vector.shape_cast %128 : vector<1x1x32xf32> to vector<1x32xf32>
    %130 = vector.broadcast %129 : vector<1x32xf32> to vector<8x32xf32>
    %131 = arith.addf %127, %130 : vector<8x32xf32>
    %132 = arith.addf %3, %131 : vector<8x32xf32>
    %133 = vector.extract_strided_slice %12 {offsets = [0, 0, 0], sizes = [1, 1, 32], strides = [1, 1, 1]} : vector<3x1x32xf32> to vector<1x1x32xf32>
    %134 = vector.shape_cast %133 : vector<1x1x32xf32> to vector<1x32xf32>
    %135 = vector.extract_strided_slice %14 {offsets = [0, 0, 0], sizes = [1, 1, 32], strides = [1, 1, 1]} : vector<3x1x32xf32> to vector<1x1x32xf32>
    %136 = vector.shape_cast %135 : vector<1x1x32xf32> to vector<1x32xf32>
    %cst_52 = arith.constant dense<0.000000e+00> : vector<8xf32>
    %137 = vector.multi_reduction <add>, %132, %cst_52 [1] : vector<8x32xf32> to vector<8xf32>
    %138 = vector.shape_cast %137 : vector<8xf32> to vector<8x1xf32>
    %cst_53 = arith.constant 3.200000e+01 : f32
    %139 = vector.broadcast %cst_53 : f32 to vector<8x1xf32>
    %140 = arith.divf %138, %139 : vector<8x1xf32>
    %141 = vector.broadcast %140 : vector<8x1xf32> to vector<8x32xf32>
    %142 = arith.subf %132, %141 : vector<8x32xf32>
    %143 = arith.mulf %142, %142 : vector<8x32xf32>
    %cst_54 = arith.constant dense<0.000000e+00> : vector<8xf32>
    %144 = vector.multi_reduction <add>, %143, %cst_54 [1] : vector<8x32xf32> to vector<8xf32>
    %145 = vector.shape_cast %144 : vector<8xf32> to vector<8x1xf32>
    %cst_55 = arith.constant 3.200000e+01 : f32
    %146 = vector.broadcast %cst_55 : f32 to vector<8x1xf32>
    %147 = arith.divf %145, %146 : vector<8x1xf32>
    %148 = vector.broadcast %140 : vector<8x1xf32> to vector<8x32xf32>
    %149 = arith.subf %132, %148 : vector<8x32xf32>
    %cst_56 = arith.constant 9.99999974E-6 : f32
    %150 = vector.broadcast %cst_56 : f32 to vector<8x1xf32>
    %151 = arith.addf %147, %150 : vector<8x1xf32>
    %152 = math.rsqrt %151 : vector<8x1xf32>
    %153 = vector.broadcast %152 : vector<8x1xf32> to vector<8x32xf32>
    %154 = arith.mulf %149, %153 : vector<8x32xf32>
    %155 = vector.broadcast %134 : vector<1x32xf32> to vector<8x32xf32>
    %156 = arith.mulf %154, %155 : vector<8x32xf32>
    %157 = vector.broadcast %136 : vector<1x32xf32> to vector<8x32xf32>
    %158 = arith.addf %156, %157 : vector<8x32xf32>
    %159 = arith.addf %158, %4 : vector<8x32xf32>
    %160 = arith.addf %6, %8 : vector<64x32xf32>
    %c0_57 = arith.constant 0 : index
    %c0_58 = arith.constant 0 : index
    %c0_59 = arith.constant 0 : index
    %c0_60 = arith.constant 0 : index
    %161 = vector.load %arg8[%c0_57, %c0_58, %c0_59, %c0_60] : memref<1x4x32x32xbf16, #tpu.memory_space<vmem>>, vector<1x4x32x32xbf16>
    %162 = vector.shape_cast %161 : vector<1x4x32x32xbf16> to vector<4x32x32xbf16>
    %c0_61 = arith.constant 0 : index
    %c0_62 = arith.constant 0 : index
    %c0_63 = arith.constant 0 : index
    %c0_64 = arith.constant 0 : index
    %163 = vector.load %arg9[%c0_61, %c0_62, %c0_63, %c0_64] : memref<1x4x1x32xf32, #tpu.memory_space<vmem>>, vector<1x4x1x32xf32>
    %164 = vector.shape_cast %163 : vector<1x4x1x32xf32> to vector<4x1x32xf32>
    %165 = vector.extract_strided_slice %162 {offsets = [0, 0, 0], sizes = [1, 32, 32], strides = [1, 1, 1]} : vector<4x32x32xbf16> to vector<1x32x32xbf16>
    %166 = vector.shape_cast %165 : vector<1x32x32xbf16> to vector<32x32xbf16>
    %167 = arith.truncf %159 : vector<8x32xf32> to vector<8x32xbf16>
    %cst_65 = arith.constant dense<0.000000e+00> : vector<8x32xf32>
    %168 = tpu.matmul %167, %166, %cst_65 {dimension_numbers = #tpu.dot_dimension_numbers<[1], [0], [0], [1], [0, 0, 1, 1], [], []>} : vector<8x32xbf16>, vector<32x32xbf16>, vector<8x32xf32> -> vector<8x32xf32>
    %169 = vector.extract_strided_slice %164 {offsets = [0, 0, 0], sizes = [1, 1, 32], strides = [1, 1, 1]} : vector<4x1x32xf32> to vector<1x1x32xf32>
    %170 = vector.shape_cast %169 : vector<1x1x32xf32> to vector<1x32xf32>
    %171 = vector.broadcast %170 : vector<1x32xf32> to vector<8x32xf32>
    %172 = arith.addf %168, %171 : vector<8x32xf32>
    %173 = arith.truncf %172 : vector<8x32xf32> to vector<8x32xbf16>
    %174 = vector.extract_strided_slice %162 {offsets = [1, 0, 0], sizes = [1, 32, 32], strides = [1, 1, 1]} : vector<4x32x32xbf16> to vector<1x32x32xbf16>
    %175 = vector.shape_cast %174 : vector<1x32x32xbf16> to vector<32x32xbf16>
    %176 = arith.truncf %160 : vector<64x32xf32> to vector<64x32xbf16>
    %cst_66 = arith.constant dense<0.000000e+00> : vector<64x32xf32>
    %177 = tpu.matmul %176, %175, %cst_66 {dimension_numbers = #tpu.dot_dimension_numbers<[1], [0], [0], [1], [0, 0, 1, 1], [], []>} : vector<64x32xbf16>, vector<32x32xbf16>, vector<64x32xf32> -> vector<64x32xf32>
    %178 = vector.extract_strided_slice %164 {offsets = [1, 0, 0], sizes = [1, 1, 32], strides = [1, 1, 1]} : vector<4x1x32xf32> to vector<1x1x32xf32>
    %179 = vector.shape_cast %178 : vector<1x1x32xf32> to vector<1x32xf32>
    %180 = vector.broadcast %179 : vector<1x32xf32> to vector<64x32xf32>
    %181 = arith.addf %177, %180 : vector<64x32xf32>
    %182 = vector.extract_strided_slice %162 {offsets = [2, 0, 0], sizes = [1, 32, 32], strides = [1, 1, 1]} : vector<4x32x32xbf16> to vector<1x32x32xbf16>
    %183 = vector.shape_cast %182 : vector<1x32x32xbf16> to vector<32x32xbf16>
    %184 = arith.truncf %6 : vector<64x32xf32> to vector<64x32xbf16>
    %cst_67 = arith.constant dense<0.000000e+00> : vector<64x32xf32>
    %185 = tpu.matmul %184, %183, %cst_67 {dimension_numbers = #tpu.dot_dimension_numbers<[1], [0], [0], [1], [0, 0, 1, 1], [], []>} : vector<64x32xbf16>, vector<32x32xbf16>, vector<64x32xf32> -> vector<64x32xf32>
    %186 = vector.extract_strided_slice %164 {offsets = [2, 0, 0], sizes = [1, 1, 32], strides = [1, 1, 1]} : vector<4x1x32xf32> to vector<1x1x32xf32>
    %187 = vector.shape_cast %186 : vector<1x1x32xf32> to vector<1x32xf32>
    %188 = vector.broadcast %187 : vector<1x32xf32> to vector<64x32xf32>
    %189 = arith.addf %185, %188 : vector<64x32xf32>
    %190 = arith.truncf %189 : vector<64x32xf32> to vector<64x32xbf16>
    %191 = tpu.transpose %181, [1, 0] : vector<64x32xf32> -> vector<32x64xf32>
    %192 = vector.extract_strided_slice %173 {offsets = [0, 0], sizes = [8, 8], strides = [1, 1]} : vector<8x32xbf16> to vector<8x8xbf16>
    %193 = vector.extract_strided_slice %191 {offsets = [0, 0], sizes = [8, 64], strides = [1, 1]} : vector<32x64xf32> to vector<8x64xf32>
    %194 = arith.truncf %193 : vector<8x64xf32> to vector<8x64xbf16>
    %cst_68 = arith.constant dense<0.000000e+00> : vector<8x64xf32>
    %195 = tpu.matmul %192, %194, %cst_68 {dimension_numbers = #tpu.dot_dimension_numbers<[1], [0], [0], [1], [0, 0, 1, 1], [], []>} : vector<8x8xbf16>, vector<8x64xbf16>, vector<8x64xf32> -> vector<8x64xf32>
    %cst_69 = arith.constant 0.353553385 : f32
    %196 = vector.broadcast %cst_69 : f32 to vector<8x64xf32>
    %197 = arith.mulf %195, %196 : vector<8x64xf32>
    %198 = vector.broadcast %10 : vector<1x64xf32> to vector<8x64xf32>
    %199 = arith.addf %197, %198 : vector<8x64xf32>
    %cst_70 = arith.constant dense<0xFF800000> : vector<8xf32>
    %200 = vector.multi_reduction <maximumf>, %199, %cst_70 [1] : vector<8x64xf32> to vector<8xf32>
    %201 = vector.shape_cast %200 : vector<8xf32> to vector<8x1xf32>
    %202 = vector.broadcast %201 : vector<8x1xf32> to vector<8x64xf32>
    %203 = arith.subf %199, %202 : vector<8x64xf32>
    %204 = math.exp %203 : vector<8x64xf32>
    %cst_71 = arith.constant dense<0.000000e+00> : vector<8xf32>
    %205 = vector.multi_reduction <add>, %204, %cst_71 [1] : vector<8x64xf32> to vector<8xf32>
    %206 = vector.shape_cast %205 : vector<8xf32> to vector<8x1xf32>
    %207 = tpu.reciprocal %206 {approx = true} : vector<8x1xf32> -> vector<8x1xf32>
    %208 = vector.extract_strided_slice %190 {offsets = [0, 0], sizes = [64, 8], strides = [1, 1]} : vector<64x32xbf16> to vector<64x8xbf16>
    %209 = arith.truncf %204 : vector<8x64xf32> to vector<8x64xbf16>
    %cst_72 = arith.constant dense<0.000000e+00> : vector<8x8xf32>
    %210 = tpu.matmul %209, %208, %cst_72 {dimension_numbers = #tpu.dot_dimension_numbers<[1], [0], [0], [1], [0, 0, 1, 1], [], []>} : vector<8x64xbf16>, vector<64x8xbf16>, vector<8x8xf32> -> vector<8x8xf32>
    %211 = vector.broadcast %207 : vector<8x1xf32> to vector<8x8xf32>
    %212 = arith.mulf %210, %211 : vector<8x8xf32>
    %213 = vector.extract_strided_slice %173 {offsets = [0, 8], sizes = [8, 8], strides = [1, 1]} : vector<8x32xbf16> to vector<8x8xbf16>
    %214 = vector.extract_strided_slice %191 {offsets = [8, 0], sizes = [8, 64], strides = [1, 1]} : vector<32x64xf32> to vector<8x64xf32>
    %215 = arith.truncf %214 : vector<8x64xf32> to vector<8x64xbf16>
    %cst_73 = arith.constant dense<0.000000e+00> : vector<8x64xf32>
    %216 = tpu.matmul %213, %215, %cst_73 {dimension_numbers = #tpu.dot_dimension_numbers<[1], [0], [0], [1], [0, 0, 1, 1], [], []>} : vector<8x8xbf16>, vector<8x64xbf16>, vector<8x64xf32> -> vector<8x64xf32>
    %cst_74 = arith.constant 0.353553385 : f32
    %217 = vector.broadcast %cst_74 : f32 to vector<8x64xf32>
    %218 = arith.mulf %216, %217 : vector<8x64xf32>
    %219 = vector.broadcast %10 : vector<1x64xf32> to vector<8x64xf32>
    %220 = arith.addf %218, %219 : vector<8x64xf32>
    %cst_75 = arith.constant dense<0xFF800000> : vector<8xf32>
    %221 = vector.multi_reduction <maximumf>, %220, %cst_75 [1] : vector<8x64xf32> to vector<8xf32>
    %222 = vector.shape_cast %221 : vector<8xf32> to vector<8x1xf32>
    %223 = vector.broadcast %222 : vector<8x1xf32> to vector<8x64xf32>
    %224 = arith.subf %220, %223 : vector<8x64xf32>
    %225 = math.exp %224 : vector<8x64xf32>
    %cst_76 = arith.constant dense<0.000000e+00> : vector<8xf32>
    %226 = vector.multi_reduction <add>, %225, %cst_76 [1] : vector<8x64xf32> to vector<8xf32>
    %227 = vector.shape_cast %226 : vector<8xf32> to vector<8x1xf32>
    %228 = tpu.reciprocal %227 {approx = true} : vector<8x1xf32> -> vector<8x1xf32>
    %229 = vector.extract_strided_slice %190 {offsets = [0, 8], sizes = [64, 8], strides = [1, 1]} : vector<64x32xbf16> to vector<64x8xbf16>
    %230 = arith.truncf %225 : vector<8x64xf32> to vector<8x64xbf16>
    %cst_77 = arith.constant dense<0.000000e+00> : vector<8x8xf32>
    %231 = tpu.matmul %230, %229, %cst_77 {dimension_numbers = #tpu.dot_dimension_numbers<[1], [0], [0], [1], [0, 0, 1, 1], [], []>} : vector<8x64xbf16>, vector<64x8xbf16>, vector<8x8xf32> -> vector<8x8xf32>
    %232 = vector.broadcast %228 : vector<8x1xf32> to vector<8x8xf32>
    %233 = arith.mulf %231, %232 : vector<8x8xf32>
    %234 = vector.extract_strided_slice %173 {offsets = [0, 16], sizes = [8, 8], strides = [1, 1]} : vector<8x32xbf16> to vector<8x8xbf16>
    %235 = vector.extract_strided_slice %191 {offsets = [16, 0], sizes = [8, 64], strides = [1, 1]} : vector<32x64xf32> to vector<8x64xf32>
    %236 = arith.truncf %235 : vector<8x64xf32> to vector<8x64xbf16>
    %cst_78 = arith.constant dense<0.000000e+00> : vector<8x64xf32>
    %237 = tpu.matmul %234, %236, %cst_78 {dimension_numbers = #tpu.dot_dimension_numbers<[1], [0], [0], [1], [0, 0, 1, 1], [], []>} : vector<8x8xbf16>, vector<8x64xbf16>, vector<8x64xf32> -> vector<8x64xf32>
    %cst_79 = arith.constant 0.353553385 : f32
    %238 = vector.broadcast %cst_79 : f32 to vector<8x64xf32>
    %239 = arith.mulf %237, %238 : vector<8x64xf32>
    %240 = vector.broadcast %10 : vector<1x64xf32> to vector<8x64xf32>
    %241 = arith.addf %239, %240 : vector<8x64xf32>
    %cst_80 = arith.constant dense<0xFF800000> : vector<8xf32>
    %242 = vector.multi_reduction <maximumf>, %241, %cst_80 [1] : vector<8x64xf32> to vector<8xf32>
    %243 = vector.shape_cast %242 : vector<8xf32> to vector<8x1xf32>
    %244 = vector.broadcast %243 : vector<8x1xf32> to vector<8x64xf32>
    %245 = arith.subf %241, %244 : vector<8x64xf32>
    %246 = math.exp %245 : vector<8x64xf32>
    %cst_81 = arith.constant dense<0.000000e+00> : vector<8xf32>
    %247 = vector.multi_reduction <add>, %246, %cst_81 [1] : vector<8x64xf32> to vector<8xf32>
    %248 = vector.shape_cast %247 : vector<8xf32> to vector<8x1xf32>
    %249 = tpu.reciprocal %248 {approx = true} : vector<8x1xf32> -> vector<8x1xf32>
    %250 = vector.extract_strided_slice %190 {offsets = [0, 16], sizes = [64, 8], strides = [1, 1]} : vector<64x32xbf16> to vector<64x8xbf16>
    %251 = arith.truncf %246 : vector<8x64xf32> to vector<8x64xbf16>
    %cst_82 = arith.constant dense<0.000000e+00> : vector<8x8xf32>
    %252 = tpu.matmul %251, %250, %cst_82 {dimension_numbers = #tpu.dot_dimension_numbers<[1], [0], [0], [1], [0, 0, 1, 1], [], []>} : vector<8x64xbf16>, vector<64x8xbf16>, vector<8x8xf32> -> vector<8x8xf32>
    %253 = vector.broadcast %249 : vector<8x1xf32> to vector<8x8xf32>
    %254 = arith.mulf %252, %253 : vector<8x8xf32>
    %255 = vector.extract_strided_slice %173 {offsets = [0, 24], sizes = [8, 8], strides = [1, 1]} : vector<8x32xbf16> to vector<8x8xbf16>
    %256 = vector.extract_strided_slice %191 {offsets = [24, 0], sizes = [8, 64], strides = [1, 1]} : vector<32x64xf32> to vector<8x64xf32>
    %257 = arith.truncf %256 : vector<8x64xf32> to vector<8x64xbf16>
    %cst_83 = arith.constant dense<0.000000e+00> : vector<8x64xf32>
    %258 = tpu.matmul %255, %257, %cst_83 {dimension_numbers = #tpu.dot_dimension_numbers<[1], [0], [0], [1], [0, 0, 1, 1], [], []>} : vector<8x8xbf16>, vector<8x64xbf16>, vector<8x64xf32> -> vector<8x64xf32>
    %cst_84 = arith.constant 0.353553385 : f32
    %259 = vector.broadcast %cst_84 : f32 to vector<8x64xf32>
    %260 = arith.mulf %258, %259 : vector<8x64xf32>
    %261 = vector.broadcast %10 : vector<1x64xf32> to vector<8x64xf32>
    %262 = arith.addf %260, %261 : vector<8x64xf32>
    %cst_85 = arith.constant dense<0xFF800000> : vector<8xf32>
    %263 = vector.multi_reduction <maximumf>, %262, %cst_85 [1] : vector<8x64xf32> to vector<8xf32>
    %264 = vector.shape_cast %263 : vector<8xf32> to vector<8x1xf32>
    %265 = vector.broadcast %264 : vector<8x1xf32> to vector<8x64xf32>
    %266 = arith.subf %262, %265 : vector<8x64xf32>
    %267 = math.exp %266 : vector<8x64xf32>
    %cst_86 = arith.constant dense<0.000000e+00> : vector<8xf32>
    %268 = vector.multi_reduction <add>, %267, %cst_86 [1] : vector<8x64xf32> to vector<8xf32>
    %269 = vector.shape_cast %268 : vector<8xf32> to vector<8x1xf32>
    %270 = tpu.reciprocal %269 {approx = true} : vector<8x1xf32> -> vector<8x1xf32>
    %271 = vector.extract_strided_slice %190 {offsets = [0, 24], sizes = [64, 8], strides = [1, 1]} : vector<64x32xbf16> to vector<64x8xbf16>
    %272 = arith.truncf %267 : vector<8x64xf32> to vector<8x64xbf16>
    %cst_87 = arith.constant dense<0.000000e+00> : vector<8x8xf32>
    %273 = tpu.matmul %272, %271, %cst_87 {dimension_numbers = #tpu.dot_dimension_numbers<[1], [0], [0], [1], [0, 0, 1, 1], [], []>} : vector<8x64xbf16>, vector<64x8xbf16>, vector<8x8xf32> -> vector<8x8xf32>
    %274 = vector.broadcast %270 : vector<8x1xf32> to vector<8x8xf32>
    %275 = arith.mulf %273, %274 : vector<8x8xf32>
    %276 = tpu.concatenate %212, %233, %254, %275 in 1 : vector<8x8xf32>, vector<8x8xf32>, vector<8x8xf32>, vector<8x8xf32> -> vector<8x32xf32>
    %277 = vector.extract_strided_slice %162 {offsets = [3, 0, 0], sizes = [1, 32, 32], strides = [1, 1, 1]} : vector<4x32x32xbf16> to vector<1x32x32xbf16>
    %278 = vector.shape_cast %277 : vector<1x32x32xbf16> to vector<32x32xbf16>
    %279 = arith.truncf %276 : vector<8x32xf32> to vector<8x32xbf16>
    %cst_88 = arith.constant dense<0.000000e+00> : vector<8x32xf32>
    %280 = tpu.matmul %279, %278, %cst_88 {dimension_numbers = #tpu.dot_dimension_numbers<[1], [0], [0], [1], [0, 0, 1, 1], [], []>} : vector<8x32xbf16>, vector<32x32xbf16>, vector<8x32xf32> -> vector<8x32xf32>
    %281 = vector.extract_strided_slice %164 {offsets = [3, 0, 0], sizes = [1, 1, 32], strides = [1, 1, 1]} : vector<4x1x32xf32> to vector<1x1x32xf32>
    %282 = vector.shape_cast %281 : vector<1x1x32xf32> to vector<1x32xf32>
    %283 = vector.broadcast %282 : vector<1x32xf32> to vector<8x32xf32>
    %284 = arith.addf %280, %283 : vector<8x32xf32>
    %285 = arith.addf %158, %284 : vector<8x32xf32>
    %286 = vector.extract_strided_slice %12 {offsets = [1, 0, 0], sizes = [1, 1, 32], strides = [1, 1, 1]} : vector<3x1x32xf32> to vector<1x1x32xf32>
    %287 = vector.shape_cast %286 : vector<1x1x32xf32> to vector<1x32xf32>
    %288 = vector.extract_strided_slice %14 {offsets = [1, 0, 0], sizes = [1, 1, 32], strides = [1, 1, 1]} : vector<3x1x32xf32> to vector<1x1x32xf32>
    %289 = vector.shape_cast %288 : vector<1x1x32xf32> to vector<1x32xf32>
    %cst_89 = arith.constant dense<0.000000e+00> : vector<8xf32>
    %290 = vector.multi_reduction <add>, %285, %cst_89 [1] : vector<8x32xf32> to vector<8xf32>
    %291 = vector.shape_cast %290 : vector<8xf32> to vector<8x1xf32>
    %cst_90 = arith.constant 3.200000e+01 : f32
    %292 = vector.broadcast %cst_90 : f32 to vector<8x1xf32>
    %293 = arith.divf %291, %292 : vector<8x1xf32>
    %294 = vector.broadcast %293 : vector<8x1xf32> to vector<8x32xf32>
    %295 = arith.subf %285, %294 : vector<8x32xf32>
    %296 = arith.mulf %295, %295 : vector<8x32xf32>
    %cst_91 = arith.constant dense<0.000000e+00> : vector<8xf32>
    %297 = vector.multi_reduction <add>, %296, %cst_91 [1] : vector<8x32xf32> to vector<8xf32>
    %298 = vector.shape_cast %297 : vector<8xf32> to vector<8x1xf32>
    %cst_92 = arith.constant 3.200000e+01 : f32
    %299 = vector.broadcast %cst_92 : f32 to vector<8x1xf32>
    %300 = arith.divf %298, %299 : vector<8x1xf32>
    %301 = vector.broadcast %293 : vector<8x1xf32> to vector<8x32xf32>
    %302 = arith.subf %285, %301 : vector<8x32xf32>
    %cst_93 = arith.constant 9.99999974E-6 : f32
    %303 = vector.broadcast %cst_93 : f32 to vector<8x1xf32>
    %304 = arith.addf %300, %303 : vector<8x1xf32>
    %305 = math.rsqrt %304 : vector<8x1xf32>
    %306 = vector.broadcast %305 : vector<8x1xf32> to vector<8x32xf32>
    %307 = arith.mulf %302, %306 : vector<8x32xf32>
    %308 = vector.broadcast %287 : vector<1x32xf32> to vector<8x32xf32>
    %309 = arith.mulf %307, %308 : vector<8x32xf32>
    %310 = vector.broadcast %289 : vector<1x32xf32> to vector<8x32xf32>
    %311 = arith.addf %309, %310 : vector<8x32xf32>
    %c0_94 = arith.constant 0 : index
    %c0_95 = arith.constant 0 : index
    %c0_96 = arith.constant 0 : index
    %312 = vector.load %arg12[%c0_94, %c0_95, %c0_96] : memref<1x32x64xbf16, #tpu.memory_space<vmem>>, vector<1x32x64xbf16>
    %313 = vector.shape_cast %312 : vector<1x32x64xbf16> to vector<32x64xbf16>
    %314 = arith.truncf %311 : vector<8x32xf32> to vector<8x32xbf16>
    %cst_97 = arith.constant dense<0.000000e+00> : vector<8x64xf32>
    %315 = tpu.matmul %314, %313, %cst_97 {dimension_numbers = #tpu.dot_dimension_numbers<[1], [0], [0], [1], [0, 0, 1, 1], [], []>} : vector<8x32xbf16>, vector<32x64xbf16>, vector<8x64xf32> -> vector<8x64xf32>
    %c0_98 = arith.constant 0 : index
    %c0_99 = arith.constant 0 : index
    %c0_100 = arith.constant 0 : index
    %316 = vector.load %arg13[%c0_98, %c0_99, %c0_100] : memref<1x1x64xf32, #tpu.memory_space<vmem>>, vector<1x1x64xf32>
    %317 = vector.shape_cast %316 : vector<1x1x64xf32> to vector<1x64xf32>
    %318 = vector.broadcast %317 : vector<1x64xf32> to vector<8x64xf32>
    %319 = arith.addf %315, %318 : vector<8x64xf32>
    %cst_101 = arith.constant 0.000000e+00 : f32
    %320 = vector.broadcast %cst_101 : f32 to vector<8x64xf32>
    %321 = arith.maximumf %319, %320 : vector<8x64xf32>
    %c0_102 = arith.constant 0 : index
    %c0_103 = arith.constant 0 : index
    %c0_104 = arith.constant 0 : index
    %322 = vector.load %arg14[%c0_102, %c0_103, %c0_104] : memref<1x64x32xbf16, #tpu.memory_space<vmem>>, vector<1x64x32xbf16>
    %323 = vector.shape_cast %322 : vector<1x64x32xbf16> to vector<64x32xbf16>
    %324 = arith.truncf %321 : vector<8x64xf32> to vector<8x64xbf16>
    %cst_105 = arith.constant dense<0.000000e+00> : vector<8x32xf32>
    %325 = tpu.matmul %324, %323, %cst_105 {dimension_numbers = #tpu.dot_dimension_numbers<[1], [0], [0], [1], [0, 0, 1, 1], [], []>} : vector<8x64xbf16>, vector<64x32xbf16>, vector<8x32xf32> -> vector<8x32xf32>
    %c0_106 = arith.constant 0 : index
    %c0_107 = arith.constant 0 : index
    %c0_108 = arith.constant 0 : index
    %326 = vector.load %arg15[%c0_106, %c0_107, %c0_108] : memref<1x1x32xf32, #tpu.memory_space<vmem>>, vector<1x1x32xf32>
    %327 = vector.shape_cast %326 : vector<1x1x32xf32> to vector<1x32xf32>
    %328 = vector.broadcast %327 : vector<1x32xf32> to vector<8x32xf32>
    %329 = arith.addf %325, %328 : vector<8x32xf32>
    %330 = arith.addf %311, %329 : vector<8x32xf32>
    %331 = vector.extract_strided_slice %12 {offsets = [2, 0, 0], sizes = [1, 1, 32], strides = [1, 1, 1]} : vector<3x1x32xf32> to vector<1x1x32xf32>
    %332 = vector.shape_cast %331 : vector<1x1x32xf32> to vector<1x32xf32>
    %333 = vector.extract_strided_slice %14 {offsets = [2, 0, 0], sizes = [1, 1, 32], strides = [1, 1, 1]} : vector<3x1x32xf32> to vector<1x1x32xf32>
    %334 = vector.shape_cast %333 : vector<1x1x32xf32> to vector<1x32xf32>
    %cst_109 = arith.constant dense<0.000000e+00> : vector<8xf32>
    %335 = vector.multi_reduction <add>, %330, %cst_109 [1] : vector<8x32xf32> to vector<8xf32>
    %336 = vector.shape_cast %335 : vector<8xf32> to vector<8x1xf32>
    %cst_110 = arith.constant 3.200000e+01 : f32
    %337 = vector.broadcast %cst_110 : f32 to vector<8x1xf32>
    %338 = arith.divf %336, %337 : vector<8x1xf32>
    %339 = vector.broadcast %338 : vector<8x1xf32> to vector<8x32xf32>
    %340 = arith.subf %330, %339 : vector<8x32xf32>
    %341 = arith.mulf %340, %340 : vector<8x32xf32>
    %cst_111 = arith.constant dense<0.000000e+00> : vector<8xf32>
    %342 = vector.multi_reduction <add>, %341, %cst_111 [1] : vector<8x32xf32> to vector<8xf32>
    %343 = vector.shape_cast %342 : vector<8xf32> to vector<8x1xf32>
    %cst_112 = arith.constant 3.200000e+01 : f32
    %344 = vector.broadcast %cst_112 : f32 to vector<8x1xf32>
    %345 = arith.divf %343, %344 : vector<8x1xf32>
    %346 = vector.broadcast %338 : vector<8x1xf32> to vector<8x32xf32>
    %347 = arith.subf %330, %346 : vector<8x32xf32>
    %cst_113 = arith.constant 9.99999974E-6 : f32
    %348 = vector.broadcast %cst_113 : f32 to vector<8x1xf32>
    %349 = arith.addf %345, %348 : vector<8x1xf32>
    %350 = math.rsqrt %349 : vector<8x1xf32>
    %351 = vector.broadcast %350 : vector<8x1xf32> to vector<8x32xf32>
    %352 = arith.mulf %347, %351 : vector<8x32xf32>
    %353 = vector.broadcast %332 : vector<1x32xf32> to vector<8x32xf32>
    %354 = arith.mulf %352, %353 : vector<8x32xf32>
    %355 = vector.broadcast %334 : vector<1x32xf32> to vector<8x32xf32>
    %356 = arith.addf %354, %355 : vector<8x32xf32>
    %c0_114 = arith.constant 0 : index
    %c0_115 = arith.constant 0 : index
    %357 = vector.load %arg19[%c0_114, %c0_115] : memref<8x32xf32, #tpu.memory_space<vmem>>, vector<8x32xf32>
    tpu.vector_store %arg19[%c0_114, %c0_115], %356 {strides = array<i32>} : memref<8x32xf32, #tpu.memory_space<vmem>>, vector<8x32xf32>,
    %c0_116 = arith.constant 0 : index
    %c0_117 = arith.constant 0 : index
    %358 = vector.load %arg16[%c0_116, %c0_117] : memref<1x32xf32, #tpu.memory_space<vmem>>, vector<1x32xf32>
    %c0_118 = arith.constant 0 : index
    %c0_119 = arith.constant 0 : index
    %359 = vector.load %arg17[%c0_118, %c0_119] : memref<1x32xf32, #tpu.memory_space<vmem>>, vector<1x32xf32>
    %cst_120 = arith.constant dense<0.000000e+00> : vector<8xf32>
    %360 = vector.multi_reduction <add>, %356, %cst_120 [1] : vector<8x32xf32> to vector<8xf32>
    %361 = vector.shape_cast %360 : vector<8xf32> to vector<8x1xf32>
    %cst_121 = arith.constant 3.200000e+01 : f32
    %362 = vector.broadcast %cst_121 : f32 to vector<8x1xf32>
    %363 = arith.divf %361, %362 : vector<8x1xf32>
    %364 = vector.broadcast %363 : vector<8x1xf32> to vector<8x32xf32>
    %365 = arith.subf %356, %364 : vector<8x32xf32>
    %366 = arith.mulf %365, %365 : vector<8x32xf32>
    %cst_122 = arith.constant dense<0.000000e+00> : vector<8xf32>
    %367 = vector.multi_reduction <add>, %366, %cst_122 [1] : vector<8x32xf32> to vector<8xf32>
    %368 = vector.shape_cast %367 : vector<8xf32> to vector<8x1xf32>
    %cst_123 = arith.constant 3.200000e+01 : f32
    %369 = vector.broadcast %cst_123 : f32 to vector<8x1xf32>
    %370 = arith.divf %368, %369 : vector<8x1xf32>
    %371 = vector.broadcast %363 : vector<8x1xf32> to vector<8x32xf32>
    %372 = arith.subf %356, %371 : vector<8x32xf32>
    %cst_124 = arith.constant 9.99999974E-6 : f32
    %373 = vector.broadcast %cst_124 : f32 to vector<8x1xf32>
    %374 = arith.addf %370, %373 : vector<8x1xf32>
    %375 = math.rsqrt %374 : vector<8x1xf32>
    %376 = vector.broadcast %375 : vector<8x1xf32> to vector<8x32xf32>
    %377 = arith.mulf %372, %376 : vector<8x32xf32>
    %378 = vector.broadcast %358 : vector<1x32xf32> to vector<8x32xf32>
    %379 = arith.mulf %377, %378 : vector<8x32xf32>
    %380 = vector.broadcast %359 : vector<1x32xf32> to vector<8x32xf32>
    %381 = arith.addf %379, %380 : vector<8x32xf32>
    %c0_125 = arith.constant 0 : index
    %c0_126 = arith.constant 0 : index
    %c0_127 = arith.constant 0 : index
    %c0_128 = arith.constant 0 : index
    %382 = vector.load %arg18[%c0_125, %c0_126, %c0_127, %c0_128] : memref<1x1x8x32xf32, #tpu.memory_space<vmem>>, vector<1x1x8x32xf32>
    %383 = vector.shape_cast %382 : vector<1x1x8x32xf32> to vector<8x32xf32>
    %384 = vector.shape_cast %381 : vector<8x32xf32> to vector<1x1x8x32xf32>
    tpu.vector_store %arg18[%c0_125, %c0_126, %c0_127, %c0_128], %384 {strides = array<i32>} : memref<1x1x8x32xf32, #tpu.memory_space<vmem>>, vector<1x1x8x32xf32>,
    return
  }
  func.func @transform_0(%arg0: i32, %arg1: i32) -> (i32, i32) {
    %c0_i32 = arith.constant 0 : i32
    %c0_i32_0 = arith.constant 0 : i32
    %c0_i32_1 = arith.constant 0 : i32
    return %c0_i32, %c0_i32_0 : i32, i32
  }
  func.func @transform_1(%arg0: i32, %arg1: i32) -> (i32, i32, i32) {
    %c0_i32 = arith.constant 0 : i32
    %c0_i32_0 = arith.constant 0 : i32
    %c0_i32_1 = arith.constant 0 : i32
    return %arg0, %c0_i32, %c0_i32_0 : i32, i32, i32
  }
  func.func @transform_2(%arg0: i32, %arg1: i32) -> (i32, i32, i32) {
    %c0_i32 = arith.constant 0 : i32
    %c0_i32_0 = arith.constant 0 : i32
    %c0_i32_1 = arith.constant 0 : i32
    return %arg0, %c0_i32, %c0_i32_0 : i32, i32, i32
  }
  func.func @transform_3(%arg0: i32, %arg1: i32) -> (i32, i32, i32) {
    %c0_i32 = arith.constant 0 : i32
    %c0_i32_0 = arith.constant 0 : i32
    %c0_i32_1 = arith.constant 0 : i32
    return %arg0, %c0_i32, %c0_i32_0 : i32, i32, i32
  }
  func.func @transform_4(%arg0: i32, %arg1: i32) -> (i32, i32, i32, i32) {
    %c0_i32 = arith.constant 0 : i32
    %c0_i32_0 = arith.constant 0 : i32
    %c0_i32_1 = arith.constant 0 : i32
    %c0_i32_2 = arith.constant 0 : i32
    return %arg1, %c0_i32, %c0_i32_0, %c0_i32_1 : i32, i32, i32, i32
  }
  func.func @transform_5(%arg0: i32, %arg1: i32) -> (i32, i32, i32, i32) {
    %c0_i32 = arith.constant 0 : i32
    %c0_i32_0 = arith.constant 0 : i32
    %c0_i32_1 = arith.constant 0 : i32
    %c0_i32_2 = arith.constant 0 : i32
    return %arg1, %c0_i32, %c0_i32_0, %c0_i32_1 : i32, i32, i32, i32
  }
  func.func @transform_6(%arg0: i32, %arg1: i32) -> (i32, i32, i32, i32) {
    %c0_i32 = arith.constant 0 : i32
    %c0_i32_0 = arith.constant 0 : i32
    %c0_i32_1 = arith.constant 0 : i32
    %c0_i32_2 = arith.constant 0 : i32
    return %arg1, %c0_i32, %c0_i32_0, %c0_i32_1 : i32, i32, i32, i32
  }
  func.func @transform_7(%arg0: i32, %arg1: i32) -> (i32, i32, i32, i32) {
    %c0_i32 = arith.constant 0 : i32
    %c0_i32_0 = arith.constant 0 : i32
    %c0_i32_1 = arith.constant 0 : i32
    %c0_i32_2 = arith.constant 0 : i32
    return %arg1, %c0_i32, %c0_i32_0, %c0_i32_1 : i32, i32, i32, i32
  }
  func.func @transform_8(%arg0: i32, %arg1: i32) -> (i32, i32, i32, i32) {
    %c0_i32 = arith.constant 0 : i32
    %c0_i32_0 = arith.constant 0 : i32
    %c0_i32_1 = arith.constant 0 : i32
    %c0_i32_2 = arith.constant 0 : i32
    return %arg1, %c0_i32, %c0_i32_0, %c0_i32_1 : i32, i32, i32, i32
  }
  func.func @transform_9(%arg0: i32, %arg1: i32) -> (i32, i32, i32, i32) {
    %c0_i32 = arith.constant 0 : i32
    %c0_i32_0 = arith.constant 0 : i32
    %c0_i32_1 = arith.constant 0 : i32
    %c0_i32_2 = arith.constant 0 : i32
    return %arg1, %c0_i32, %c0_i32_0, %c0_i32_1 : i32, i32, i32, i32
  }
  func.func @transform_10(%arg0: i32, %arg1: i32) -> (i32, i32, i32) {
    %c0_i32 = arith.constant 0 : i32
    %c0_i32_0 = arith.constant 0 : i32
    %c0_i32_1 = arith.constant 0 : i32
    return %arg1, %c0_i32, %c0_i32_0 : i32, i32, i32
  }
  func.func @transform_11(%arg0: i32, %arg1: i32) -> (i32, i32, i32) {
    %c0_i32 = arith.constant 0 : i32
    %c0_i32_0 = arith.constant 0 : i32
    %c0_i32_1 = arith.constant 0 : i32
    return %arg1, %c0_i32, %c0_i32_0 : i32, i32, i32
  }
  func.func @transform_12(%arg0: i32, %arg1: i32) -> (i32, i32, i32) {
    %c0_i32 = arith.constant 0 : i32
    %c0_i32_0 = arith.constant 0 : i32
    %c0_i32_1 = arith.constant 0 : i32
    return %arg1, %c0_i32, %c0_i32_0 : i32, i32, i32
  }
  func.func @transform_13(%arg0: i32, %arg1: i32) -> (i32, i32, i32) {
    %c0_i32 = arith.constant 0 : i32
    %c0_i32_0 = arith.constant 0 : i32
    %c0_i32_1 = arith.constant 0 : i32
    return %arg1, %c0_i32, %c0_i32_0 : i32, i32, i32
  }
  func.func @transform_14(%arg0: i32, %arg1: i32) -> (i32, i32) {
    %c0_i32 = arith.constant 0 : i32
    %c0_i32_0 = arith.constant 0 : i32
    %c0_i32_1 = arith.constant 0 : i32
    return %c0_i32, %c0_i32_0 : i32, i32
  }
  func.func @transform_15(%arg0: i32, %arg1: i32) -> (i32, i32) {
    %c0_i32 = arith.constant 0 : i32
    %c0_i32_0 = arith.constant 0 : i32
    %c0_i32_1 = arith.constant 0 : i32
    return %c0_i32, %c0_i32_0 : i32, i32
  }
  func.func @transform_16(%arg0: i32, %arg1: i32) -> (i32, i32, i32, i32) {
    %c0_i32 = arith.constant 0 : i32
    %c0_i32_0 = arith.constant 0 : i32
    %c0_i32_1 = arith.constant 0 : i32
    return %arg1, %arg0, %c0_i32, %c0_i32_0 : i32, i32, i32, i32
  }
}

module attributes {stable_mosaic.version = 11 : i64} {
  func.func @_encoder_kernel(%arg0: i32, %arg1: i32, %arg2: memref<1x64x32xf32, #tpu.memory_space<vmem>>, %arg3: memref<1x64x32xf32, #tpu.memory_space<vmem>>, %arg4: memref<1x1x64xf32, #tpu.memory_space<vmem>>, %arg5: memref<1x4x32x32xbf16, #tpu.memory_space<vmem>>, %arg6: memref<1x4x1x32xf32, #tpu.memory_space<vmem>>, %arg7: memref<1x2x1x32xf32, #tpu.memory_space<vmem>>, %arg8: memref<1x2x1x32xf32, #tpu.memory_space<vmem>>, %arg9: memref<1x32x64xbf16, #tpu.memory_space<vmem>>, %arg10: memref<1x1x64xf32, #tpu.memory_space<vmem>>, %arg11: memref<1x64x32xbf16, #tpu.memory_space<vmem>>, %arg12: memref<1x1x32xf32, #tpu.memory_space<vmem>>, %arg13: memref<1x64x32xf32, #tpu.memory_space<vmem>>) attributes {dimension_semantics = [#tpu.dimension_semantics<parallel>, #tpu.dimension_semantics<arbitrary>], iteration_bounds = array<i64: 2, 1>, scalar_prefetch = 0 : i64, scratch_operands = 0 : i64, tpu.core_type = #tpu.core_type<tc>, window_params = [{transform_indices = @transform_0, window_bounds = array<i64: 1, 64, 32>}, {transform_indices = @transform_1, window_bounds = array<i64: 1, 64, 32>}, {transform_indices = @transform_2, window_bounds = array<i64: 1, 1, 64>}, {transform_indices = @transform_3, window_bounds = array<i64: 1, 4, 32, 32>}, {transform_indices = @transform_4, window_bounds = array<i64: 1, 4, 1, 32>}, {transform_indices = @transform_5, window_bounds = array<i64: 1, 2, 1, 32>}, {transform_indices = @transform_6, window_bounds = array<i64: 1, 2, 1, 32>}, {transform_indices = @transform_7, window_bounds = array<i64: 1, 32, 64>}, {transform_indices = @transform_8, window_bounds = array<i64: 1, 1, 64>}, {transform_indices = @transform_9, window_bounds = array<i64: 1, 64, 32>}, {transform_indices = @transform_10, window_bounds = array<i64: 1, 1, 32>}, {transform_indices = @transform_11, window_bounds = array<i64: 1, 64, 32>}]} {
    %c0_i32 = arith.constant 0 : i32
    %0 = arith.cmpi eq, %arg1, %c0_i32 : i32
    %1 = arith.extui %0 : i1 to i32
    %c0_i32_0 = arith.constant 0 : i32
    %2 = arith.cmpi ne, %1, %c0_i32_0 : i32
    scf.if %2 {
      %c0_76 = arith.constant 0 : index
      %c0_77 = arith.constant 0 : index
      %c0_78 = arith.constant 0 : index
      %213 = vector.load %arg2[%c0_76, %c0_77, %c0_78] : memref<1x64x32xf32, #tpu.memory_space<vmem>>, vector<1x64x32xf32>
      %214 = vector.shape_cast %213 : vector<1x64x32xf32> to vector<64x32xf32>
      %c0_79 = arith.constant 0 : index
      %c0_80 = arith.constant 0 : index
      %c0_81 = arith.constant 0 : index
      %215 = vector.load %arg13[%c0_79, %c0_80, %c0_81] : memref<1x64x32xf32, #tpu.memory_space<vmem>>, vector<1x64x32xf32>
      %216 = vector.shape_cast %215 : vector<1x64x32xf32> to vector<64x32xf32>
      %217 = vector.shape_cast %214 : vector<64x32xf32> to vector<1x64x32xf32>
      tpu.vector_store %arg13[%c0_79, %c0_80, %c0_81], %217 {strides = array<i32>} : memref<1x64x32xf32, #tpu.memory_space<vmem>>, vector<1x64x32xf32>,
    } else {
    }
    %c0 = arith.constant 0 : index
    %c0_1 = arith.constant 0 : index
    %c0_2 = arith.constant 0 : index
    %3 = vector.load %arg13[%c0, %c0_1, %c0_2] : memref<1x64x32xf32, #tpu.memory_space<vmem>>, vector<1x64x32xf32>
    %4 = vector.shape_cast %3 : vector<1x64x32xf32> to vector<64x32xf32>
    %c0_3 = arith.constant 0 : index
    %c0_4 = arith.constant 0 : index
    %c0_5 = arith.constant 0 : index
    %5 = vector.load %arg3[%c0_3, %c0_4, %c0_5] : memref<1x64x32xf32, #tpu.memory_space<vmem>>, vector<1x64x32xf32>
    %6 = vector.shape_cast %5 : vector<1x64x32xf32> to vector<64x32xf32>
    %c0_6 = arith.constant 0 : index
    %c0_7 = arith.constant 0 : index
    %c0_8 = arith.constant 0 : index
    %7 = vector.load %arg4[%c0_6, %c0_7, %c0_8] : memref<1x1x64xf32, #tpu.memory_space<vmem>>, vector<1x1x64xf32>
    %8 = vector.shape_cast %7 : vector<1x1x64xf32> to vector<1x64xf32>
    %c0_9 = arith.constant 0 : index
    %c0_10 = arith.constant 0 : index
    %c0_11 = arith.constant 0 : index
    %c0_12 = arith.constant 0 : index
    %9 = vector.load %arg5[%c0_9, %c0_10, %c0_11, %c0_12] : memref<1x4x32x32xbf16, #tpu.memory_space<vmem>>, vector<1x4x32x32xbf16>
    %10 = vector.shape_cast %9 : vector<1x4x32x32xbf16> to vector<4x32x32xbf16>
    %c0_13 = arith.constant 0 : index
    %c0_14 = arith.constant 0 : index
    %c0_15 = arith.constant 0 : index
    %c0_16 = arith.constant 0 : index
    %11 = vector.load %arg6[%c0_13, %c0_14, %c0_15, %c0_16] : memref<1x4x1x32xf32, #tpu.memory_space<vmem>>, vector<1x4x1x32xf32>
    %12 = vector.shape_cast %11 : vector<1x4x1x32xf32> to vector<4x1x32xf32>
    %c0_17 = arith.constant 0 : index
    %c0_18 = arith.constant 0 : index
    %c0_19 = arith.constant 0 : index
    %c0_20 = arith.constant 0 : index
    %13 = vector.load %arg7[%c0_17, %c0_18, %c0_19, %c0_20] : memref<1x2x1x32xf32, #tpu.memory_space<vmem>>, vector<1x2x1x32xf32>
    %14 = vector.shape_cast %13 : vector<1x2x1x32xf32> to vector<2x1x32xf32>
    %c0_21 = arith.constant 0 : index
    %c0_22 = arith.constant 0 : index
    %c0_23 = arith.constant 0 : index
    %c0_24 = arith.constant 0 : index
    %15 = vector.load %arg8[%c0_21, %c0_22, %c0_23, %c0_24] : memref<1x2x1x32xf32, #tpu.memory_space<vmem>>, vector<1x2x1x32xf32>
    %16 = vector.shape_cast %15 : vector<1x2x1x32xf32> to vector<2x1x32xf32>
    %17 = arith.addf %4, %6 : vector<64x32xf32>
    %18 = vector.extract_strided_slice %10 {offsets = [0, 0, 0], sizes = [1, 32, 32], strides = [1, 1, 1]} : vector<4x32x32xbf16> to vector<1x32x32xbf16>
    %19 = vector.shape_cast %18 : vector<1x32x32xbf16> to vector<32x32xbf16>
    %20 = arith.truncf %17 : vector<64x32xf32> to vector<64x32xbf16>
    %cst = arith.constant dense<0.000000e+00> : vector<64x32xf32>
    %21 = tpu.matmul %20, %19, %cst {dimension_numbers = #tpu.dot_dimension_numbers<[1], [0], [0], [1], [0, 0, 1, 1], [], []>} : vector<64x32xbf16>, vector<32x32xbf16>, vector<64x32xf32> -> vector<64x32xf32>
    %22 = vector.extract_strided_slice %12 {offsets = [0, 0, 0], sizes = [1, 1, 32], strides = [1, 1, 1]} : vector<4x1x32xf32> to vector<1x1x32xf32>
    %23 = vector.shape_cast %22 : vector<1x1x32xf32> to vector<1x32xf32>
    %24 = vector.broadcast %23 : vector<1x32xf32> to vector<64x32xf32>
    %25 = arith.addf %21, %24 : vector<64x32xf32>
    %26 = arith.truncf %25 : vector<64x32xf32> to vector<64x32xbf16>
    %27 = vector.extract_strided_slice %10 {offsets = [1, 0, 0], sizes = [1, 32, 32], strides = [1, 1, 1]} : vector<4x32x32xbf16> to vector<1x32x32xbf16>
    %28 = vector.shape_cast %27 : vector<1x32x32xbf16> to vector<32x32xbf16>
    %29 = arith.truncf %17 : vector<64x32xf32> to vector<64x32xbf16>
    %cst_25 = arith.constant dense<0.000000e+00> : vector<64x32xf32>
    %30 = tpu.matmul %29, %28, %cst_25 {dimension_numbers = #tpu.dot_dimension_numbers<[1], [0], [0], [1], [0, 0, 1, 1], [], []>} : vector<64x32xbf16>, vector<32x32xbf16>, vector<64x32xf32> -> vector<64x32xf32>
    %31 = vector.extract_strided_slice %12 {offsets = [1, 0, 0], sizes = [1, 1, 32], strides = [1, 1, 1]} : vector<4x1x32xf32> to vector<1x1x32xf32>
    %32 = vector.shape_cast %31 : vector<1x1x32xf32> to vector<1x32xf32>
    %33 = vector.broadcast %32 : vector<1x32xf32> to vector<64x32xf32>
    %34 = arith.addf %30, %33 : vector<64x32xf32>
    %35 = vector.extract_strided_slice %10 {offsets = [2, 0, 0], sizes = [1, 32, 32], strides = [1, 1, 1]} : vector<4x32x32xbf16> to vector<1x32x32xbf16>
    %36 = vector.shape_cast %35 : vector<1x32x32xbf16> to vector<32x32xbf16>
    %37 = arith.truncf %4 : vector<64x32xf32> to vector<64x32xbf16>
    %cst_26 = arith.constant dense<0.000000e+00> : vector<64x32xf32>
    %38 = tpu.matmul %37, %36, %cst_26 {dimension_numbers = #tpu.dot_dimension_numbers<[1], [0], [0], [1], [0, 0, 1, 1], [], []>} : vector<64x32xbf16>, vector<32x32xbf16>, vector<64x32xf32> -> vector<64x32xf32>
    %39 = vector.extract_strided_slice %12 {offsets = [2, 0, 0], sizes = [1, 1, 32], strides = [1, 1, 1]} : vector<4x1x32xf32> to vector<1x1x32xf32>
    %40 = vector.shape_cast %39 : vector<1x1x32xf32> to vector<1x32xf32>
    %41 = vector.broadcast %40 : vector<1x32xf32> to vector<64x32xf32>
    %42 = arith.addf %38, %41 : vector<64x32xf32>
    %43 = arith.truncf %42 : vector<64x32xf32> to vector<64x32xbf16>
    %44 = tpu.transpose %34, [1, 0] : vector<64x32xf32> -> vector<32x64xf32>
    %45 = vector.extract_strided_slice %26 {offsets = [0, 0], sizes = [64, 8], strides = [1, 1]} : vector<64x32xbf16> to vector<64x8xbf16>
    %46 = vector.extract_strided_slice %44 {offsets = [0, 0], sizes = [8, 64], strides = [1, 1]} : vector<32x64xf32> to vector<8x64xf32>
    %47 = arith.truncf %46 : vector<8x64xf32> to vector<8x64xbf16>
    %cst_27 = arith.constant dense<0.000000e+00> : vector<64x64xf32>
    %48 = tpu.matmul %45, %47, %cst_27 {dimension_numbers = #tpu.dot_dimension_numbers<[1], [0], [0], [1], [0, 0, 1, 1], [], []>} : vector<64x8xbf16>, vector<8x64xbf16>, vector<64x64xf32> -> vector<64x64xf32>
    %cst_28 = arith.constant 0.353553385 : f32
    %49 = vector.broadcast %cst_28 : f32 to vector<64x64xf32>
    %50 = arith.mulf %48, %49 : vector<64x64xf32>
    %51 = vector.broadcast %8 : vector<1x64xf32> to vector<64x64xf32>
    %52 = arith.addf %50, %51 : vector<64x64xf32>
    %cst_29 = arith.constant dense<0xFF800000> : vector<64xf32>
    %53 = vector.multi_reduction <maximumf>, %52, %cst_29 [1] : vector<64x64xf32> to vector<64xf32>
    %54 = vector.shape_cast %53 : vector<64xf32> to vector<64x1xf32>
    %55 = vector.broadcast %54 : vector<64x1xf32> to vector<64x64xf32>
    %56 = arith.subf %52, %55 : vector<64x64xf32>
    %57 = math.exp %56 : vector<64x64xf32>
    %cst_30 = arith.constant dense<0.000000e+00> : vector<64xf32>
    %58 = vector.multi_reduction <add>, %57, %cst_30 [1] : vector<64x64xf32> to vector<64xf32>
    %59 = vector.shape_cast %58 : vector<64xf32> to vector<64x1xf32>
    %60 = tpu.reciprocal %59 {approx = true} : vector<64x1xf32> -> vector<64x1xf32>
    %61 = vector.extract_strided_slice %43 {offsets = [0, 0], sizes = [64, 8], strides = [1, 1]} : vector<64x32xbf16> to vector<64x8xbf16>
    %62 = arith.truncf %57 : vector<64x64xf32> to vector<64x64xbf16>
    %cst_31 = arith.constant dense<0.000000e+00> : vector<64x8xf32>
    %63 = tpu.matmul %62, %61, %cst_31 {dimension_numbers = #tpu.dot_dimension_numbers<[1], [0], [0], [1], [0, 0, 1, 1], [], []>} : vector<64x64xbf16>, vector<64x8xbf16>, vector<64x8xf32> -> vector<64x8xf32>
    %64 = vector.broadcast %60 : vector<64x1xf32> to vector<64x8xf32>
    %65 = arith.mulf %63, %64 : vector<64x8xf32>
    %66 = vector.extract_strided_slice %26 {offsets = [0, 8], sizes = [64, 8], strides = [1, 1]} : vector<64x32xbf16> to vector<64x8xbf16>
    %67 = vector.extract_strided_slice %44 {offsets = [8, 0], sizes = [8, 64], strides = [1, 1]} : vector<32x64xf32> to vector<8x64xf32>
    %68 = arith.truncf %67 : vector<8x64xf32> to vector<8x64xbf16>
    %cst_32 = arith.constant dense<0.000000e+00> : vector<64x64xf32>
    %69 = tpu.matmul %66, %68, %cst_32 {dimension_numbers = #tpu.dot_dimension_numbers<[1], [0], [0], [1], [0, 0, 1, 1], [], []>} : vector<64x8xbf16>, vector<8x64xbf16>, vector<64x64xf32> -> vector<64x64xf32>
    %cst_33 = arith.constant 0.353553385 : f32
    %70 = vector.broadcast %cst_33 : f32 to vector<64x64xf32>
    %71 = arith.mulf %69, %70 : vector<64x64xf32>
    %72 = vector.broadcast %8 : vector<1x64xf32> to vector<64x64xf32>
    %73 = arith.addf %71, %72 : vector<64x64xf32>
    %cst_34 = arith.constant dense<0xFF800000> : vector<64xf32>
    %74 = vector.multi_reduction <maximumf>, %73, %cst_34 [1] : vector<64x64xf32> to vector<64xf32>
    %75 = vector.shape_cast %74 : vector<64xf32> to vector<64x1xf32>
    %76 = vector.broadcast %75 : vector<64x1xf32> to vector<64x64xf32>
    %77 = arith.subf %73, %76 : vector<64x64xf32>
    %78 = math.exp %77 : vector<64x64xf32>
    %cst_35 = arith.constant dense<0.000000e+00> : vector<64xf32>
    %79 = vector.multi_reduction <add>, %78, %cst_35 [1] : vector<64x64xf32> to vector<64xf32>
    %80 = vector.shape_cast %79 : vector<64xf32> to vector<64x1xf32>
    %81 = tpu.reciprocal %80 {approx = true} : vector<64x1xf32> -> vector<64x1xf32>
    %82 = vector.extract_strided_slice %43 {offsets = [0, 8], sizes = [64, 8], strides = [1, 1]} : vector<64x32xbf16> to vector<64x8xbf16>
    %83 = arith.truncf %78 : vector<64x64xf32> to vector<64x64xbf16>
    %cst_36 = arith.constant dense<0.000000e+00> : vector<64x8xf32>
    %84 = tpu.matmul %83, %82, %cst_36 {dimension_numbers = #tpu.dot_dimension_numbers<[1], [0], [0], [1], [0, 0, 1, 1], [], []>} : vector<64x64xbf16>, vector<64x8xbf16>, vector<64x8xf32> -> vector<64x8xf32>
    %85 = vector.broadcast %81 : vector<64x1xf32> to vector<64x8xf32>
    %86 = arith.mulf %84, %85 : vector<64x8xf32>
    %87 = vector.extract_strided_slice %26 {offsets = [0, 16], sizes = [64, 8], strides = [1, 1]} : vector<64x32xbf16> to vector<64x8xbf16>
    %88 = vector.extract_strided_slice %44 {offsets = [16, 0], sizes = [8, 64], strides = [1, 1]} : vector<32x64xf32> to vector<8x64xf32>
    %89 = arith.truncf %88 : vector<8x64xf32> to vector<8x64xbf16>
    %cst_37 = arith.constant dense<0.000000e+00> : vector<64x64xf32>
    %90 = tpu.matmul %87, %89, %cst_37 {dimension_numbers = #tpu.dot_dimension_numbers<[1], [0], [0], [1], [0, 0, 1, 1], [], []>} : vector<64x8xbf16>, vector<8x64xbf16>, vector<64x64xf32> -> vector<64x64xf32>
    %cst_38 = arith.constant 0.353553385 : f32
    %91 = vector.broadcast %cst_38 : f32 to vector<64x64xf32>
    %92 = arith.mulf %90, %91 : vector<64x64xf32>
    %93 = vector.broadcast %8 : vector<1x64xf32> to vector<64x64xf32>
    %94 = arith.addf %92, %93 : vector<64x64xf32>
    %cst_39 = arith.constant dense<0xFF800000> : vector<64xf32>
    %95 = vector.multi_reduction <maximumf>, %94, %cst_39 [1] : vector<64x64xf32> to vector<64xf32>
    %96 = vector.shape_cast %95 : vector<64xf32> to vector<64x1xf32>
    %97 = vector.broadcast %96 : vector<64x1xf32> to vector<64x64xf32>
    %98 = arith.subf %94, %97 : vector<64x64xf32>
    %99 = math.exp %98 : vector<64x64xf32>
    %cst_40 = arith.constant dense<0.000000e+00> : vector<64xf32>
    %100 = vector.multi_reduction <add>, %99, %cst_40 [1] : vector<64x64xf32> to vector<64xf32>
    %101 = vector.shape_cast %100 : vector<64xf32> to vector<64x1xf32>
    %102 = tpu.reciprocal %101 {approx = true} : vector<64x1xf32> -> vector<64x1xf32>
    %103 = vector.extract_strided_slice %43 {offsets = [0, 16], sizes = [64, 8], strides = [1, 1]} : vector<64x32xbf16> to vector<64x8xbf16>
    %104 = arith.truncf %99 : vector<64x64xf32> to vector<64x64xbf16>
    %cst_41 = arith.constant dense<0.000000e+00> : vector<64x8xf32>
    %105 = tpu.matmul %104, %103, %cst_41 {dimension_numbers = #tpu.dot_dimension_numbers<[1], [0], [0], [1], [0, 0, 1, 1], [], []>} : vector<64x64xbf16>, vector<64x8xbf16>, vector<64x8xf32> -> vector<64x8xf32>
    %106 = vector.broadcast %102 : vector<64x1xf32> to vector<64x8xf32>
    %107 = arith.mulf %105, %106 : vector<64x8xf32>
    %108 = vector.extract_strided_slice %26 {offsets = [0, 24], sizes = [64, 8], strides = [1, 1]} : vector<64x32xbf16> to vector<64x8xbf16>
    %109 = vector.extract_strided_slice %44 {offsets = [24, 0], sizes = [8, 64], strides = [1, 1]} : vector<32x64xf32> to vector<8x64xf32>
    %110 = arith.truncf %109 : vector<8x64xf32> to vector<8x64xbf16>
    %cst_42 = arith.constant dense<0.000000e+00> : vector<64x64xf32>
    %111 = tpu.matmul %108, %110, %cst_42 {dimension_numbers = #tpu.dot_dimension_numbers<[1], [0], [0], [1], [0, 0, 1, 1], [], []>} : vector<64x8xbf16>, vector<8x64xbf16>, vector<64x64xf32> -> vector<64x64xf32>
    %cst_43 = arith.constant 0.353553385 : f32
    %112 = vector.broadcast %cst_43 : f32 to vector<64x64xf32>
    %113 = arith.mulf %111, %112 : vector<64x64xf32>
    %114 = vector.broadcast %8 : vector<1x64xf32> to vector<64x64xf32>
    %115 = arith.addf %113, %114 : vector<64x64xf32>
    %cst_44 = arith.constant dense<0xFF800000> : vector<64xf32>
    %116 = vector.multi_reduction <maximumf>, %115, %cst_44 [1] : vector<64x64xf32> to vector<64xf32>
    %117 = vector.shape_cast %116 : vector<64xf32> to vector<64x1xf32>
    %118 = vector.broadcast %117 : vector<64x1xf32> to vector<64x64xf32>
    %119 = arith.subf %115, %118 : vector<64x64xf32>
    %120 = math.exp %119 : vector<64x64xf32>
    %cst_45 = arith.constant dense<0.000000e+00> : vector<64xf32>
    %121 = vector.multi_reduction <add>, %120, %cst_45 [1] : vector<64x64xf32> to vector<64xf32>
    %122 = vector.shape_cast %121 : vector<64xf32> to vector<64x1xf32>
    %123 = tpu.reciprocal %122 {approx = true} : vector<64x1xf32> -> vector<64x1xf32>
    %124 = vector.extract_strided_slice %43 {offsets = [0, 24], sizes = [64, 8], strides = [1, 1]} : vector<64x32xbf16> to vector<64x8xbf16>
    %125 = arith.truncf %120 : vector<64x64xf32> to vector<64x64xbf16>
    %cst_46 = arith.constant dense<0.000000e+00> : vector<64x8xf32>
    %126 = tpu.matmul %125, %124, %cst_46 {dimension_numbers = #tpu.dot_dimension_numbers<[1], [0], [0], [1], [0, 0, 1, 1], [], []>} : vector<64x64xbf16>, vector<64x8xbf16>, vector<64x8xf32> -> vector<64x8xf32>
    %127 = vector.broadcast %123 : vector<64x1xf32> to vector<64x8xf32>
    %128 = arith.mulf %126, %127 : vector<64x8xf32>
    %129 = tpu.concatenate %65, %86, %107, %128 in 1 : vector<64x8xf32>, vector<64x8xf32>, vector<64x8xf32>, vector<64x8xf32> -> vector<64x32xf32>
    %130 = vector.extract_strided_slice %10 {offsets = [3, 0, 0], sizes = [1, 32, 32], strides = [1, 1, 1]} : vector<4x32x32xbf16> to vector<1x32x32xbf16>
    %131 = vector.shape_cast %130 : vector<1x32x32xbf16> to vector<32x32xbf16>
    %132 = arith.truncf %129 : vector<64x32xf32> to vector<64x32xbf16>
    %cst_47 = arith.constant dense<0.000000e+00> : vector<64x32xf32>
    %133 = tpu.matmul %132, %131, %cst_47 {dimension_numbers = #tpu.dot_dimension_numbers<[1], [0], [0], [1], [0, 0, 1, 1], [], []>} : vector<64x32xbf16>, vector<32x32xbf16>, vector<64x32xf32> -> vector<64x32xf32>
    %134 = vector.extract_strided_slice %12 {offsets = [3, 0, 0], sizes = [1, 1, 32], strides = [1, 1, 1]} : vector<4x1x32xf32> to vector<1x1x32xf32>
    %135 = vector.shape_cast %134 : vector<1x1x32xf32> to vector<1x32xf32>
    %136 = vector.broadcast %135 : vector<1x32xf32> to vector<64x32xf32>
    %137 = arith.addf %133, %136 : vector<64x32xf32>
    %138 = arith.addf %4, %137 : vector<64x32xf32>
    %139 = vector.extract_strided_slice %14 {offsets = [0, 0, 0], sizes = [1, 1, 32], strides = [1, 1, 1]} : vector<2x1x32xf32> to vector<1x1x32xf32>
    %140 = vector.shape_cast %139 : vector<1x1x32xf32> to vector<1x32xf32>
    %141 = vector.extract_strided_slice %16 {offsets = [0, 0, 0], sizes = [1, 1, 32], strides = [1, 1, 1]} : vector<2x1x32xf32> to vector<1x1x32xf32>
    %142 = vector.shape_cast %141 : vector<1x1x32xf32> to vector<1x32xf32>
    %cst_48 = arith.constant dense<0.000000e+00> : vector<64xf32>
    %143 = vector.multi_reduction <add>, %138, %cst_48 [1] : vector<64x32xf32> to vector<64xf32>
    %144 = vector.shape_cast %143 : vector<64xf32> to vector<64x1xf32>
    %cst_49 = arith.constant 3.200000e+01 : f32
    %145 = vector.broadcast %cst_49 : f32 to vector<64x1xf32>
    %146 = arith.divf %144, %145 : vector<64x1xf32>
    %147 = vector.broadcast %146 : vector<64x1xf32> to vector<64x32xf32>
    %148 = arith.subf %138, %147 : vector<64x32xf32>
    %149 = arith.mulf %148, %148 : vector<64x32xf32>
    %cst_50 = arith.constant dense<0.000000e+00> : vector<64xf32>
    %150 = vector.multi_reduction <add>, %149, %cst_50 [1] : vector<64x32xf32> to vector<64xf32>
    %151 = vector.shape_cast %150 : vector<64xf32> to vector<64x1xf32>
    %cst_51 = arith.constant 3.200000e+01 : f32
    %152 = vector.broadcast %cst_51 : f32 to vector<64x1xf32>
    %153 = arith.divf %151, %152 : vector<64x1xf32>
    %154 = vector.broadcast %146 : vector<64x1xf32> to vector<64x32xf32>
    %155 = arith.subf %138, %154 : vector<64x32xf32>
    %cst_52 = arith.constant 9.99999974E-6 : f32
    %156 = vector.broadcast %cst_52 : f32 to vector<64x1xf32>
    %157 = arith.addf %153, %156 : vector<64x1xf32>
    %158 = math.rsqrt %157 : vector<64x1xf32>
    %159 = vector.broadcast %158 : vector<64x1xf32> to vector<64x32xf32>
    %160 = arith.mulf %155, %159 : vector<64x32xf32>
    %161 = vector.broadcast %140 : vector<1x32xf32> to vector<64x32xf32>
    %162 = arith.mulf %160, %161 : vector<64x32xf32>
    %163 = vector.broadcast %142 : vector<1x32xf32> to vector<64x32xf32>
    %164 = arith.addf %162, %163 : vector<64x32xf32>
    %c0_53 = arith.constant 0 : index
    %c0_54 = arith.constant 0 : index
    %c0_55 = arith.constant 0 : index
    %165 = vector.load %arg9[%c0_53, %c0_54, %c0_55] : memref<1x32x64xbf16, #tpu.memory_space<vmem>>, vector<1x32x64xbf16>
    %166 = vector.shape_cast %165 : vector<1x32x64xbf16> to vector<32x64xbf16>
    %167 = arith.truncf %164 : vector<64x32xf32> to vector<64x32xbf16>
    %cst_56 = arith.constant dense<0.000000e+00> : vector<64x64xf32>
    %168 = tpu.matmul %167, %166, %cst_56 {dimension_numbers = #tpu.dot_dimension_numbers<[1], [0], [0], [1], [0, 0, 1, 1], [], []>} : vector<64x32xbf16>, vector<32x64xbf16>, vector<64x64xf32> -> vector<64x64xf32>
    %c0_57 = arith.constant 0 : index
    %c0_58 = arith.constant 0 : index
    %c0_59 = arith.constant 0 : index
    %169 = vector.load %arg10[%c0_57, %c0_58, %c0_59] : memref<1x1x64xf32, #tpu.memory_space<vmem>>, vector<1x1x64xf32>
    %170 = vector.shape_cast %169 : vector<1x1x64xf32> to vector<1x64xf32>
    %171 = vector.broadcast %170 : vector<1x64xf32> to vector<64x64xf32>
    %172 = arith.addf %168, %171 : vector<64x64xf32>
    %cst_60 = arith.constant 0.000000e+00 : f32
    %173 = vector.broadcast %cst_60 : f32 to vector<64x64xf32>
    %174 = arith.maximumf %172, %173 : vector<64x64xf32>
    %c0_61 = arith.constant 0 : index
    %c0_62 = arith.constant 0 : index
    %c0_63 = arith.constant 0 : index
    %175 = vector.load %arg11[%c0_61, %c0_62, %c0_63] : memref<1x64x32xbf16, #tpu.memory_space<vmem>>, vector<1x64x32xbf16>
    %176 = vector.shape_cast %175 : vector<1x64x32xbf16> to vector<64x32xbf16>
    %177 = arith.truncf %174 : vector<64x64xf32> to vector<64x64xbf16>
    %cst_64 = arith.constant dense<0.000000e+00> : vector<64x32xf32>
    %178 = tpu.matmul %177, %176, %cst_64 {dimension_numbers = #tpu.dot_dimension_numbers<[1], [0], [0], [1], [0, 0, 1, 1], [], []>} : vector<64x64xbf16>, vector<64x32xbf16>, vector<64x32xf32> -> vector<64x32xf32>
    %c0_65 = arith.constant 0 : index
    %c0_66 = arith.constant 0 : index
    %c0_67 = arith.constant 0 : index
    %179 = vector.load %arg12[%c0_65, %c0_66, %c0_67] : memref<1x1x32xf32, #tpu.memory_space<vmem>>, vector<1x1x32xf32>
    %180 = vector.shape_cast %179 : vector<1x1x32xf32> to vector<1x32xf32>
    %181 = vector.broadcast %180 : vector<1x32xf32> to vector<64x32xf32>
    %182 = arith.addf %178, %181 : vector<64x32xf32>
    %183 = arith.addf %164, %182 : vector<64x32xf32>
    %184 = vector.extract_strided_slice %14 {offsets = [1, 0, 0], sizes = [1, 1, 32], strides = [1, 1, 1]} : vector<2x1x32xf32> to vector<1x1x32xf32>
    %185 = vector.shape_cast %184 : vector<1x1x32xf32> to vector<1x32xf32>
    %186 = vector.extract_strided_slice %16 {offsets = [1, 0, 0], sizes = [1, 1, 32], strides = [1, 1, 1]} : vector<2x1x32xf32> to vector<1x1x32xf32>
    %187 = vector.shape_cast %186 : vector<1x1x32xf32> to vector<1x32xf32>
    %cst_68 = arith.constant dense<0.000000e+00> : vector<64xf32>
    %188 = vector.multi_reduction <add>, %183, %cst_68 [1] : vector<64x32xf32> to vector<64xf32>
    %189 = vector.shape_cast %188 : vector<64xf32> to vector<64x1xf32>
    %cst_69 = arith.constant 3.200000e+01 : f32
    %190 = vector.broadcast %cst_69 : f32 to vector<64x1xf32>
    %191 = arith.divf %189, %190 : vector<64x1xf32>
    %192 = vector.broadcast %191 : vector<64x1xf32> to vector<64x32xf32>
    %193 = arith.subf %183, %192 : vector<64x32xf32>
    %194 = arith.mulf %193, %193 : vector<64x32xf32>
    %cst_70 = arith.constant dense<0.000000e+00> : vector<64xf32>
    %195 = vector.multi_reduction <add>, %194, %cst_70 [1] : vector<64x32xf32> to vector<64xf32>
    %196 = vector.shape_cast %195 : vector<64xf32> to vector<64x1xf32>
    %cst_71 = arith.constant 3.200000e+01 : f32
    %197 = vector.broadcast %cst_71 : f32 to vector<64x1xf32>
    %198 = arith.divf %196, %197 : vector<64x1xf32>
    %199 = vector.broadcast %191 : vector<64x1xf32> to vector<64x32xf32>
    %200 = arith.subf %183, %199 : vector<64x32xf32>
    %cst_72 = arith.constant 9.99999974E-6 : f32
    %201 = vector.broadcast %cst_72 : f32 to vector<64x1xf32>
    %202 = arith.addf %198, %201 : vector<64x1xf32>
    %203 = math.rsqrt %202 : vector<64x1xf32>
    %204 = vector.broadcast %203 : vector<64x1xf32> to vector<64x32xf32>
    %205 = arith.mulf %200, %204 : vector<64x32xf32>
    %206 = vector.broadcast %185 : vector<1x32xf32> to vector<64x32xf32>
    %207 = arith.mulf %205, %206 : vector<64x32xf32>
    %208 = vector.broadcast %187 : vector<1x32xf32> to vector<64x32xf32>
    %209 = arith.addf %207, %208 : vector<64x32xf32>
    %c0_73 = arith.constant 0 : index
    %c0_74 = arith.constant 0 : index
    %c0_75 = arith.constant 0 : index
    %210 = vector.load %arg13[%c0_73, %c0_74, %c0_75] : memref<1x64x32xf32, #tpu.memory_space<vmem>>, vector<1x64x32xf32>
    %211 = vector.shape_cast %210 : vector<1x64x32xf32> to vector<64x32xf32>
    %212 = vector.shape_cast %209 : vector<64x32xf32> to vector<1x64x32xf32>
    tpu.vector_store %arg13[%c0_73, %c0_74, %c0_75], %212 {strides = array<i32>} : memref<1x64x32xf32, #tpu.memory_space<vmem>>, vector<1x64x32xf32>,
    return
  }
  func.func @transform_0(%arg0: i32, %arg1: i32) -> (i32, i32, i32) {
    %c0_i32 = arith.constant 0 : i32
    %c0_i32_0 = arith.constant 0 : i32
    %c0_i32_1 = arith.constant 0 : i32
    return %arg0, %c0_i32, %c0_i32_0 : i32, i32, i32
  }
  func.func @transform_1(%arg0: i32, %arg1: i32) -> (i32, i32, i32) {
    %c0_i32 = arith.constant 0 : i32
    %c0_i32_0 = arith.constant 0 : i32
    %c0_i32_1 = arith.constant 0 : i32
    return %arg0, %c0_i32, %c0_i32_0 : i32, i32, i32
  }
  func.func @transform_2(%arg0: i32, %arg1: i32) -> (i32, i32, i32) {
    %c0_i32 = arith.constant 0 : i32
    %c0_i32_0 = arith.constant 0 : i32
    %c0_i32_1 = arith.constant 0 : i32
    return %arg0, %c0_i32, %c0_i32_0 : i32, i32, i32
  }
  func.func @transform_3(%arg0: i32, %arg1: i32) -> (i32, i32, i32, i32) {
    %c0_i32 = arith.constant 0 : i32
    %c0_i32_0 = arith.constant 0 : i32
    %c0_i32_1 = arith.constant 0 : i32
    %c0_i32_2 = arith.constant 0 : i32
    return %arg1, %c0_i32, %c0_i32_0, %c0_i32_1 : i32, i32, i32, i32
  }
  func.func @transform_4(%arg0: i32, %arg1: i32) -> (i32, i32, i32, i32) {
    %c0_i32 = arith.constant 0 : i32
    %c0_i32_0 = arith.constant 0 : i32
    %c0_i32_1 = arith.constant 0 : i32
    %c0_i32_2 = arith.constant 0 : i32
    return %arg1, %c0_i32, %c0_i32_0, %c0_i32_1 : i32, i32, i32, i32
  }
  func.func @transform_5(%arg0: i32, %arg1: i32) -> (i32, i32, i32, i32) {
    %c0_i32 = arith.constant 0 : i32
    %c0_i32_0 = arith.constant 0 : i32
    %c0_i32_1 = arith.constant 0 : i32
    %c0_i32_2 = arith.constant 0 : i32
    return %arg1, %c0_i32, %c0_i32_0, %c0_i32_1 : i32, i32, i32, i32
  }
  func.func @transform_6(%arg0: i32, %arg1: i32) -> (i32, i32, i32, i32) {
    %c0_i32 = arith.constant 0 : i32
    %c0_i32_0 = arith.constant 0 : i32
    %c0_i32_1 = arith.constant 0 : i32
    %c0_i32_2 = arith.constant 0 : i32
    return %arg1, %c0_i32, %c0_i32_0, %c0_i32_1 : i32, i32, i32, i32
  }
  func.func @transform_7(%arg0: i32, %arg1: i32) -> (i32, i32, i32) {
    %c0_i32 = arith.constant 0 : i32
    %c0_i32_0 = arith.constant 0 : i32
    %c0_i32_1 = arith.constant 0 : i32
    return %arg1, %c0_i32, %c0_i32_0 : i32, i32, i32
  }
  func.func @transform_8(%arg0: i32, %arg1: i32) -> (i32, i32, i32) {
    %c0_i32 = arith.constant 0 : i32
    %c0_i32_0 = arith.constant 0 : i32
    %c0_i32_1 = arith.constant 0 : i32
    return %arg1, %c0_i32, %c0_i32_0 : i32, i32, i32
  }
  func.func @transform_9(%arg0: i32, %arg1: i32) -> (i32, i32, i32) {
    %c0_i32 = arith.constant 0 : i32
    %c0_i32_0 = arith.constant 0 : i32
    %c0_i32_1 = arith.constant 0 : i32
    return %arg1, %c0_i32, %c0_i32_0 : i32, i32, i32
  }
  func.func @transform_10(%arg0: i32, %arg1: i32) -> (i32, i32, i32) {
    %c0_i32 = arith.constant 0 : i32
    %c0_i32_0 = arith.constant 0 : i32
    %c0_i32_1 = arith.constant 0 : i32
    return %arg1, %c0_i32, %c0_i32_0 : i32, i32, i32
  }
  func.func @transform_11(%arg0: i32, %arg1: i32) -> (i32, i32, i32) {
    %c0_i32 = arith.constant 0 : i32
    %c0_i32_0 = arith.constant 0 : i32
    %c0_i32_1 = arith.constant 0 : i32
    return %arg0, %c0_i32, %c0_i32_0 : i32, i32, i32
  }
}

</mosaic_0001>

<llo_original>
// kernel: conditional_detr_forward.4
$region0: #{conditional_detr_forward.4}
  #allocation0 [shape = 'u32[]', space=smem, size = 0x4, offset = 0x4, fixed_abs, tag = 'smem constant byte address 0x4 - core index']
  #allocation1 [shape = 'u32[72,128]{1,0:T(1,128)}', space=vmem, size = 0x9000, scoped, tag = 'internal scratch']
  %s0 = inlined_call_operand.vmem [shape: f32[128,48], index: 0, kind: input, shape index: {}]
  %s1 = inlined_call_operand.vmem [shape: bf16[48,8], index: 1, kind: input, shape index: {}]
  %s2 = inlined_call_operand.vmem [shape: f32[1,8], index: 2, kind: input, shape index: {}]
  %s3 = inlined_call_operand.vmem [shape: bf16[8,32], index: 3, kind: input, shape index: {}]
  %s4 = inlined_call_operand.vmem [shape: f32[1,32], index: 4, kind: input, shape index: {}]
  %s5 = inlined_call_operand.vmem [shape: f32[8,32], index: 5, kind: input, shape index: {}]
  %s6 = inlined_call_operand.vmem [shape: bf16[32,2], index: 6, kind: input, shape index: {}]
  %s7 = inlined_call_operand.vmem [shape: f32[1,2], index: 7, kind: input, shape index: {}]
  %s8 = inlined_call_operand.vmem [shape: f32[128,32], index: 8, kind: output, shape index: {0}]
  %s9 = inlined_call_operand.vmem [shape: f32[8,2], index: 9, kind: output, shape index: {1}]
  %10 = xla_tuple %s8, %s9
  %s11 = sld [smem:[#allocation0]]
  $region50: #{conditional_detr_forward.4} parent=0
    _
  %s13 = ssub.s32 1, %s11
  %s14 = scalar_select 0, %s13, %s11
  // Predicated region
  $region2: #{conditional_detr_forward.4} parent=0 // pred_check
    _
  $region3: #{conditional_detr_forward.4} parent=0 // pred_check_branch
    %16 = sbr.rel (0) target = $region5
  $region4: #{conditional_detr_forward.4} parent=0 // pred_region
    _
  $region5: #{conditional_detr_forward.4} parent=0 // pred_fallthru
    _
  // Predicated region
  $region6: #{conditional_detr_forward.4} parent=0 // pred_check
    _
  $region7: #{conditional_detr_forward.4} parent=0 // pred_check_branch
    %18 = sbr.rel (0) target = $region9
  $region8: #{conditional_detr_forward.4} parent=0 // pred_region
    _
  $region9: #{conditional_detr_forward.4} parent=0 // pred_fallthru
    _
  // Predicated region
  $region10: #{conditional_detr_forward.4} parent=0 // pred_check
    _
  $region11: #{conditional_detr_forward.4} parent=0 // pred_check_branch
    %20 = sbr.rel (0) target = $region13
  $region12: #{conditional_detr_forward.4} parent=0 // pred_region
    _
  $region13: #{conditional_detr_forward.4} parent=0 // pred_fallthru
    _
  // Predicated region
  $region14: #{conditional_detr_forward.4} parent=0 // pred_check
    _
  $region15: #{conditional_detr_forward.4} parent=0 // pred_check_branch
    %22 = sbr.rel (0) target = $region17
  $region16: #{conditional_detr_forward.4} parent=0 // pred_region
    _
  $region17: #{conditional_detr_forward.4} parent=0 // pred_fallthru
    _
  // Predicated region
  $region18: #{conditional_detr_forward.4} parent=0 // pred_check
    _
  $region19: #{conditional_detr_forward.4} parent=0 // pred_check_branch
    %24 = sbr.rel (0) target = $region21
  $region20: #{conditional_detr_forward.4} parent=0 // pred_region
    _
  $region21: #{conditional_detr_forward.4} parent=0 // pred_fallthru
    _
  // Predicated region
  $region22: #{conditional_detr_forward.4} parent=0 // pred_check
    _
  $region23: #{conditional_detr_forward.4} parent=0 // pred_check_branch
    %26 = sbr.rel (0) target = $region25
  $region24: #{conditional_detr_forward.4} parent=0 // pred_region
    _
  $region25: #{conditional_detr_forward.4} parent=0 // pred_fallthru
    _
  // Predicated region
  $region26: #{conditional_detr_forward.4} parent=0 // pred_check
    _
  $region27: #{conditional_detr_forward.4} parent=0 // pred_check_branch
    %28 = sbr.rel (0) target = $region29
  $region28: #{conditional_detr_forward.4} parent=0 // pred_region
    _
  $region29: #{conditional_detr_forward.4} parent=0 // pred_fallthru
    _
  // Predicated region
  $region30: #{conditional_detr_forward.4} parent=0 // pred_check
    _
  $region31: #{conditional_detr_forward.4} parent=0 // pred_check_branch
    %30 = sbr.rel (0) target = $region33
  $region32: #{conditional_detr_forward.4} parent=0 // pred_region
    _
  $region33: #{conditional_detr_forward.4} parent=0 // pred_fallthru
    _
  %v32 = vld [vmem:[%s0] sm:$0xff]
  %v33 = vld [vmem:[%s0 + $0x8] sm:$0xff]
  %v34 = vld [vmem:[%s0 + $0x10] sm:$0xff]
  %v35 = vld [vmem:[%s0 + $0x18] sm:$0xff]
  %v36 = vld [vmem:[%s0 + $0x20] sm:$0xff]
  %v37 = vld [vmem:[%s0 + $0x28] sm:$0xff]
  %v38 = vld [vmem:[%s0 + $0x30] sm:$0xff]
  %v39 = vld [vmem:[%s0 + $0x38] sm:$0xff]
  %v40 = vld [vmem:[%s0 + $0x40] sm:$0xff]
  %v41 = vld [vmem:[%s0 + $0x48] sm:$0xff]
  %v42 = vld [vmem:[%s0 + $0x50] sm:$0xff]
  %v43 = vld [vmem:[%s0 + $0x58] sm:$0xff]
  %v44 = vld [vmem:[%s0 + $0x60] sm:$0xff]
  %v45 = vld [vmem:[%s0 + $0x68] sm:$0xff]
  %v46 = vld [vmem:[%s0 + $0x70] sm:$0xff]
  %v47 = vld [vmem:[%s0 + $0x78] sm:$0xff]
  %v48 = vld [vmem:[%s1] sm:$0xf]
  %v49 = vld [vmem:[%s1 + $0x4] sm:$0xf]
  %v50 = vld [vmem:[%s1 + $0x8] sm:$0xf]
  %v51 = vld [vmem:[%s1 + $0xc] sm:$0xf]
  %v52 = vld [vmem:[%s1 + $0x10] sm:$0xf]
  %v53 = vld [vmem:[%s1 + $0x14] sm:$0xf]
  %v54 = vpack.c.bf16 %v33, %v32
  %v55 = vpack.c.bf16 %v35, %v34
  %v56 = vpack.c.bf16 %v37, %v36
  %v57 = vpack.c.bf16 %v39, %v38
  %v58 = vpack.c.bf16 %v41, %v40
  %v59 = vpack.c.bf16 %v43, %v42
  %v60 = vpack.c.bf16 %v45, %v44
  %v61 = vpack.c.bf16 %v47, %v46
  %v62 = vld [vmem:[%s2] sm:$0x1]
  %v64 = vperm.slane %v62, 0
  %v72 = vunpack.c.l.b16 %v48
  %v73 = vunpack.c.l.b16 %v49
  %v74 = vunpack.c.l.b16 %v50
  %v75 = vunpack.c.l.b16 %v51
  %v76 = vunpack.c.l.b16 %v52
  %v77 = vunpack.c.l.b16 %v53
  %v78 = vpack.c.b16 %v73, %v72
  %v79 = vpack.c.b16 %v75, %v74
  %v80 = vpack.c.b16 %v77, %v76
  %vm84 = vcmask 392192
  %v86 = vsel %vm84, %v54, 0
  %v89 = vsel %vm84, %v55, 0
  %v92 = vsel %vm84, %v56, 0
  %v95 = vsel %vm84, %v57, 0
  %v98 = vsel %vm84, %v58, 0
  %v101 = vsel %vm84, %v59, 0
  %v104 = vsel %vm84, %v60, 0
  %v107 = vsel %vm84, %v61, 0
  %109 = vmatpush.bf16.msra.mxu0 0
  %110 = vmatpush.bf16.msra.mxu0 0
  %111 = vmatpush.bf16.msra.mxu0 0
  %112 = vmatpush.bf16.msra.mxu0 0
  %113 = vmatpush.bf16.msra.mxu0 0
  %114 = vmatpush.bf16.msra.mxu0 %v80
  %115 = vmatpush.bf16.msra.mxu0 %v79
  %116 = vmatpush.bf16.msra.mxu0 %v78
  %117 = vmatmul.bf16.gmra.mxu0 %v86
  %v118 = vpop.f32.mrf.mxu0
  %v119 = vadd.f32 %v64, %v118
  %v120 = vpop.f32.mrf.mxu0
  %v121 = vadd.f32 %v64, %v120
  %122 = vmatmul.bf16.gmra.mxu0 %v89
  %v123 = vpop.f32.mrf.mxu0
  %v124 = vadd.f32 %v64, %v123
  %v125 = vpop.f32.mrf.mxu0
  %v126 = vadd.f32 %v64, %v125
  %127 = vmatmul.bf16.gmra.mxu0 %v92
  %v128 = vpop.f32.mrf.mxu0
  %v129 = vadd.f32 %v64, %v128
  %v130 = vpop.f32.mrf.mxu0
  %v131 = vadd.f32 %v64, %v130
  %132 = vmatmul.bf16.gmra.mxu0 %v95
  %v133 = vpop.f32.mrf.mxu0
  %v134 = vadd.f32 %v64, %v133
  %v135 = vpop.f32.mrf.mxu0
  %v136 = vadd.f32 %v64, %v135
  %137 = vmatmul.bf16.gmra.mxu0 %v98
  %v138 = vpop.f32.mrf.mxu0
  %v139 = vadd.f32 %v64, %v138
  %v140 = vpop.f32.mrf.mxu0
  %v141 = vadd.f32 %v64, %v140
  %142 = vmatmul.bf16.gmra.mxu0 %v101
  %v143 = vpop.f32.mrf.mxu0
  %v144 = vadd.f32 %v64, %v143
  %v145 = vpop.f32.mrf.mxu0
  %v146 = vadd.f32 %v64, %v145
  %147 = vmatmul.bf16.gmra.mxu0 %v104
  %v148 = vpop.f32.mrf.mxu0
  %v149 = vadd.f32 %v64, %v148
  %v150 = vpop.f32.mrf.mxu0
  %v151 = vadd.f32 %v64, %v150
  %152 = vmatmul.bf16.gmra.mxu0 %v107
  %v153 = vpop.f32.mrf.mxu0
  %v154 = vadd.f32 %v64, %v153
  %v155 = vpop.f32.mrf.mxu0
  %v156 = vadd.f32 %v64, %v155
  %157 = vdwg.mxu0
  %v158 = vmax.f32 %v119, 0.0
  %v159 = vmax.f32 %v121, 0.0
  %v160 = vmax.f32 %v124, 0.0
  %v161 = vmax.f32 %v126, 0.0
  %v162 = vmax.f32 %v129, 0.0
  %v163 = vmax.f32 %v131, 0.0
  %v164 = vmax.f32 %v134, 0.0
  %v165 = vmax.f32 %v136, 0.0
  %v166 = vmax.f32 %v139, 0.0
  %v167 = vmax.f32 %v141, 0.0
  %v168 = vmax.f32 %v144, 0.0
  %v169 = vmax.f32 %v146, 0.0
  %v170 = vmax.f32 %v149, 0.0
  %v171 = vmax.f32 %v151, 0.0
  %v172 = vmax.f32 %v154, 0.0
  %v173 = vmax.f32 %v156, 0.0
  %v174 = vld [vmem:[%s3] sm:$0xf]
  %v175 = vpack.c.bf16 %v159, %v158
  %v176 = vpack.c.bf16 %v161, %v160
  %v177 = vpack.c.bf16 %v163, %v162
  %v178 = vpack.c.bf16 %v165, %v164
  %v179 = vpack.c.bf16 %v167, %v166
  %v180 = vpack.c.bf16 %v169, %v168
  %v181 = vpack.c.bf16 %v171, %v170
  %v182 = vpack.c.bf16 %v173, %v172
  %v183 = vld [vmem:[%s4] sm:$0x1]
  %v185 = vperm.slane %v183, 0
  %vm187 = vcmask 64512
  %v189 = vsel %vm187, %v175, 0
  %v192 = vsel %vm187, %v176, 0
  %v195 = vsel %vm187, %v177, 0
  %v198 = vsel %vm187, %v178, 0
  %v201 = vsel %vm187, %v179, 0
  %v204 = vsel %vm187, %v180, 0
  %v207 = vsel %vm187, %v181, 0
  %v210 = vsel %vm187, %v182, 0
  %vm212 = vcmask 1043456
  %v214 = vsel %vm212, %v174, 0
  %216 = vmatpush.bf16.msra.mxu0 0
  %217 = vmatpush.bf16.msra.mxu0 0
  %218 = vmatpush.bf16.msra.mxu0 0
  %219 = vmatpush.bf16.msra.mxu0 0
  %220 = vmatpush.bf16.msra.mxu0 0
  %221 = vmatpush.bf16.msra.mxu0 0
  %222 = vmatpush.bf16.msra.mxu0 0
  %223 = vmatpush.bf16.msra.mxu0 %v214
  %224 = vmatmul.bf16.gmra.mxu0 %v189
  %v225 = vpop.f32.mrf.mxu0
  %v226 = vadd.f32 %v185, %v225
  %v227 = vpop.f32.mrf.mxu0
  %v228 = vadd.f32 %v185, %v227
  %229 = vmatmul.bf16.gmra.mxu0 %v192
  %v230 = vpop.f32.mrf.mxu0
  %v231 = vadd.f32 %v185, %v230
  %v232 = vpop.f32.mrf.mxu0
  %v233 = vadd.f32 %v185, %v232
  %234 = vmatmul.bf16.gmra.mxu0 %v195
  %v235 = vpop.f32.mrf.mxu0
  %v236 = vadd.f32 %v185, %v235
  %v237 = vpop.f32.mrf.mxu0
  %v238 = vadd.f32 %v185, %v237
  %239 = vmatmul.bf16.gmra.mxu0 %v198
  %v240 = vpop.f32.mrf.mxu0
  %v241 = vadd.f32 %v185, %v240
  %v242 = vpop.f32.mrf.mxu0
  %v243 = vadd.f32 %v185, %v242
  %244 = vmatmul.bf16.gmra.mxu0 %v201
  %v245 = vpop.f32.mrf.mxu0
  %v246 = vadd.f32 %v185, %v245
  %v247 = vpop.f32.mrf.mxu0
  %v248 = vadd.f32 %v185, %v247
  %249 = vmatmul.bf16.gmra.mxu0 %v204
  %v250 = vpop.f32.mrf.mxu0
  %v251 = vadd.f32 %v185, %v250
  %v252 = vpop.f32.mrf.mxu0
  %v253 = vadd.f32 %v185, %v252
  %254 = vmatmul.bf16.gmra.mxu0 %v207
  %v255 = vpop.f32.mrf.mxu0
  %v256 = vadd.f32 %v185, %v255
  %v257 = vpop.f32.mrf.mxu0
  %v258 = vadd.f32 %v185, %v257
  %259 = vmatmul.bf16.gmra.mxu0 %v210
  %v260 = vpop.f32.mrf.mxu0
  %v261 = vadd.f32 %v185, %v260
  %v262 = vpop.f32.mrf.mxu0
  %v263 = vadd.f32 %v185, %v262
  %264 = vdwg.mxu0
  %vm265 = vcmask 261120
  %266 = vst.msk [vmem:[%s8] sm:$0xff] %vm265, %v226
  %267 = vst.msk [vmem:[%s8 + $0x8] sm:$0xff] %vm265, %v228
  %268 = vst.msk [vmem:[%s8 + $0x10] sm:$0xff] %vm265, %v231
  %269 = vst.msk [vmem:[%s8 + $0x18] sm:$0xff] %vm265, %v233
  %270 = vst.msk [vmem:[%s8 + $0x20] sm:$0xff] %vm265, %v236
  %271 = vst.msk [vmem:[%s8 + $0x28] sm:$0xff] %vm265, %v238
  %272 = vst.msk [vmem:[%s8 + $0x30] sm:$0xff] %vm265, %v241
  %273 = vst.msk [vmem:[%s8 + $0x38] sm:$0xff] %vm265, %v243
  %274 = vst.msk [vmem:[%s8 + $0x40] sm:$0xff] %vm265, %v246
  %275 = vst.msk [vmem:[%s8 + $0x48] sm:$0xff] %vm265, %v248
  %276 = vst.msk [vmem:[%s8 + $0x50] sm:$0xff] %vm265, %v251
  %277 = vst.msk [vmem:[%s8 + $0x58] sm:$0xff] %vm265, %v253
  %278 = vst.msk [vmem:[%s8 + $0x60] sm:$0xff] %vm265, %v256
  %279 = vst.msk [vmem:[%s8 + $0x68] sm:$0xff] %vm265, %v258
  %280 = vst.msk [vmem:[%s8 + $0x70] sm:$0xff] %vm265, %v261
  %281 = vst.msk [vmem:[%s8 + $0x78] sm:$0xff] %vm265, %v263
  %v282 = vld [vmem:[%s5] sm:$0xff]
  %v283 = vld [vmem:[%s6] sm:$0xf]
  %v284 = vld [vmem:[%s6 + $0x4] sm:$0xf]
  %v285 = vld [vmem:[%s6 + $0x8] sm:$0xf]
  %v286 = vld [vmem:[%s6 + $0xc] sm:$0xf]
  %v287 = vpack.c.bf16 %v282, %v282
  %v288 = vld [vmem:[%s7] sm:$0x1]
  %v290 = vperm.slane %v288, 0
  %v296 = vunpack.c.l.b16 %v283
  %v297 = vunpack.c.l.b16 %v284
  %v298 = vunpack.c.l.b16 %v285
  %v299 = vunpack.c.l.b16 %v286
  %v300 = vpack.c.b16 %v297, %v296
  %v301 = vpack.c.b16 %v299, %v298
  %v305 = vsel %vm265, %v287, 0
  %307 = vmatpush.bf16.msra.mxu0 0
  %308 = vmatpush.bf16.msra.mxu0 0
  %309 = vmatpush.bf16.msra.mxu0 0
  %310 = vmatpush.bf16.msra.mxu0 0
  %311 = vmatpush.bf16.msra.mxu0 0
  %312 = vmatpush.bf16.msra.mxu0 0
  %313 = vmatpush.bf16.msra.mxu0 %v301
  %314 = vmatpush.bf16.msra.mxu0 %v300
  %315 = vmatmul.bf16.gmra.mxu0 %v305
  %v316 = vpop.f32.mrf.mxu0
  %v317 = vadd.f32 %v290, %v316
  %v318 = vpop.f32.mrf.mxu0
  %319 = vdwg.mxu0
  %v320 = vand.u32 2147483647, %v317
  %v321 = vsub.f32 0.0, %v320
  %v322 = vmul.f32 %v321, 1.442695
  %v323 = vpow.pop %v322
  %vm324 = vcmp.ge.f32.partialorder %v317, 0.0
  %v325 = vadd.f32 %v323, 1.0
  %v326 = vrcp.pop %v325
  %v327 = vmul.f32 %v325, %v326
  %v328 = vsub.f32 1.0, %v327
  %v329 = vmul.f32 %v326, %v328
  %v330 = vadd.f32 %v326, %v329
  %vm331 = vweird.f32 %v325
  %vm332 = vweird.f32 %v326
  %vm333 = vmor %vm331, %vm332
  %v334 = vsel %vm333, %v326, %v330
  %v335 = vand.u32 2147483647, %v325
  %vm336 = vcmp.eq.f32.partialorder %v335, 8.507059e+37
  %v337 = vand.u32 %v325, 2147483648
  %v338 = vor.u32 1.1754944e-38, %v337
  %v339 = vsel %vm336, %v338, %v334
  %v340 = vmul.f32 1.0, %v339
  %v341 = vmul.f32 %v323, %v339
  %v342 = vsel %vm324, %v340, %v341
  %vm343 = vcmask 15360
  %344 = vst.msk [vmem:[%s9] sm:$0xff] %vm343, %v342
  // Predicated region
  $region34: #{conditional_detr_forward.4} parent=0 // pred_check
    _
  $region35: #{conditional_detr_forward.4} parent=0 // pred_check_branch
    %346 = sbr.rel (0) target = $region37
  $region36: #{conditional_detr_forward.4} parent=0 // pred_region
    _
  $region37: #{conditional_detr_forward.4} parent=0 // pred_fallthru
    _
  // Predicated region
  $region38: #{conditional_detr_forward.4} parent=0 // pred_check
    _
  $region39: #{conditional_detr_forward.4} parent=0 // pred_check_branch
    %348 = sbr.rel (0) target = $region41
  $region40: #{conditional_detr_forward.4} parent=0 // pred_region
    _
  $region41: #{conditional_detr_forward.4} parent=0 // pred_fallthru
    _
  // Predicated region
  $region42: #{conditional_detr_forward.4} parent=0 // pred_check
    _
  $region43: #{conditional_detr_forward.4} parent=0 // pred_check_branch
    %350 = sbr.rel (0) target = $region45
  $region44: #{conditional_detr_forward.4} parent=0 // pred_region
    _
  $region45: #{conditional_detr_forward.4} parent=0 // pred_fallthru
    _
  // Predicated region
  $region46: #{conditional_detr_forward.4} parent=0 // pred_check
    _
  $region47: #{conditional_detr_forward.4} parent=0 // pred_check_branch
    %352 = sbr.rel (0) target = $region49
  $region48: #{conditional_detr_forward.4} parent=0 // pred_region
    _
  $region49: #{conditional_detr_forward.4} parent=0 // pred_fallthru
    _

// kernel: conditional_detr_forward.7
$region0: #{conditional_detr_forward.7}
  #allocation0 [shape = 'u32[]', space=smem, size = 0x4, offset = 0x4, fixed_abs, tag = 'smem constant byte address 0x4 - core index']
  #allocation1 [shape = 'u32[72,128]{1,0:T(1,128)}', space=vmem, size = 0x9000, scoped, tag = 'internal scratch']
  %s0 = inlined_call_operand.vmem [shape: f32[16,32], index: 0, kind: input, shape index: {}]
  %s1 = inlined_call_operand.vmem [shape: f32[16,4], index: 1, kind: input, shape index: {}]
  %s2 = inlined_call_operand.vmem [shape: bf16[32,32], index: 2, kind: input, shape index: {}]
  %s3 = inlined_call_operand.vmem [shape: f32[1,32], index: 3, kind: input, shape index: {}]
  %s4 = inlined_call_operand.vmem [shape: bf16[32,32], index: 4, kind: input, shape index: {}]
  %s5 = inlined_call_operand.vmem [shape: f32[1,32], index: 5, kind: input, shape index: {}]
  %s6 = inlined_call_operand.vmem [shape: bf16[32,4], index: 6, kind: input, shape index: {}]
  %s7 = inlined_call_operand.vmem [shape: f32[1,4], index: 7, kind: input, shape index: {}]
  %s8 = inlined_call_operand.vmem [shape: bf16[32,2], index: 8, kind: input, shape index: {}]
  %s9 = inlined_call_operand.vmem [shape: f32[1,2], index: 9, kind: input, shape index: {}]
  %s10 = inlined_call_operand.vmem [shape: f32[16,128], index: 10, kind: output, shape index: {}]
  %s11 = sld [smem:[#allocation0]]
  $region50: #{conditional_detr_forward.7} parent=0
    _
  %s13 = ssub.s32 1, %s11
  %s14 = scalar_select 0, %s13, %s11
  // Predicated region
  $region2: #{conditional_detr_forward.7} parent=0 // pred_check
    _
  $region3: #{conditional_detr_forward.7} parent=0 // pred_check_branch
    %16 = sbr.rel (0) target = $region5
  $region4: #{conditional_detr_forward.7} parent=0 // pred_region
    _
  $region5: #{conditional_detr_forward.7} parent=0 // pred_fallthru
    _
  // Predicated region
  $region6: #{conditional_detr_forward.7} parent=0 // pred_check
    _
  $region7: #{conditional_detr_forward.7} parent=0 // pred_check_branch
    %18 = sbr.rel (0) target = $region9
  $region8: #{conditional_detr_forward.7} parent=0 // pred_region
    _
  $region9: #{conditional_detr_forward.7} parent=0 // pred_fallthru
    _
  // Predicated region
  $region10: #{conditional_detr_forward.7} parent=0 // pred_check
    _
  $region11: #{conditional_detr_forward.7} parent=0 // pred_check_branch
    %20 = sbr.rel (0) target = $region13
  $region12: #{conditional_detr_forward.7} parent=0 // pred_region
    _
  $region13: #{conditional_detr_forward.7} parent=0 // pred_fallthru
    _
  // Predicated region
  $region14: #{conditional_detr_forward.7} parent=0 // pred_check
    _
  $region15: #{conditional_detr_forward.7} parent=0 // pred_check_branch
    %22 = sbr.rel (0) target = $region17
  $region16: #{conditional_detr_forward.7} parent=0 // pred_region
    _
  $region17: #{conditional_detr_forward.7} parent=0 // pred_fallthru
    _
  // Predicated region
  $region18: #{conditional_detr_forward.7} parent=0 // pred_check
    _
  $region19: #{conditional_detr_forward.7} parent=0 // pred_check_branch
    %24 = sbr.rel (0) target = $region21
  $region20: #{conditional_detr_forward.7} parent=0 // pred_region
    _
  $region21: #{conditional_detr_forward.7} parent=0 // pred_fallthru
    _
  // Predicated region
  $region22: #{conditional_detr_forward.7} parent=0 // pred_check
    _
  $region23: #{conditional_detr_forward.7} parent=0 // pred_check_branch
    %26 = sbr.rel (0) target = $region25
  $region24: #{conditional_detr_forward.7} parent=0 // pred_region
    _
  $region25: #{conditional_detr_forward.7} parent=0 // pred_fallthru
    _
  // Predicated region
  $region26: #{conditional_detr_forward.7} parent=0 // pred_check
    _
  $region27: #{conditional_detr_forward.7} parent=0 // pred_check_branch
    %28 = sbr.rel (0) target = $region29
  $region28: #{conditional_detr_forward.7} parent=0 // pred_region
    _
  $region29: #{conditional_detr_forward.7} parent=0 // pred_fallthru
    _
  // Predicated region
  $region30: #{conditional_detr_forward.7} parent=0 // pred_check
    _
  $region31: #{conditional_detr_forward.7} parent=0 // pred_check_branch
    %30 = sbr.rel (0) target = $region33
  $region32: #{conditional_detr_forward.7} parent=0 // pred_region
    _
  $region33: #{conditional_detr_forward.7} parent=0 // pred_fallthru
    _
  // Predicated region
  $region34: #{conditional_detr_forward.7} parent=0 // pred_check
    _
  $region35: #{conditional_detr_forward.7} parent=0 // pred_check_branch
    %32 = sbr.rel (0) target = $region37
  $region36: #{conditional_detr_forward.7} parent=0 // pred_region
    _
  $region37: #{conditional_detr_forward.7} parent=0 // pred_fallthru
    _
  // Predicated region
  $region38: #{conditional_detr_forward.7} parent=0 // pred_check
    _
  $region39: #{conditional_detr_forward.7} parent=0 // pred_check_branch
    %34 = sbr.rel (0) target = $region41
  $region40: #{conditional_detr_forward.7} parent=0 // pred_region
    _
  $region41: #{conditional_detr_forward.7} parent=0 // pred_fallthru
    _
  %v36 = vld [vmem:[%s0] sm:$0xff]
  %v37 = vld [vmem:[%s0 + $0x8] sm:$0xff]
  %v38 = vld [vmem:[%s2] sm:$0xf]
  %v39 = vld [vmem:[%s2 + $0x4] sm:$0xf]
  %v40 = vld [vmem:[%s2 + $0x8] sm:$0xf]
  %v41 = vld [vmem:[%s2 + $0xc] sm:$0xf]
  %v42 = vpack.c.bf16 %v37, %v36
  %v43 = vld [vmem:[%s3] sm:$0x1]
  %v45 = vperm.slane %v43, 0
  %v51 = vunpack.c.l.b16 %v38
  %v52 = vunpack.c.l.b16 %v39
  %v53 = vunpack.c.l.b16 %v40
  %v54 = vunpack.c.l.b16 %v41
  %v55 = vpack.c.b16 %v52, %v51
  %v56 = vpack.c.b16 %v54, %v53
  %vm59 = vcmask 261120
  %v61 = vsel %vm59, %v42, 0
  %63 = vmatpush.bf16.msra.mxu0 0
  %64 = vmatpush.bf16.msra.mxu0 0
  %65 = vmatpush.bf16.msra.mxu0 0
  %66 = vmatpush.bf16.msra.mxu0 0
  %67 = vmatpush.bf16.msra.mxu0 0
  %68 = vmatpush.bf16.msra.mxu0 0
  %69 = vmatpush.bf16.msra.mxu0 %v56
  %70 = vmatpush.bf16.msra.mxu0 %v55
  %71 = vmatmul.bf16.gmra.mxu0 %v61
  %v72 = vpop.f32.mrf.mxu0
  %v73 = vadd.f32 %v45, %v72
  %v74 = vpop.f32.mrf.mxu0
  %v75 = vadd.f32 %v45, %v74
  %76 = vdwg.mxu0
  %v77 = vmax.f32 %v73, 0.0
  %v78 = vmax.f32 %v75, 0.0
  %v79 = vld [vmem:[%s4] sm:$0xf]
  %v80 = vld [vmem:[%s4 + $0x4] sm:$0xf]
  %v81 = vld [vmem:[%s4 + $0x8] sm:$0xf]
  %v82 = vld [vmem:[%s4 + $0xc] sm:$0xf]
  %v83 = vpack.c.bf16 %v78, %v77
  %v84 = vld [vmem:[%s5] sm:$0x1]
  %v86 = vperm.slane %v84, 0
  %v92 = vunpack.c.l.b16 %v79
  %v93 = vunpack.c.l.b16 %v80
  %v94 = vunpack.c.l.b16 %v81
  %v95 = vunpack.c.l.b16 %v82
  %v96 = vpack.c.b16 %v93, %v92
  %v97 = vpack.c.b16 %v95, %v94
  %v101 = vsel %vm59, %v83, 0
  %103 = vmatpush.bf16.msra.mxu0 0
  %104 = vmatpush.bf16.msra.mxu0 0
  %105 = vmatpush.bf16.msra.mxu0 0
  %106 = vmatpush.bf16.msra.mxu0 0
  %107 = vmatpush.bf16.msra.mxu0 0
  %108 = vmatpush.bf16.msra.mxu0 0
  %109 = vmatpush.bf16.msra.mxu0 %v97
  %110 = vmatpush.bf16.msra.mxu0 %v96
  %111 = vmatmul.bf16.gmra.mxu0 %v101
  %v112 = vpop.f32.mrf.mxu0
  %v113 = vadd.f32 %v86, %v112
  %v114 = vpop.f32.mrf.mxu0
  %v115 = vadd.f32 %v86, %v114
  %116 = vdwg.mxu0
  %v117 = vmax.f32 %v113, 0.0
  %v118 = vmax.f32 %v115, 0.0
  %v119 = vld [vmem:[%s6] sm:$0xf]
  %v120 = vld [vmem:[%s6 + $0x4] sm:$0xf]
  %v121 = vld [vmem:[%s6 + $0x8] sm:$0xf]
  %v122 = vld [vmem:[%s6 + $0xc] sm:$0xf]
  %v123 = vpack.c.bf16 %v118, %v117
  %v124 = vld [vmem:[%s7] sm:$0x1]
  %v126 = vperm.slane %v124, 0
  %v132 = vunpack.c.l.b16 %v119
  %v133 = vunpack.c.l.b16 %v120
  %v134 = vunpack.c.l.b16 %v121
  %v135 = vunpack.c.l.b16 %v122
  %v136 = vpack.c.b16 %v133, %v132
  %v137 = vpack.c.b16 %v135, %v134
  %v141 = vsel %vm59, %v123, 0
  %143 = vmatpush.bf16.msra.mxu0 0
  %144 = vmatpush.bf16.msra.mxu0 0
  %145 = vmatpush.bf16.msra.mxu0 0
  %146 = vmatpush.bf16.msra.mxu0 0
  %147 = vmatpush.bf16.msra.mxu0 0
  %148 = vmatpush.bf16.msra.mxu0 0
  %149 = vmatpush.bf16.msra.mxu0 %v137
  %150 = vmatpush.bf16.msra.mxu0 %v136
  %151 = vmatmul.bf16.gmra.mxu0 %v141
  %v152 = vpop.f32.mrf.mxu0
  %v153 = vadd.f32 %v126, %v152
  %v154 = vpop.f32.mrf.mxu0
  %v155 = vadd.f32 %v126, %v154
  %156 = vdwg.mxu0
  %v157 = vld [vmem:[%s1] sm:$0xff]
  %v158 = vld [vmem:[%s1 + $0x8] sm:$0xff]
  %v159 = vmax.f32 %v157, 0.0
  %v160 = vmax.f32 %v158, 0.0
  %v161 = vmin.f32 %v159, 1.0
  %v162 = vmin.f32 %v160, 1.0
  %v163 = vmax.f32 %v161, 1e-05
  %v164 = vmax.f32 %v162, 1e-05
  %v165 = vsub.f32 1.0, %v161
  %v166 = vsub.f32 1.0, %v162
  %v167 = vmax.f32 %v165, 1e-05
  %v168 = vmax.f32 %v166, 1e-05
  %v169 = vlog2.pop %v163
  %v170 = vmul.f32 %v169, 0.6931472
  %v171 = vlog2.pop %v164
  %v172 = vmul.f32 %v171, 0.6931472
  %v173 = vadd.f32 %v153, %v170
  %v174 = vadd.f32 %v155, %v172
  %v175 = vlog2.pop %v167
  %v176 = vmul.f32 %v175, 0.6931472
  %v177 = vlog2.pop %v168
  %v178 = vmul.f32 %v177, 0.6931472
  %v179 = vsub.f32 %v173, %v176
  %v180 = vsub.f32 %v174, %v178
  %v181 = vand.u32 2147483647, %v179
  %v182 = vand.u32 2147483647, %v180
  %v183 = vsub.f32 0.0, %v181
  %v184 = vsub.f32 0.0, %v182
  %v185 = vmul.f32 %v183, 1.442695
  %v186 = vpow.pop %v185
  %v187 = vmul.f32 %v184, 1.442695
  %v188 = vpow.pop %v187
  %vm189 = vcmp.ge.f32.partialorder %v179, 0.0
  %vm190 = vcmp.ge.f32.partialorder %v180, 0.0
  %v191 = vadd.f32 %v186, 1.0
  %v192 = vadd.f32 %v188, 1.0
  %v193 = vrcp.pop %v191
  %v194 = vmul.f32 %v191, %v193
  %v195 = vsub.f32 1.0, %v194
  %v196 = vmul.f32 %v193, %v195
  %v197 = vadd.f32 %v193, %v196
  %vm198 = vweird.f32 %v191
  %vm199 = vweird.f32 %v193
  %vm200 = vmor %vm198, %vm199
  %v201 = vsel %vm200, %v193, %v197
  %v202 = vand.u32 2147483647, %v191
  %vm203 = vcmp.eq.f32.partialorder %v202, 8.507059e+37
  %v204 = vand.u32 %v191, 2147483648
  %v205 = vor.u32 1.1754944e-38, %v204
  %v206 = vsel %vm203, %v205, %v201
  %v207 = vmul.f32 1.0, %v206
  %v208 = vrcp.pop %v192
  %v209 = vmul.f32 %v192, %v208
  %v210 = vsub.f32 1.0, %v209
  %v211 = vmul.f32 %v208, %v210
  %v212 = vadd.f32 %v208, %v211
  %vm213 = vweird.f32 %v192
  %vm214 = vweird.f32 %v208
  %vm215 = vmor %vm213, %vm214
  %v216 = vsel %vm215, %v208, %v212
  %v217 = vand.u32 2147483647, %v192
  %vm218 = vcmp.eq.f32.partialorder %v217, 8.507059e+37
  %v219 = vand.u32 %v192, 2147483648
  %v220 = vor.u32 1.1754944e-38, %v219
  %v221 = vsel %vm218, %v220, %v216
  %v222 = vmul.f32 1.0, %v221
  %v223 = vmul.f32 %v186, %v206
  %v224 = vmul.f32 %v188, %v221
  %v225 = vsel %vm189, %v207, %v223
  %v226 = vsel %vm190, %v222, %v224
  %v227 = vld [vmem:[%s8] sm:$0xf]
  %v228 = vld [vmem:[%s8 + $0x4] sm:$0xf]
  %v229 = vld [vmem:[%s8 + $0x8] sm:$0xf]
  %v230 = vld [vmem:[%s8 + $0xc] sm:$0xf]
  %v231 = vld [vmem:[%s9] sm:$0x1]
  %v233 = vperm.slane %v231, 0
  %v239 = vunpack.c.l.b16 %v227
  %v240 = vunpack.c.l.b16 %v228
  %v241 = vunpack.c.l.b16 %v229
  %v242 = vunpack.c.l.b16 %v230
  %v243 = vpack.c.b16 %v240, %v239
  %v244 = vpack.c.b16 %v242, %v241
  %247 = vmatpush.bf16.msra.mxu0 0
  %248 = vmatpush.bf16.msra.mxu0 0
  %249 = vmatpush.bf16.msra.mxu0 0
  %250 = vmatpush.bf16.msra.mxu0 0
  %251 = vmatpush.bf16.msra.mxu0 0
  %252 = vmatpush.bf16.msra.mxu0 0
  %253 = vmatpush.bf16.msra.mxu0 %v244
  %254 = vmatpush.bf16.msra.mxu0 %v243
  %255 = vmatmul.bf16.gmra.mxu0 %v61
  %v256 = vpop.f32.mrf.mxu0
  %v257 = vadd.f32 %v233, %v256
  %v258 = vpop.f32.mrf.mxu0
  %v259 = vadd.f32 %v233, %v258
  %260 = vdwg.mxu0
  %263 = vrot.lane.b32.xlu0 %v225, 2
  %v264 = vpop.permute.xlu0 %263
  %265 = vrot.lane.b32.xlu0 %v226, 2
  %v266 = vpop.permute.xlu0 %265
  %vm269 = vcmask 15360
  %v270 = vsel %vm269, %v257, %v264
  %v271 = vsel %vm269, %v259, %v266
  %vm272 = vcmask 48128
  %v273 = vsel %vm272, %v270, 0.0
  %v274 = vsel %vm272, %v271, 0.0
  %275 = vst [vmem:[%s10] sm:$0xff] %v273
  %276 = vst [vmem:[%s10 + $0x8] sm:$0xff] %v274
  // Predicated region
  $region42: #{conditional_detr_forward.7} parent=0 // pred_check
    _
  $region43: #{conditional_detr_forward.7} parent=0 // pred_check_branch
    %278 = sbr.rel (0) target = $region45
  $region44: #{conditional_detr_forward.7} parent=0 // pred_region
    _
  $region45: #{conditional_detr_forward.7} parent=0 // pred_fallthru
    _
  // Predicated region
  $region46: #{conditional_detr_forward.7} parent=0 // pred_check
    _
  $region47: #{conditional_detr_forward.7} parent=0 // pred_check_branch
    %280 = sbr.rel (0) target = $region49
  $region48: #{conditional_detr_forward.7} parent=0 // pred_region
    _
  $region49: #{conditional_detr_forward.7} parent=0 // pred_fallthru
    _

// kernel: conditional_detr_forward.6
$region0: #{conditional_detr_forward.6}
  #allocation0 [shape = 'u32[]', space=smem, size = 0x4, offset = 0x4, fixed_abs, tag = 'smem constant byte address 0x4 - core index']
  #allocation1 [shape = 'u32[72,128]{1,0:T(1,128)}', space=vmem, size = 0x9000, scoped, tag = 'internal scratch']
  #allocation2 [shape = 'f32[8,32]{1,0:T(8,128)}', space=vmem, size = 0x1000, scoped, tag = 'scratch operand']
  %s0 = inlined_call_operand.vmem [shape: f32[8,32], index: 0, kind: input, shape index: {}]
  %s1 = inlined_call_operand.vmem [shape: f32[2,64,32], index: 1, kind: input, shape index: {}]
  %s2 = inlined_call_operand.vmem [shape: f32[2,64,32], index: 2, kind: input, shape index: {}]
  %s3 = inlined_call_operand.vmem [shape: f32[2,1,64], index: 3, kind: input, shape index: {}]
  %s4 = inlined_call_operand.vmem [shape: bf16[2,4,32,32], index: 4, kind: input, shape index: {}]
  %s5 = inlined_call_operand.vmem [shape: f32[2,4,1,32], index: 5, kind: input, shape index: {}]
  %s6 = inlined_call_operand.vmem [shape: bf16[2,4,32,32], index: 6, kind: input, shape index: {}]
  %s7 = inlined_call_operand.vmem [shape: f32[2,4,1,32], index: 7, kind: input, shape index: {}]
  %s8 = inlined_call_operand.vmem [shape: f32[2,3,1,32], index: 8, kind: input, shape index: {}]
  %s9 = inlined_call_operand.vmem [shape: f32[2,3,1,32], index: 9, kind: input, shape index: {}]
  %s10 = inlined_call_operand.vmem [shape: bf16[2,32,64], index: 10, kind: input, shape index: {}]
  %s11 = inlined_call_operand.vmem [shape: f32[2,1,64], index: 11, kind: input, shape index: {}]
  %s12 = inlined_call_operand.vmem [shape: bf16[2,64,32], index: 12, kind: input, shape index: {}]
  %s13 = inlined_call_operand.vmem [shape: f32[2,1,32], index: 13, kind: input, shape index: {}]
  %s14 = inlined_call_operand.vmem [shape: f32[1,32], index: 14, kind: input, shape index: {}]
  %s15 = inlined_call_operand.vmem [shape: f32[1,32], index: 15, kind: input, shape index: {}]
  %s16 = inlined_call_operand.vmem [shape: f32[2,2,8,32], index: 16, kind: output, shape index: {}]
  %s17 = sld [smem:[#allocation0]]
  $region101: #{conditional_detr_forward.6} parent=0
    _
  %s19 = ssub.s32 1, %s17
  %s20 = scalar_select 0, %s19, %s17
  loop: start=0, step=1, limit=6
  $region2: #{conditional_detr_forward.6} parent=0 // loop_pre_header
    _
  $region3: #{conditional_detr_forward.6} parent=0 // loop_header
    %s22 = sphi 0, %s26
    %p23 = scmp.ge.s32.totalorder %s22, 6
    %s29 = sphi 0, %s41
    %s30 = sphi 0, %s37
    %s31 = sphi 0, %s29
    %s32 = sphi 0, %s30
    %s33 = sphi 0, %s31
    %s34 = sphi 0, %s32
    %s42 = sphi 0, %s42
    %s44 = sphi 0, %s42
    %s45 = sphi 0, %s44
    %s59 = sphi 0, %s45
    %s65 = sphi 0, %s67
    %s68 = sphi 0, %s65
    %s69 = sphi 0, %s68
    %s85 = sphi 0, %s69
    %s91 = sphi 0, %s93
    %s94 = sphi 0, %s91
    %s95 = sphi 0, %s94
    %s111 = sphi 0, %s95
    %s117 = sphi 0, %s119
    %s120 = sphi 0, %s117
    %s121 = sphi 0, %s120
    %s137 = sphi 0, %s121
    %s143 = sphi 0, %s145
    %s146 = sphi 0, %s143
    %s147 = sphi 0, %s146
    %s163 = sphi 0, %s147
    %s169 = sphi 0, %s171
    %s172 = sphi 0, %s169
    %s173 = sphi 0, %s172
    %s189 = sphi 0, %s173
    %s195 = sphi 0, %s197
    %s198 = sphi 0, %s195
    %s199 = sphi 0, %s198
    %s215 = sphi 0, %s199
    %s221 = sphi 0, %s223
    %s224 = sphi 0, %s221
    %s225 = sphi 0, %s224
    %s241 = sphi 0, %s225
    %s247 = sphi 0, %s249
    %s250 = sphi 0, %s247
    %s251 = sphi 0, %s250
    %s267 = sphi 0, %s251
    %s273 = sphi 0, %s275
    %s276 = sphi 0, %s273
    %s277 = sphi 0, %s276
    %s293 = sphi 0, %s277
    %s299 = sphi 0, %s301
    %s302 = sphi 0, %s299
    %s303 = sphi 0, %s302
    %s319 = sphi 0, %s303
    %s325 = sphi 0, %s327
    %s328 = sphi 0, %s325
    %s329 = sphi 0, %s328
    %s345 = sphi 0, %s329
    %s351 = sphi 0, %s353
    %s354 = sphi 0, %s351
    %s355 = sphi 0, %s354
    %s371 = sphi 0, %s355
    %s377 = sphi 0, %s379
    %s380 = sphi 0, %s377
    %s381 = sphi 0, %s380
    %s397 = sphi 0, %s381
    %s401 = sphi 0, %s401
    %s403 = sphi 0, %s401
    %s404 = sphi 0, %s403
    %s418 = sphi 0, %s404
    %s422 = sphi 0, %s422
    %s424 = sphi 0, %s422
    %s425 = sphi 0, %s424
    %s439 = sphi 0, %s425
    %s447 = sphi 0, %s449
    %s450 = sphi 0, %s447
    %s451 = sphi 0, %s450
    %s467 = sphi 0, %s451
  $region4: #{conditional_detr_forward.6} parent=0 // loop_header_branch
    %25 = sbr.rel (%p23) target = $region8
  $region5: #{conditional_detr_forward.6} parent=0 // loop_body
    %s27 = ssub.s32 %s22, 1
    %s28 = ssub.s32 %s22, 2
    %s35 = sadd.s32 1, %s30
    %p36 = scmp.ge.s32.totalorder %s35, 2
    %s37 = scalar_select %p36, 0, %s35
    %s38 = sadd.s32 1, %s29
    %s39 = scalar_select %p36, %s38, %s29
    %p40 = scmp.ge.s32.totalorder %s39, 2
    %s41 = scalar_select %p40, 0, %s39
    %s43 = sadd.s32 %s42, 1
    %p46 = scmp.eq.s32.totalorder %s22, 3
    %p47 = scmp.ne.s32.totalorder %s42, %s44
    %p48 = scmp.eq.s32.totalorder %s22, 0
    %p49 = por %p47, %p48
    %p50 = scmp.ne.s32.totalorder %s42, %s44
    %p51 = scmp.eq.s32.totalorder %s27, 3
    %p52 = por %p50, %p51
    %p53 = scmp.ne.s32.totalorder %s44, %s45
    %p54 = scmp.eq.s32.totalorder %s27, 0
    %p55 = por %p53, %p54
    %p56 = scmp.ne.s32.totalorder %s44, %s45
    %p57 = scmp.eq.s32.totalorder %s28, 3
    %p58 = por %p56, %p57
    %p60 = scmp.ne.s32.totalorder %s45, %s59
    %p61 = scmp.eq.s32.totalorder %s28, 0
    %p62 = por %p60, %p61
    %s63 = ssub.s32 %s29, %s41
    %p64 = scmp.eq.s32.totalorder %s63, 0
    %s66 = sadd.s32 %s65, 1
    %s67 = scalar_select %p64, %s65, %s66
    %p70 = pneg %p64
    %p71 = scmp.eq.s32.totalorder %s22, 3
    %p72 = por %p70, %p71
    %p73 = scmp.ne.s32.totalorder %s65, %s68
    %p74 = scmp.eq.s32.totalorder %s22, 0
    %p75 = por %p73, %p74
    %p76 = scmp.ne.s32.totalorder %s65, %s68
    %p77 = scmp.eq.s32.totalorder %s27, 3
    %p78 = por %p76, %p77
    %p79 = scmp.ne.s32.totalorder %s68, %s69
    %p80 = scmp.eq.s32.totalorder %s27, 0
    %p81 = por %p79, %p80
    %p82 = scmp.ne.s32.totalorder %s68, %s69
    %p83 = scmp.eq.s32.totalorder %s28, 3
    %p84 = por %p82, %p83
    %p86 = scmp.ne.s32.totalorder %s69, %s85
    %p87 = scmp.eq.s32.totalorder %s28, 0
    %p88 = por %p86, %p87
    %s89 = ssub.s32 %s29, %s41
    %p90 = scmp.eq.s32.totalorder %s89, 0
    %s92 = sadd.s32 %s91, 1
    %s93 = scalar_select %p90, %s91, %s92
    %p96 = pneg %p90
    %p97 = scmp.eq.s32.totalorder %s22, 3
    %p98 = por %p96, %p97
    %p99 = scmp.ne.s32.totalorder %s91, %s94
    %p100 = scmp.eq.s32.totalorder %s22, 0
    %p101 = por %p99, %p100
    %p102 = scmp.ne.s32.totalorder %s91, %s94
    %p103 = scmp.eq.s32.totalorder %s27, 3
    %p104 = por %p102, %p103
    %p105 = scmp.ne.s32.totalorder %s94, %s95
    %p106 = scmp.eq.s32.totalorder %s27, 0
    %p107 = por %p105, %p106
    %p108 = scmp.ne.s32.totalorder %s94, %s95
    %p109 = scmp.eq.s32.totalorder %s28, 3
    %p110 = por %p108, %p109
    %p112 = scmp.ne.s32.totalorder %s95, %s111
    %p113 = scmp.eq.s32.totalorder %s28, 0
    %p114 = por %p112, %p113
    %s115 = ssub.s32 %s29, %s41
    %p116 = scmp.eq.s32.totalorder %s115, 0
    %s118 = sadd.s32 %s117, 1
    %s119 = scalar_select %p116, %s117, %s118
    %p122 = pneg %p116
    %p123 = scmp.eq.s32.totalorder %s22, 3
    %p124 = por %p122, %p123
    %p125 = scmp.ne.s32.totalorder %s117, %s120
    %p126 = scmp.eq.s32.totalorder %s22, 0
    %p127 = por %p125, %p126
    %p128 = scmp.ne.s32.totalorder %s117, %s120
    %p129 = scmp.eq.s32.totalorder %s27, 3
    %p130 = por %p128, %p129
    %p131 = scmp.ne.s32.totalorder %s120, %s121
    %p132 = scmp.eq.s32.totalorder %s27, 0
    %p133 = por %p131, %p132
    %p134 = scmp.ne.s32.totalorder %s120, %s121
    %p135 = scmp.eq.s32.totalorder %s28, 3
    %p136 = por %p134, %p135
    %p138 = scmp.ne.s32.totalorder %s121, %s137
    %p139 = scmp.eq.s32.totalorder %s28, 0
    %p140 = por %p138, %p139
    %s141 = ssub.s32 %s30, %s37
    %p142 = scmp.eq.s32.totalorder %s141, 0
    %s144 = sadd.s32 %s143, 1
    %s145 = scalar_select %p142, %s143, %s144
    %p148 = pneg %p142
    %p149 = scmp.eq.s32.totalorder %s22, 3
    %p150 = por %p148, %p149
    %p151 = scmp.ne.s32.totalorder %s143, %s146
    %p152 = scmp.eq.s32.totalorder %s22, 0
    %p153 = por %p151, %p152
    %p154 = scmp.ne.s32.totalorder %s143, %s146
    %p155 = scmp.eq.s32.totalorder %s27, 3
    %p156 = por %p154, %p155
    %p157 = scmp.ne.s32.totalorder %s146, %s147
    %p158 = scmp.eq.s32.totalorder %s27, 0
    %p159 = por %p157, %p158
    %p160 = scmp.ne.s32.totalorder %s146, %s147
    %p161 = scmp.eq.s32.totalorder %s28, 3
    %p162 = por %p160, %p161
    %p164 = scmp.ne.s32.totalorder %s147, %s163
    %p165 = scmp.eq.s32.totalorder %s28, 0
    %p166 = por %p164, %p165
    %s167 = ssub.s32 %s30, %s37
    %p168 = scmp.eq.s32.totalorder %s167, 0
    %s170 = sadd.s32 %s169, 1
    %s171 = scalar_select %p168, %s169, %s170
    %p174 = pneg %p168
    %p175 = scmp.eq.s32.totalorder %s22, 3
    %p176 = por %p174, %p175
    %p177 = scmp.ne.s32.totalorder %s169, %s172
    %p178 = scmp.eq.s32.totalorder %s22, 0
    %p179 = por %p177, %p178
    %p180 = scmp.ne.s32.totalorder %s169, %s172
    %p181 = scmp.eq.s32.totalorder %s27, 3
    %p182 = por %p180, %p181
    %p183 = scmp.ne.s32.totalorder %s172, %s173
    %p184 = scmp.eq.s32.totalorder %s27, 0
    %p185 = por %p183, %p184
    %p186 = scmp.ne.s32.totalorder %s172, %s173
    %p187 = scmp.eq.s32.totalorder %s28, 3
    %p188 = por %p186, %p187
    %p190 = scmp.ne.s32.totalorder %s173, %s189
    %p191 = scmp.eq.s32.totalorder %s28, 0
    %p192 = por %p190, %p191
    %s193 = ssub.s32 %s30, %s37
    %p194 = scmp.eq.s32.totalorder %s193, 0
    %s196 = sadd.s32 %s195, 1
    %s197 = scalar_select %p194, %s195, %s196
    %p200 = pneg %p194
    %p201 = scmp.eq.s32.totalorder %s22, 3
    %p202 = por %p200, %p201
    %p203 = scmp.ne.s32.totalorder %s195, %s198
    %p204 = scmp.eq.s32.totalorder %s22, 0
    %p205 = por %p203, %p204
    %p206 = scmp.ne.s32.totalorder %s195, %s198
    %p207 = scmp.eq.s32.totalorder %s27, 3
    %p208 = por %p206, %p207
    %p209 = scmp.ne.s32.totalorder %s198, %s199
    %p210 = scmp.eq.s32.totalorder %s27, 0
    %p211 = por %p209, %p210
    %p212 = scmp.ne.s32.totalorder %s198, %s199
    %p213 = scmp.eq.s32.totalorder %s28, 3
    %p214 = por %p212, %p213
    %p216 = scmp.ne.s32.totalorder %s199, %s215
    %p217 = scmp.eq.s32.totalorder %s28, 0
    %p218 = por %p216, %p217
    %s219 = ssub.s32 %s30, %s37
    %p220 = scmp.eq.s32.totalorder %s219, 0
    %s222 = sadd.s32 %s221, 1
    %s223 = scalar_select %p220, %s221, %s222
    %p226 = pneg %p220
    %p227 = scmp.eq.s32.totalorder %s22, 3
    %p228 = por %p226, %p227
    %p229 = scmp.ne.s32.totalorder %s221, %s224
    %p230 = scmp.eq.s32.totalorder %s22, 0
    %p231 = por %p229, %p230
    %p232 = scmp.ne.s32.totalorder %s221, %s224
    %p233 = scmp.eq.s32.totalorder %s27, 3
    %p234 = por %p232, %p233
    %p235 = scmp.ne.s32.totalorder %s224, %s225
    %p236 = scmp.eq.s32.totalorder %s27, 0
    %p237 = por %p235, %p236
    %p238 = scmp.ne.s32.totalorder %s224, %s225
    %p239 = scmp.eq.s32.totalorder %s28, 3
    %p240 = por %p238, %p239
    %p242 = scmp.ne.s32.totalorder %s225, %s241
    %p243 = scmp.eq.s32.totalorder %s28, 0
    %p244 = por %p242, %p243
    %s245 = ssub.s32 %s30, %s37
    %p246 = scmp.eq.s32.totalorder %s245, 0
    %s248 = sadd.s32 %s247, 1
    %s249 = scalar_select %p246, %s247, %s248
    %p252 = pneg %p246
    %p253 = scmp.eq.s32.totalorder %s22, 3
    %p254 = por %p252, %p253
    %p255 = scmp.ne.s32.totalorder %s247, %s250
    %p256 = scmp.eq.s32.totalorder %s22, 0
    %p257 = por %p255, %p256
    %p258 = scmp.ne.s32.totalorder %s247, %s250
    %p259 = scmp.eq.s32.totalorder %s27, 3
    %p260 = por %p258, %p259
    %p261 = scmp.ne.s32.totalorder %s250, %s251
    %p262 = scmp.eq.s32.totalorder %s27, 0
    %p263 = por %p261, %p262
    %p264 = scmp.ne.s32.totalorder %s250, %s251
    %p265 = scmp.eq.s32.totalorder %s28, 3
    %p266 = por %p264, %p265
    %p268 = scmp.ne.s32.totalorder %s251, %s267
    %p269 = scmp.eq.s32.totalorder %s28, 0
    %p270 = por %p268, %p269
    %s271 = ssub.s32 %s30, %s37
    %p272 = scmp.eq.s32.totalorder %s271, 0
    %s274 = sadd.s32 %s273, 1
    %s275 = scalar_select %p272, %s273, %s274
    %p278 = pneg %p272
    %p279 = scmp.eq.s32.totalorder %s22, 3
    %p280 = por %p278, %p279
    %p281 = scmp.ne.s32.totalorder %s273, %s276
    %p282 = scmp.eq.s32.totalorder %s22, 0
    %p283 = por %p281, %p282
    %p284 = scmp.ne.s32.totalorder %s273, %s276
    %p285 = scmp.eq.s32.totalorder %s27, 3
    %p286 = por %p284, %p285
    %p287 = scmp.ne.s32.totalorder %s276, %s277
    %p288 = scmp.eq.s32.totalorder %s27, 0
    %p289 = por %p287, %p288
    %p290 = scmp.ne.s32.totalorder %s276, %s277
    %p291 = scmp.eq.s32.totalorder %s28, 3
    %p292 = por %p290, %p291
    %p294 = scmp.ne.s32.totalorder %s277, %s293
    %p295 = scmp.eq.s32.totalorder %s28, 0
    %p296 = por %p294, %p295
    %s297 = ssub.s32 %s30, %s37
    %p298 = scmp.eq.s32.totalorder %s297, 0
    %s300 = sadd.s32 %s299, 1
    %s301 = scalar_select %p298, %s299, %s300
    %p304 = pneg %p298
    %p305 = scmp.eq.s32.totalorder %s22, 3
    %p306 = por %p304, %p305
    %p307 = scmp.ne.s32.totalorder %s299, %s302
    %p308 = scmp.eq.s32.totalorder %s22, 0
    %p309 = por %p307, %p308
    %p310 = scmp.ne.s32.totalorder %s299, %s302
    %p311 = scmp.eq.s32.totalorder %s27, 3
    %p312 = por %p310, %p311
    %p313 = scmp.ne.s32.totalorder %s302, %s303
    %p314 = scmp.eq.s32.totalorder %s27, 0
    %p315 = por %p313, %p314
    %p316 = scmp.ne.s32.totalorder %s302, %s303
    %p317 = scmp.eq.s32.totalorder %s28, 3
    %p318 = por %p316, %p317
    %p320 = scmp.ne.s32.totalorder %s303, %s319
    %p321 = scmp.eq.s32.totalorder %s28, 0
    %p322 = por %p320, %p321
    %s323 = ssub.s32 %s30, %s37
    %p324 = scmp.eq.s32.totalorder %s323, 0
    %s326 = sadd.s32 %s325, 1
    %s327 = scalar_select %p324, %s325, %s326
    %p330 = pneg %p324
    %p331 = scmp.eq.s32.totalorder %s22, 3
    %p332 = por %p330, %p331
    %p333 = scmp.ne.s32.totalorder %s325, %s328
    %p334 = scmp.eq.s32.totalorder %s22, 0
    %p335 = por %p333, %p334
    %p336 = scmp.ne.s32.totalorder %s325, %s328
    %p337 = scmp.eq.s32.totalorder %s27, 3
    %p338 = por %p336, %p337
    %p339 = scmp.ne.s32.totalorder %s328, %s329
    %p340 = scmp.eq.s32.totalorder %s27, 0
    %p341 = por %p339, %p340
    %p342 = scmp.ne.s32.totalorder %s328, %s329
    %p343 = scmp.eq.s32.totalorder %s28, 3
    %p344 = por %p342, %p343
    %p346 = scmp.ne.s32.totalorder %s329, %s345
    %p347 = scmp.eq.s32.totalorder %s28, 0
    %p348 = por %p346, %p347
    %s349 = ssub.s32 %s30, %s37
    %p350 = scmp.eq.s32.totalorder %s349, 0
    %s352 = sadd.s32 %s351, 1
    %s353 = scalar_select %p350, %s351, %s352
    %p356 = pneg %p350
    %p357 = scmp.eq.s32.totalorder %s22, 3
    %p358 = por %p356, %p357
    %p359 = scmp.ne.s32.totalorder %s351, %s354
    %p360 = scmp.eq.s32.totalorder %s22, 0
    %p361 = por %p359, %p360
    %p362 = scmp.ne.s32.totalorder %s351, %s354
    %p363 = scmp.eq.s32.totalorder %s27, 3
    %p364 = por %p362, %p363
    %p365 = scmp.ne.s32.totalorder %s354, %s355
    %p366 = scmp.eq.s32.totalorder %s27, 0
    %p367 = por %p365, %p366
    %p368 = scmp.ne.s32.totalorder %s354, %s355
    %p369 = scmp.eq.s32.totalorder %s28, 3
    %p370 = por %p368, %p369
    %p372 = scmp.ne.s32.totalorder %s355, %s371
    %p373 = scmp.eq.s32.totalorder %s28, 0
    %p374 = por %p372, %p373
    %s375 = ssub.s32 %s30, %s37
    %p376 = scmp.eq.s32.totalorder %s375, 0
    %s378 = sadd.s32 %s377, 1
    %s379 = scalar_select %p376, %s377, %s378
    %p382 = pneg %p376
    %p383 = scmp.eq.s32.totalorder %s22, 3
    %p384 = por %p382, %p383
    %p385 = scmp.ne.s32.totalorder %s377, %s380
    %p386 = scmp.eq.s32.totalorder %s22, 0
    %p387 = por %p385, %p386
    %p388 = scmp.ne.s32.totalorder %s377, %s380
    %p389 = scmp.eq.s32.totalorder %s27, 3
    %p390 = por %p388, %p389
    %p391 = scmp.ne.s32.totalorder %s380, %s381
    %p392 = scmp.eq.s32.totalorder %s27, 0
    %p393 = por %p391, %p392
    %p394 = scmp.ne.s32.totalorder %s380, %s381
    %p395 = scmp.eq.s32.totalorder %s28, 3
    %p396 = por %p394, %p395
    %p398 = scmp.ne.s32.totalorder %s381, %s397
    %p399 = scmp.eq.s32.totalorder %s28, 0
    %p400 = por %p398, %p399
    %s402 = sadd.s32 %s401, 1
    %p405 = scmp.eq.s32.totalorder %s22, 3
    %p406 = scmp.ne.s32.totalorder %s401, %s403
    %p407 = scmp.eq.s32.totalorder %s22, 0
    %p408 = por %p406, %p407
    %p409 = scmp.ne.s32.totalorder %s401, %s403
    %p410 = scmp.eq.s32.totalorder %s27, 3
    %p411 = por %p409, %p410
    %p412 = scmp.ne.s32.totalorder %s403, %s404
    %p413 = scmp.eq.s32.totalorder %s27, 0
    %p414 = por %p412, %p413
    %p415 = scmp.ne.s32.totalorder %s403, %s404
    %p416 = scmp.eq.s32.totalorder %s28, 3
    %p417 = por %p415, %p416
    %p419 = scmp.ne.s32.totalorder %s404, %s418
    %p420 = scmp.eq.s32.totalorder %s28, 0
    %p421 = por %p419, %p420
    %s423 = sadd.s32 %s422, 1
    %p426 = scmp.eq.s32.totalorder %s22, 3
    %p427 = scmp.ne.s32.totalorder %s422, %s424
    %p428 = scmp.eq.s32.totalorder %s22, 0
    %p429 = por %p427, %p428
    %p430 = scmp.ne.s32.totalorder %s422, %s424
    %p431 = scmp.eq.s32.totalorder %s27, 3
    %p432 = por %p430, %p431
    %p433 = scmp.ne.s32.totalorder %s424, %s425
    %p434 = scmp.eq.s32.totalorder %s27, 0
    %p435 = por %p433, %p434
    %p436 = scmp.ne.s32.totalorder %s424, %s425
    %p437 = scmp.eq.s32.totalorder %s28, 3
    %p438 = por %p436, %p437
    %p440 = scmp.ne.s32.totalorder %s425, %s439
    %p441 = scmp.eq.s32.totalorder %s28, 0
    %p442 = por %p440, %p441
    %s443 = ssub.s32 %s30, %s37
    %s444 = ssub.s32 %s29, %s41
    %s445 = sor.u32 %s443, %s444
    %p446 = scmp.eq.s32.totalorder %s445, 0
    %s448 = sadd.s32 %s447, 1
    %s449 = scalar_select %p446, %s447, %s448
    %p452 = pneg %p446
    %p453 = scmp.eq.s32.totalorder %s22, 3
    %p454 = por %p452, %p453
    %p455 = scmp.ne.s32.totalorder %s447, %s450
    %p456 = scmp.eq.s32.totalorder %s22, 0
    %p457 = por %p455, %p456
    %p458 = scmp.ne.s32.totalorder %s447, %s450
    %p459 = scmp.eq.s32.totalorder %s27, 3
    %p460 = por %p458, %p459
    %p461 = scmp.ne.s32.totalorder %s450, %s451
    %p462 = scmp.eq.s32.totalorder %s27, 0
    %p463 = por %p461, %p462
    %p464 = scmp.ne.s32.totalorder %s450, %s451
    %p465 = scmp.eq.s32.totalorder %s28, 3
    %p466 = por %p464, %p465
    %p468 = scmp.ne.s32.totalorder %s451, %s467
    %p469 = scmp.eq.s32.totalorder %s28, 0
    %p470 = por %p468, %p469
    %p471 = scmp.le.s32.totalorder 1, %s22
    %p472 = scmp.lt.s32.totalorder %s22, 5
    %p473 = pnand %p471, %p472
    %p474 = pneg %p473
    // Predicated region
    $region9: #{conditional_detr_forward.6} parent=5 // pred_check
      _
    $region10: #{conditional_detr_forward.6} parent=5 // pred_check_branch
      %476 = sbr.rel (%p473) target = $region12
    $region11: #{conditional_detr_forward.6} parent=5 // pred_region
      %s477 = ssub.s32 %s22, 1
      // Predicated region
      $region13: #{conditional_detr_forward.6} parent=11 // pred_check
        %p478 = pneg %p55
      $region14: #{conditional_detr_forward.6} parent=11 // pred_check_branch
        %480 = sbr.rel (%p478) target = $region16
      $region15: #{conditional_detr_forward.6} parent=11 // pred_region
        _
      $region16: #{conditional_detr_forward.6} parent=11 // pred_fallthru
        _
      // Predicated region
      $region17: #{conditional_detr_forward.6} parent=11 // pred_check
        %p481 = pneg %p414
      $region18: #{conditional_detr_forward.6} parent=11 // pred_check_branch
        %483 = sbr.rel (%p481) target = $region20
      $region19: #{conditional_detr_forward.6} parent=11 // pred_region
        _
      $region20: #{conditional_detr_forward.6} parent=11 // pred_fallthru
        _
      // Predicated region
      $region21: #{conditional_detr_forward.6} parent=11 // pred_check
        %p484 = pneg %p435
      $region22: #{conditional_detr_forward.6} parent=11 // pred_check_branch
        %486 = sbr.rel (%p484) target = $region24
      $region23: #{conditional_detr_forward.6} parent=11 // pred_region
        _
      $region24: #{conditional_detr_forward.6} parent=11 // pred_fallthru
        _
    $region12: #{conditional_detr_forward.6} parent=5 // pred_fallthru
      _
    %p487 = scmp.lt.s32.totalorder %s22, 4
    // Predicated region
    $region25: #{conditional_detr_forward.6} parent=5 // pred_check
      %p488 = pneg %p487
    $region26: #{conditional_detr_forward.6} parent=5 // pred_check_branch
      %490 = sbr.rel (%p488) target = $region28
    $region27: #{conditional_detr_forward.6} parent=5 // pred_region
      // Predicated region
      $region29: #{conditional_detr_forward.6} parent=27 // pred_check
        %p491 = pneg %p75
      $region30: #{conditional_detr_forward.6} parent=27 // pred_check_branch
        %493 = sbr.rel (%p491) target = $region32
      $region31: #{conditional_detr_forward.6} parent=27 // pred_region
        %p494 = scmp.lt.s32.totalorder %s29, 1
        %s495 = scalar_select %p494, %s29, 1
        %s496 = smul.addr %s495, 8
        %s497 = smul.addr %s496, 8
        %s498 = scalar_lea.vmem %s1, %s497
      $region32: #{conditional_detr_forward.6} parent=27 // pred_fallthru
        _
      // Predicated region
      $region33: #{conditional_detr_forward.6} parent=27 // pred_check
        %p499 = pneg %p101
      $region34: #{conditional_detr_forward.6} parent=27 // pred_check_branch
        %501 = sbr.rel (%p499) target = $region36
      $region35: #{conditional_detr_forward.6} parent=27 // pred_region
        %p502 = scmp.lt.s32.totalorder %s29, 1
        %s503 = scalar_select %p502, %s29, 1
        %s504 = smul.addr %s503, 8
        %s505 = smul.addr %s504, 8
        %s506 = scalar_lea.vmem %s2, %s505
      $region36: #{conditional_detr_forward.6} parent=27 // pred_fallthru
        _
      // Predicated region
      $region37: #{conditional_detr_forward.6} parent=27 // pred_check
        %p507 = pneg %p127
      $region38: #{conditional_detr_forward.6} parent=27 // pred_check_branch
        %509 = sbr.rel (%p507) target = $region40
      $region39: #{conditional_detr_forward.6} parent=27 // pred_region
        %p510 = scmp.lt.s32.totalorder %s29, 1
        %s511 = scalar_select %p510, %s29, 1
        %s512 = scalar_lea.vmem %s3, %s511
      $region40: #{conditional_detr_forward.6} parent=27 // pred_fallthru
        _
      // Predicated region
      $region41: #{conditional_detr_forward.6} parent=27 // pred_check
        %p513 = pneg %p153
      $region42: #{conditional_detr_forward.6} parent=27 // pred_check_branch
        %515 = sbr.rel (%p513) target = $region44
      $region43: #{conditional_detr_forward.6} parent=27 // pred_region
        %p516 = scmp.lt.s32.totalorder %s30, 1
        %s517 = scalar_select %p516, %s30, 1
        %s518 = smul.addr %s517, 16
        %s519 = smul.addr %s518, 4
        %s520 = scalar_lea.vmem %s4, %s519
      $region44: #{conditional_detr_forward.6} parent=27 // pred_fallthru
        _
      // Predicated region
      $region45: #{conditional_detr_forward.6} parent=27 // pred_check
        %p521 = pneg %p179
      $region46: #{conditional_detr_forward.6} parent=27 // pred_check_branch
        %523 = sbr.rel (%p521) target = $region48
      $region47: #{conditional_detr_forward.6} parent=27 // pred_region
        %p524 = scmp.lt.s32.totalorder %s30, 1
        %s525 = scalar_select %p524, %s30, 1
        %s526 = smul.addr %s525, 4
        %s527 = scalar_lea.vmem %s5, %s526
      $region48: #{conditional_detr_forward.6} parent=27 // pred_fallthru
        _
      // Predicated region
      $region49: #{conditional_detr_forward.6} parent=27 // pred_check
        %p528 = pneg %p205
      $region50: #{conditional_detr_forward.6} parent=27 // pred_check_branch
        %530 = sbr.rel (%p528) target = $region52
      $region51: #{conditional_detr_forward.6} parent=27 // pred_region
        %p531 = scmp.lt.s32.totalorder %s30, 1
        %s532 = scalar_select %p531, %s30, 1
        %s533 = smul.addr %s532, 16
        %s534 = smul.addr %s533, 4
        %s535 = scalar_lea.vmem %s6, %s534
      $region52: #{conditional_detr_forward.6} parent=27 // pred_fallthru
        _
      // Predicated region
      $region53: #{conditional_detr_forward.6} parent=27 // pred_check
        %p536 = pneg %p231
      $region54: #{conditional_detr_forward.6} parent=27 // pred_check_branch
        %538 = sbr.rel (%p536) target = $region56
      $region55: #{conditional_detr_forward.6} parent=27 // pred_region
        %p539 = scmp.lt.s32.totalorder %s30, 1
        %s540 = scalar_select %p539, %s30, 1
        %s541 = smul.addr %s540, 4
        %s542 = scalar_lea.vmem %s7, %s541
      $region56: #{conditional_detr_forward.6} parent=27 // pred_fallthru
        _
      // Predicated region
      $region57: #{conditional_detr_forward.6} parent=27 // pred_check
        %p543 = pneg %p257
      $region58: #{conditional_detr_forward.6} parent=27 // pred_check_branch
        %545 = sbr.rel (%p543) target = $region60
      $region59: #{conditional_detr_forward.6} parent=27 // pred_region
        %p546 = scmp.lt.s32.totalorder %s30, 1
        %s547 = scalar_select %p546, %s30, 1
        %s548 = smul.addr %s547, 3
        %s549 = scalar_lea.vmem %s8, %s548
      $region60: #{conditional_detr_forward.6} parent=27 // pred_fallthru
        _
      // Predicated region
      $region61: #{conditional_detr_forward.6} parent=27 // pred_check
        %p550 = pneg %p283
      $region62: #{conditional_detr_forward.6} parent=27 // pred_check_branch
        %552 = sbr.rel (%p550) target = $region64
      $region63: #{conditional_detr_forward.6} parent=27 // pred_region
        %p553 = scmp.lt.s32.totalorder %s30, 1
        %s554 = scalar_select %p553, %s30, 1
        %s555 = smul.addr %s554, 3
        %s556 = scalar_lea.vmem %s9, %s555
      $region64: #{conditional_detr_forward.6} parent=27 // pred_fallthru
        _
      // Predicated region
      $region65: #{conditional_detr_forward.6} parent=27 // pred_check
        %p557 = pneg %p309
      $region66: #{conditional_detr_forward.6} parent=27 // pred_check_branch
        %559 = sbr.rel (%p557) target = $region68
      $region67: #{conditional_detr_forward.6} parent=27 // pred_region
        %p560 = scmp.lt.s32.totalorder %s30, 1
        %s561 = scalar_select %p560, %s30, 1
        %s562 = smul.addr %s561, 4
        %s563 = smul.addr %s562, 4
        %s564 = scalar_lea.vmem %s10, %s563
      $region68: #{conditional_detr_forward.6} parent=27 // pred_fallthru
        _
      // Predicated region
      $region69: #{conditional_detr_forward.6} parent=27 // pred_check
        %p565 = pneg %p335
      $region70: #{conditional_detr_forward.6} parent=27 // pred_check_branch
        %567 = sbr.rel (%p565) target = $region72
      $region71: #{conditional_detr_forward.6} parent=27 // pred_region
        %p568 = scmp.lt.s32.totalorder %s30, 1
        %s569 = scalar_select %p568, %s30, 1
        %s570 = scalar_lea.vmem %s11, %s569
      $region72: #{conditional_detr_forward.6} parent=27 // pred_fallthru
        _
      // Predicated region
      $region73: #{conditional_detr_forward.6} parent=27 // pred_check
        %p571 = pneg %p361
      $region74: #{conditional_detr_forward.6} parent=27 // pred_check_branch
        %573 = sbr.rel (%p571) target = $region76
      $region75: #{conditional_detr_forward.6} parent=27 // pred_region
        %p574 = scmp.lt.s32.totalorder %s30, 1
        %s575 = scalar_select %p574, %s30, 1
        %s576 = smul.addr %s575, 8
        %s577 = smul.addr %s576, 4
        %s578 = scalar_lea.vmem %s12, %s577
      $region76: #{conditional_detr_forward.6} parent=27 // pred_fallthru
        _
      // Predicated region
      $region77: #{conditional_detr_forward.6} parent=27 // pred_check
        %p579 = pneg %p387
      $region78: #{conditional_detr_forward.6} parent=27 // pred_check_branch
        %581 = sbr.rel (%p579) target = $region80
      $region79: #{conditional_detr_forward.6} parent=27 // pred_region
        %p582 = scmp.lt.s32.totalorder %s30, 1
        %s583 = scalar_select %p582, %s30, 1
        %s584 = scalar_lea.vmem %s13, %s583
      $region80: #{conditional_detr_forward.6} parent=27 // pred_fallthru
        _
    $region28: #{conditional_detr_forward.6} parent=5 // pred_fallthru
      _
    %p585 = scmp.le.s32.totalorder 1, %s22
    %p586 = scmp.lt.s32.totalorder %s22, 5
    %p587 = pnand %p585, %p586
    %p588 = pneg %p587
    // Predicated region
    $region81: #{conditional_detr_forward.6} parent=5 // pred_check
      _
    $region82: #{conditional_detr_forward.6} parent=5 // pred_check_branch
      %590 = sbr.rel (%p587) target = $region84
    $region83: #{conditional_detr_forward.6} parent=5 // pred_region
      %s591 = ssub.s32 %s22, 1
      %p592 = pneg %p55
      %p593 = pneg %p52
      %p594 = scmp.lt.s32.totalorder %s31, 1
      %s595 = scalar_select %p594, %s31, 1
      %s596 = smul.addr %s595, 8
      %s597 = smul.addr %s596, 8
      %s598 = scalar_lea.vmem %s1, %s597
      %p599 = pneg %p81
      %p600 = pneg %p78
      %p601 = scmp.lt.s32.totalorder %s31, 1
      %s602 = scalar_select %p601, %s31, 1
      %s603 = smul.addr %s602, 8
      %s604 = smul.addr %s603, 8
      %s605 = scalar_lea.vmem %s2, %s604
      %p606 = pneg %p107
      %p607 = pneg %p104
      %p608 = scmp.lt.s32.totalorder %s31, 1
      %s609 = scalar_select %p608, %s31, 1
      %s610 = scalar_lea.vmem %s3, %s609
      %p611 = pneg %p133
      %p612 = pneg %p130
      %p613 = scmp.lt.s32.totalorder %s32, 1
      %s614 = scalar_select %p613, %s32, 1
      %s615 = smul.addr %s614, 16
      %s616 = smul.addr %s615, 4
      %s617 = scalar_lea.vmem %s4, %s616
      %p618 = pneg %p159
      %p619 = pneg %p156
      %p620 = scmp.lt.s32.totalorder %s32, 1
      %s621 = scalar_select %p620, %s32, 1
      %s622 = smul.addr %s621, 4
      %s623 = scalar_lea.vmem %s5, %s622
      %p624 = pneg %p185
      %p625 = pneg %p182
      %p626 = scmp.lt.s32.totalorder %s32, 1
      %s627 = scalar_select %p626, %s32, 1
      %s628 = smul.addr %s627, 16
      %s629 = smul.addr %s628, 4
      %s630 = scalar_lea.vmem %s6, %s629
      %p631 = pneg %p211
      %p632 = pneg %p208
      %p633 = scmp.lt.s32.totalorder %s32, 1
      %s634 = scalar_select %p633, %s32, 1
      %s635 = smul.addr %s634, 4
      %s636 = scalar_lea.vmem %s7, %s635
      %p637 = pneg %p237
      %p638 = pneg %p234
      %p639 = scmp.lt.s32.totalorder %s32, 1
      %s640 = scalar_select %p639, %s32, 1
      %s641 = smul.addr %s640, 3
      %s642 = scalar_lea.vmem %s8, %s641
      %p643 = pneg %p263
      %p644 = pneg %p260
      %p645 = scmp.lt.s32.totalorder %s32, 1
      %s646 = scalar_select %p645, %s32, 1
      %s647 = smul.addr %s646, 3
      %s648 = scalar_lea.vmem %s9, %s647
      %p649 = pneg %p289
      %p650 = pneg %p286
      %p651 = scmp.lt.s32.totalorder %s32, 1
      %s652 = scalar_select %p651, %s32, 1
      %s653 = smul.addr %s652, 4
      %s654 = smul.addr %s653, 4
      %s655 = scalar_lea.vmem %s10, %s654
      %p656 = pneg %p315
      %p657 = pneg %p312
      %p658 = scmp.lt.s32.totalorder %s32, 1
      %s659 = scalar_select %p658, %s32, 1
      %s660 = scalar_lea.vmem %s11, %s659
      %p661 = pneg %p341
      %p662 = pneg %p338
      %p663 = scmp.lt.s32.totalorder %s32, 1
      %s664 = scalar_select %p663, %s32, 1
      %s665 = smul.addr %s664, 8
      %s666 = smul.addr %s665, 4
      %s667 = scalar_lea.vmem %s12, %s666
      %p668 = pneg %p367
      %p669 = pneg %p364
      %p670 = scmp.lt.s32.totalorder %s32, 1
      %s671 = scalar_select %p670, %s32, 1
      %s672 = scalar_lea.vmem %s13, %s671
      %p673 = pneg %p393
      %p674 = pneg %p390
      %p675 = pneg %p414
      %p676 = pneg %p411
      %p677 = pneg %p435
      %p678 = pneg %p432
      %p679 = pneg %p463
      %p680 = pneg %p460
      %p681 = scmp.lt.s32.totalorder %s32, 1
      %s682 = scalar_select %p681, %s32, 1
      %p683 = scmp.lt.s32.totalorder %s31, 1
      %s684 = scalar_select %p683, %s31, 1
      %s685 = smul.addr %s682, 2
      %s686 = sadd.s32 %s684, %s685
      %s687 = smul.addr %s686, 8
      %s688 = scalar_lea.vmem %s16, %s687
      %p689 = scmp.lt.s32.totalorder %s31, 1
      %s690 = scalar_select %p689, %s31, 1
      %s691 = smul.addr %s690, 8
      %s692 = smul.addr %s691, 8
      %s693 = scalar_lea.vmem %s1, %s692
      %p694 = scmp.lt.s32.totalorder %s31, 1
      %s695 = scalar_select %p694, %s31, 1
      %s696 = smul.addr %s695, 8
      %s697 = smul.addr %s696, 8
      %s698 = scalar_lea.vmem %s2, %s697
      %p699 = scmp.lt.s32.totalorder %s31, 1
      %s700 = scalar_select %p699, %s31, 1
      %s701 = scalar_lea.vmem %s3, %s700
      %p702 = scmp.lt.s32.totalorder %s32, 1
      %s703 = scalar_select %p702, %s32, 1
      %s704 = smul.addr %s703, 16
      %s705 = smul.addr %s704, 4
      %s706 = scalar_lea.vmem %s4, %s705
      %p707 = scmp.lt.s32.totalorder %s32, 1
      %s708 = scalar_select %p707, %s32, 1
      %s709 = smul.addr %s708, 4
      %s710 = scalar_lea.vmem %s5, %s709
      %p711 = scmp.lt.s32.totalorder %s32, 1
      %s712 = scalar_select %p711, %s32, 1
      %s713 = smul.addr %s712, 16
      %s714 = smul.addr %s713, 4
      %s715 = scalar_lea.vmem %s6, %s714
      %p716 = scmp.lt.s32.totalorder %s32, 1
      %s717 = scalar_select %p716, %s32, 1
      %s718 = smul.addr %s717, 4
      %s719 = scalar_lea.vmem %s7, %s718
      %p720 = scmp.lt.s32.totalorder %s32, 1
      %s721 = scalar_select %p720, %s32, 1
      %s722 = smul.addr %s721, 3
      %s723 = scalar_lea.vmem %s8, %s722
      %p724 = scmp.lt.s32.totalorder %s32, 1
      %s725 = scalar_select %p724, %s32, 1
      %s726 = smul.addr %s725, 3
      %s727 = scalar_lea.vmem %s9, %s726
      %p728 = scmp.lt.s32.totalorder %s32, 1
      %s729 = scalar_select %p728, %s32, 1
      %s730 = smul.addr %s729, 4
      %s731 = smul.addr %s730, 4
      %s732 = scalar_lea.vmem %s10, %s731
      %p733 = scmp.lt.s32.totalorder %s32, 1
      %s734 = scalar_select %p733, %s32, 1
      %s735 = scalar_lea.vmem %s11, %s734
      %p736 = scmp.lt.s32.totalorder %s32, 1
      %s737 = scalar_select %p736, %s32, 1
      %s738 = smul.addr %s737, 8
      %s739 = smul.addr %s738, 4
      %s740 = scalar_lea.vmem %s12, %s739
      %p741 = scmp.lt.s32.totalorder %s32, 1
      %s742 = scalar_select %p741, %s32, 1
      %s743 = scalar_lea.vmem %s13, %s742
      %p744 = scmp.lt.s32.totalorder %s32, 1
      %s745 = scalar_select %p744, %s32, 1
      %p746 = scmp.lt.s32.totalorder %s31, 1
      %s747 = scalar_select %p746, %s31, 1
      %s748 = smul.addr %s745, 2
      %s749 = sadd.s32 %s747, %s748
      %s750 = smul.addr %s749, 8
      %s751 = scalar_lea.vmem %s16, %s750
      %p753 = scmp.eq.s32.totalorder %s32, 0
      // Predicated region
      $region85: #{conditional_detr_forward.6} parent=83 // pred_check
        %p754 = pneg %p753
      $region86: #{conditional_detr_forward.6} parent=83 // pred_check_branch
        %756 = sbr.rel (%p754) target = $region88
      $region87: #{conditional_detr_forward.6} parent=83 // pred_region
        %vm757 = vcmask 261120
        %758 = vst.msk [vmem:[#allocation2] sm:$0xff] %vm757, 0.0
      $region88: #{conditional_detr_forward.6} parent=83 // pred_fallthru
        _
      %v759 = vld [vmem:[#allocation2] sm:$0xff]
      %v760 = vld [vmem:[%s0] sm:$0xff]
      %v761 = vld [vmem:[%s693] sm:$0xff]
      %v762 = vld [vmem:[%s693 + $0x8] sm:$0xff]
      %v763 = vld [vmem:[%s693 + $0x10] sm:$0xff]
      %v764 = vld [vmem:[%s693 + $0x18] sm:$0xff]
      %v765 = vld [vmem:[%s693 + $0x20] sm:$0xff]
      %v766 = vld [vmem:[%s693 + $0x28] sm:$0xff]
      %v767 = vld [vmem:[%s693 + $0x30] sm:$0xff]
      %v768 = vld [vmem:[%s693 + $0x38] sm:$0xff]
      %v769 = vld [vmem:[%s698] sm:$0xff]
      %v770 = vld [vmem:[%s698 + $0x8] sm:$0xff]
      %v771 = vld [vmem:[%s698 + $0x10] sm:$0xff]
      %v772 = vld [vmem:[%s698 + $0x18] sm:$0xff]
      %v773 = vld [vmem:[%s698 + $0x20] sm:$0xff]
      %v774 = vld [vmem:[%s698 + $0x28] sm:$0xff]
      %v775 = vld [vmem:[%s698 + $0x30] sm:$0xff]
      %v776 = vld [vmem:[%s698 + $0x38] sm:$0xff]
      %v777 = vld [vmem:[%s701] sm:$0x1]
      %v778 = vld [vmem:[%s723] sm:$0x1]
      %v779 = vld [vmem:[%s723 + $0x1] sm:$0x1]
      %v780 = vld [vmem:[%s723 + $0x2] sm:$0x1]
      %v781 = vld [vmem:[%s727] sm:$0x1]
      %v782 = vld [vmem:[%s727 + $0x1] sm:$0x1]
      %v783 = vld [vmem:[%s727 + $0x2] sm:$0x1]
      %v784 = vadd.f32 %v759, %v760
      %v785 = vld [vmem:[%s706] sm:$0xf]
      %v786 = vld [vmem:[%s706 + $0x4] sm:$0xf]
      %v787 = vld [vmem:[%s706 + $0x8] sm:$0xf]
      %v788 = vld [vmem:[%s706 + $0xc] sm:$0xf]
      %v789 = vld [vmem:[%s706 + $0x10] sm:$0xf]
      %v790 = vld [vmem:[%s706 + $0x14] sm:$0xf]
      %v791 = vld [vmem:[%s706 + $0x18] sm:$0xf]
      %v792 = vld [vmem:[%s706 + $0x1c] sm:$0xf]
      %v793 = vld [vmem:[%s706 + $0x20] sm:$0xf]
      %v794 = vld [vmem:[%s706 + $0x24] sm:$0xf]
      %v795 = vld [vmem:[%s706 + $0x28] sm:$0xf]
      %v796 = vld [vmem:[%s706 + $0x2c] sm:$0xf]
      %v797 = vld [vmem:[%s706 + $0x30] sm:$0xf]
      %v798 = vld [vmem:[%s706 + $0x34] sm:$0xf]
      %v799 = vld [vmem:[%s706 + $0x38] sm:$0xf]
      %v800 = vld [vmem:[%s706 + $0x3c] sm:$0xf]
      %v801 = vld [vmem:[%s710] sm:$0x1]
      %v802 = vld [vmem:[%s710 + $0x1] sm:$0x1]
      %v803 = vld [vmem:[%s710 + $0x2] sm:$0x1]
      %v804 = vld [vmem:[%s710 + $0x3] sm:$0x1]
      %v805 = vpack.c.bf16 %v784, %v784
      %v807 = vperm.slane %v801, 0
      %v813 = vunpack.c.l.b16 %v785
      %v814 = vunpack.c.l.b16 %v786
      %v815 = vunpack.c.l.b16 %v787
      %v816 = vunpack.c.l.b16 %v788
      %v817 = vpack.c.b16 %v814, %v813
      %v818 = vpack.c.b16 %v816, %v815
      %vm821 = vcmask 261120
      %v823 = vsel %vm821, %v805, 0
      %825 = vmatpush.bf16.msra.mxu0 0
      %826 = vmatpush.bf16.msra.mxu0 0
      %827 = vmatpush.bf16.msra.mxu0 0
      %828 = vmatpush.bf16.msra.mxu0 0
      %829 = vmatpush.bf16.msra.mxu0 0
      %830 = vmatpush.bf16.msra.mxu0 0
      %831 = vmatpush.bf16.msra.mxu0 %v818
      %832 = vmatpush.bf16.msra.mxu0 %v817
      %833 = vmatmul.bf16.gmra.mxu0 %v823
      %v834 = vpop.f32.mrf.mxu0
      %v835 = vadd.f32 %v807, %v834
      %v836 = vpop.f32.mrf.mxu0
      %837 = vdwg.mxu0
      %v838 = vpack.c.bf16 %v835, %v835
      %v840 = vperm.slane %v802, 0
      %v846 = vunpack.c.l.b16 %v789
      %v847 = vunpack.c.l.b16 %v790
      %v848 = vunpack.c.l.b16 %v791
      %v849 = vunpack.c.l.b16 %v792
      %v850 = vpack.c.b16 %v847, %v846
      %v851 = vpack.c.b16 %v849, %v848
      %854 = vmatpush.bf16.msra.mxu0 0
      %855 = vmatpush.bf16.msra.mxu0 0
      %856 = vmatpush.bf16.msra.mxu0 0
      %857 = vmatpush.bf16.msra.mxu0 0
      %858 = vmatpush.bf16.msra.mxu0 0
      %859 = vmatpush.bf16.msra.mxu0 0
      %860 = vmatpush.bf16.msra.mxu0 %v851
      %861 = vmatpush.bf16.msra.mxu0 %v850
      %862 = vmatmul.bf16.gmra.mxu0 %v823
      %v863 = vpop.f32.mrf.mxu0
      %v864 = vadd.f32 %v840, %v863
      %v865 = vpop.f32.mrf.mxu0
      %866 = vdwg.mxu0
      %v867 = vpack.c.bf16 %v759, %v759
      %v869 = vperm.slane %v803, 0
      %v875 = vunpack.c.l.b16 %v793
      %v876 = vunpack.c.l.b16 %v794
      %v877 = vunpack.c.l.b16 %v795
      %v878 = vunpack.c.l.b16 %v796
      %v879 = vpack.c.b16 %v876, %v875
      %v880 = vpack.c.b16 %v878, %v877
      %v884 = vsel %vm821, %v867, 0
      %886 = vmatpush.bf16.msra.mxu0 0
      %887 = vmatpush.bf16.msra.mxu0 0
      %888 = vmatpush.bf16.msra.mxu0 0
      %889 = vmatpush.bf16.msra.mxu0 0
      %890 = vmatpush.bf16.msra.mxu0 0
      %891 = vmatpush.bf16.msra.mxu0 0
      %892 = vmatpush.bf16.msra.mxu0 %v880
      %893 = vmatpush.bf16.msra.mxu0 %v879
      %894 = vmatmul.bf16.gmra.mxu0 %v884
      %v895 = vpop.f32.mrf.mxu0
      %v896 = vadd.f32 %v869, %v895
      %v897 = vpop.f32.mrf.mxu0
      %898 = vdwg.mxu0
      %v899 = vpack.c.bf16 %v896, %v896
      %900 = vxpose.xlu0.b32.start [1/16] %v864, 128
      %901 = vxpose.xlu0.b32.cont [2/16] 0.0, 128
      %902 = vxpose.xlu0.b32.cont [3/16] 0.0, 128
      %903 = vxpose.xlu0.b32.cont [4/16] 0.0, 128
      %904 = vxpose.xlu0.b32.cont [5/16] 0.0, 128
      %905 = vxpose.xlu0.b32.cont [6/16] 0.0, 128
      %906 = vxpose.xlu0.b32.cont [7/16] 0.0, 128
      %907 = vxpose.xlu0.b32.cont [8/16] 0.0, 128
      %908 = vxpose.xlu0.b32.cont [9/16] 0.0, 128
      %909 = vxpose.xlu0.b32.cont [10/16] 0.0, 128
      %910 = vxpose.xlu0.b32.cont [11/16] 0.0, 128
      %911 = vxpose.xlu0.b32.cont [12/16] 0.0, 128
      %912 = vxpose.xlu0.b32.cont [13/16] 0.0, 128
      %913 = vxpose.xlu0.b32.cont [14/16] 0.0, 128
      %914 = vxpose.xlu0.b32.cont [15/16] 0.0, 128
      %915 = vxpose.xlu0.b32.end [16/16] 0.0, 128
      %v916 = vpop.trf.xlu0
      %v917 = vpop.trf.xlu0
      %v918 = vpop.trf.xlu0
      %v919 = vpop.trf.xlu0
      %v920 = vpop.trf.xlu0
      %v921 = vpop.trf.xlu0
      %v922 = vpop.trf.xlu0
      %v923 = vpop.trf.xlu0
      %v924 = vpop.trf.xlu0
      %v925 = vpop.trf.xlu0
      %v926 = vpop.trf.xlu0
      %v927 = vpop.trf.xlu0
      %v928 = vpop.trf.xlu0
      %v929 = vpop.trf.xlu0
      %v930 = vpop.trf.xlu0
      %v931 = vpop.trf.xlu0
      %v932 = vpack.c.bf16 %v916, %v916
      %vm933 = vcmask 64512
      %v935 = vsel %vm933, %v838, 0
      %vm937 = vcmask 1043456
      %v939 = vsel %vm937, %v932, 0
      %941 = vmatpush.bf16.msra.mxu0 0
      %942 = vmatpush.bf16.msra.mxu0 0
      %943 = vmatpush.bf16.msra.mxu0 0
      %944 = vmatpush.bf16.msra.mxu0 0
      %945 = vmatpush.bf16.msra.mxu0 0
      %946 = vmatpush.bf16.msra.mxu0 0
      %947 = vmatpush.bf16.msra.mxu0 0
      %948 = vmatpush.bf16.msra.mxu0 %v939
      %949 = vmatmul.bf16.gmra.mxu0 %v935
      %v950 = vpop.f32.mrf.mxu0
      %v951 = vadd.f32 0.0, %v950
      %v952 = vpop.f32.mrf.mxu0
      %953 = vdwg.mxu0
      %v954 = vmul.f32 %v951, 0.35355338
      %v955 = vsel %vm933, %v954, -inf
      %956 = vmax.xlane.f32.xlu0 %v955
      %v957 = vpop.xlane.xlu0 %956
      %v958 = vsub.f32 %v954, %v957
      %v959 = vmul.f32 %v958, 1.442695
      %v960 = vpow.pop %v959
      %v961 = vsel %vm933, %v960, 0.0
      %962 = vadd.xlane.f32.xlu0 %v961
      %v963 = vpop.xlane.xlu0 %962
      %v964 = vrcp.pop %v963
      %v965 = vpack.c.bf16 %v960, %v960
      %v967 = vsel %vm933, %v965, 0
      %v970 = vsel %vm937, %v899, 0
      %972 = vmatpush.bf16.msra.mxu0 0
      %973 = vmatpush.bf16.msra.mxu0 0
      %974 = vmatpush.bf16.msra.mxu0 0
      %975 = vmatpush.bf16.msra.mxu0 0
      %976 = vmatpush.bf16.msra.mxu0 0
      %977 = vmatpush.bf16.msra.mxu0 0
      %978 = vmatpush.bf16.msra.mxu0 0
      %979 = vmatpush.bf16.msra.mxu0 %v970
      %980 = vmatmul.bf16.gmra.mxu0 %v967
      %v981 = vpop.f32.mrf.mxu0
      %v982 = vadd.f32 0.0, %v981
      %v983 = vpop.f32.mrf.mxu0
      %984 = vdwg.mxu0
      %v985 = vmul.f32 %v982, %v964
      %v986 = vpack.c.bf16 %v917, %v917
      %v988 = vunpack.c.l.b16 %v838
      %v989 = vpack.c.b16 %v988, %v988
      %990 = vrot.lane.b32.xlu0 %v989, 120
      %v991 = vpop.permute.xlu0 %990
      %v993 = vsel %vm933, %v991, 0
      %v996 = vsel %vm937, %v986, 0
      %998 = vmatpush.bf16.msra.mxu0 0
      %999 = vmatpush.bf16.msra.mxu0 0
      %1000 = vmatpush.bf16.msra.mxu0 0
      %1001 = vmatpush.bf16.msra.mxu0 0
      %1002 = vmatpush.bf16.msra.mxu0 0
      %1003 = vmatpush.bf16.msra.mxu0 0
      %1004 = vmatpush.bf16.msra.mxu0 0
      %1005 = vmatpush.bf16.msra.mxu0 %v996
      %1006 = vmatmul.bf16.gmra.mxu0 %v993
      %v1007 = vpop.f32.mrf.mxu0
      %v1008 = vadd.f32 0.0, %v1007
      %v1009 = vpop.f32.mrf.mxu0
      %1010 = vdwg.mxu0
      %v1011 = vmul.f32 %v1008, 0.35355338
      %v1012 = vsel %vm933, %v1011, -inf
      %1013 = vmax.xlane.f32.xlu0 %v1012
      %v1014 = vpop.xlane.xlu0 %1013
      %v1015 = vsub.f32 %v1011, %v1014
      %v1016 = vmul.f32 %v1015, 1.442695
      %v1017 = vpow.pop %v1016
      %v1018 = vsel %vm933, %v1017, 0.0
      %1019 = vadd.xlane.f32.xlu0 %v1018
      %v1020 = vpop.xlane.xlu0 %1019
      %v1021 = vrcp.pop %v1020
      %v1022 = vpack.c.bf16 %v1017, %v1017
      %v1024 = vunpack.c.l.b16 %v899
      %v1025 = vpack.c.b16 %v1024, %v1024
      %1026 = vrot.lane.b32.xlu0 %v1025, 120
      %v1027 = vpop.permute.xlu0 %1026
      %v1029 = vsel %vm933, %v1022, 0
      %v1032 = vsel %vm937, %v1027, 0
      %1034 = vmatpush.bf16.msra.mxu0 0
      %1035 = vmatpush.bf16.msra.mxu0 0
      %1036 = vmatpush.bf16.msra.mxu0 0
      %1037 = vmatpush.bf16.msra.mxu0 0
      %1038 = vmatpush.bf16.msra.mxu0 0
      %1039 = vmatpush.bf16.msra.mxu0 0
      %1040 = vmatpush.bf16.msra.mxu0 0
      %1041 = vmatpush.bf16.msra.mxu0 %v1032
      %1042 = vmatmul.bf16.gmra.mxu0 %v1029
      %v1043 = vpop.f32.mrf.mxu0
      %v1044 = vadd.f32 0.0, %v1043
      %v1045 = vpop.f32.mrf.mxu0
      %1046 = vdwg.mxu0
      %v1047 = vmul.f32 %v1044, %v1021
      %v1048 = vpack.c.bf16 %v918, %v918
      %1049 = vrot.lane.b32.xlu0 %v989, 112
      %v1050 = vpop.permute.xlu0 %1049
      %v1052 = vsel %vm933, %v1050, 0
      %v1055 = vsel %vm937, %v1048, 0
      %1057 = vmatpush.bf16.msra.mxu0 0
      %1058 = vmatpush.bf16.msra.mxu0 0
      %1059 = vmatpush.bf16.msra.mxu0 0
      %1060 = vmatpush.bf16.msra.mxu0 0
      %1061 = vmatpush.bf16.msra.mxu0 0
      %1062 = vmatpush.bf16.msra.mxu0 0
      %1063 = vmatpush.bf16.msra.mxu0 0
      %1064 = vmatpush.bf16.msra.mxu0 %v1055
      %1065 = vmatmul.bf16.gmra.mxu0 %v1052
      %v1066 = vpop.f32.mrf.mxu0
      %v1067 = vadd.f32 0.0, %v1066
      %v1068 = vpop.f32.mrf.mxu0
      %1069 = vdwg.mxu0
      %v1070 = vmul.f32 %v1067, 0.35355338
      %v1071 = vsel %vm933, %v1070, -inf
      %1072 = vmax.xlane.f32.xlu0 %v1071
      %v1073 = vpop.xlane.xlu0 %1072
      %v1074 = vsub.f32 %v1070, %v1073
      %v1075 = vmul.f32 %v1074, 1.442695
      %v1076 = vpow.pop %v1075
      %v1077 = vsel %vm933, %v1076, 0.0
      %1078 = vadd.xlane.f32.xlu0 %v1077
      %v1079 = vpop.xlane.xlu0 %1078
      %v1080 = vrcp.pop %v1079
      %v1081 = vpack.c.bf16 %v1076, %v1076
      %1082 = vrot.lane.b32.xlu0 %v1025, 112
      %v1083 = vpop.permute.xlu0 %1082
      %v1085 = vsel %vm933, %v1081, 0
      %v1088 = vsel %vm937, %v1083, 0
      %1090 = vmatpush.bf16.msra.mxu0 0
      %1091 = vmatpush.bf16.msra.mxu0 0
      %1092 = vmatpush.bf16.msra.mxu0 0
      %1093 = vmatpush.bf16.msra.mxu0 0
      %1094 = vmatpush.bf16.msra.mxu0 0
      %1095 = vmatpush.bf16.msra.mxu0 0
      %1096 = vmatpush.bf16.msra.mxu0 0
      %1097 = vmatpush.bf16.msra.mxu0 %v1088
      %1098 = vmatmul.bf16.gmra.mxu0 %v1085
      %v1099 = vpop.f32.mrf.mxu0
      %v1100 = vadd.f32 0.0, %v1099
      %v1101 = vpop.f32.mrf.mxu0
      %1102 = vdwg.mxu0
      %v1103 = vmul.f32 %v1100, %v1080
      %v1104 = vpack.c.bf16 %v919, %v919
      %1105 = vrot.lane.b32.xlu0 %v989, 104
      %v1106 = vpop.permute.xlu0 %1105
      %v1108 = vsel %vm933, %v1106, 0
      %v1111 = vsel %vm937, %v1104, 0
      %1113 = vmatpush.bf16.msra.mxu0 0
      %1114 = vmatpush.bf16.msra.mxu0 0
      %1115 = vmatpush.bf16.msra.mxu0 0
      %1116 = vmatpush.bf16.msra.mxu0 0
      %1117 = vmatpush.bf16.msra.mxu0 0
      %1118 = vmatpush.bf16.msra.mxu0 0
      %1119 = vmatpush.bf16.msra.mxu0 0
      %1120 = vmatpush.bf16.msra.mxu0 %v1111
      %1121 = vmatmul.bf16.gmra.mxu0 %v1108
      %v1122 = vpop.f32.mrf.mxu0
      %v1123 = vadd.f32 0.0, %v1122
      %v1124 = vpop.f32.mrf.mxu0
      %1125 = vdwg.mxu0
      %v1126 = vmul.f32 %v1123, 0.35355338
      %v1127 = vsel %vm933, %v1126, -inf
      %1128 = vmax.xlane.f32.xlu0 %v1127
      %v1129 = vpop.xlane.xlu0 %1128
      %v1130 = vsub.f32 %v1126, %v1129
      %v1131 = vmul.f32 %v1130, 1.442695
      %v1132 = vpow.pop %v1131
      %v1133 = vsel %vm933, %v1132, 0.0
      %1134 = vadd.xlane.f32.xlu0 %v1133
      %v1135 = vpop.xlane.xlu0 %1134
      %v1136 = vrcp.pop %v1135
      %v1137 = vpack.c.bf16 %v1132, %v1132
      %1138 = vrot.lane.b32.xlu0 %v1025, 104
      %v1139 = vpop.permute.xlu0 %1138
      %v1141 = vsel %vm933, %v1137, 0
      %v1144 = vsel %vm937, %v1139, 0
      %1146 = vmatpush.bf16.msra.mxu0 0
      %1147 = vmatpush.bf16.msra.mxu0 0
      %1148 = vmatpush.bf16.msra.mxu0 0
      %1149 = vmatpush.bf16.msra.mxu0 0
      %1150 = vmatpush.bf16.msra.mxu0 0
      %1151 = vmatpush.bf16.msra.mxu0 0
      %1152 = vmatpush.bf16.msra.mxu0 0
      %1153 = vmatpush.bf16.msra.mxu0 %v1144
      %1154 = vmatmul.bf16.gmra.mxu0 %v1141
      %v1155 = vpop.f32.mrf.mxu0
      %v1156 = vadd.f32 0.0, %v1155
      %v1157 = vpop.f32.mrf.mxu0
      %1158 = vdwg.mxu0
      %v1159 = vmul.f32 %v1156, %v1136
      %1161 = vrot.lane.b32.xlu0 %v1047, 8
      %v1162 = vpop.permute.xlu0 %1161
      %1165 = vrot.lane.b32.xlu0 %v1103, 16
      %v1166 = vpop.permute.xlu0 %1165
      %1169 = vrot.lane.b32.xlu0 %v1159, 24
      %v1170 = vpop.permute.xlu0 %1169
      %v1172 = vsel %vm933, %v985, %v1162
      %vm1173 = vcmask 130048
      %v1174 = vsel %vm1173, %v1172, %v1166
      %vm1175 = vcmask 195584
      %v1176 = vsel %vm1175, %v1174, %v1170
      %v1177 = vpack.c.bf16 %v1176, %v1176
      %v1179 = vperm.slane %v804, 0
      %v1185 = vunpack.c.l.b16 %v797
      %v1186 = vunpack.c.l.b16 %v798
      %v1187 = vunpack.c.l.b16 %v799
      %v1188 = vunpack.c.l.b16 %v800
      %v1189 = vpack.c.b16 %v1186, %v1185
      %v1190 = vpack.c.b16 %v1188, %v1187
      %v1194 = vsel %vm821, %v1177, 0
      %1196 = vmatpush.bf16.msra.mxu0 0
      %1197 = vmatpush.bf16.msra.mxu0 0
      %1198 = vmatpush.bf16.msra.mxu0 0
      %1199 = vmatpush.bf16.msra.mxu0 0
      %1200 = vmatpush.bf16.msra.mxu0 0
      %1201 = vmatpush.bf16.msra.mxu0 0
      %1202 = vmatpush.bf16.msra.mxu0 %v1190
      %1203 = vmatpush.bf16.msra.mxu0 %v1189
      %1204 = vmatmul.bf16.gmra.mxu0 %v1194
      %v1205 = vpop.f32.mrf.mxu0
      %v1206 = vadd.f32 %v1179, %v1205
      %v1207 = vpop.f32.mrf.mxu0
      %1208 = vdwg.mxu0
      %v1209 = vadd.f32 %v759, %v1206
      %v1210 = vsel %vm821, %v1209, 0.0
      %1211 = vadd.xlane.f32.xlu0 %v1210
      %v1212 = vpop.xlane.xlu0 %1211
      %v1213 = vrcp.pop 32.0
      %v1214 = vmul.f32 32.0, %v1213
      %v1215 = vsub.f32 1.0, %v1214
      %v1216 = vmul.f32 %v1213, %v1215
      %v1217 = vadd.f32 %v1213, %v1216
      %vm1218 = vweird.f32 %v1213
      %v1219 = vsel %vm1218, %v1213, %v1217
      %v1220 = vmul.f32 %v1212, %v1219
      %v1221 = vsub.f32 %v1209, %v1220
      %v1222 = vmul.f32 %v1221, %v1221
      %v1223 = vsel %vm821, %v1222, 0.0
      %1224 = vadd.xlane.f32.xlu0 %v1223
      %v1225 = vpop.xlane.xlu0 %1224
      %v1226 = vmul.f32 %v1225, %v1219
      %v1227 = vadd.f32 %v1226, 1e-05
      %v1228 = vrsqrt.pop %v1227
      %v1229 = vmul.f32 %v1228, %v1227
      %v1230 = vmul.f32 %v1229, %v1228
      %v1231 = vmul.f32 0.5, %v1230
      %v1232 = vsub.f32 1.5, %v1231
      %v1233 = vmul.f32 %v1228, %v1232
      %vm1234 = vweird.f32 %v1227
      %vm1235 = vweird.f32 %v1228
      %vm1236 = vmor %vm1234, %vm1235
      %v1237 = vsel %vm1236, %v1228, %v1233
      %v1238 = vmul.f32 %v1221, %v1237
      %v1240 = vperm.slane %v778, 0
      %v1242 = vmul.f32 %v1238, %v1240
      %v1244 = vperm.slane %v781, 0
      %v1246 = vadd.f32 %v1242, %v1244
      %v1247 = vadd.f32 %v1246, %v760
      %v1248 = vadd.f32 %v761, %v769
      %v1249 = vadd.f32 %v762, %v770
      %v1250 = vadd.f32 %v763, %v771
      %v1251 = vadd.f32 %v764, %v772
      %v1252 = vadd.f32 %v765, %v773
      %v1253 = vadd.f32 %v766, %v774
      %v1254 = vadd.f32 %v767, %v775
      %v1255 = vadd.f32 %v768, %v776
      %v1256 = vld [vmem:[%s715] sm:$0xf]
      %v1257 = vld [vmem:[%s715 + $0x4] sm:$0xf]
      %v1258 = vld [vmem:[%s715 + $0x8] sm:$0xf]
      %v1259 = vld [vmem:[%s715 + $0xc] sm:$0xf]
      %v1260 = vld [vmem:[%s715 + $0x10] sm:$0xf]
      %v1261 = vld [vmem:[%s715 + $0x14] sm:$0xf]
      %v1262 = vld [vmem:[%s715 + $0x18] sm:$0xf]
      %v1263 = vld [vmem:[%s715 + $0x1c] sm:$0xf]
      %v1264 = vld [vmem:[%s715 + $0x20] sm:$0xf]
      %v1265 = vld [vmem:[%s715 + $0x24] sm:$0xf]
      %v1266 = vld [vmem:[%s715 + $0x28] sm:$0xf]
      %v1267 = vld [vmem:[%s715 + $0x2c] sm:$0xf]
      %v1268 = vld [vmem:[%s715 + $0x30] sm:$0xf]
      %v1269 = vld [vmem:[%s715 + $0x34] sm:$0xf]
      %v1270 = vld [vmem:[%s715 + $0x38] sm:$0xf]
      %v1271 = vld [vmem:[%s715 + $0x3c] sm:$0xf]
      %v1272 = vld [vmem:[%s719] sm:$0x1]
      %v1273 = vld [vmem:[%s719 + $0x1] sm:$0x1]
      %v1274 = vld [vmem:[%s719 + $0x2] sm:$0x1]
      %v1275 = vld [vmem:[%s719 + $0x3] sm:$0x1]
      %v1276 = vpack.c.bf16 %v1247, %v1247
      %v1278 = vperm.slane %v1272, 0
      %v1284 = vunpack.c.l.b16 %v1256
      %v1285 = vunpack.c.l.b16 %v1257
      %v1286 = vunpack.c.l.b16 %v1258
      %v1287 = vunpack.c.l.b16 %v1259
      %v1288 = vpack.c.b16 %v1285, %v1284
      %v1289 = vpack.c.b16 %v1287, %v1286
      %v1293 = vsel %vm821, %v1276, 0
      %1295 = vmatpush.bf16.msra.mxu0 0
      %1296 = vmatpush.bf16.msra.mxu0 0
      %1297 = vmatpush.bf16.msra.mxu0 0
      %1298 = vmatpush.bf16.msra.mxu0 0
      %1299 = vmatpush.bf16.msra.mxu0 0
      %1300 = vmatpush.bf16.msra.mxu0 0
      %1301 = vmatpush.bf16.msra.mxu0 %v1289
      %1302 = vmatpush.bf16.msra.mxu0 %v1288
      %1303 = vmatmul.bf16.gmra.mxu0 %v1293
      %v1304 = vpop.f32.mrf.mxu0
      %v1305 = vadd.f32 %v1278, %v1304
      %v1306 = vpop.f32.mrf.mxu0
      %1307 = vdwg.mxu0
      %v1308 = vpack.c.bf16 %v1305, %v1305
      %v1309 = vpack.c.bf16 %v1249, %v1248
      %v1310 = vpack.c.bf16 %v1251, %v1250
      %v1311 = vpack.c.bf16 %v1253, %v1252
      %v1312 = vpack.c.bf16 %v1255, %v1254
      %v1314 = vperm.slane %v1273, 0
      %v1320 = vunpack.c.l.b16 %v1260
      %v1321 = vunpack.c.l.b16 %v1261
      %v1322 = vunpack.c.l.b16 %v1262
      %v1323 = vunpack.c.l.b16 %v1263
      %v1324 = vpack.c.b16 %v1321, %v1320
      %v1325 = vpack.c.b16 %v1323, %v1322
      %v1329 = vsel %vm821, %v1309, 0
      %v1332 = vsel %vm821, %v1310, 0
      %v1335 = vsel %vm821, %v1311, 0
      %v1338 = vsel %vm821, %v1312, 0
      %1340 = vmatpush.bf16.msra.mxu0 0
      %1341 = vmatpush.bf16.msra.mxu0 0
      %1342 = vmatpush.bf16.msra.mxu0 0
      %1343 = vmatpush.bf16.msra.mxu0 0
      %1344 = vmatpush.bf16.msra.mxu0 0
      %1345 = vmatpush.bf16.msra.mxu0 0
      %1346 = vmatpush.bf16.msra.mxu0 %v1325
      %1347 = vmatpush.bf16.msra.mxu0 %v1324
      %1348 = vmatmul.bf16.gmra.mxu0 %v1329
      %v1349 = vpop.f32.mrf.mxu0
      %v1350 = vadd.f32 %v1314, %v1349
      %v1351 = vpop.f32.mrf.mxu0
      %v1352 = vadd.f32 %v1314, %v1351
      %1353 = vmatmul.bf16.gmra.mxu0 %v1332
      %v1354 = vpop.f32.mrf.mxu0
      %v1355 = vadd.f32 %v1314, %v1354
      %v1356 = vpop.f32.mrf.mxu0
      %v1357 = vadd.f32 %v1314, %v1356
      %1358 = vmatmul.bf16.gmra.mxu0 %v1335
      %v1359 = vpop.f32.mrf.mxu0
      %v1360 = vadd.f32 %v1314, %v1359
      %v1361 = vpop.f32.mrf.mxu0
      %v1362 = vadd.f32 %v1314, %v1361
      %1363 = vmatmul.bf16.gmra.mxu0 %v1338
      %v1364 = vpop.f32.mrf.mxu0
      %v1365 = vadd.f32 %v1314, %v1364
      %v1366 = vpop.f32.mrf.mxu0
      %v1367 = vadd.f32 %v1314, %v1366
      %1368 = vdwg.mxu0
      %v1369 = vpack.c.bf16 %v762, %v761
      %v1370 = vpack.c.bf16 %v764, %v763
      %v1371 = vpack.c.bf16 %v766, %v765
      %v1372 = vpack.c.bf16 %v768, %v767
      %v1374 = vperm.slane %v1274, 0
      %v1380 = vunpack.c.l.b16 %v1264
      %v1381 = vunpack.c.l.b16 %v1265
      %v1382 = vunpack.c.l.b16 %v1266
      %v1383 = vunpack.c.l.b16 %v1267
      %v1384 = vpack.c.b16 %v1381, %v1380
      %v1385 = vpack.c.b16 %v1383, %v1382
      %v1389 = vsel %vm821, %v1369, 0
      %v1392 = vsel %vm821, %v1370, 0
      %v1395 = vsel %vm821, %v1371, 0
      %v1398 = vsel %vm821, %v1372, 0
      %1400 = vmatpush.bf16.msra.mxu0 0
      %1401 = vmatpush.bf16.msra.mxu0 0
      %1402 = vmatpush.bf16.msra.mxu0 0
      %1403 = vmatpush.bf16.msra.mxu0 0
      %1404 = vmatpush.bf16.msra.mxu0 0
      %1405 = vmatpush.bf16.msra.mxu0 0
      %1406 = vmatpush.bf16.msra.mxu0 %v1385
      %1407 = vmatpush.bf16.msra.mxu0 %v1384
      %1408 = vmatmul.bf16.gmra.mxu0 %v1389
      %v1409 = vpop.f32.mrf.mxu0
      %v1410 = vadd.f32 %v1374, %v1409
      %v1411 = vpop.f32.mrf.mxu0
      %v1412 = vadd.f32 %v1374, %v1411
      %1413 = vmatmul.bf16.gmra.mxu0 %v1392
      %v1414 = vpop.f32.mrf.mxu0
      %v1415 = vadd.f32 %v1374, %v1414
      %v1416 = vpop.f32.mrf.mxu0
      %v1417 = vadd.f32 %v1374, %v1416
      %1418 = vmatmul.bf16.gmra.mxu0 %v1395
      %v1419 = vpop.f32.mrf.mxu0
      %v1420 = vadd.f32 %v1374, %v1419
      %v1421 = vpop.f32.mrf.mxu0
      %v1422 = vadd.f32 %v1374, %v1421
      %1423 = vmatmul.bf16.gmra.mxu0 %v1398
      %v1424 = vpop.f32.mrf.mxu0
      %v1425 = vadd.f32 %v1374, %v1424
      %v1426 = vpop.f32.mrf.mxu0
      %v1427 = vadd.f32 %v1374, %v1426
      %1428 = vdwg.mxu0
      %v1429 = vpack.c.bf16 %v1410, %v1410
      %v1430 = vpack.c.bf16 %v1412, %v1412
      %v1431 = vpack.c.bf16 %v1415, %v1415
      %v1432 = vpack.c.bf16 %v1417, %v1417
      %v1433 = vpack.c.bf16 %v1420, %v1420
      %v1434 = vpack.c.bf16 %v1422, %v1422
      %v1435 = vpack.c.bf16 %v1425, %v1425
      %v1436 = vpack.c.bf16 %v1427, %v1427
      %1437 = vxpose.xlu0.b32.start [1/16] %v1350, 128
      %1438 = vxpose.xlu0.b32.cont [2/16] %v1352, 128
      %1439 = vxpose.xlu0.b32.cont [3/16] %v1355, 128
      %1440 = vxpose.xlu0.b32.cont [4/16] %v1357, 128
      %1441 = vxpose.xlu0.b32.cont [5/16] %v1360, 128
      %1442 = vxpose.xlu0.b32.cont [6/16] %v1362, 128
      %1443 = vxpose.xlu0.b32.cont [7/16] %v1365, 128
      %1444 = vxpose.xlu0.b32.cont [8/16] %v1367, 128
      %1445 = vxpose.xlu0.b32.cont [9/16] 0.0, 128
      %1446 = vxpose.xlu0.b32.cont [10/16] 0.0, 128
      %1447 = vxpose.xlu0.b32.cont [11/16] 0.0, 128
      %1448 = vxpose.xlu0.b32.cont [12/16] 0.0, 128
      %1449 = vxpose.xlu0.b32.cont [13/16] 0.0, 128
      %1450 = vxpose.xlu0.b32.cont [14/16] 0.0, 128
      %1451 = vxpose.xlu0.b32.cont [15/16] 0.0, 128
      %1452 = vxpose.xlu0.b32.end [16/16] 0.0, 128
      %v1453 = vpop.trf.xlu0
      %v1454 = vpop.trf.xlu0
      %v1455 = vpop.trf.xlu0
      %v1456 = vpop.trf.xlu0
      %v1457 = vpop.trf.xlu0
      %v1458 = vpop.trf.xlu0
      %v1459 = vpop.trf.xlu0
      %v1460 = vpop.trf.xlu0
      %v1461 = vpop.trf.xlu0
      %v1462 = vpop.trf.xlu0
      %v1463 = vpop.trf.xlu0
      %v1464 = vpop.trf.xlu0
      %v1465 = vpop.trf.xlu0
      %v1466 = vpop.trf.xlu0
      %v1467 = vpop.trf.xlu0
      %v1468 = vpop.trf.xlu0
      %v1469 = vpack.c.bf16 %v1453, %v1453
      %v1471 = vsel %vm933, %v1308, 0
      %v1474 = vsel %vm937, %v1469, 0
      %1476 = vmatpush.bf16.msra.mxu0 0
      %1477 = vmatpush.bf16.msra.mxu0 0
      %1478 = vmatpush.bf16.msra.mxu0 0
      %1479 = vmatpush.bf16.msra.mxu0 0
      %1480 = vmatpush.bf16.msra.mxu0 0
      %1481 = vmatpush.bf16.msra.mxu0 0
      %1482 = vmatpush.bf16.msra.mxu0 0
      %1483 = vmatpush.bf16.msra.mxu0 %v1474
      %1484 = vmatmul.bf16.gmra.mxu0 %v1471
      %v1485 = vpop.f32.mrf.mxu0
      %v1486 = vadd.f32 0.0, %v1485
      %v1487 = vpop.f32.mrf.mxu0
      %1488 = vdwg.mxu0
      %v1489 = vmul.f32 %v1486, 0.35355338
      %v1491 = vperm.slane %v777, 0
      %v1493 = vadd.f32 %v1489, %v1491
      %vm1494 = vcmask 523264
      %v1495 = vsel %vm1494, %v1493, -inf
      %1496 = vmax.xlane.f32.xlu0 %v1495
      %v1497 = vpop.xlane.xlu0 %1496
      %v1498 = vsub.f32 %v1493, %v1497
      %v1499 = vmul.f32 %v1498, 1.442695
      %v1500 = vpow.pop %v1499
      %v1501 = vsel %vm1494, %v1500, 0.0
      %1502 = vadd.xlane.f32.xlu0 %v1501
      %v1503 = vpop.xlane.xlu0 %1502
      %v1504 = vrcp.pop %v1503
      %v1505 = vpack.c.bf16 %v1500, %v1500
      %v1514 = vunpack.c.l.b16 %v1429
      %v1515 = vunpack.c.l.b16 %v1430
      %v1516 = vunpack.c.l.b16 %v1431
      %v1517 = vunpack.c.l.b16 %v1432
      %v1518 = vunpack.c.l.b16 %v1433
      %v1519 = vunpack.c.l.b16 %v1434
      %v1520 = vunpack.c.l.b16 %v1435
      %v1521 = vunpack.c.l.b16 %v1436
      %v1522 = vpack.c.b16 %v1515, %v1514
      %v1523 = vpack.c.b16 %v1517, %v1516
      %v1524 = vpack.c.b16 %v1519, %v1518
      %v1525 = vpack.c.b16 %v1521, %v1520
      %v1531 = vsel %vm1494, %v1505, 0
      %1533 = vmatpush.bf16.msra.mxu0 0
      %1534 = vmatpush.bf16.msra.mxu0 0
      %1535 = vmatpush.bf16.msra.mxu0 0
      %1536 = vmatpush.bf16.msra.mxu0 0
      %1537 = vmatpush.bf16.msra.mxu0 %v1525
      %1538 = vmatpush.bf16.msra.mxu0 %v1524
      %1539 = vmatpush.bf16.msra.mxu0 %v1523
      %1540 = vmatpush.bf16.msra.mxu0 %v1522
      %1541 = vmatmul.bf16.gmra.mxu0 %v1531
      %v1542 = vpop.f32.mrf.mxu0
      %v1543 = vadd.f32 0.0, %v1542
      %v1544 = vpop.f32.mrf.mxu0
      %1545 = vdwg.mxu0
      %v1546 = vmul.f32 %v1543, %v1504
      %v1547 = vpack.c.bf16 %v1454, %v1454
      %v1549 = vunpack.c.l.b16 %v1308
      %v1550 = vpack.c.b16 %v1549, %v1549
      %1551 = vrot.lane.b32.xlu0 %v1550, 120
      %v1552 = vpop.permute.xlu0 %1551
      %v1554 = vsel %vm933, %v1552, 0
      %v1557 = vsel %vm937, %v1547, 0
      %1559 = vmatpush.bf16.msra.mxu0 0
      %1560 = vmatpush.bf16.msra.mxu0 0
      %1561 = vmatpush.bf16.msra.mxu0 0
      %1562 = vmatpush.bf16.msra.mxu0 0
      %1563 = vmatpush.bf16.msra.mxu0 0
      %1564 = vmatpush.bf16.msra.mxu0 0
      %1565 = vmatpush.bf16.msra.mxu0 0
      %1566 = vmatpush.bf16.msra.mxu0 %v1557
      %1567 = vmatmul.bf16.gmra.mxu0 %v1554
      %v1568 = vpop.f32.mrf.mxu0
      %v1569 = vadd.f32 0.0, %v1568
      %v1570 = vpop.f32.mrf.mxu0
      %1571 = vdwg.mxu0
      %v1572 = vmul.f32 %v1569, 0.35355338
      %v1573 = vadd.f32 %v1572, %v1491
      %v1574 = vsel %vm1494, %v1573, -inf
      %1575 = vmax.xlane.f32.xlu0 %v1574
      %v1576 = vpop.xlane.xlu0 %1575
      %v1577 = vsub.f32 %v1573, %v1576
      %v1578 = vmul.f32 %v1577, 1.442695
      %v1579 = vpow.pop %v1578
      %v1580 = vsel %vm1494, %v1579, 0.0
      %1581 = vadd.xlane.f32.xlu0 %v1580
      %v1582 = vpop.xlane.xlu0 %1581
      %v1583 = vrcp.pop %v1582
      %v1584 = vpack.c.bf16 %v1579, %v1579
      %1585 = vrot.lane.b32.xlu0 %v1522, 120
      %v1586 = vpop.permute.xlu0 %1585
      %1587 = vrot.lane.b32.xlu0 %v1523, 120
      %v1588 = vpop.permute.xlu0 %1587
      %1589 = vrot.lane.b32.xlu0 %v1524, 120
      %v1590 = vpop.permute.xlu0 %1589
      %1591 = vrot.lane.b32.xlu0 %v1525, 120
      %v1592 = vpop.permute.xlu0 %1591
      %v1598 = vsel %vm1494, %v1584, 0
      %1600 = vmatpush.bf16.msra.mxu0 0
      %1601 = vmatpush.bf16.msra.mxu0 0
      %1602 = vmatpush.bf16.msra.mxu0 0
      %1603 = vmatpush.bf16.msra.mxu0 0
      %1604 = vmatpush.bf16.msra.mxu0 %v1592
      %1605 = vmatpush.bf16.msra.mxu0 %v1590
      %1606 = vmatpush.bf16.msra.mxu0 %v1588
      %1607 = vmatpush.bf16.msra.mxu0 %v1586
      %1608 = vmatmul.bf16.gmra.mxu0 %v1598
      %v1609 = vpop.f32.mrf.mxu0
      %v1610 = vadd.f32 0.0, %v1609
      %v1611 = vpop.f32.mrf.mxu0
      %1612 = vdwg.mxu0
      %v1613 = vmul.f32 %v1610, %v1583
      %v1614 = vpack.c.bf16 %v1455, %v1455
      %1615 = vrot.lane.b32.xlu0 %v1550, 112
      %v1616 = vpop.permute.xlu0 %1615
      %v1618 = vsel %vm933, %v1616, 0
      %v1621 = vsel %vm937, %v1614, 0
      %1623 = vmatpush.bf16.msra.mxu0 0
      %1624 = vmatpush.bf16.msra.mxu0 0
      %1625 = vmatpush.bf16.msra.mxu0 0
      %1626 = vmatpush.bf16.msra.mxu0 0
      %1627 = vmatpush.bf16.msra.mxu0 0
      %1628 = vmatpush.bf16.msra.mxu0 0
      %1629 = vmatpush.bf16.msra.mxu0 0
      %1630 = vmatpush.bf16.msra.mxu0 %v1621
      %1631 = vmatmul.bf16.gmra.mxu0 %v1618
      %v1632 = vpop.f32.mrf.mxu0
      %v1633 = vadd.f32 0.0, %v1632
      %v1634 = vpop.f32.mrf.mxu0
      %1635 = vdwg.mxu0
      %v1636 = vmul.f32 %v1633, 0.35355338
      %v1637 = vadd.f32 %v1636, %v1491
      %v1638 = vsel %vm1494, %v1637, -inf
      %1639 = vmax.xlane.f32.xlu0 %v1638
      %v1640 = vpop.xlane.xlu0 %1639
      %v1641 = vsub.f32 %v1637, %v1640
      %v1642 = vmul.f32 %v1641, 1.442695
      %v1643 = vpow.pop %v1642
      %v1644 = vsel %vm1494, %v1643, 0.0
      %1645 = vadd.xlane.f32.xlu0 %v1644
      %v1646 = vpop.xlane.xlu0 %1645
      %v1647 = vrcp.pop %v1646
      %v1648 = vpack.c.bf16 %v1643, %v1643
      %1649 = vrot.lane.b32.xlu0 %v1522, 112
      %v1650 = vpop.permute.xlu0 %1649
      %1651 = vrot.lane.b32.xlu0 %v1523, 112
      %v1652 = vpop.permute.xlu0 %1651
      %1653 = vrot.lane.b32.xlu0 %v1524, 112
      %v1654 = vpop.permute.xlu0 %1653
      %1655 = vrot.lane.b32.xlu0 %v1525, 112
      %v1656 = vpop.permute.xlu0 %1655
      %v1662 = vsel %vm1494, %v1648, 0
      %1664 = vmatpush.bf16.msra.mxu0 0
      %1665 = vmatpush.bf16.msra.mxu0 0
      %1666 = vmatpush.bf16.msra.mxu0 0
      %1667 = vmatpush.bf16.msra.mxu0 0
      %1668 = vmatpush.bf16.msra.mxu0 %v1656
      %1669 = vmatpush.bf16.msra.mxu0 %v1654
      %1670 = vmatpush.bf16.msra.mxu0 %v1652
      %1671 = vmatpush.bf16.msra.mxu0 %v1650
      %1672 = vmatmul.bf16.gmra.mxu0 %v1662
      %v1673 = vpop.f32.mrf.mxu0
      %v1674 = vadd.f32 0.0, %v1673
      %v1675 = vpop.f32.mrf.mxu0
      %1676 = vdwg.mxu0
      %v1677 = vmul.f32 %v1674, %v1647
      %v1678 = vpack.c.bf16 %v1456, %v1456
      %1679 = vrot.lane.b32.xlu0 %v1550, 104
      %v1680 = vpop.permute.xlu0 %1679
      %v1682 = vsel %vm933, %v1680, 0
      %v1685 = vsel %vm937, %v1678, 0
      %1687 = vmatpush.bf16.msra.mxu0 0
      %1688 = vmatpush.bf16.msra.mxu0 0
      %1689 = vmatpush.bf16.msra.mxu0 0
      %1690 = vmatpush.bf16.msra.mxu0 0
      %1691 = vmatpush.bf16.msra.mxu0 0
      %1692 = vmatpush.bf16.msra.mxu0 0
      %1693 = vmatpush.bf16.msra.mxu0 0
      %1694 = vmatpush.bf16.msra.mxu0 %v1685
      %1695 = vmatmul.bf16.gmra.mxu0 %v1682
      %v1696 = vpop.f32.mrf.mxu0
      %v1697 = vadd.f32 0.0, %v1696
      %v1698 = vpop.f32.mrf.mxu0
      %1699 = vdwg.mxu0
      %v1700 = vmul.f32 %v1697, 0.35355338
      %v1701 = vadd.f32 %v1700, %v1491
      %v1702 = vsel %vm1494, %v1701, -inf
      %1703 = vmax.xlane.f32.xlu0 %v1702
      %v1704 = vpop.xlane.xlu0 %1703
      %v1705 = vsub.f32 %v1701, %v1704
      %v1706 = vmul.f32 %v1705, 1.442695
      %v1707 = vpow.pop %v1706
      %v1708 = vsel %vm1494, %v1707, 0.0
      %1709 = vadd.xlane.f32.xlu0 %v1708
      %v1710 = vpop.xlane.xlu0 %1709
      %v1711 = vrcp.pop %v1710
      %v1712 = vpack.c.bf16 %v1707, %v1707
      %1713 = vrot.lane.b32.xlu0 %v1522, 104
      %v1714 = vpop.permute.xlu0 %1713
      %1715 = vrot.lane.b32.xlu0 %v1523, 104
      %v1716 = vpop.permute.xlu0 %1715
      %1717 = vrot.lane.b32.xlu0 %v1524, 104
      %v1718 = vpop.permute.xlu0 %1717
      %1719 = vrot.lane.b32.xlu0 %v1525, 104
      %v1720 = vpop.permute.xlu0 %1719
      %v1726 = vsel %vm1494, %v1712, 0
      %1728 = vmatpush.bf16.msra.mxu0 0
      %1729 = vmatpush.bf16.msra.mxu0 0
      %1730 = vmatpush.bf16.msra.mxu0 0
      %1731 = vmatpush.bf16.msra.mxu0 0
      %1732 = vmatpush.bf16.msra.mxu0 %v1720
      %1733 = vmatpush.bf16.msra.mxu0 %v1718
      %1734 = vmatpush.bf16.msra.mxu0 %v1716
      %1735 = vmatpush.bf16.msra.mxu0 %v1714
      %1736 = vmatmul.bf16.gmra.mxu0 %v1726
      %v1737 = vpop.f32.mrf.mxu0
      %v1738 = vadd.f32 0.0, %v1737
      %v1739 = vpop.f32.mrf.mxu0
      %1740 = vdwg.mxu0
      %v1741 = vmul.f32 %v1738, %v1711
      %1743 = vrot.lane.b32.xlu0 %v1613, 8
      %v1744 = vpop.permute.xlu0 %1743
      %1747 = vrot.lane.b32.xlu0 %v1677, 16
      %v1748 = vpop.permute.xlu0 %1747
      %1751 = vrot.lane.b32.xlu0 %v1741, 24
      %v1752 = vpop.permute.xlu0 %1751
      %v1754 = vsel %vm933, %v1546, %v1744
      %v1755 = vsel %vm1173, %v1754, %v1748
      %v1756 = vsel %vm1175, %v1755, %v1752
      %v1757 = vpack.c.bf16 %v1756, %v1756
      %v1759 = vperm.slane %v1275, 0
      %v1765 = vunpack.c.l.b16 %v1268
      %v1766 = vunpack.c.l.b16 %v1269
      %v1767 = vunpack.c.l.b16 %v1270
      %v1768 = vunpack.c.l.b16 %v1271
      %v1769 = vpack.c.b16 %v1766, %v1765
      %v1770 = vpack.c.b16 %v1768, %v1767
      %v1774 = vsel %vm821, %v1757, 0
      %1776 = vmatpush.bf16.msra.mxu0 0
      %1777 = vmatpush.bf16.msra.mxu0 0
      %1778 = vmatpush.bf16.msra.mxu0 0
      %1779 = vmatpush.bf16.msra.mxu0 0
      %1780 = vmatpush.bf16.msra.mxu0 0
      %1781 = vmatpush.bf16.msra.mxu0 0
      %1782 = vmatpush.bf16.msra.mxu0 %v1770
      %1783 = vmatpush.bf16.msra.mxu0 %v1769
      %1784 = vmatmul.bf16.gmra.mxu0 %v1774
      %v1785 = vpop.f32.mrf.mxu0
      %v1786 = vadd.f32 %v1759, %v1785
      %v1787 = vpop.f32.mrf.mxu0
      %1788 = vdwg.mxu0
      %v1789 = vadd.f32 %v1246, %v1786
      %v1790 = vsel %vm821, %v1789, 0.0
      %1791 = vadd.xlane.f32.xlu0 %v1790
      %v1792 = vpop.xlane.xlu0 %1791
      %v1793 = vmul.f32 %v1792, %v1219
      %v1794 = vsub.f32 %v1789, %v1793
      %v1795 = vmul.f32 %v1794, %v1794
      %v1796 = vsel %vm821, %v1795, 0.0
      %1797 = vadd.xlane.f32.xlu0 %v1796
      %v1798 = vpop.xlane.xlu0 %1797
      %v1799 = vmul.f32 %v1798, %v1219
      %v1800 = vadd.f32 %v1799, 1e-05
      %v1801 = vrsqrt.pop %v1800
      %v1802 = vmul.f32 %v1801, %v1800
      %v1803 = vmul.f32 %v1802, %v1801
      %v1804 = vmul.f32 0.5, %v1803
      %v1805 = vsub.f32 1.5, %v1804
      %v1806 = vmul.f32 %v1801, %v1805
      %vm1807 = vweird.f32 %v1800
      %vm1808 = vweird.f32 %v1801
      %vm1809 = vmor %vm1807, %vm1808
      %v1810 = vsel %vm1809, %v1801, %v1806
      %v1811 = vmul.f32 %v1794, %v1810
      %v1813 = vperm.slane %v779, 0
      %v1815 = vmul.f32 %v1811, %v1813
      %v1817 = vperm.slane %v782, 0
      %v1819 = vadd.f32 %v1815, %v1817
      %v1820 = vld [vmem:[%s732] sm:$0xf]
      %v1821 = vld [vmem:[%s732 + $0x4] sm:$0xf]
      %v1822 = vld [vmem:[%s732 + $0x8] sm:$0xf]
      %v1823 = vld [vmem:[%s732 + $0xc] sm:$0xf]
      %v1824 = vpack.c.bf16 %v1819, %v1819
      %v1825 = vld [vmem:[%s735] sm:$0x1]
      %v1827 = vperm.slane %v1825, 0
      %v1833 = vunpack.c.l.b16 %v1820
      %v1834 = vunpack.c.l.b16 %v1821
      %v1835 = vunpack.c.l.b16 %v1822
      %v1836 = vunpack.c.l.b16 %v1823
      %v1837 = vpack.c.b16 %v1834, %v1833
      %v1838 = vpack.c.b16 %v1836, %v1835
      %v1842 = vsel %vm821, %v1824, 0
      %1844 = vmatpush.bf16.msra.mxu0 0
      %1845 = vmatpush.bf16.msra.mxu0 0
      %1846 = vmatpush.bf16.msra.mxu0 0
      %1847 = vmatpush.bf16.msra.mxu0 0
      %1848 = vmatpush.bf16.msra.mxu0 0
      %1849 = vmatpush.bf16.msra.mxu0 0
      %1850 = vmatpush.bf16.msra.mxu0 %v1838
      %1851 = vmatpush.bf16.msra.mxu0 %v1837
      %1852 = vmatmul.bf16.gmra.mxu0 %v1842
      %v1853 = vpop.f32.mrf.mxu0
      %v1854 = vadd.f32 %v1827, %v1853
      %v1855 = vpop.f32.mrf.mxu0
      %1856 = vdwg.mxu0
      %v1857 = vmax.f32 %v1854, 0.0
      %v1858 = vld [vmem:[%s740] sm:$0xf]
      %v1859 = vld [vmem:[%s740 + $0x4] sm:$0xf]
      %v1860 = vld [vmem:[%s740 + $0x8] sm:$0xf]
      %v1861 = vld [vmem:[%s740 + $0xc] sm:$0xf]
      %v1862 = vld [vmem:[%s740 + $0x10] sm:$0xf]
      %v1863 = vld [vmem:[%s740 + $0x14] sm:$0xf]
      %v1864 = vld [vmem:[%s740 + $0x18] sm:$0xf]
      %v1865 = vld [vmem:[%s740 + $0x1c] sm:$0xf]
      %v1866 = vpack.c.bf16 %v1857, %v1857
      %v1867 = vld [vmem:[%s743] sm:$0x1]
      %v1869 = vperm.slane %v1867, 0
      %v1879 = vunpack.c.l.b16 %v1858
      %v1880 = vunpack.c.l.b16 %v1859
      %v1881 = vunpack.c.l.b16 %v1860
      %v1882 = vunpack.c.l.b16 %v1861
      %v1883 = vunpack.c.l.b16 %v1862
      %v1884 = vunpack.c.l.b16 %v1863
      %v1885 = vunpack.c.l.b16 %v1864
      %v1886 = vunpack.c.l.b16 %v1865
      %v1887 = vpack.c.b16 %v1880, %v1879
      %v1888 = vpack.c.b16 %v1882, %v1881
      %v1889 = vpack.c.b16 %v1884, %v1883
      %v1890 = vpack.c.b16 %v1886, %v1885
      %v1896 = vsel %vm1494, %v1866, 0
      %1898 = vmatpush.bf16.msra.mxu0 0
      %1899 = vmatpush.bf16.msra.mxu0 0
      %1900 = vmatpush.bf16.msra.mxu0 0
      %1901 = vmatpush.bf16.msra.mxu0 0
      %1902 = vmatpush.bf16.msra.mxu0 %v1890
      %1903 = vmatpush.bf16.msra.mxu0 %v1889
      %1904 = vmatpush.bf16.msra.mxu0 %v1888
      %1905 = vmatpush.bf16.msra.mxu0 %v1887
      %1906 = vmatmul.bf16.gmra.mxu0 %v1896
      %v1907 = vpop.f32.mrf.mxu0
      %v1908 = vadd.f32 %v1869, %v1907
      %v1909 = vpop.f32.mrf.mxu0
      %1910 = vdwg.mxu0
      %v1911 = vadd.f32 %v1819, %v1908
      %v1912 = vsel %vm821, %v1911, 0.0
      %1913 = vadd.xlane.f32.xlu0 %v1912
      %v1914 = vpop.xlane.xlu0 %1913
      %v1915 = vmul.f32 %v1914, %v1219
      %v1916 = vsub.f32 %v1911, %v1915
      %v1917 = vmul.f32 %v1916, %v1916
      %v1918 = vsel %vm821, %v1917, 0.0
      %1919 = vadd.xlane.f32.xlu0 %v1918
      %v1920 = vpop.xlane.xlu0 %1919
      %v1921 = vmul.f32 %v1920, %v1219
      %v1922 = vadd.f32 %v1921, 1e-05
      %v1923 = vrsqrt.pop %v1922
      %v1924 = vmul.f32 %v1923, %v1922
      %v1925 = vmul.f32 %v1924, %v1923
      %v1926 = vmul.f32 0.5, %v1925
      %v1927 = vsub.f32 1.5, %v1926
      %v1928 = vmul.f32 %v1923, %v1927
      %vm1929 = vweird.f32 %v1922
      %vm1930 = vweird.f32 %v1923
      %vm1931 = vmor %vm1929, %vm1930
      %v1932 = vsel %vm1931, %v1923, %v1928
      %v1933 = vmul.f32 %v1916, %v1932
      %v1935 = vperm.slane %v780, 0
      %v1937 = vmul.f32 %v1933, %v1935
      %v1939 = vperm.slane %v783, 0
      %v1941 = vadd.f32 %v1937, %v1939
      %1942 = vst.msk [vmem:[#allocation2] sm:$0xff] %vm821, %v1941
      %v1943 = vld [vmem:[%s14] sm:$0x1]
      %v1944 = vld [vmem:[%s15] sm:$0x1]
      %v1945 = vsel %vm821, %v1941, 0.0
      %1946 = vadd.xlane.f32.xlu0 %v1945
      %v1947 = vpop.xlane.xlu0 %1946
      %v1948 = vmul.f32 %v1947, %v1219
      %v1949 = vsub.f32 %v1941, %v1948
      %v1950 = vmul.f32 %v1949, %v1949
      %v1951 = vsel %vm821, %v1950, 0.0
      %1952 = vadd.xlane.f32.xlu0 %v1951
      %v1953 = vpop.xlane.xlu0 %1952
      %v1954 = vmul.f32 %v1953, %v1219
      %v1955 = vadd.f32 %v1954, 1e-05
      %v1956 = vrsqrt.pop %v1955
      %v1957 = vmul.f32 %v1956, %v1955
      %v1958 = vmul.f32 %v1957, %v1956
      %v1959 = vmul.f32 0.5, %v1958
      %v1960 = vsub.f32 1.5, %v1959
      %v1961 = vmul.f32 %v1956, %v1960
      %vm1962 = vweird.f32 %v1955
      %vm1963 = vweird.f32 %v1956
      %vm1964 = vmor %vm1962, %vm1963
      %v1965 = vsel %vm1964, %v1956, %v1961
      %v1966 = vmul.f32 %v1949, %v1965
      %v1968 = vperm.slane %v1943, 0
      %v1970 = vmul.f32 %v1966, %v1968
      %v1972 = vperm.slane %v1944, 0
      %v1974 = vadd.f32 %v1970, %v1972
      %1975 = vst.msk [vmem:[%s751] sm:$0xff] %vm821, %v1974
      %p1976 = scmp.lt.s32.totalorder %s32, 1
      %s1977 = scalar_select %p1976, %s32, 1
      %p1978 = scmp.lt.s32.totalorder %s31, 1
      %s1979 = scalar_select %p1978, %s31, 1
      %s1980 = smul.addr %s1977, 2
      %s1981 = sadd.s32 %s1979, %s1980
      %s1982 = smul.addr %s1981, 8
      %s1983 = scalar_lea.vmem %s16, %s1982
      // Predicated region
      $region89: #{conditional_detr_forward.6} parent=83 // pred_check
        %p1984 = pneg %p460
      $region90: #{conditional_detr_forward.6} parent=83 // pred_check_branch
        %1986 = sbr.rel (%p1984) target = $region92
      $region91: #{conditional_detr_forward.6} parent=83 // pred_region
        _
      $region92: #{conditional_detr_forward.6} parent=83 // pred_fallthru
        _
    $region84: #{conditional_detr_forward.6} parent=5 // pred_fallthru
      _
    %p1987 = scmp.le.s32.totalorder 2, %s22
    // Predicated region
    $region93: #{conditional_detr_forward.6} parent=5 // pred_check
      %p1988 = pneg %p1987
    $region94: #{conditional_detr_forward.6} parent=5 // pred_check_branch
      %1990 = sbr.rel (%p1988) target = $region96
    $region95: #{conditional_detr_forward.6} parent=5 // pred_region
      %s1991 = ssub.s32 %s22, 2
      // Predicated region
      $region97: #{conditional_detr_forward.6} parent=95 // pred_check
        %p1992 = pneg %p466
      $region98: #{conditional_detr_forward.6} parent=95 // pred_check_branch
        %1994 = sbr.rel (%p1992) target = $region100
      $region99: #{conditional_detr_forward.6} parent=95 // pred_region
        %p1995 = scmp.lt.s32.totalorder %s34, 1
        %s1996 = scalar_select %p1995, %s34, 1
        %p1997 = scmp.lt.s32.totalorder %s33, 1
        %s1998 = scalar_select %p1997, %s33, 1
        %s1999 = smul.addr %s1996, 2
        %s2000 = sadd.s32 %s1998, %s1999
        %s2001 = smul.addr %s2000, 8
        %s2002 = scalar_lea.vmem %s16, %s2001
      $region100: #{conditional_detr_forward.6} parent=95 // pred_fallthru
        _
    $region96: #{conditional_detr_forward.6} parent=5 // pred_fallthru
      _
  $region6: #{conditional_detr_forward.6} parent=0 // loop_footer
    %s26 = sadd.s32 1, %s22
  $region7: #{conditional_detr_forward.6} parent=0 // loop_footer_branch
    %21 = sbr.rel target = $region3
  $region8: #{conditional_detr_forward.6} parent=0 // loop_exit
    _

// kernel: conditional_detr_forward.5
$region0: #{conditional_detr_forward.5}
  #allocation0 [shape = 'u32[]', space=smem, size = 0x4, offset = 0x4, fixed_abs, tag = 'smem constant byte address 0x4 - core index']
  #allocation1 [shape = 'u32[72,128]{1,0:T(1,128)}', space=vmem, size = 0x9000, scoped, tag = 'internal scratch']
  %s0 = inlined_call_operand.vmem [shape: f32[2,64,32], index: 0, kind: input, shape index: {}]
  %s1 = inlined_call_operand.vmem [shape: f32[2,64,32], index: 1, kind: input, shape index: {}]
  %s2 = inlined_call_operand.vmem [shape: f32[2,1,64], index: 2, kind: input, shape index: {}]
  %s3 = inlined_call_operand.vmem [shape: bf16[1,4,32,32], index: 3, kind: input, shape index: {}]
  %s4 = inlined_call_operand.vmem [shape: f32[1,4,1,32], index: 4, kind: input, shape index: {}]
  %s5 = inlined_call_operand.vmem [shape: f32[1,2,1,32], index: 5, kind: input, shape index: {}]
  %s6 = inlined_call_operand.vmem [shape: f32[1,2,1,32], index: 6, kind: input, shape index: {}]
  %s7 = inlined_call_operand.vmem [shape: bf16[1,32,64], index: 7, kind: input, shape index: {}]
  %s8 = inlined_call_operand.vmem [shape: f32[1,1,64], index: 8, kind: input, shape index: {}]
  %s9 = inlined_call_operand.vmem [shape: bf16[1,64,32], index: 9, kind: input, shape index: {}]
  %s10 = inlined_call_operand.vmem [shape: f32[1,1,32], index: 10, kind: input, shape index: {}]
  %s11 = inlined_call_operand.vmem [shape: f32[2,64,32], index: 11, kind: output, shape index: {}]
  %s12 = sld [smem:[#allocation0]]
  $region81: #{conditional_detr_forward.5} parent=0
    _
  %s14 = ssub.s32 1, %s12
  %s15 = scalar_select 0, %s14, %s12
  loop: start=0, step=1, limit=4
  $region2: #{conditional_detr_forward.5} parent=0 // loop_pre_header
    _
  $region3: #{conditional_detr_forward.5} parent=0 // loop_header
    %s17 = sphi 0, %s21
    %p18 = scmp.ge.s32.totalorder %s17, 4
    %s24 = sphi 0, %s36
    %s25 = sphi 0, %s32
    %s26 = sphi 0, %s24
    %s27 = sphi 0, %s25
    %s28 = sphi 0, %s26
    %s29 = sphi 0, %s27
    %s39 = sphi 0, %s41
    %s42 = sphi 0, %s39
    %s43 = sphi 0, %s42
    %s59 = sphi 0, %s43
    %s65 = sphi 0, %s67
    %s68 = sphi 0, %s65
    %s69 = sphi 0, %s68
    %s85 = sphi 0, %s69
    %s91 = sphi 0, %s93
    %s94 = sphi 0, %s91
    %s95 = sphi 0, %s94
    %s111 = sphi 0, %s95
    %s117 = sphi 0, %s119
    %s120 = sphi 0, %s117
    %s121 = sphi 0, %s120
    %s137 = sphi 0, %s121
    %s143 = sphi 0, %s145
    %s146 = sphi 0, %s143
    %s147 = sphi 0, %s146
    %s163 = sphi 0, %s147
    %s169 = sphi 0, %s171
    %s172 = sphi 0, %s169
    %s173 = sphi 0, %s172
    %s189 = sphi 0, %s173
    %s195 = sphi 0, %s197
    %s198 = sphi 0, %s195
    %s199 = sphi 0, %s198
    %s215 = sphi 0, %s199
    %s221 = sphi 0, %s223
    %s224 = sphi 0, %s221
    %s225 = sphi 0, %s224
    %s241 = sphi 0, %s225
    %s247 = sphi 0, %s249
    %s250 = sphi 0, %s247
    %s251 = sphi 0, %s250
    %s267 = sphi 0, %s251
    %s273 = sphi 0, %s275
    %s276 = sphi 0, %s273
    %s277 = sphi 0, %s276
    %s293 = sphi 0, %s277
    %s299 = sphi 0, %s301
    %s302 = sphi 0, %s299
    %s303 = sphi 0, %s302
    %s319 = sphi 0, %s303
    %s325 = sphi 0, %s327
    %s328 = sphi 0, %s325
    %s329 = sphi 0, %s328
    %s345 = sphi 0, %s329
  $region4: #{conditional_detr_forward.5} parent=0 // loop_header_branch
    %20 = sbr.rel (%p18) target = $region8
  $region5: #{conditional_detr_forward.5} parent=0 // loop_body
    %s22 = ssub.s32 %s17, 1
    %s23 = ssub.s32 %s17, 2
    %s30 = sadd.s32 1, %s25
    %p31 = scmp.ge.s32.totalorder %s30, 1
    %s32 = scalar_select %p31, 0, %s30
    %s33 = sadd.s32 1, %s24
    %s34 = scalar_select %p31, %s33, %s24
    %p35 = scmp.ge.s32.totalorder %s34, 2
    %s36 = scalar_select %p35, 0, %s34
    %s37 = ssub.s32 %s24, %s36
    %p38 = scmp.eq.s32.totalorder %s37, 0
    %s40 = sadd.s32 %s39, 1
    %s41 = scalar_select %p38, %s39, %s40
    %p44 = pneg %p38
    %p45 = scmp.eq.s32.totalorder %s17, 1
    %p46 = por %p44, %p45
    %p47 = scmp.ne.s32.totalorder %s39, %s42
    %p48 = scmp.eq.s32.totalorder %s17, 0
    %p49 = por %p47, %p48
    %p50 = scmp.ne.s32.totalorder %s39, %s42
    %p51 = scmp.eq.s32.totalorder %s22, 1
    %p52 = por %p50, %p51
    %p53 = scmp.ne.s32.totalorder %s42, %s43
    %p54 = scmp.eq.s32.totalorder %s22, 0
    %p55 = por %p53, %p54
    %p56 = scmp.ne.s32.totalorder %s42, %s43
    %p57 = scmp.eq.s32.totalorder %s23, 1
    %p58 = por %p56, %p57
    %p60 = scmp.ne.s32.totalorder %s43, %s59
    %p61 = scmp.eq.s32.totalorder %s23, 0
    %p62 = por %p60, %p61
    %s63 = ssub.s32 %s24, %s36
    %p64 = scmp.eq.s32.totalorder %s63, 0
    %s66 = sadd.s32 %s65, 1
    %s67 = scalar_select %p64, %s65, %s66
    %p70 = pneg %p64
    %p71 = scmp.eq.s32.totalorder %s17, 1
    %p72 = por %p70, %p71
    %p73 = scmp.ne.s32.totalorder %s65, %s68
    %p74 = scmp.eq.s32.totalorder %s17, 0
    %p75 = por %p73, %p74
    %p76 = scmp.ne.s32.totalorder %s65, %s68
    %p77 = scmp.eq.s32.totalorder %s22, 1
    %p78 = por %p76, %p77
    %p79 = scmp.ne.s32.totalorder %s68, %s69
    %p80 = scmp.eq.s32.totalorder %s22, 0
    %p81 = por %p79, %p80
    %p82 = scmp.ne.s32.totalorder %s68, %s69
    %p83 = scmp.eq.s32.totalorder %s23, 1
    %p84 = por %p82, %p83
    %p86 = scmp.ne.s32.totalorder %s69, %s85
    %p87 = scmp.eq.s32.totalorder %s23, 0
    %p88 = por %p86, %p87
    %s89 = ssub.s32 %s24, %s36
    %p90 = scmp.eq.s32.totalorder %s89, 0
    %s92 = sadd.s32 %s91, 1
    %s93 = scalar_select %p90, %s91, %s92
    %p96 = pneg %p90
    %p97 = scmp.eq.s32.totalorder %s17, 1
    %p98 = por %p96, %p97
    %p99 = scmp.ne.s32.totalorder %s91, %s94
    %p100 = scmp.eq.s32.totalorder %s17, 0
    %p101 = por %p99, %p100
    %p102 = scmp.ne.s32.totalorder %s91, %s94
    %p103 = scmp.eq.s32.totalorder %s22, 1
    %p104 = por %p102, %p103
    %p105 = scmp.ne.s32.totalorder %s94, %s95
    %p106 = scmp.eq.s32.totalorder %s22, 0
    %p107 = por %p105, %p106
    %p108 = scmp.ne.s32.totalorder %s94, %s95
    %p109 = scmp.eq.s32.totalorder %s23, 1
    %p110 = por %p108, %p109
    %p112 = scmp.ne.s32.totalorder %s95, %s111
    %p113 = scmp.eq.s32.totalorder %s23, 0
    %p114 = por %p112, %p113
    %s115 = ssub.s32 %s25, %s32
    %p116 = scmp.eq.s32.totalorder %s115, 0
    %s118 = sadd.s32 %s117, 1
    %s119 = scalar_select %p116, %s117, %s118
    %p122 = pneg %p116
    %p123 = scmp.eq.s32.totalorder %s17, 1
    %p124 = por %p122, %p123
    %p125 = scmp.ne.s32.totalorder %s117, %s120
    %p126 = scmp.eq.s32.totalorder %s17, 0
    %p127 = por %p125, %p126
    %p128 = scmp.ne.s32.totalorder %s117, %s120
    %p129 = scmp.eq.s32.totalorder %s22, 1
    %p130 = por %p128, %p129
    %p131 = scmp.ne.s32.totalorder %s120, %s121
    %p132 = scmp.eq.s32.totalorder %s22, 0
    %p133 = por %p131, %p132
    %p134 = scmp.ne.s32.totalorder %s120, %s121
    %p135 = scmp.eq.s32.totalorder %s23, 1
    %p136 = por %p134, %p135
    %p138 = scmp.ne.s32.totalorder %s121, %s137
    %p139 = scmp.eq.s32.totalorder %s23, 0
    %p140 = por %p138, %p139
    %s141 = ssub.s32 %s25, %s32
    %p142 = scmp.eq.s32.totalorder %s141, 0
    %s144 = sadd.s32 %s143, 1
    %s145 = scalar_select %p142, %s143, %s144
    %p148 = pneg %p142
    %p149 = scmp.eq.s32.totalorder %s17, 1
    %p150 = por %p148, %p149
    %p151 = scmp.ne.s32.totalorder %s143, %s146
    %p152 = scmp.eq.s32.totalorder %s17, 0
    %p153 = por %p151, %p152
    %p154 = scmp.ne.s32.totalorder %s143, %s146
    %p155 = scmp.eq.s32.totalorder %s22, 1
    %p156 = por %p154, %p155
    %p157 = scmp.ne.s32.totalorder %s146, %s147
    %p158 = scmp.eq.s32.totalorder %s22, 0
    %p159 = por %p157, %p158
    %p160 = scmp.ne.s32.totalorder %s146, %s147
    %p161 = scmp.eq.s32.totalorder %s23, 1
    %p162 = por %p160, %p161
    %p164 = scmp.ne.s32.totalorder %s147, %s163
    %p165 = scmp.eq.s32.totalorder %s23, 0
    %p166 = por %p164, %p165
    %s167 = ssub.s32 %s25, %s32
    %p168 = scmp.eq.s32.totalorder %s167, 0
    %s170 = sadd.s32 %s169, 1
    %s171 = scalar_select %p168, %s169, %s170
    %p174 = pneg %p168
    %p175 = scmp.eq.s32.totalorder %s17, 1
    %p176 = por %p174, %p175
    %p177 = scmp.ne.s32.totalorder %s169, %s172
    %p178 = scmp.eq.s32.totalorder %s17, 0
    %p179 = por %p177, %p178
    %p180 = scmp.ne.s32.totalorder %s169, %s172
    %p181 = scmp.eq.s32.totalorder %s22, 1
    %p182 = por %p180, %p181
    %p183 = scmp.ne.s32.totalorder %s172, %s173
    %p184 = scmp.eq.s32.totalorder %s22, 0
    %p185 = por %p183, %p184
    %p186 = scmp.ne.s32.totalorder %s172, %s173
    %p187 = scmp.eq.s32.totalorder %s23, 1
    %p188 = por %p186, %p187
    %p190 = scmp.ne.s32.totalorder %s173, %s189
    %p191 = scmp.eq.s32.totalorder %s23, 0
    %p192 = por %p190, %p191
    %s193 = ssub.s32 %s25, %s32
    %p194 = scmp.eq.s32.totalorder %s193, 0
    %s196 = sadd.s32 %s195, 1
    %s197 = scalar_select %p194, %s195, %s196
    %p200 = pneg %p194
    %p201 = scmp.eq.s32.totalorder %s17, 1
    %p202 = por %p200, %p201
    %p203 = scmp.ne.s32.totalorder %s195, %s198
    %p204 = scmp.eq.s32.totalorder %s17, 0
    %p205 = por %p203, %p204
    %p206 = scmp.ne.s32.totalorder %s195, %s198
    %p207 = scmp.eq.s32.totalorder %s22, 1
    %p208 = por %p206, %p207
    %p209 = scmp.ne.s32.totalorder %s198, %s199
    %p210 = scmp.eq.s32.totalorder %s22, 0
    %p211 = por %p209, %p210
    %p212 = scmp.ne.s32.totalorder %s198, %s199
    %p213 = scmp.eq.s32.totalorder %s23, 1
    %p214 = por %p212, %p213
    %p216 = scmp.ne.s32.totalorder %s199, %s215
    %p217 = scmp.eq.s32.totalorder %s23, 0
    %p218 = por %p216, %p217
    %s219 = ssub.s32 %s25, %s32
    %p220 = scmp.eq.s32.totalorder %s219, 0
    %s222 = sadd.s32 %s221, 1
    %s223 = scalar_select %p220, %s221, %s222
    %p226 = pneg %p220
    %p227 = scmp.eq.s32.totalorder %s17, 1
    %p228 = por %p226, %p227
    %p229 = scmp.ne.s32.totalorder %s221, %s224
    %p230 = scmp.eq.s32.totalorder %s17, 0
    %p231 = por %p229, %p230
    %p232 = scmp.ne.s32.totalorder %s221, %s224
    %p233 = scmp.eq.s32.totalorder %s22, 1
    %p234 = por %p232, %p233
    %p235 = scmp.ne.s32.totalorder %s224, %s225
    %p236 = scmp.eq.s32.totalorder %s22, 0
    %p237 = por %p235, %p236
    %p238 = scmp.ne.s32.totalorder %s224, %s225
    %p239 = scmp.eq.s32.totalorder %s23, 1
    %p240 = por %p238, %p239
    %p242 = scmp.ne.s32.totalorder %s225, %s241
    %p243 = scmp.eq.s32.totalorder %s23, 0
    %p244 = por %p242, %p243
    %s245 = ssub.s32 %s25, %s32
    %p246 = scmp.eq.s32.totalorder %s245, 0
    %s248 = sadd.s32 %s247, 1
    %s249 = scalar_select %p246, %s247, %s248
    %p252 = pneg %p246
    %p253 = scmp.eq.s32.totalorder %s17, 1
    %p254 = por %p252, %p253
    %p255 = scmp.ne.s32.totalorder %s247, %s250
    %p256 = scmp.eq.s32.totalorder %s17, 0
    %p257 = por %p255, %p256
    %p258 = scmp.ne.s32.totalorder %s247, %s250
    %p259 = scmp.eq.s32.totalorder %s22, 1
    %p260 = por %p258, %p259
    %p261 = scmp.ne.s32.totalorder %s250, %s251
    %p262 = scmp.eq.s32.totalorder %s22, 0
    %p263 = por %p261, %p262
    %p264 = scmp.ne.s32.totalorder %s250, %s251
    %p265 = scmp.eq.s32.totalorder %s23, 1
    %p266 = por %p264, %p265
    %p268 = scmp.ne.s32.totalorder %s251, %s267
    %p269 = scmp.eq.s32.totalorder %s23, 0
    %p270 = por %p268, %p269
    %s271 = ssub.s32 %s25, %s32
    %p272 = scmp.eq.s32.totalorder %s271, 0
    %s274 = sadd.s32 %s273, 1
    %s275 = scalar_select %p272, %s273, %s274
    %p278 = pneg %p272
    %p279 = scmp.eq.s32.totalorder %s17, 1
    %p280 = por %p278, %p279
    %p281 = scmp.ne.s32.totalorder %s273, %s276
    %p282 = scmp.eq.s32.totalorder %s17, 0
    %p283 = por %p281, %p282
    %p284 = scmp.ne.s32.totalorder %s273, %s276
    %p285 = scmp.eq.s32.totalorder %s22, 1
    %p286 = por %p284, %p285
    %p287 = scmp.ne.s32.totalorder %s276, %s277
    %p288 = scmp.eq.s32.totalorder %s22, 0
    %p289 = por %p287, %p288
    %p290 = scmp.ne.s32.totalorder %s276, %s277
    %p291 = scmp.eq.s32.totalorder %s23, 1
    %p292 = por %p290, %p291
    %p294 = scmp.ne.s32.totalorder %s277, %s293
    %p295 = scmp.eq.s32.totalorder %s23, 0
    %p296 = por %p294, %p295
    %s297 = ssub.s32 %s25, %s32
    %p298 = scmp.eq.s32.totalorder %s297, 0
    %s300 = sadd.s32 %s299, 1
    %s301 = scalar_select %p298, %s299, %s300
    %p304 = pneg %p298
    %p305 = scmp.eq.s32.totalorder %s17, 1
    %p306 = por %p304, %p305
    %p307 = scmp.ne.s32.totalorder %s299, %s302
    %p308 = scmp.eq.s32.totalorder %s17, 0
    %p309 = por %p307, %p308
    %p310 = scmp.ne.s32.totalorder %s299, %s302
    %p311 = scmp.eq.s32.totalorder %s22, 1
    %p312 = por %p310, %p311
    %p313 = scmp.ne.s32.totalorder %s302, %s303
    %p314 = scmp.eq.s32.totalorder %s22, 0
    %p315 = por %p313, %p314
    %p316 = scmp.ne.s32.totalorder %s302, %s303
    %p317 = scmp.eq.s32.totalorder %s23, 1
    %p318 = por %p316, %p317
    %p320 = scmp.ne.s32.totalorder %s303, %s319
    %p321 = scmp.eq.s32.totalorder %s23, 0
    %p322 = por %p320, %p321
    %s323 = ssub.s32 %s24, %s36
    %p324 = scmp.eq.s32.totalorder %s323, 0
    %s326 = sadd.s32 %s325, 1
    %s327 = scalar_select %p324, %s325, %s326
    %p330 = pneg %p324
    %p331 = scmp.eq.s32.totalorder %s17, 1
    %p332 = por %p330, %p331
    %p333 = scmp.ne.s32.totalorder %s325, %s328
    %p334 = scmp.eq.s32.totalorder %s17, 0
    %p335 = por %p333, %p334
    %p336 = scmp.ne.s32.totalorder %s325, %s328
    %p337 = scmp.eq.s32.totalorder %s22, 1
    %p338 = por %p336, %p337
    %p339 = scmp.ne.s32.totalorder %s328, %s329
    %p340 = scmp.eq.s32.totalorder %s22, 0
    %p341 = por %p339, %p340
    %p342 = scmp.ne.s32.totalorder %s328, %s329
    %p343 = scmp.eq.s32.totalorder %s23, 1
    %p344 = por %p342, %p343
    %p346 = scmp.ne.s32.totalorder %s329, %s345
    %p347 = scmp.eq.s32.totalorder %s23, 0
    %p348 = por %p346, %p347
    %p349 = scmp.le.s32.totalorder 1, %s17
    %p350 = scmp.lt.s32.totalorder %s17, 3
    %p351 = pnand %p349, %p350
    %p352 = pneg %p351
    // Predicated region
    $region9: #{conditional_detr_forward.5} parent=5 // pred_check
      _
    $region10: #{conditional_detr_forward.5} parent=5 // pred_check_branch
      %354 = sbr.rel (%p351) target = $region12
    $region11: #{conditional_detr_forward.5} parent=5 // pred_region
      %s355 = ssub.s32 %s17, 1
      // Predicated region
      $region13: #{conditional_detr_forward.5} parent=11 // pred_check
        %p356 = pneg %p133
      $region14: #{conditional_detr_forward.5} parent=11 // pred_check_branch
        %358 = sbr.rel (%p356) target = $region16
      $region15: #{conditional_detr_forward.5} parent=11 // pred_region
        %p359 = scmp.lt.s32.totalorder %s27, 0
        %s360 = scalar_select %p359, %s27, 0
        %s361 = smul.addr %s360, 16
        %s362 = smul.addr %s361, 4
        %s363 = scalar_lea.vmem %s3, %s362
      $region16: #{conditional_detr_forward.5} parent=11 // pred_fallthru
        _
      // Predicated region
      $region17: #{conditional_detr_forward.5} parent=11 // pred_check
        %p364 = pneg %p159
      $region18: #{conditional_detr_forward.5} parent=11 // pred_check_branch
        %366 = sbr.rel (%p364) target = $region20
      $region19: #{conditional_detr_forward.5} parent=11 // pred_region
        %p367 = scmp.lt.s32.totalorder %s27, 0
        %s368 = scalar_select %p367, %s27, 0
        %s369 = smul.addr %s368, 4
        %s370 = scalar_lea.vmem %s4, %s369
      $region20: #{conditional_detr_forward.5} parent=11 // pred_fallthru
        _
      // Predicated region
      $region21: #{conditional_detr_forward.5} parent=11 // pred_check
        %p371 = pneg %p185
      $region22: #{conditional_detr_forward.5} parent=11 // pred_check_branch
        %373 = sbr.rel (%p371) target = $region24
      $region23: #{conditional_detr_forward.5} parent=11 // pred_region
        %p374 = scmp.lt.s32.totalorder %s27, 0
        %s375 = scalar_select %p374, %s27, 0
        %s376 = smul.addr %s375, 2
        %s377 = scalar_lea.vmem %s5, %s376
      $region24: #{conditional_detr_forward.5} parent=11 // pred_fallthru
        _
      // Predicated region
      $region25: #{conditional_detr_forward.5} parent=11 // pred_check
        %p378 = pneg %p211
      $region26: #{conditional_detr_forward.5} parent=11 // pred_check_branch
        %380 = sbr.rel (%p378) target = $region28
      $region27: #{conditional_detr_forward.5} parent=11 // pred_region
        %p381 = scmp.lt.s32.totalorder %s27, 0
        %s382 = scalar_select %p381, %s27, 0
        %s383 = smul.addr %s382, 2
        %s384 = scalar_lea.vmem %s6, %s383
      $region28: #{conditional_detr_forward.5} parent=11 // pred_fallthru
        _
      // Predicated region
      $region29: #{conditional_detr_forward.5} parent=11 // pred_check
        %p385 = pneg %p237
      $region30: #{conditional_detr_forward.5} parent=11 // pred_check_branch
        %387 = sbr.rel (%p385) target = $region32
      $region31: #{conditional_detr_forward.5} parent=11 // pred_region
        %p388 = scmp.lt.s32.totalorder %s27, 0
        %s389 = scalar_select %p388, %s27, 0
        %s390 = smul.addr %s389, 4
        %s391 = smul.addr %s390, 4
        %s392 = scalar_lea.vmem %s7, %s391
      $region32: #{conditional_detr_forward.5} parent=11 // pred_fallthru
        _
      // Predicated region
      $region33: #{conditional_detr_forward.5} parent=11 // pred_check
        %p393 = pneg %p263
      $region34: #{conditional_detr_forward.5} parent=11 // pred_check_branch
        %395 = sbr.rel (%p393) target = $region36
      $region35: #{conditional_detr_forward.5} parent=11 // pred_region
        %p396 = scmp.lt.s32.totalorder %s27, 0
        %s397 = scalar_select %p396, %s27, 0
        %s398 = scalar_lea.vmem %s8, %s397
      $region36: #{conditional_detr_forward.5} parent=11 // pred_fallthru
        _
      // Predicated region
      $region37: #{conditional_detr_forward.5} parent=11 // pred_check
        %p399 = pneg %p289
      $region38: #{conditional_detr_forward.5} parent=11 // pred_check_branch
        %401 = sbr.rel (%p399) target = $region40
      $region39: #{conditional_detr_forward.5} parent=11 // pred_region
        %p402 = scmp.lt.s32.totalorder %s27, 0
        %s403 = scalar_select %p402, %s27, 0
        %s404 = smul.addr %s403, 8
        %s405 = smul.addr %s404, 4
        %s406 = scalar_lea.vmem %s9, %s405
      $region40: #{conditional_detr_forward.5} parent=11 // pred_fallthru
        _
      // Predicated region
      $region41: #{conditional_detr_forward.5} parent=11 // pred_check
        %p407 = pneg %p315
      $region42: #{conditional_detr_forward.5} parent=11 // pred_check_branch
        %409 = sbr.rel (%p407) target = $region44
      $region43: #{conditional_detr_forward.5} parent=11 // pred_region
        %p410 = scmp.lt.s32.totalorder %s27, 0
        %s411 = scalar_select %p410, %s27, 0
        %s412 = scalar_lea.vmem %s10, %s411
      $region44: #{conditional_detr_forward.5} parent=11 // pred_fallthru
        _
    $region12: #{conditional_detr_forward.5} parent=5 // pred_fallthru
      _
    %p413 = scmp.lt.s32.totalorder %s17, 2
    // Predicated region
    $region45: #{conditional_detr_forward.5} parent=5 // pred_check
      %p414 = pneg %p413
    $region46: #{conditional_detr_forward.5} parent=5 // pred_check_branch
      %416 = sbr.rel (%p414) target = $region48
    $region47: #{conditional_detr_forward.5} parent=5 // pred_region
      // Predicated region
      $region49: #{conditional_detr_forward.5} parent=47 // pred_check
        %p417 = pneg %p49
      $region50: #{conditional_detr_forward.5} parent=47 // pred_check_branch
        %419 = sbr.rel (%p417) target = $region52
      $region51: #{conditional_detr_forward.5} parent=47 // pred_region
        %p420 = scmp.lt.s32.totalorder %s24, 1
        %s421 = scalar_select %p420, %s24, 1
        %s422 = smul.addr %s421, 8
        %s423 = smul.addr %s422, 8
        %s424 = scalar_lea.vmem %s0, %s423
      $region52: #{conditional_detr_forward.5} parent=47 // pred_fallthru
        _
      // Predicated region
      $region53: #{conditional_detr_forward.5} parent=47 // pred_check
        %p425 = pneg %p75
      $region54: #{conditional_detr_forward.5} parent=47 // pred_check_branch
        %427 = sbr.rel (%p425) target = $region56
      $region55: #{conditional_detr_forward.5} parent=47 // pred_region
        %p428 = scmp.lt.s32.totalorder %s24, 1
        %s429 = scalar_select %p428, %s24, 1
        %s430 = smul.addr %s429, 8
        %s431 = smul.addr %s430, 8
        %s432 = scalar_lea.vmem %s1, %s431
      $region56: #{conditional_detr_forward.5} parent=47 // pred_fallthru
        _
      // Predicated region
      $region57: #{conditional_detr_forward.5} parent=47 // pred_check
        %p433 = pneg %p101
      $region58: #{conditional_detr_forward.5} parent=47 // pred_check_branch
        %435 = sbr.rel (%p433) target = $region60
      $region59: #{conditional_detr_forward.5} parent=47 // pred_region
        %p436 = scmp.lt.s32.totalorder %s24, 1
        %s437 = scalar_select %p436, %s24, 1
        %s438 = scalar_lea.vmem %s2, %s437
      $region60: #{conditional_detr_forward.5} parent=47 // pred_fallthru
        _
    $region48: #{conditional_detr_forward.5} parent=5 // pred_fallthru
      _
    %p439 = scmp.le.s32.totalorder 1, %s17
    %p440 = scmp.lt.s32.totalorder %s17, 3
    %p441 = pnand %p439, %p440
    %p442 = pneg %p441
    // Predicated region
    $region61: #{conditional_detr_forward.5} parent=5 // pred_check
      _
    $region62: #{conditional_detr_forward.5} parent=5 // pred_check_branch
      %444 = sbr.rel (%p441) target = $region64
    $region63: #{conditional_detr_forward.5} parent=5 // pred_region
      %s445 = ssub.s32 %s17, 1
      %p446 = scmp.lt.s32.totalorder %s26, 1
      %s447 = scalar_select %p446, %s26, 1
      %s448 = smul.addr %s447, 8
      %s449 = smul.addr %s448, 8
      %s450 = scalar_lea.vmem %s0, %s449
      %p451 = pneg %p55
      %p452 = pneg %p52
      %p453 = scmp.lt.s32.totalorder %s26, 1
      %s454 = scalar_select %p453, %s26, 1
      %s455 = smul.addr %s454, 8
      %s456 = smul.addr %s455, 8
      %s457 = scalar_lea.vmem %s1, %s456
      %p458 = pneg %p81
      %p459 = pneg %p78
      %p460 = scmp.lt.s32.totalorder %s26, 1
      %s461 = scalar_select %p460, %s26, 1
      %s462 = scalar_lea.vmem %s2, %s461
      %p463 = pneg %p107
      %p464 = pneg %p104
      %p465 = scmp.lt.s32.totalorder %s27, 0
      %s466 = scalar_select %p465, %s27, 0
      %s467 = smul.addr %s466, 16
      %s468 = smul.addr %s467, 4
      %s469 = scalar_lea.vmem %s3, %s468
      %p470 = pneg %p133
      %p471 = pneg %p130
      %p472 = scmp.lt.s32.totalorder %s27, 0
      %s473 = scalar_select %p472, %s27, 0
      %s474 = smul.addr %s473, 4
      %s475 = scalar_lea.vmem %s4, %s474
      %p476 = pneg %p159
      %p477 = pneg %p156
      %p478 = scmp.lt.s32.totalorder %s27, 0
      %s479 = scalar_select %p478, %s27, 0
      %s480 = smul.addr %s479, 2
      %s481 = scalar_lea.vmem %s5, %s480
      %p482 = pneg %p185
      %p483 = pneg %p182
      %p484 = scmp.lt.s32.totalorder %s27, 0
      %s485 = scalar_select %p484, %s27, 0
      %s486 = smul.addr %s485, 2
      %s487 = scalar_lea.vmem %s6, %s486
      %p488 = pneg %p211
      %p489 = pneg %p208
      %p490 = scmp.lt.s32.totalorder %s27, 0
      %s491 = scalar_select %p490, %s27, 0
      %s492 = smul.addr %s491, 4
      %s493 = smul.addr %s492, 4
      %s494 = scalar_lea.vmem %s7, %s493
      %p495 = pneg %p237
      %p496 = pneg %p234
      %p497 = scmp.lt.s32.totalorder %s27, 0
      %s498 = scalar_select %p497, %s27, 0
      %s499 = scalar_lea.vmem %s8, %s498
      %p500 = pneg %p263
      %p501 = pneg %p260
      %p502 = scmp.lt.s32.totalorder %s27, 0
      %s503 = scalar_select %p502, %s27, 0
      %s504 = smul.addr %s503, 8
      %s505 = smul.addr %s504, 4
      %s506 = scalar_lea.vmem %s9, %s505
      %p507 = pneg %p289
      %p508 = pneg %p286
      %p509 = scmp.lt.s32.totalorder %s27, 0
      %s510 = scalar_select %p509, %s27, 0
      %s511 = scalar_lea.vmem %s10, %s510
      %p512 = pneg %p315
      %p513 = pneg %p312
      %p514 = pneg %p341
      %p515 = pneg %p338
      %p516 = scmp.lt.s32.totalorder %s26, 1
      %s517 = scalar_select %p516, %s26, 1
      %s518 = smul.addr %s517, 8
      %s519 = smul.addr %s518, 8
      %s520 = scalar_lea.vmem %s11, %s519
      %p521 = scmp.lt.s32.totalorder %s26, 1
      %s522 = scalar_select %p521, %s26, 1
      %s523 = smul.addr %s522, 8
      %s524 = smul.addr %s523, 8
      %s525 = scalar_lea.vmem %s0, %s524
      %p526 = scmp.lt.s32.totalorder %s26, 1
      %s527 = scalar_select %p526, %s26, 1
      %s528 = smul.addr %s527, 8
      %s529 = smul.addr %s528, 8
      %s530 = scalar_lea.vmem %s1, %s529
      %p531 = scmp.lt.s32.totalorder %s26, 1
      %s532 = scalar_select %p531, %s26, 1
      %s533 = scalar_lea.vmem %s2, %s532
      %p534 = scmp.lt.s32.totalorder %s27, 0
      %s535 = scalar_select %p534, %s27, 0
      %s536 = smul.addr %s535, 16
      %s537 = smul.addr %s536, 4
      %s538 = scalar_lea.vmem %s3, %s537
      %p539 = scmp.lt.s32.totalorder %s27, 0
      %s540 = scalar_select %p539, %s27, 0
      %s541 = smul.addr %s540, 4
      %s542 = scalar_lea.vmem %s4, %s541
      %p543 = scmp.lt.s32.totalorder %s27, 0
      %s544 = scalar_select %p543, %s27, 0
      %s545 = smul.addr %s544, 2
      %s546 = scalar_lea.vmem %s5, %s545
      %p547 = scmp.lt.s32.totalorder %s27, 0
      %s548 = scalar_select %p547, %s27, 0
      %s549 = smul.addr %s548, 2
      %s550 = scalar_lea.vmem %s6, %s549
      %p551 = scmp.lt.s32.totalorder %s27, 0
      %s552 = scalar_select %p551, %s27, 0
      %s553 = smul.addr %s552, 4
      %s554 = smul.addr %s553, 4
      %s555 = scalar_lea.vmem %s7, %s554
      %p556 = scmp.lt.s32.totalorder %s27, 0
      %s557 = scalar_select %p556, %s27, 0
      %s558 = scalar_lea.vmem %s8, %s557
      %p559 = scmp.lt.s32.totalorder %s27, 0
      %s560 = scalar_select %p559, %s27, 0
      %s561 = smul.addr %s560, 8
      %s562 = smul.addr %s561, 4
      %s563 = scalar_lea.vmem %s9, %s562
      %p564 = scmp.lt.s32.totalorder %s27, 0
      %s565 = scalar_select %p564, %s27, 0
      %s566 = scalar_lea.vmem %s10, %s565
      %p567 = scmp.lt.s32.totalorder %s26, 1
      %s568 = scalar_select %p567, %s26, 1
      %s569 = smul.addr %s568, 8
      %s570 = smul.addr %s569, 8
      %s571 = scalar_lea.vmem %s11, %s570
      %p573 = scmp.eq.s32.totalorder %s27, 0
      // Predicated region
      $region65: #{conditional_detr_forward.5} parent=63 // pred_check
        %p574 = pneg %p573
      $region66: #{conditional_detr_forward.5} parent=63 // pred_check_branch
        %576 = sbr.rel (%p574) target = $region68
      $region67: #{conditional_detr_forward.5} parent=63 // pred_region
        %v577 = vld [vmem:[%s525] sm:$0xff]
        %v578 = vld [vmem:[%s525 + $0x8] sm:$0xff]
        %v579 = vld [vmem:[%s525 + $0x10] sm:$0xff]
        %v580 = vld [vmem:[%s525 + $0x18] sm:$0xff]
        %v581 = vld [vmem:[%s525 + $0x20] sm:$0xff]
        %v582 = vld [vmem:[%s525 + $0x28] sm:$0xff]
        %v583 = vld [vmem:[%s525 + $0x30] sm:$0xff]
        %v584 = vld [vmem:[%s525 + $0x38] sm:$0xff]
        %vm585 = vcmask 261120
        %586 = vst.msk [vmem:[%s571] sm:$0xff] %vm585, %v577
        %587 = vst.msk [vmem:[%s571 + $0x8] sm:$0xff] %vm585, %v578
        %588 = vst.msk [vmem:[%s571 + $0x10] sm:$0xff] %vm585, %v579
        %589 = vst.msk [vmem:[%s571 + $0x18] sm:$0xff] %vm585, %v580
        %590 = vst.msk [vmem:[%s571 + $0x20] sm:$0xff] %vm585, %v581
        %591 = vst.msk [vmem:[%s571 + $0x28] sm:$0xff] %vm585, %v582
        %592 = vst.msk [vmem:[%s571 + $0x30] sm:$0xff] %vm585, %v583
        %593 = vst.msk [vmem:[%s571 + $0x38] sm:$0xff] %vm585, %v584
      $region68: #{conditional_detr_forward.5} parent=63 // pred_fallthru
        _
      %v594 = vld [vmem:[%s571] sm:$0xff]
      %v595 = vld [vmem:[%s571 + $0x8] sm:$0xff]
      %v596 = vld [vmem:[%s571 + $0x10] sm:$0xff]
      %v597 = vld [vmem:[%s571 + $0x18] sm:$0xff]
      %v598 = vld [vmem:[%s571 + $0x20] sm:$0xff]
      %v599 = vld [vmem:[%s571 + $0x28] sm:$0xff]
      %v600 = vld [vmem:[%s571 + $0x30] sm:$0xff]
      %v601 = vld [vmem:[%s571 + $0x38] sm:$0xff]
      %v602 = vld [vmem:[%s530] sm:$0xff]
      %v603 = vld [vmem:[%s530 + $0x8] sm:$0xff]
      %v604 = vld [vmem:[%s530 + $0x10] sm:$0xff]
      %v605 = vld [vmem:[%s530 + $0x18] sm:$0xff]
      %v606 = vld [vmem:[%s530 + $0x20] sm:$0xff]
      %v607 = vld [vmem:[%s530 + $0x28] sm:$0xff]
      %v608 = vld [vmem:[%s530 + $0x30] sm:$0xff]
      %v609 = vld [vmem:[%s530 + $0x38] sm:$0xff]
      %v610 = vld [vmem:[%s533] sm:$0x1]
      %v611 = vld [vmem:[%s538] sm:$0xf]
      %v612 = vld [vmem:[%s538 + $0x4] sm:$0xf]
      %v613 = vld [vmem:[%s538 + $0x8] sm:$0xf]
      %v614 = vld [vmem:[%s538 + $0xc] sm:$0xf]
      %v615 = vld [vmem:[%s538 + $0x10] sm:$0xf]
      %v616 = vld [vmem:[%s538 + $0x14] sm:$0xf]
      %v617 = vld [vmem:[%s538 + $0x18] sm:$0xf]
      %v618 = vld [vmem:[%s538 + $0x1c] sm:$0xf]
      %v619 = vld [vmem:[%s538 + $0x20] sm:$0xf]
      %v620 = vld [vmem:[%s538 + $0x24] sm:$0xf]
      %v621 = vld [vmem:[%s538 + $0x28] sm:$0xf]
      %v622 = vld [vmem:[%s538 + $0x2c] sm:$0xf]
      %v623 = vld [vmem:[%s538 + $0x30] sm:$0xf]
      %v624 = vld [vmem:[%s538 + $0x34] sm:$0xf]
      %v625 = vld [vmem:[%s538 + $0x38] sm:$0xf]
      %v626 = vld [vmem:[%s538 + $0x3c] sm:$0xf]
      %v627 = vld [vmem:[%s542] sm:$0x1]
      %v628 = vld [vmem:[%s542 + $0x1] sm:$0x1]
      %v629 = vld [vmem:[%s542 + $0x2] sm:$0x1]
      %v630 = vld [vmem:[%s542 + $0x3] sm:$0x1]
      %v631 = vld [vmem:[%s546] sm:$0x1]
      %v632 = vld [vmem:[%s546 + $0x1] sm:$0x1]
      %v633 = vld [vmem:[%s550] sm:$0x1]
      %v634 = vld [vmem:[%s550 + $0x1] sm:$0x1]
      %v635 = vadd.f32 %v594, %v602
      %v636 = vadd.f32 %v595, %v603
      %v637 = vadd.f32 %v596, %v604
      %v638 = vadd.f32 %v597, %v605
      %v639 = vadd.f32 %v598, %v606
      %v640 = vadd.f32 %v599, %v607
      %v641 = vadd.f32 %v600, %v608
      %v642 = vadd.f32 %v601, %v609
      %v643 = vpack.c.bf16 %v636, %v635
      %v644 = vpack.c.bf16 %v638, %v637
      %v645 = vpack.c.bf16 %v640, %v639
      %v646 = vpack.c.bf16 %v642, %v641
      %v648 = vperm.slane %v627, 0
      %v654 = vunpack.c.l.b16 %v611
      %v655 = vunpack.c.l.b16 %v612
      %v656 = vunpack.c.l.b16 %v613
      %v657 = vunpack.c.l.b16 %v614
      %v658 = vpack.c.b16 %v655, %v654
      %v659 = vpack.c.b16 %v657, %v656
      %vm662 = vcmask 261120
      %v664 = vsel %vm662, %v643, 0
      %v667 = vsel %vm662, %v644, 0
      %v670 = vsel %vm662, %v645, 0
      %v673 = vsel %vm662, %v646, 0
      %675 = vmatpush.bf16.msra.mxu0 0
      %676 = vmatpush.bf16.msra.mxu0 0
      %677 = vmatpush.bf16.msra.mxu0 0
      %678 = vmatpush.bf16.msra.mxu0 0
      %679 = vmatpush.bf16.msra.mxu0 0
      %680 = vmatpush.bf16.msra.mxu0 0
      %681 = vmatpush.bf16.msra.mxu0 %v659
      %682 = vmatpush.bf16.msra.mxu0 %v658
      %683 = vmatmul.bf16.gmra.mxu0 %v664
      %v684 = vpop.f32.mrf.mxu0
      %v685 = vadd.f32 %v648, %v684
      %v686 = vpop.f32.mrf.mxu0
      %v687 = vadd.f32 %v648, %v686
      %688 = vmatmul.bf16.gmra.mxu0 %v667
      %v689 = vpop.f32.mrf.mxu0
      %v690 = vadd.f32 %v648, %v689
      %v691 = vpop.f32.mrf.mxu0
      %v692 = vadd.f32 %v648, %v691
      %693 = vmatmul.bf16.gmra.mxu0 %v670
      %v694 = vpop.f32.mrf.mxu0
      %v695 = vadd.f32 %v648, %v694
      %v696 = vpop.f32.mrf.mxu0
      %v697 = vadd.f32 %v648, %v696
      %698 = vmatmul.bf16.gmra.mxu0 %v673
      %v699 = vpop.f32.mrf.mxu0
      %v700 = vadd.f32 %v648, %v699
      %v701 = vpop.f32.mrf.mxu0
      %v702 = vadd.f32 %v648, %v701
      %703 = vdwg.mxu0
      %v704 = vpack.c.bf16 %v685, %v685
      %v705 = vpack.c.bf16 %v687, %v687
      %v706 = vpack.c.bf16 %v690, %v690
      %v707 = vpack.c.bf16 %v692, %v692
      %v708 = vpack.c.bf16 %v695, %v695
      %v709 = vpack.c.bf16 %v697, %v697
      %v710 = vpack.c.bf16 %v700, %v700
      %v711 = vpack.c.bf16 %v702, %v702
      %v713 = vperm.slane %v628, 0
      %v719 = vunpack.c.l.b16 %v615
      %v720 = vunpack.c.l.b16 %v616
      %v721 = vunpack.c.l.b16 %v617
      %v722 = vunpack.c.l.b16 %v618
      %v723 = vpack.c.b16 %v720, %v719
      %v724 = vpack.c.b16 %v722, %v721
      %727 = vmatpush.bf16.msra.mxu0 0
      %728 = vmatpush.bf16.msra.mxu0 0
      %729 = vmatpush.bf16.msra.mxu0 0
      %730 = vmatpush.bf16.msra.mxu0 0
      %731 = vmatpush.bf16.msra.mxu0 0
      %732 = vmatpush.bf16.msra.mxu0 0
      %733 = vmatpush.bf16.msra.mxu0 %v724
      %734 = vmatpush.bf16.msra.mxu0 %v723
      %735 = vmatmul.bf16.gmra.mxu0 %v664
      %v736 = vpop.f32.mrf.mxu0
      %v737 = vadd.f32 %v713, %v736
      %v738 = vpop.f32.mrf.mxu0
      %v739 = vadd.f32 %v713, %v738
      %740 = vmatmul.bf16.gmra.mxu0 %v667
      %v741 = vpop.f32.mrf.mxu0
      %v742 = vadd.f32 %v713, %v741
      %v743 = vpop.f32.mrf.mxu0
      %v744 = vadd.f32 %v713, %v743
      %745 = vmatmul.bf16.gmra.mxu0 %v670
      %v746 = vpop.f32.mrf.mxu0
      %v747 = vadd.f32 %v713, %v746
      %v748 = vpop.f32.mrf.mxu0
      %v749 = vadd.f32 %v713, %v748
      %750 = vmatmul.bf16.gmra.mxu0 %v673
      %v751 = vpop.f32.mrf.mxu0
      %v752 = vadd.f32 %v713, %v751
      %v753 = vpop.f32.mrf.mxu0
      %v754 = vadd.f32 %v713, %v753
      %755 = vdwg.mxu0
      %v756 = vpack.c.bf16 %v595, %v594
      %v757 = vpack.c.bf16 %v597, %v596
      %v758 = vpack.c.bf16 %v599, %v598
      %v759 = vpack.c.bf16 %v601, %v600
      %v761 = vperm.slane %v629, 0
      %v767 = vunpack.c.l.b16 %v619
      %v768 = vunpack.c.l.b16 %v620
      %v769 = vunpack.c.l.b16 %v621
      %v770 = vunpack.c.l.b16 %v622
      %v771 = vpack.c.b16 %v768, %v767
      %v772 = vpack.c.b16 %v770, %v769
      %v776 = vsel %vm662, %v756, 0
      %v779 = vsel %vm662, %v757, 0
      %v782 = vsel %vm662, %v758, 0
      %v785 = vsel %vm662, %v759, 0
      %787 = vmatpush.bf16.msra.mxu0 0
      %788 = vmatpush.bf16.msra.mxu0 0
      %789 = vmatpush.bf16.msra.mxu0 0
      %790 = vmatpush.bf16.msra.mxu0 0
      %791 = vmatpush.bf16.msra.mxu0 0
      %792 = vmatpush.bf16.msra.mxu0 0
      %793 = vmatpush.bf16.msra.mxu0 %v772
      %794 = vmatpush.bf16.msra.mxu0 %v771
      %795 = vmatmul.bf16.gmra.mxu0 %v776
      %v796 = vpop.f32.mrf.mxu0
      %v797 = vadd.f32 %v761, %v796
      %v798 = vpop.f32.mrf.mxu0
      %v799 = vadd.f32 %v761, %v798
      %800 = vmatmul.bf16.gmra.mxu0 %v779
      %v801 = vpop.f32.mrf.mxu0
      %v802 = vadd.f32 %v761, %v801
      %v803 = vpop.f32.mrf.mxu0
      %v804 = vadd.f32 %v761, %v803
      %805 = vmatmul.bf16.gmra.mxu0 %v782
      %v806 = vpop.f32.mrf.mxu0
      %v807 = vadd.f32 %v761, %v806
      %v808 = vpop.f32.mrf.mxu0
      %v809 = vadd.f32 %v761, %v808
      %810 = vmatmul.bf16.gmra.mxu0 %v785
      %v811 = vpop.f32.mrf.mxu0
      %v812 = vadd.f32 %v761, %v811
      %v813 = vpop.f32.mrf.mxu0
      %v814 = vadd.f32 %v761, %v813
      %815 = vdwg.mxu0
      %v816 = vpack.c.bf16 %v797, %v797
      %v817 = vpack.c.bf16 %v799, %v799
      %v818 = vpack.c.bf16 %v802, %v802
      %v819 = vpack.c.bf16 %v804, %v804
      %v820 = vpack.c.bf16 %v807, %v807
      %v821 = vpack.c.bf16 %v809, %v809
      %v822 = vpack.c.bf16 %v812, %v812
      %v823 = vpack.c.bf16 %v814, %v814
      %824 = vxpose.xlu0.b32.start [1/16] %v737, 128
      %825 = vxpose.xlu0.b32.cont [2/16] %v739, 128
      %826 = vxpose.xlu0.b32.cont [3/16] %v742, 128
      %827 = vxpose.xlu0.b32.cont [4/16] %v744, 128
      %828 = vxpose.xlu0.b32.cont [5/16] %v747, 128
      %829 = vxpose.xlu0.b32.cont [6/16] %v749, 128
      %830 = vxpose.xlu0.b32.cont [7/16] %v752, 128
      %831 = vxpose.xlu0.b32.cont [8/16] %v754, 128
      %832 = vxpose.xlu0.b32.cont [9/16] 0.0, 128
      %833 = vxpose.xlu0.b32.cont [10/16] 0.0, 128
      %834 = vxpose.xlu0.b32.cont [11/16] 0.0, 128
      %835 = vxpose.xlu0.b32.cont [12/16] 0.0, 128
      %836 = vxpose.xlu0.b32.cont [13/16] 0.0, 128
      %837 = vxpose.xlu0.b32.cont [14/16] 0.0, 128
      %838 = vxpose.xlu0.b32.cont [15/16] 0.0, 128
      %839 = vxpose.xlu0.b32.end [16/16] 0.0, 128
      %v840 = vpop.trf.xlu0
      %v841 = vpop.trf.xlu0
      %v842 = vpop.trf.xlu0
      %v843 = vpop.trf.xlu0
      %v844 = vpop.trf.xlu0
      %v845 = vpop.trf.xlu0
      %v846 = vpop.trf.xlu0
      %v847 = vpop.trf.xlu0
      %v848 = vpop.trf.xlu0
      %v849 = vpop.trf.xlu0
      %v850 = vpop.trf.xlu0
      %v851 = vpop.trf.xlu0
      %v852 = vpop.trf.xlu0
      %v853 = vpop.trf.xlu0
      %v854 = vpop.trf.xlu0
      %v855 = vpop.trf.xlu0
      %v856 = vpack.c.bf16 %v840, %v840
      %v865 = vunpack.c.l.b16 %v704
      %v866 = vunpack.c.l.b16 %v705
      %v867 = vunpack.c.l.b16 %v706
      %v868 = vunpack.c.l.b16 %v707
      %v869 = vunpack.c.l.b16 %v708
      %v870 = vunpack.c.l.b16 %v709
      %v871 = vunpack.c.l.b16 %v710
      %v872 = vunpack.c.l.b16 %v711
      %v873 = vpack.c.b16 %v866, %v865
      %v874 = vpack.c.b16 %v868, %v867
      %v875 = vpack.c.b16 %v870, %v869
      %v876 = vpack.c.b16 %v872, %v871
      %vm877 = vcmask 64512
      %v879 = vsel %vm877, %v873, 0
      %v882 = vsel %vm877, %v874, 0
      %v885 = vsel %vm877, %v875, 0
      %v888 = vsel %vm877, %v876, 0
      %vm890 = vcmask 1043456
      %v892 = vsel %vm890, %v856, 0
      %894 = vmatpush.bf16.msra.mxu0 0
      %895 = vmatpush.bf16.msra.mxu0 0
      %896 = vmatpush.bf16.msra.mxu0 0
      %897 = vmatpush.bf16.msra.mxu0 0
      %898 = vmatpush.bf16.msra.mxu0 0
      %899 = vmatpush.bf16.msra.mxu0 0
      %900 = vmatpush.bf16.msra.mxu0 0
      %901 = vmatpush.bf16.msra.mxu0 %v892
      %902 = vmatmul.bf16.gmra.mxu0 %v879
      %v903 = vpop.f32.mrf.mxu0
      %v904 = vadd.f32 0.0, %v903
      %v905 = vpop.f32.mrf.mxu0
      %v906 = vadd.f32 0.0, %v905
      %907 = vmatmul.bf16.gmra.mxu0 %v882
      %v908 = vpop.f32.mrf.mxu0
      %v909 = vadd.f32 0.0, %v908
      %v910 = vpop.f32.mrf.mxu0
      %v911 = vadd.f32 0.0, %v910
      %912 = vmatmul.bf16.gmra.mxu0 %v885
      %v913 = vpop.f32.mrf.mxu0
      %v914 = vadd.f32 0.0, %v913
      %v915 = vpop.f32.mrf.mxu0
      %v916 = vadd.f32 0.0, %v915
      %917 = vmatmul.bf16.gmra.mxu0 %v888
      %v918 = vpop.f32.mrf.mxu0
      %v919 = vadd.f32 0.0, %v918
      %v920 = vpop.f32.mrf.mxu0
      %v921 = vadd.f32 0.0, %v920
      %922 = vdwg.mxu0
      %v923 = vmul.f32 %v904, 0.35355338
      %v924 = vmul.f32 %v906, 0.35355338
      %v925 = vmul.f32 %v909, 0.35355338
      %v926 = vmul.f32 %v911, 0.35355338
      %v927 = vmul.f32 %v914, 0.35355338
      %v928 = vmul.f32 %v916, 0.35355338
      %v929 = vmul.f32 %v919, 0.35355338
      %v930 = vmul.f32 %v921, 0.35355338
      %v932 = vperm.slane %v610, 0
      %v934 = vadd.f32 %v923, %v932
      %v935 = vadd.f32 %v924, %v932
      %v936 = vadd.f32 %v925, %v932
      %v937 = vadd.f32 %v926, %v932
      %v938 = vadd.f32 %v927, %v932
      %v939 = vadd.f32 %v928, %v932
      %v940 = vadd.f32 %v929, %v932
      %v941 = vadd.f32 %v930, %v932
      %vm942 = vcmask 523264
      %v943 = vsel %vm942, %v934, -inf
      %944 = vmax.xlane.f32.xlu0 %v943
      %v945 = vpop.xlane.xlu0 %944
      %v946 = vsel %vm942, %v935, -inf
      %947 = vmax.xlane.f32.xlu0 %v946
      %v948 = vpop.xlane.xlu0 %947
      %v949 = vsel %vm942, %v936, -inf
      %950 = vmax.xlane.f32.xlu0 %v949
      %v951 = vpop.xlane.xlu0 %950
      %v952 = vsel %vm942, %v937, -inf
      %953 = vmax.xlane.f32.xlu0 %v952
      %v954 = vpop.xlane.xlu0 %953
      %v955 = vsel %vm942, %v938, -inf
      %956 = vmax.xlane.f32.xlu0 %v955
      %v957 = vpop.xlane.xlu0 %956
      %v958 = vsel %vm942, %v939, -inf
      %959 = vmax.xlane.f32.xlu0 %v958
      %v960 = vpop.xlane.xlu0 %959
      %v961 = vsel %vm942, %v940, -inf
      %962 = vmax.xlane.f32.xlu0 %v961
      %v963 = vpop.xlane.xlu0 %962
      %v964 = vsel %vm942, %v941, -inf
      %965 = vmax.xlane.f32.xlu0 %v964
      %v966 = vpop.xlane.xlu0 %965
      %v967 = vsub.f32 %v934, %v945
      %v968 = vsub.f32 %v935, %v948
      %v969 = vsub.f32 %v936, %v951
      %v970 = vsub.f32 %v937, %v954
      %v971 = vsub.f32 %v938, %v957
      %v972 = vsub.f32 %v939, %v960
      %v973 = vsub.f32 %v940, %v963
      %v974 = vsub.f32 %v941, %v966
      %v975 = vmul.f32 %v967, 1.442695
      %v976 = vpow.pop %v975
      %v977 = vmul.f32 %v968, 1.442695
      %v978 = vpow.pop %v977
      %v979 = vmul.f32 %v969, 1.442695
      %v980 = vpow.pop %v979
      %v981 = vmul.f32 %v970, 1.442695
      %v982 = vpow.pop %v981
      %v983 = vmul.f32 %v971, 1.442695
      %v984 = vpow.pop %v983
      %v985 = vmul.f32 %v972, 1.442695
      %v986 = vpow.pop %v985
      %v987 = vmul.f32 %v973, 1.442695
      %v988 = vpow.pop %v987
      %v989 = vmul.f32 %v974, 1.442695
      %v990 = vpow.pop %v989
      %v991 = vsel %vm942, %v976, 0.0
      %992 = vadd.xlane.f32.xlu0 %v991
      %v993 = vpop.xlane.xlu0 %992
      %v994 = vsel %vm942, %v978, 0.0
      %995 = vadd.xlane.f32.xlu0 %v994
      %v996 = vpop.xlane.xlu0 %995
      %v997 = vsel %vm942, %v980, 0.0
      %998 = vadd.xlane.f32.xlu0 %v997
      %v999 = vpop.xlane.xlu0 %998
      %v1000 = vsel %vm942, %v982, 0.0
      %1001 = vadd.xlane.f32.xlu0 %v1000
      %v1002 = vpop.xlane.xlu0 %1001
      %v1003 = vsel %vm942, %v984, 0.0
      %1004 = vadd.xlane.f32.xlu0 %v1003
      %v1005 = vpop.xlane.xlu0 %1004
      %v1006 = vsel %vm942, %v986, 0.0
      %1007 = vadd.xlane.f32.xlu0 %v1006
      %v1008 = vpop.xlane.xlu0 %1007
      %v1009 = vsel %vm942, %v988, 0.0
      %1010 = vadd.xlane.f32.xlu0 %v1009
      %v1011 = vpop.xlane.xlu0 %1010
      %v1012 = vsel %vm942, %v990, 0.0
      %1013 = vadd.xlane.f32.xlu0 %v1012
      %v1014 = vpop.xlane.xlu0 %1013
      %v1015 = vrcp.pop %v993
      %v1016 = vrcp.pop %v996
      %v1017 = vrcp.pop %v999
      %v1018 = vrcp.pop %v1002
      %v1019 = vrcp.pop %v1005
      %v1020 = vrcp.pop %v1008
      %v1021 = vrcp.pop %v1011
      %v1022 = vrcp.pop %v1014
      %v1023 = vpack.c.bf16 %v978, %v976
      %v1024 = vpack.c.bf16 %v982, %v980
      %v1025 = vpack.c.bf16 %v986, %v984
      %v1026 = vpack.c.bf16 %v990, %v988
      %v1035 = vunpack.c.l.b16 %v816
      %v1036 = vunpack.c.l.b16 %v817
      %v1037 = vunpack.c.l.b16 %v818
      %v1038 = vunpack.c.l.b16 %v819
      %v1039 = vunpack.c.l.b16 %v820
      %v1040 = vunpack.c.l.b16 %v821
      %v1041 = vunpack.c.l.b16 %v822
      %v1042 = vunpack.c.l.b16 %v823
      %v1043 = vpack.c.b16 %v1036, %v1035
      %v1044 = vpack.c.b16 %v1038, %v1037
      %v1045 = vpack.c.b16 %v1040, %v1039
      %v1046 = vpack.c.b16 %v1042, %v1041
      %v1052 = vsel %vm942, %v1023, 0
      %v1055 = vsel %vm942, %v1024, 0
      %v1058 = vsel %vm942, %v1025, 0
      %v1061 = vsel %vm942, %v1026, 0
      %1063 = vmatpush.bf16.msra.mxu0 0
      %1064 = vmatpush.bf16.msra.mxu0 0
      %1065 = vmatpush.bf16.msra.mxu0 0
      %1066 = vmatpush.bf16.msra.mxu0 0
      %1067 = vmatpush.bf16.msra.mxu0 %v1046
      %1068 = vmatpush.bf16.msra.mxu0 %v1045
      %1069 = vmatpush.bf16.msra.mxu0 %v1044
      %1070 = vmatpush.bf16.msra.mxu0 %v1043
      %1071 = vmatmul.bf16.gmra.mxu0 %v1052
      %v1072 = vpop.f32.mrf.mxu0
      %v1073 = vadd.f32 0.0, %v1072
      %v1074 = vpop.f32.mrf.mxu0
      %v1075 = vadd.f32 0.0, %v1074
      %1076 = vmatmul.bf16.gmra.mxu0 %v1055
      %v1077 = vpop.f32.mrf.mxu0
      %v1078 = vadd.f32 0.0, %v1077
      %v1079 = vpop.f32.mrf.mxu0
      %v1080 = vadd.f32 0.0, %v1079
      %1081 = vmatmul.bf16.gmra.mxu0 %v1058
      %v1082 = vpop.f32.mrf.mxu0
      %v1083 = vadd.f32 0.0, %v1082
      %v1084 = vpop.f32.mrf.mxu0
      %v1085 = vadd.f32 0.0, %v1084
      %1086 = vmatmul.bf16.gmra.mxu0 %v1061
      %v1087 = vpop.f32.mrf.mxu0
      %v1088 = vadd.f32 0.0, %v1087
      %v1089 = vpop.f32.mrf.mxu0
      %v1090 = vadd.f32 0.0, %v1089
      %1091 = vdwg.mxu0
      %v1092 = vmul.f32 %v1073, %v1015
      %v1093 = vmul.f32 %v1075, %v1016
      %v1094 = vmul.f32 %v1078, %v1017
      %v1095 = vmul.f32 %v1080, %v1018
      %v1096 = vmul.f32 %v1083, %v1019
      %v1097 = vmul.f32 %v1085, %v1020
      %v1098 = vmul.f32 %v1088, %v1021
      %v1099 = vmul.f32 %v1090, %v1022
      %v1100 = vpack.c.bf16 %v841, %v841
      %1101 = vrot.lane.b32.xlu0 %v873, 120
      %v1102 = vpop.permute.xlu0 %1101
      %1103 = vrot.lane.b32.xlu0 %v874, 120
      %v1104 = vpop.permute.xlu0 %1103
      %1105 = vrot.lane.b32.xlu0 %v875, 120
      %v1106 = vpop.permute.xlu0 %1105
      %1107 = vrot.lane.b32.xlu0 %v876, 120
      %v1108 = vpop.permute.xlu0 %1107
      %v1110 = vsel %vm877, %v1102, 0
      %v1113 = vsel %vm877, %v1104, 0
      %v1116 = vsel %vm877, %v1106, 0
      %v1119 = vsel %vm877, %v1108, 0
      %v1122 = vsel %vm890, %v1100, 0
      %1124 = vmatpush.bf16.msra.mxu0 0
      %1125 = vmatpush.bf16.msra.mxu0 0
      %1126 = vmatpush.bf16.msra.mxu0 0
      %1127 = vmatpush.bf16.msra.mxu0 0
      %1128 = vmatpush.bf16.msra.mxu0 0
      %1129 = vmatpush.bf16.msra.mxu0 0
      %1130 = vmatpush.bf16.msra.mxu0 0
      %1131 = vmatpush.bf16.msra.mxu0 %v1122
      %1132 = vmatmul.bf16.gmra.mxu0 %v1110
      %v1133 = vpop.f32.mrf.mxu0
      %v1134 = vadd.f32 0.0, %v1133
      %v1135 = vpop.f32.mrf.mxu0
      %v1136 = vadd.f32 0.0, %v1135
      %1137 = vmatmul.bf16.gmra.mxu0 %v1113
      %v1138 = vpop.f32.mrf.mxu0
      %v1139 = vadd.f32 0.0, %v1138
      %v1140 = vpop.f32.mrf.mxu0
      %v1141 = vadd.f32 0.0, %v1140
      %1142 = vmatmul.bf16.gmra.mxu0 %v1116
      %v1143 = vpop.f32.mrf.mxu0
      %v1144 = vadd.f32 0.0, %v1143
      %v1145 = vpop.f32.mrf.mxu0
      %v1146 = vadd.f32 0.0, %v1145
      %1147 = vmatmul.bf16.gmra.mxu0 %v1119
      %v1148 = vpop.f32.mrf.mxu0
      %v1149 = vadd.f32 0.0, %v1148
      %v1150 = vpop.f32.mrf.mxu0
      %v1151 = vadd.f32 0.0, %v1150
      %1152 = vdwg.mxu0
      %v1153 = vmul.f32 %v1134, 0.35355338
      %v1154 = vmul.f32 %v1136, 0.35355338
      %v1155 = vmul.f32 %v1139, 0.35355338
      %v1156 = vmul.f32 %v1141, 0.35355338
      %v1157 = vmul.f32 %v1144, 0.35355338
      %v1158 = vmul.f32 %v1146, 0.35355338
      %v1159 = vmul.f32 %v1149, 0.35355338
      %v1160 = vmul.f32 %v1151, 0.35355338
      %v1161 = vadd.f32 %v1153, %v932
      %v1162 = vadd.f32 %v1154, %v932
      %v1163 = vadd.f32 %v1155, %v932
      %v1164 = vadd.f32 %v1156, %v932
      %v1165 = vadd.f32 %v1157, %v932
      %v1166 = vadd.f32 %v1158, %v932
      %v1167 = vadd.f32 %v1159, %v932
      %v1168 = vadd.f32 %v1160, %v932
      %v1169 = vsel %vm942, %v1161, -inf
      %1170 = vmax.xlane.f32.xlu0 %v1169
      %v1171 = vpop.xlane.xlu0 %1170
      %v1172 = vsel %vm942, %v1162, -inf
      %1173 = vmax.xlane.f32.xlu0 %v1172
      %v1174 = vpop.xlane.xlu0 %1173
      %v1175 = vsel %vm942, %v1163, -inf
      %1176 = vmax.xlane.f32.xlu0 %v1175
      %v1177 = vpop.xlane.xlu0 %1176
      %v1178 = vsel %vm942, %v1164, -inf
      %1179 = vmax.xlane.f32.xlu0 %v1178
      %v1180 = vpop.xlane.xlu0 %1179
      %v1181 = vsel %vm942, %v1165, -inf
      %1182 = vmax.xlane.f32.xlu0 %v1181
      %v1183 = vpop.xlane.xlu0 %1182
      %v1184 = vsel %vm942, %v1166, -inf
      %1185 = vmax.xlane.f32.xlu0 %v1184
      %v1186 = vpop.xlane.xlu0 %1185
      %v1187 = vsel %vm942, %v1167, -inf
      %1188 = vmax.xlane.f32.xlu0 %v1187
      %v1189 = vpop.xlane.xlu0 %1188
      %v1190 = vsel %vm942, %v1168, -inf
      %1191 = vmax.xlane.f32.xlu0 %v1190
      %v1192 = vpop.xlane.xlu0 %1191
      %v1193 = vsub.f32 %v1161, %v1171
      %v1194 = vsub.f32 %v1162, %v1174
      %v1195 = vsub.f32 %v1163, %v1177
      %v1196 = vsub.f32 %v1164, %v1180
      %v1197 = vsub.f32 %v1165, %v1183
      %v1198 = vsub.f32 %v1166, %v1186
      %v1199 = vsub.f32 %v1167, %v1189
      %v1200 = vsub.f32 %v1168, %v1192
      %v1201 = vmul.f32 %v1193, 1.442695
      %v1202 = vpow.pop %v1201
      %v1203 = vmul.f32 %v1194, 1.442695
      %v1204 = vpow.pop %v1203
      %v1205 = vmul.f32 %v1195, 1.442695
      %v1206 = vpow.pop %v1205
      %v1207 = vmul.f32 %v1196, 1.442695
      %v1208 = vpow.pop %v1207
      %v1209 = vmul.f32 %v1197, 1.442695
      %v1210 = vpow.pop %v1209
      %v1211 = vmul.f32 %v1198, 1.442695
      %v1212 = vpow.pop %v1211
      %v1213 = vmul.f32 %v1199, 1.442695
      %v1214 = vpow.pop %v1213
      %v1215 = vmul.f32 %v1200, 1.442695
      %v1216 = vpow.pop %v1215
      %v1217 = vsel %vm942, %v1202, 0.0
      %1218 = vadd.xlane.f32.xlu0 %v1217
      %v1219 = vpop.xlane.xlu0 %1218
      %v1220 = vsel %vm942, %v1204, 0.0
      %1221 = vadd.xlane.f32.xlu0 %v1220
      %v1222 = vpop.xlane.xlu0 %1221
      %v1223 = vsel %vm942, %v1206, 0.0
      %1224 = vadd.xlane.f32.xlu0 %v1223
      %v1225 = vpop.xlane.xlu0 %1224
      %v1226 = vsel %vm942, %v1208, 0.0
      %1227 = vadd.xlane.f32.xlu0 %v1226
      %v1228 = vpop.xlane.xlu0 %1227
      %v1229 = vsel %vm942, %v1210, 0.0
      %1230 = vadd.xlane.f32.xlu0 %v1229
      %v1231 = vpop.xlane.xlu0 %1230
      %v1232 = vsel %vm942, %v1212, 0.0
      %1233 = vadd.xlane.f32.xlu0 %v1232
      %v1234 = vpop.xlane.xlu0 %1233
      %v1235 = vsel %vm942, %v1214, 0.0
      %1236 = vadd.xlane.f32.xlu0 %v1235
      %v1237 = vpop.xlane.xlu0 %1236
      %v1238 = vsel %vm942, %v1216, 0.0
      %1239 = vadd.xlane.f32.xlu0 %v1238
      %v1240 = vpop.xlane.xlu0 %1239
      %v1241 = vrcp.pop %v1219
      %v1242 = vrcp.pop %v1222
      %v1243 = vrcp.pop %v1225
      %v1244 = vrcp.pop %v1228
      %v1245 = vrcp.pop %v1231
      %v1246 = vrcp.pop %v1234
      %v1247 = vrcp.pop %v1237
      %v1248 = vrcp.pop %v1240
      %v1249 = vpack.c.bf16 %v1204, %v1202
      %v1250 = vpack.c.bf16 %v1208, %v1206
      %v1251 = vpack.c.bf16 %v1212, %v1210
      %v1252 = vpack.c.bf16 %v1216, %v1214
      %1253 = vrot.lane.b32.xlu0 %v1043, 120
      %v1254 = vpop.permute.xlu0 %1253
      %1255 = vrot.lane.b32.xlu0 %v1044, 120
      %v1256 = vpop.permute.xlu0 %1255
      %1257 = vrot.lane.b32.xlu0 %v1045, 120
      %v1258 = vpop.permute.xlu0 %1257
      %1259 = vrot.lane.b32.xlu0 %v1046, 120
      %v1260 = vpop.permute.xlu0 %1259
      %v1266 = vsel %vm942, %v1249, 0
      %v1269 = vsel %vm942, %v1250, 0
      %v1272 = vsel %vm942, %v1251, 0
      %v1275 = vsel %vm942, %v1252, 0
      %1277 = vmatpush.bf16.msra.mxu0 0
      %1278 = vmatpush.bf16.msra.mxu0 0
      %1279 = vmatpush.bf16.msra.mxu0 0
      %1280 = vmatpush.bf16.msra.mxu0 0
      %1281 = vmatpush.bf16.msra.mxu0 %v1260
      %1282 = vmatpush.bf16.msra.mxu0 %v1258
      %1283 = vmatpush.bf16.msra.mxu0 %v1256
      %1284 = vmatpush.bf16.msra.mxu0 %v1254
      %1285 = vmatmul.bf16.gmra.mxu0 %v1266
      %v1286 = vpop.f32.mrf.mxu0
      %v1287 = vadd.f32 0.0, %v1286
      %v1288 = vpop.f32.mrf.mxu0
      %v1289 = vadd.f32 0.0, %v1288
      %1290 = vmatmul.bf16.gmra.mxu0 %v1269
      %v1291 = vpop.f32.mrf.mxu0
      %v1292 = vadd.f32 0.0, %v1291
      %v1293 = vpop.f32.mrf.mxu0
      %v1294 = vadd.f32 0.0, %v1293
      %1295 = vmatmul.bf16.gmra.mxu0 %v1272
      %v1296 = vpop.f32.mrf.mxu0
      %v1297 = vadd.f32 0.0, %v1296
      %v1298 = vpop.f32.mrf.mxu0
      %v1299 = vadd.f32 0.0, %v1298
      %1300 = vmatmul.bf16.gmra.mxu0 %v1275
      %v1301 = vpop.f32.mrf.mxu0
      %v1302 = vadd.f32 0.0, %v1301
      %v1303 = vpop.f32.mrf.mxu0
      %v1304 = vadd.f32 0.0, %v1303
      %1305 = vdwg.mxu0
      %v1306 = vmul.f32 %v1287, %v1241
      %v1307 = vmul.f32 %v1289, %v1242
      %v1308 = vmul.f32 %v1292, %v1243
      %v1309 = vmul.f32 %v1294, %v1244
      %v1310 = vmul.f32 %v1297, %v1245
      %v1311 = vmul.f32 %v1299, %v1246
      %v1312 = vmul.f32 %v1302, %v1247
      %v1313 = vmul.f32 %v1304, %v1248
      %v1314 = vpack.c.bf16 %v842, %v842
      %1315 = vrot.lane.b32.xlu0 %v873, 112
      %v1316 = vpop.permute.xlu0 %1315
      %1317 = vrot.lane.b32.xlu0 %v874, 112
      %v1318 = vpop.permute.xlu0 %1317
      %1319 = vrot.lane.b32.xlu0 %v875, 112
      %v1320 = vpop.permute.xlu0 %1319
      %1321 = vrot.lane.b32.xlu0 %v876, 112
      %v1322 = vpop.permute.xlu0 %1321
      %v1324 = vsel %vm877, %v1316, 0
      %v1327 = vsel %vm877, %v1318, 0
      %v1330 = vsel %vm877, %v1320, 0
      %v1333 = vsel %vm877, %v1322, 0
      %v1336 = vsel %vm890, %v1314, 0
      %1338 = vmatpush.bf16.msra.mxu0 0
      %1339 = vmatpush.bf16.msra.mxu0 0
      %1340 = vmatpush.bf16.msra.mxu0 0
      %1341 = vmatpush.bf16.msra.mxu0 0
      %1342 = vmatpush.bf16.msra.mxu0 0
      %1343 = vmatpush.bf16.msra.mxu0 0
      %1344 = vmatpush.bf16.msra.mxu0 0
      %1345 = vmatpush.bf16.msra.mxu0 %v1336
      %1346 = vmatmul.bf16.gmra.mxu0 %v1324
      %v1347 = vpop.f32.mrf.mxu0
      %v1348 = vadd.f32 0.0, %v1347
      %v1349 = vpop.f32.mrf.mxu0
      %v1350 = vadd.f32 0.0, %v1349
      %1351 = vmatmul.bf16.gmra.mxu0 %v1327
      %v1352 = vpop.f32.mrf.mxu0
      %v1353 = vadd.f32 0.0, %v1352
      %v1354 = vpop.f32.mrf.mxu0
      %v1355 = vadd.f32 0.0, %v1354
      %1356 = vmatmul.bf16.gmra.mxu0 %v1330
      %v1357 = vpop.f32.mrf.mxu0
      %v1358 = vadd.f32 0.0, %v1357
      %v1359 = vpop.f32.mrf.mxu0
      %v1360 = vadd.f32 0.0, %v1359
      %1361 = vmatmul.bf16.gmra.mxu0 %v1333
      %v1362 = vpop.f32.mrf.mxu0
      %v1363 = vadd.f32 0.0, %v1362
      %v1364 = vpop.f32.mrf.mxu0
      %v1365 = vadd.f32 0.0, %v1364
      %1366 = vdwg.mxu0
      %v1367 = vmul.f32 %v1348, 0.35355338
      %v1368 = vmul.f32 %v1350, 0.35355338
      %v1369 = vmul.f32 %v1353, 0.35355338
      %v1370 = vmul.f32 %v1355, 0.35355338
      %v1371 = vmul.f32 %v1358, 0.35355338
      %v1372 = vmul.f32 %v1360, 0.35355338
      %v1373 = vmul.f32 %v1363, 0.35355338
      %v1374 = vmul.f32 %v1365, 0.35355338
      %v1375 = vadd.f32 %v1367, %v932
      %v1376 = vadd.f32 %v1368, %v932
      %v1377 = vadd.f32 %v1369, %v932
      %v1378 = vadd.f32 %v1370, %v932
      %v1379 = vadd.f32 %v1371, %v932
      %v1380 = vadd.f32 %v1372, %v932
      %v1381 = vadd.f32 %v1373, %v932
      %v1382 = vadd.f32 %v1374, %v932
      %v1383 = vsel %vm942, %v1375, -inf
      %1384 = vmax.xlane.f32.xlu0 %v1383
      %v1385 = vpop.xlane.xlu0 %1384
      %v1386 = vsel %vm942, %v1376, -inf
      %1387 = vmax.xlane.f32.xlu0 %v1386
      %v1388 = vpop.xlane.xlu0 %1387
      %v1389 = vsel %vm942, %v1377, -inf
      %1390 = vmax.xlane.f32.xlu0 %v1389
      %v1391 = vpop.xlane.xlu0 %1390
      %v1392 = vsel %vm942, %v1378, -inf
      %1393 = vmax.xlane.f32.xlu0 %v1392
      %v1394 = vpop.xlane.xlu0 %1393
      %v1395 = vsel %vm942, %v1379, -inf
      %1396 = vmax.xlane.f32.xlu0 %v1395
      %v1397 = vpop.xlane.xlu0 %1396
      %v1398 = vsel %vm942, %v1380, -inf
      %1399 = vmax.xlane.f32.xlu0 %v1398
      %v1400 = vpop.xlane.xlu0 %1399
      %v1401 = vsel %vm942, %v1381, -inf
      %1402 = vmax.xlane.f32.xlu0 %v1401
      %v1403 = vpop.xlane.xlu0 %1402
      %v1404 = vsel %vm942, %v1382, -inf
      %1405 = vmax.xlane.f32.xlu0 %v1404
      %v1406 = vpop.xlane.xlu0 %1405
      %v1407 = vsub.f32 %v1375, %v1385
      %v1408 = vsub.f32 %v1376, %v1388
      %v1409 = vsub.f32 %v1377, %v1391
      %v1410 = vsub.f32 %v1378, %v1394
      %v1411 = vsub.f32 %v1379, %v1397
      %v1412 = vsub.f32 %v1380, %v1400
      %v1413 = vsub.f32 %v1381, %v1403
      %v1414 = vsub.f32 %v1382, %v1406
      %v1415 = vmul.f32 %v1407, 1.442695
      %v1416 = vpow.pop %v1415
      %v1417 = vmul.f32 %v1408, 1.442695
      %v1418 = vpow.pop %v1417
      %v1419 = vmul.f32 %v1409, 1.442695
      %v1420 = vpow.pop %v1419
      %v1421 = vmul.f32 %v1410, 1.442695
      %v1422 = vpow.pop %v1421
      %v1423 = vmul.f32 %v1411, 1.442695
      %v1424 = vpow.pop %v1423
      %v1425 = vmul.f32 %v1412, 1.442695
      %v1426 = vpow.pop %v1425
      %v1427 = vmul.f32 %v1413, 1.442695
      %v1428 = vpow.pop %v1427
      %v1429 = vmul.f32 %v1414, 1.442695
      %v1430 = vpow.pop %v1429
      %v1431 = vsel %vm942, %v1416, 0.0
      %1432 = vadd.xlane.f32.xlu0 %v1431
      %v1433 = vpop.xlane.xlu0 %1432
      %v1434 = vsel %vm942, %v1418, 0.0
      %1435 = vadd.xlane.f32.xlu0 %v1434
      %v1436 = vpop.xlane.xlu0 %1435
      %v1437 = vsel %vm942, %v1420, 0.0
      %1438 = vadd.xlane.f32.xlu0 %v1437
      %v1439 = vpop.xlane.xlu0 %1438
      %v1440 = vsel %vm942, %v1422, 0.0
      %1441 = vadd.xlane.f32.xlu0 %v1440
      %v1442 = vpop.xlane.xlu0 %1441
      %v1443 = vsel %vm942, %v1424, 0.0
      %1444 = vadd.xlane.f32.xlu0 %v1443
      %v1445 = vpop.xlane.xlu0 %1444
      %v1446 = vsel %vm942, %v1426, 0.0
      %1447 = vadd.xlane.f32.xlu0 %v1446
      %v1448 = vpop.xlane.xlu0 %1447
      %v1449 = vsel %vm942, %v1428, 0.0
      %1450 = vadd.xlane.f32.xlu0 %v1449
      %v1451 = vpop.xlane.xlu0 %1450
      %v1452 = vsel %vm942, %v1430, 0.0
      %1453 = vadd.xlane.f32.xlu0 %v1452
      %v1454 = vpop.xlane.xlu0 %1453
      %v1455 = vrcp.pop %v1433
      %v1456 = vrcp.pop %v1436
      %v1457 = vrcp.pop %v1439
      %v1458 = vrcp.pop %v1442
      %v1459 = vrcp.pop %v1445
      %v1460 = vrcp.pop %v1448
      %v1461 = vrcp.pop %v1451
      %v1462 = vrcp.pop %v1454
      %v1463 = vpack.c.bf16 %v1418, %v1416
      %v1464 = vpack.c.bf16 %v1422, %v1420
      %v1465 = vpack.c.bf16 %v1426, %v1424
      %v1466 = vpack.c.bf16 %v1430, %v1428
      %1467 = vrot.lane.b32.xlu0 %v1043, 112
      %v1468 = vpop.permute.xlu0 %1467
      %1469 = vrot.lane.b32.xlu0 %v1044, 112
      %v1470 = vpop.permute.xlu0 %1469
      %1471 = vrot.lane.b32.xlu0 %v1045, 112
      %v1472 = vpop.permute.xlu0 %1471
      %1473 = vrot.lane.b32.xlu0 %v1046, 112
      %v1474 = vpop.permute.xlu0 %1473
      %v1480 = vsel %vm942, %v1463, 0
      %v1483 = vsel %vm942, %v1464, 0
      %v1486 = vsel %vm942, %v1465, 0
      %v1489 = vsel %vm942, %v1466, 0
      %1491 = vmatpush.bf16.msra.mxu0 0
      %1492 = vmatpush.bf16.msra.mxu0 0
      %1493 = vmatpush.bf16.msra.mxu0 0
      %1494 = vmatpush.bf16.msra.mxu0 0
      %1495 = vmatpush.bf16.msra.mxu0 %v1474
      %1496 = vmatpush.bf16.msra.mxu0 %v1472
      %1497 = vmatpush.bf16.msra.mxu0 %v1470
      %1498 = vmatpush.bf16.msra.mxu0 %v1468
      %1499 = vmatmul.bf16.gmra.mxu0 %v1480
      %v1500 = vpop.f32.mrf.mxu0
      %v1501 = vadd.f32 0.0, %v1500
      %v1502 = vpop.f32.mrf.mxu0
      %v1503 = vadd.f32 0.0, %v1502
      %1504 = vmatmul.bf16.gmra.mxu0 %v1483
      %v1505 = vpop.f32.mrf.mxu0
      %v1506 = vadd.f32 0.0, %v1505
      %v1507 = vpop.f32.mrf.mxu0
      %v1508 = vadd.f32 0.0, %v1507
      %1509 = vmatmul.bf16.gmra.mxu0 %v1486
      %v1510 = vpop.f32.mrf.mxu0
      %v1511 = vadd.f32 0.0, %v1510
      %v1512 = vpop.f32.mrf.mxu0
      %v1513 = vadd.f32 0.0, %v1512
      %1514 = vmatmul.bf16.gmra.mxu0 %v1489
      %v1515 = vpop.f32.mrf.mxu0
      %v1516 = vadd.f32 0.0, %v1515
      %v1517 = vpop.f32.mrf.mxu0
      %v1518 = vadd.f32 0.0, %v1517
      %1519 = vdwg.mxu0
      %v1520 = vmul.f32 %v1501, %v1455
      %v1521 = vmul.f32 %v1503, %v1456
      %v1522 = vmul.f32 %v1506, %v1457
      %v1523 = vmul.f32 %v1508, %v1458
      %v1524 = vmul.f32 %v1511, %v1459
      %v1525 = vmul.f32 %v1513, %v1460
      %v1526 = vmul.f32 %v1516, %v1461
      %v1527 = vmul.f32 %v1518, %v1462
      %v1528 = vpack.c.bf16 %v843, %v843
      %1529 = vrot.lane.b32.xlu0 %v873, 104
      %v1530 = vpop.permute.xlu0 %1529
      %1531 = vrot.lane.b32.xlu0 %v874, 104
      %v1532 = vpop.permute.xlu0 %1531
      %1533 = vrot.lane.b32.xlu0 %v875, 104
      %v1534 = vpop.permute.xlu0 %1533
      %1535 = vrot.lane.b32.xlu0 %v876, 104
      %v1536 = vpop.permute.xlu0 %1535
      %v1538 = vsel %vm877, %v1530, 0
      %v1541 = vsel %vm877, %v1532, 0
      %v1544 = vsel %vm877, %v1534, 0
      %v1547 = vsel %vm877, %v1536, 0
      %v1550 = vsel %vm890, %v1528, 0
      %1552 = vmatpush.bf16.msra.mxu0 0
      %1553 = vmatpush.bf16.msra.mxu0 0
      %1554 = vmatpush.bf16.msra.mxu0 0
      %1555 = vmatpush.bf16.msra.mxu0 0
      %1556 = vmatpush.bf16.msra.mxu0 0
      %1557 = vmatpush.bf16.msra.mxu0 0
      %1558 = vmatpush.bf16.msra.mxu0 0
      %1559 = vmatpush.bf16.msra.mxu0 %v1550
      %1560 = vmatmul.bf16.gmra.mxu0 %v1538
      %v1561 = vpop.f32.mrf.mxu0
      %v1562 = vadd.f32 0.0, %v1561
      %v1563 = vpop.f32.mrf.mxu0
      %v1564 = vadd.f32 0.0, %v1563
      %1565 = vmatmul.bf16.gmra.mxu0 %v1541
      %v1566 = vpop.f32.mrf.mxu0
      %v1567 = vadd.f32 0.0, %v1566
      %v1568 = vpop.f32.mrf.mxu0
      %v1569 = vadd.f32 0.0, %v1568
      %1570 = vmatmul.bf16.gmra.mxu0 %v1544
      %v1571 = vpop.f32.mrf.mxu0
      %v1572 = vadd.f32 0.0, %v1571
      %v1573 = vpop.f32.mrf.mxu0
      %v1574 = vadd.f32 0.0, %v1573
      %1575 = vmatmul.bf16.gmra.mxu0 %v1547
      %v1576 = vpop.f32.mrf.mxu0
      %v1577 = vadd.f32 0.0, %v1576
      %v1578 = vpop.f32.mrf.mxu0
      %v1579 = vadd.f32 0.0, %v1578
      %1580 = vdwg.mxu0
      %v1581 = vmul.f32 %v1562, 0.35355338
      %v1582 = vmul.f32 %v1564, 0.35355338
      %v1583 = vmul.f32 %v1567, 0.35355338
      %v1584 = vmul.f32 %v1569, 0.35355338
      %v1585 = vmul.f32 %v1572, 0.35355338
      %v1586 = vmul.f32 %v1574, 0.35355338
      %v1587 = vmul.f32 %v1577, 0.35355338
      %v1588 = vmul.f32 %v1579, 0.35355338
      %v1589 = vadd.f32 %v1581, %v932
      %v1590 = vadd.f32 %v1582, %v932
      %v1591 = vadd.f32 %v1583, %v932
      %v1592 = vadd.f32 %v1584, %v932
      %v1593 = vadd.f32 %v1585, %v932
      %v1594 = vadd.f32 %v1586, %v932
      %v1595 = vadd.f32 %v1587, %v932
      %v1596 = vadd.f32 %v1588, %v932
      %v1597 = vsel %vm942, %v1589, -inf
      %1598 = vmax.xlane.f32.xlu0 %v1597
      %v1599 = vpop.xlane.xlu0 %1598
      %v1600 = vsel %vm942, %v1590, -inf
      %1601 = vmax.xlane.f32.xlu0 %v1600
      %v1602 = vpop.xlane.xlu0 %1601
      %v1603 = vsel %vm942, %v1591, -inf
      %1604 = vmax.xlane.f32.xlu0 %v1603
      %v1605 = vpop.xlane.xlu0 %1604
      %v1606 = vsel %vm942, %v1592, -inf
      %1607 = vmax.xlane.f32.xlu0 %v1606
      %v1608 = vpop.xlane.xlu0 %1607
      %v1609 = vsel %vm942, %v1593, -inf
      %1610 = vmax.xlane.f32.xlu0 %v1609
      %v1611 = vpop.xlane.xlu0 %1610
      %v1612 = vsel %vm942, %v1594, -inf
      %1613 = vmax.xlane.f32.xlu0 %v1612
      %v1614 = vpop.xlane.xlu0 %1613
      %v1615 = vsel %vm942, %v1595, -inf
      %1616 = vmax.xlane.f32.xlu0 %v1615
      %v1617 = vpop.xlane.xlu0 %1616
      %v1618 = vsel %vm942, %v1596, -inf
      %1619 = vmax.xlane.f32.xlu0 %v1618
      %v1620 = vpop.xlane.xlu0 %1619
      %v1621 = vsub.f32 %v1589, %v1599
      %v1622 = vsub.f32 %v1590, %v1602
      %v1623 = vsub.f32 %v1591, %v1605
      %v1624 = vsub.f32 %v1592, %v1608
      %v1625 = vsub.f32 %v1593, %v1611
      %v1626 = vsub.f32 %v1594, %v1614
      %v1627 = vsub.f32 %v1595, %v1617
      %v1628 = vsub.f32 %v1596, %v1620
      %v1629 = vmul.f32 %v1621, 1.442695
      %v1630 = vpow.pop %v1629
      %v1631 = vmul.f32 %v1622, 1.442695
      %v1632 = vpow.pop %v1631
      %v1633 = vmul.f32 %v1623, 1.442695
      %v1634 = vpow.pop %v1633
      %v1635 = vmul.f32 %v1624, 1.442695
      %v1636 = vpow.pop %v1635
      %v1637 = vmul.f32 %v1625, 1.442695
      %v1638 = vpow.pop %v1637
      %v1639 = vmul.f32 %v1626, 1.442695
      %v1640 = vpow.pop %v1639
      %v1641 = vmul.f32 %v1627, 1.442695
      %v1642 = vpow.pop %v1641
      %v1643 = vmul.f32 %v1628, 1.442695
      %v1644 = vpow.pop %v1643
      %v1645 = vsel %vm942, %v1630, 0.0
      %1646 = vadd.xlane.f32.xlu0 %v1645
      %v1647 = vpop.xlane.xlu0 %1646
      %v1648 = vsel %vm942, %v1632, 0.0
      %1649 = vadd.xlane.f32.xlu0 %v1648
      %v1650 = vpop.xlane.xlu0 %1649
      %v1651 = vsel %vm942, %v1634, 0.0
      %1652 = vadd.xlane.f32.xlu0 %v1651
      %v1653 = vpop.xlane.xlu0 %1652
      %v1654 = vsel %vm942, %v1636, 0.0
      %1655 = vadd.xlane.f32.xlu0 %v1654
      %v1656 = vpop.xlane.xlu0 %1655
      %v1657 = vsel %vm942, %v1638, 0.0
      %1658 = vadd.xlane.f32.xlu0 %v1657
      %v1659 = vpop.xlane.xlu0 %1658
      %v1660 = vsel %vm942, %v1640, 0.0
      %1661 = vadd.xlane.f32.xlu0 %v1660
      %v1662 = vpop.xlane.xlu0 %1661
      %v1663 = vsel %vm942, %v1642, 0.0
      %1664 = vadd.xlane.f32.xlu0 %v1663
      %v1665 = vpop.xlane.xlu0 %1664
      %v1666 = vsel %vm942, %v1644, 0.0
      %1667 = vadd.xlane.f32.xlu0 %v1666
      %v1668 = vpop.xlane.xlu0 %1667
      %v1669 = vrcp.pop %v1647
      %v1670 = vrcp.pop %v1650
      %v1671 = vrcp.pop %v1653
      %v1672 = vrcp.pop %v1656
      %v1673 = vrcp.pop %v1659
      %v1674 = vrcp.pop %v1662
      %v1675 = vrcp.pop %v1665
      %v1676 = vrcp.pop %v1668
      %v1677 = vpack.c.bf16 %v1632, %v1630
      %v1678 = vpack.c.bf16 %v1636, %v1634
      %v1679 = vpack.c.bf16 %v1640, %v1638
      %v1680 = vpack.c.bf16 %v1644, %v1642
      %1681 = vrot.lane.b32.xlu0 %v1043, 104
      %v1682 = vpop.permute.xlu0 %1681
      %1683 = vrot.lane.b32.xlu0 %v1044, 104
      %v1684 = vpop.permute.xlu0 %1683
      %1685 = vrot.lane.b32.xlu0 %v1045, 104
      %v1686 = vpop.permute.xlu0 %1685
      %1687 = vrot.lane.b32.xlu0 %v1046, 104
      %v1688 = vpop.permute.xlu0 %1687
      %v1694 = vsel %vm942, %v1677, 0
      %v1697 = vsel %vm942, %v1678, 0
      %v1700 = vsel %vm942, %v1679, 0
      %v1703 = vsel %vm942, %v1680, 0
      %1705 = vmatpush.bf16.msra.mxu0 0
      %1706 = vmatpush.bf16.msra.mxu0 0
      %1707 = vmatpush.bf16.msra.mxu0 0
      %1708 = vmatpush.bf16.msra.mxu0 0
      %1709 = vmatpush.bf16.msra.mxu0 %v1688
      %1710 = vmatpush.bf16.msra.mxu0 %v1686
      %1711 = vmatpush.bf16.msra.mxu0 %v1684
      %1712 = vmatpush.bf16.msra.mxu0 %v1682
      %1713 = vmatmul.bf16.gmra.mxu0 %v1694
      %v1714 = vpop.f32.mrf.mxu0
      %v1715 = vadd.f32 0.0, %v1714
      %v1716 = vpop.f32.mrf.mxu0
      %v1717 = vadd.f32 0.0, %v1716
      %1718 = vmatmul.bf16.gmra.mxu0 %v1697
      %v1719 = vpop.f32.mrf.mxu0
      %v1720 = vadd.f32 0.0, %v1719
      %v1721 = vpop.f32.mrf.mxu0
      %v1722 = vadd.f32 0.0, %v1721
      %1723 = vmatmul.bf16.gmra.mxu0 %v1700
      %v1724 = vpop.f32.mrf.mxu0
      %v1725 = vadd.f32 0.0, %v1724
      %v1726 = vpop.f32.mrf.mxu0
      %v1727 = vadd.f32 0.0, %v1726
      %1728 = vmatmul.bf16.gmra.mxu0 %v1703
      %v1729 = vpop.f32.mrf.mxu0
      %v1730 = vadd.f32 0.0, %v1729
      %v1731 = vpop.f32.mrf.mxu0
      %v1732 = vadd.f32 0.0, %v1731
      %1733 = vdwg.mxu0
      %v1734 = vmul.f32 %v1715, %v1669
      %v1735 = vmul.f32 %v1717, %v1670
      %v1736 = vmul.f32 %v1720, %v1671
      %v1737 = vmul.f32 %v1722, %v1672
      %v1738 = vmul.f32 %v1725, %v1673
      %v1739 = vmul.f32 %v1727, %v1674
      %v1740 = vmul.f32 %v1730, %v1675
      %v1741 = vmul.f32 %v1732, %v1676
      %1750 = vrot.lane.b32.xlu0 %v1306, 8
      %v1751 = vpop.permute.xlu0 %1750
      %1752 = vrot.lane.b32.xlu0 %v1307, 8
      %v1753 = vpop.permute.xlu0 %1752
      %1754 = vrot.lane.b32.xlu0 %v1308, 8
      %v1755 = vpop.permute.xlu0 %1754
      %1756 = vrot.lane.b32.xlu0 %v1309, 8
      %v1757 = vpop.permute.xlu0 %1756
      %1758 = vrot.lane.b32.xlu0 %v1310, 8
      %v1759 = vpop.permute.xlu0 %1758
      %1760 = vrot.lane.b32.xlu0 %v1311, 8
      %v1761 = vpop.permute.xlu0 %1760
      %1762 = vrot.lane.b32.xlu0 %v1312, 8
      %v1763 = vpop.permute.xlu0 %1762
      %1764 = vrot.lane.b32.xlu0 %v1313, 8
      %v1765 = vpop.permute.xlu0 %1764
      %1782 = vrot.lane.b32.xlu0 %v1520, 16
      %v1783 = vpop.permute.xlu0 %1782
      %1784 = vrot.lane.b32.xlu0 %v1521, 16
      %v1785 = vpop.permute.xlu0 %1784
      %1786 = vrot.lane.b32.xlu0 %v1522, 16
      %v1787 = vpop.permute.xlu0 %1786
      %1788 = vrot.lane.b32.xlu0 %v1523, 16
      %v1789 = vpop.permute.xlu0 %1788
      %1790 = vrot.lane.b32.xlu0 %v1524, 16
      %v1791 = vpop.permute.xlu0 %1790
      %1792 = vrot.lane.b32.xlu0 %v1525, 16
      %v1793 = vpop.permute.xlu0 %1792
      %1794 = vrot.lane.b32.xlu0 %v1526, 16
      %v1795 = vpop.permute.xlu0 %1794
      %1796 = vrot.lane.b32.xlu0 %v1527, 16
      %v1797 = vpop.permute.xlu0 %1796
      %1814 = vrot.lane.b32.xlu0 %v1734, 24
      %v1815 = vpop.permute.xlu0 %1814
      %1816 = vrot.lane.b32.xlu0 %v1735, 24
      %v1817 = vpop.permute.xlu0 %1816
      %1818 = vrot.lane.b32.xlu0 %v1736, 24
      %v1819 = vpop.permute.xlu0 %1818
      %1820 = vrot.lane.b32.xlu0 %v1737, 24
      %v1821 = vpop.permute.xlu0 %1820
      %1822 = vrot.lane.b32.xlu0 %v1738, 24
      %v1823 = vpop.permute.xlu0 %1822
      %1824 = vrot.lane.b32.xlu0 %v1739, 24
      %v1825 = vpop.permute.xlu0 %1824
      %1826 = vrot.lane.b32.xlu0 %v1740, 24
      %v1827 = vpop.permute.xlu0 %1826
      %1828 = vrot.lane.b32.xlu0 %v1741, 24
      %v1829 = vpop.permute.xlu0 %1828
      %v1838 = vsel %vm877, %v1092, %v1751
      %v1839 = vsel %vm877, %v1093, %v1753
      %v1840 = vsel %vm877, %v1094, %v1755
      %v1841 = vsel %vm877, %v1095, %v1757
      %v1842 = vsel %vm877, %v1096, %v1759
      %v1843 = vsel %vm877, %v1097, %v1761
      %v1844 = vsel %vm877, %v1098, %v1763
      %v1845 = vsel %vm877, %v1099, %v1765
      %vm1846 = vcmask 130048
      %v1847 = vsel %vm1846, %v1838, %v1783
      %v1848 = vsel %vm1846, %v1839, %v1785
      %v1849 = vsel %vm1846, %v1840, %v1787
      %v1850 = vsel %vm1846, %v1841, %v1789
      %v1851 = vsel %vm1846, %v1842, %v1791
      %v1852 = vsel %vm1846, %v1843, %v1793
      %v1853 = vsel %vm1846, %v1844, %v1795
      %v1854 = vsel %vm1846, %v1845, %v1797
      %vm1855 = vcmask 195584
      %v1856 = vsel %vm1855, %v1847, %v1815
      %v1857 = vsel %vm1855, %v1848, %v1817
      %v1858 = vsel %vm1855, %v1849, %v1819
      %v1859 = vsel %vm1855, %v1850, %v1821
      %v1860 = vsel %vm1855, %v1851, %v1823
      %v1861 = vsel %vm1855, %v1852, %v1825
      %v1862 = vsel %vm1855, %v1853, %v1827
      %v1863 = vsel %vm1855, %v1854, %v1829
      %v1864 = vpack.c.bf16 %v1857, %v1856
      %v1865 = vpack.c.bf16 %v1859, %v1858
      %v1866 = vpack.c.bf16 %v1861, %v1860
      %v1867 = vpack.c.bf16 %v1863, %v1862
      %v1869 = vperm.slane %v630, 0
      %v1875 = vunpack.c.l.b16 %v623
      %v1876 = vunpack.c.l.b16 %v624
      %v1877 = vunpack.c.l.b16 %v625
      %v1878 = vunpack.c.l.b16 %v626
      %v1879 = vpack.c.b16 %v1876, %v1875
      %v1880 = vpack.c.b16 %v1878, %v1877
      %v1884 = vsel %vm662, %v1864, 0
      %v1887 = vsel %vm662, %v1865, 0
      %v1890 = vsel %vm662, %v1866, 0
      %v1893 = vsel %vm662, %v1867, 0
      %1895 = vmatpush.bf16.msra.mxu0 0
      %1896 = vmatpush.bf16.msra.mxu0 0
      %1897 = vmatpush.bf16.msra.mxu0 0
      %1898 = vmatpush.bf16.msra.mxu0 0
      %1899 = vmatpush.bf16.msra.mxu0 0
      %1900 = vmatpush.bf16.msra.mxu0 0
      %1901 = vmatpush.bf16.msra.mxu0 %v1880
      %1902 = vmatpush.bf16.msra.mxu0 %v1879
      %1903 = vmatmul.bf16.gmra.mxu0 %v1884
      %v1904 = vpop.f32.mrf.mxu0
      %v1905 = vadd.f32 %v1869, %v1904
      %v1906 = vpop.f32.mrf.mxu0
      %v1907 = vadd.f32 %v1869, %v1906
      %1908 = vmatmul.bf16.gmra.mxu0 %v1887
      %v1909 = vpop.f32.mrf.mxu0
      %v1910 = vadd.f32 %v1869, %v1909
      %v1911 = vpop.f32.mrf.mxu0
      %v1912 = vadd.f32 %v1869, %v1911
      %1913 = vmatmul.bf16.gmra.mxu0 %v1890
      %v1914 = vpop.f32.mrf.mxu0
      %v1915 = vadd.f32 %v1869, %v1914
      %v1916 = vpop.f32.mrf.mxu0
      %v1917 = vadd.f32 %v1869, %v1916
      %1918 = vmatmul.bf16.gmra.mxu0 %v1893
      %v1919 = vpop.f32.mrf.mxu0
      %v1920 = vadd.f32 %v1869, %v1919
      %v1921 = vpop.f32.mrf.mxu0
      %v1922 = vadd.f32 %v1869, %v1921
      %1923 = vdwg.mxu0
      %v1924 = vadd.f32 %v594, %v1905
      %v1925 = vadd.f32 %v595, %v1907
      %v1926 = vadd.f32 %v596, %v1910
      %v1927 = vadd.f32 %v597, %v1912
      %v1928 = vadd.f32 %v598, %v1915
      %v1929 = vadd.f32 %v599, %v1917
      %v1930 = vadd.f32 %v600, %v1920
      %v1931 = vadd.f32 %v601, %v1922
      %v1932 = vsel %vm662, %v1924, 0.0
      %1933 = vadd.xlane.f32.xlu0 %v1932
      %v1934 = vpop.xlane.xlu0 %1933
      %v1935 = vsel %vm662, %v1925, 0.0
      %1936 = vadd.xlane.f32.xlu0 %v1935
      %v1937 = vpop.xlane.xlu0 %1936
      %v1938 = vsel %vm662, %v1926, 0.0
      %1939 = vadd.xlane.f32.xlu0 %v1938
      %v1940 = vpop.xlane.xlu0 %1939
      %v1941 = vsel %vm662, %v1927, 0.0
      %1942 = vadd.xlane.f32.xlu0 %v1941
      %v1943 = vpop.xlane.xlu0 %1942
      %v1944 = vsel %vm662, %v1928, 0.0
      %1945 = vadd.xlane.f32.xlu0 %v1944
      %v1946 = vpop.xlane.xlu0 %1945
      %v1947 = vsel %vm662, %v1929, 0.0
      %1948 = vadd.xlane.f32.xlu0 %v1947
      %v1949 = vpop.xlane.xlu0 %1948
      %v1950 = vsel %vm662, %v1930, 0.0
      %1951 = vadd.xlane.f32.xlu0 %v1950
      %v1952 = vpop.xlane.xlu0 %1951
      %v1953 = vsel %vm662, %v1931, 0.0
      %1954 = vadd.xlane.f32.xlu0 %v1953
      %v1955 = vpop.xlane.xlu0 %1954
      %v1956 = vrcp.pop 32.0
      %v1957 = vmul.f32 32.0, %v1956
      %v1958 = vsub.f32 1.0, %v1957
      %v1959 = vmul.f32 %v1956, %v1958
      %v1960 = vadd.f32 %v1956, %v1959
      %vm1961 = vweird.f32 %v1956
      %v1962 = vsel %vm1961, %v1956, %v1960
      %v1963 = vmul.f32 %v1934, %v1962
      %v1964 = vmul.f32 %v1937, %v1962
      %v1965 = vmul.f32 %v1940, %v1962
      %v1966 = vmul.f32 %v1943, %v1962
      %v1967 = vmul.f32 %v1946, %v1962
      %v1968 = vmul.f32 %v1949, %v1962
      %v1969 = vmul.f32 %v1952, %v1962
      %v1970 = vmul.f32 %v1955, %v1962
      %v1971 = vsub.f32 %v1924, %v1963
      %v1972 = vsub.f32 %v1925, %v1964
      %v1973 = vsub.f32 %v1926, %v1965
      %v1974 = vsub.f32 %v1927, %v1966
      %v1975 = vsub.f32 %v1928, %v1967
      %v1976 = vsub.f32 %v1929, %v1968
      %v1977 = vsub.f32 %v1930, %v1969
      %v1978 = vsub.f32 %v1931, %v1970
      %v1979 = vmul.f32 %v1971, %v1971
      %v1980 = vmul.f32 %v1972, %v1972
      %v1981 = vmul.f32 %v1973, %v1973
      %v1982 = vmul.f32 %v1974, %v1974
      %v1983 = vmul.f32 %v1975, %v1975
      %v1984 = vmul.f32 %v1976, %v1976
      %v1985 = vmul.f32 %v1977, %v1977
      %v1986 = vmul.f32 %v1978, %v1978
      %v1987 = vsel %vm662, %v1979, 0.0
      %1988 = vadd.xlane.f32.xlu0 %v1987
      %v1989 = vpop.xlane.xlu0 %1988
      %v1990 = vsel %vm662, %v1980, 0.0
      %1991 = vadd.xlane.f32.xlu0 %v1990
      %v1992 = vpop.xlane.xlu0 %1991
      %v1993 = vsel %vm662, %v1981, 0.0
      %1994 = vadd.xlane.f32.xlu0 %v1993
      %v1995 = vpop.xlane.xlu0 %1994
      %v1996 = vsel %vm662, %v1982, 0.0
      %1997 = vadd.xlane.f32.xlu0 %v1996
      %v1998 = vpop.xlane.xlu0 %1997
      %v1999 = vsel %vm662, %v1983, 0.0
      %2000 = vadd.xlane.f32.xlu0 %v1999
      %v2001 = vpop.xlane.xlu0 %2000
      %v2002 = vsel %vm662, %v1984, 0.0
      %2003 = vadd.xlane.f32.xlu0 %v2002
      %v2004 = vpop.xlane.xlu0 %2003
      %v2005 = vsel %vm662, %v1985, 0.0
      %2006 = vadd.xlane.f32.xlu0 %v2005
      %v2007 = vpop.xlane.xlu0 %2006
      %v2008 = vsel %vm662, %v1986, 0.0
      %2009 = vadd.xlane.f32.xlu0 %v2008
      %v2010 = vpop.xlane.xlu0 %2009
      %v2011 = vmul.f32 %v1989, %v1962
      %v2012 = vmul.f32 %v1992, %v1962
      %v2013 = vmul.f32 %v1995, %v1962
      %v2014 = vmul.f32 %v1998, %v1962
      %v2015 = vmul.f32 %v2001, %v1962
      %v2016 = vmul.f32 %v2004, %v1962
      %v2017 = vmul.f32 %v2007, %v1962
      %v2018 = vmul.f32 %v2010, %v1962
      %v2019 = vadd.f32 %v2011, 1e-05
      %v2020 = vadd.f32 %v2012, 1e-05
      %v2021 = vadd.f32 %v2013, 1e-05
      %v2022 = vadd.f32 %v2014, 1e-05
      %v2023 = vadd.f32 %v2015, 1e-05
      %v2024 = vadd.f32 %v2016, 1e-05
      %v2025 = vadd.f32 %v2017, 1e-05
      %v2026 = vadd.f32 %v2018, 1e-05
      %v2027 = vrsqrt.pop %v2019
      %v2028 = vmul.f32 %v2027, %v2019
      %v2029 = vmul.f32 %v2028, %v2027
      %v2030 = vmul.f32 0.5, %v2029
      %v2031 = vsub.f32 1.5, %v2030
      %v2032 = vmul.f32 %v2027, %v2031
      %vm2033 = vweird.f32 %v2019
      %vm2034 = vweird.f32 %v2027
      %vm2035 = vmor %vm2033, %vm2034
      %v2036 = vsel %vm2035, %v2027, %v2032
      %v2037 = vrsqrt.pop %v2020
      %v2038 = vmul.f32 %v2037, %v2020
      %v2039 = vmul.f32 %v2038, %v2037
      %v2040 = vmul.f32 0.5, %v2039
      %v2041 = vsub.f32 1.5, %v2040
      %v2042 = vmul.f32 %v2037, %v2041
      %vm2043 = vweird.f32 %v2020
      %vm2044 = vweird.f32 %v2037
      %vm2045 = vmor %vm2043, %vm2044
      %v2046 = vsel %vm2045, %v2037, %v2042
      %v2047 = vrsqrt.pop %v2021
      %v2048 = vmul.f32 %v2047, %v2021
      %v2049 = vmul.f32 %v2048, %v2047
      %v2050 = vmul.f32 0.5, %v2049
      %v2051 = vsub.f32 1.5, %v2050
      %v2052 = vmul.f32 %v2047, %v2051
      %vm2053 = vweird.f32 %v2021
      %vm2054 = vweird.f32 %v2047
      %vm2055 = vmor %vm2053, %vm2054
      %v2056 = vsel %vm2055, %v2047, %v2052
      %v2057 = vrsqrt.pop %v2022
      %v2058 = vmul.f32 %v2057, %v2022
      %v2059 = vmul.f32 %v2058, %v2057
      %v2060 = vmul.f32 0.5, %v2059
      %v2061 = vsub.f32 1.5, %v2060
      %v2062 = vmul.f32 %v2057, %v2061
      %vm2063 = vweird.f32 %v2022
      %vm2064 = vweird.f32 %v2057
      %vm2065 = vmor %vm2063, %vm2064
      %v2066 = vsel %vm2065, %v2057, %v2062
      %v2067 = vrsqrt.pop %v2023
      %v2068 = vmul.f32 %v2067, %v2023
      %v2069 = vmul.f32 %v2068, %v2067
      %v2070 = vmul.f32 0.5, %v2069
      %v2071 = vsub.f32 1.5, %v2070
      %v2072 = vmul.f32 %v2067, %v2071
      %vm2073 = vweird.f32 %v2023
      %vm2074 = vweird.f32 %v2067
      %vm2075 = vmor %vm2073, %vm2074
      %v2076 = vsel %vm2075, %v2067, %v2072
      %v2077 = vrsqrt.pop %v2024
      %v2078 = vmul.f32 %v2077, %v2024
      %v2079 = vmul.f32 %v2078, %v2077
      %v2080 = vmul.f32 0.5, %v2079
      %v2081 = vsub.f32 1.5, %v2080
      %v2082 = vmul.f32 %v2077, %v2081
      %vm2083 = vweird.f32 %v2024
      %vm2084 = vweird.f32 %v2077
      %vm2085 = vmor %vm2083, %vm2084
      %v2086 = vsel %vm2085, %v2077, %v2082
      %v2087 = vrsqrt.pop %v2025
      %v2088 = vmul.f32 %v2087, %v2025
      %v2089 = vmul.f32 %v2088, %v2087
      %v2090 = vmul.f32 0.5, %v2089
      %v2091 = vsub.f32 1.5, %v2090
      %v2092 = vmul.f32 %v2087, %v2091
      %vm2093 = vweird.f32 %v2025
      %vm2094 = vweird.f32 %v2087
      %vm2095 = vmor %vm2093, %vm2094
      %v2096 = vsel %vm2095, %v2087, %v2092
      %v2097 = vrsqrt.pop %v2026
      %v2098 = vmul.f32 %v2097, %v2026
      %v2099 = vmul.f32 %v2098, %v2097
      %v2100 = vmul.f32 0.5, %v2099
      %v2101 = vsub.f32 1.5, %v2100
      %v2102 = vmul.f32 %v2097, %v2101
      %vm2103 = vweird.f32 %v2026
      %vm2104 = vweird.f32 %v2097
      %vm2105 = vmor %vm2103, %vm2104
      %v2106 = vsel %vm2105, %v2097, %v2102
      %v2107 = vmul.f32 %v1971, %v2036
      %v2108 = vmul.f32 %v1972, %v2046
      %v2109 = vmul.f32 %v1973, %v2056
      %v2110 = vmul.f32 %v1974, %v2066
      %v2111 = vmul.f32 %v1975, %v2076
      %v2112 = vmul.f32 %v1976, %v2086
      %v2113 = vmul.f32 %v1977, %v2096
      %v2114 = vmul.f32 %v1978, %v2106
      %v2116 = vperm.slane %v631, 0
      %v2118 = vmul.f32 %v2107, %v2116
      %v2119 = vmul.f32 %v2108, %v2116
      %v2120 = vmul.f32 %v2109, %v2116
      %v2121 = vmul.f32 %v2110, %v2116
      %v2122 = vmul.f32 %v2111, %v2116
      %v2123 = vmul.f32 %v2112, %v2116
      %v2124 = vmul.f32 %v2113, %v2116
      %v2125 = vmul.f32 %v2114, %v2116
      %v2127 = vperm.slane %v633, 0
      %v2129 = vadd.f32 %v2118, %v2127
      %v2130 = vadd.f32 %v2119, %v2127
      %v2131 = vadd.f32 %v2120, %v2127
      %v2132 = vadd.f32 %v2121, %v2127
      %v2133 = vadd.f32 %v2122, %v2127
      %v2134 = vadd.f32 %v2123, %v2127
      %v2135 = vadd.f32 %v2124, %v2127
      %v2136 = vadd.f32 %v2125, %v2127
      %v2137 = vld [vmem:[%s555] sm:$0xf]
      %v2138 = vld [vmem:[%s555 + $0x4] sm:$0xf]
      %v2139 = vld [vmem:[%s555 + $0x8] sm:$0xf]
      %v2140 = vld [vmem:[%s555 + $0xc] sm:$0xf]
      %v2141 = vpack.c.bf16 %v2130, %v2129
      %v2142 = vpack.c.bf16 %v2132, %v2131
      %v2143 = vpack.c.bf16 %v2134, %v2133
      %v2144 = vpack.c.bf16 %v2136, %v2135
      %v2145 = vld [vmem:[%s558] sm:$0x1]
      %v2147 = vperm.slane %v2145, 0
      %v2153 = vunpack.c.l.b16 %v2137
      %v2154 = vunpack.c.l.b16 %v2138
      %v2155 = vunpack.c.l.b16 %v2139
      %v2156 = vunpack.c.l.b16 %v2140
      %v2157 = vpack.c.b16 %v2154, %v2153
      %v2158 = vpack.c.b16 %v2156, %v2155
      %v2162 = vsel %vm662, %v2141, 0
      %v2165 = vsel %vm662, %v2142, 0
      %v2168 = vsel %vm662, %v2143, 0
      %v2171 = vsel %vm662, %v2144, 0
      %2173 = vmatpush.bf16.msra.mxu0 0
      %2174 = vmatpush.bf16.msra.mxu0 0
      %2175 = vmatpush.bf16.msra.mxu0 0
      %2176 = vmatpush.bf16.msra.mxu0 0
      %2177 = vmatpush.bf16.msra.mxu0 0
      %2178 = vmatpush.bf16.msra.mxu0 0
      %2179 = vmatpush.bf16.msra.mxu0 %v2158
      %2180 = vmatpush.bf16.msra.mxu0 %v2157
      %2181 = vmatmul.bf16.gmra.mxu0 %v2162
      %v2182 = vpop.f32.mrf.mxu0
      %v2183 = vadd.f32 %v2147, %v2182
      %v2184 = vpop.f32.mrf.mxu0
      %v2185 = vadd.f32 %v2147, %v2184
      %2186 = vmatmul.bf16.gmra.mxu0 %v2165
      %v2187 = vpop.f32.mrf.mxu0
      %v2188 = vadd.f32 %v2147, %v2187
      %v2189 = vpop.f32.mrf.mxu0
      %v2190 = vadd.f32 %v2147, %v2189
      %2191 = vmatmul.bf16.gmra.mxu0 %v2168
      %v2192 = vpop.f32.mrf.mxu0
      %v2193 = vadd.f32 %v2147, %v2192
      %v2194 = vpop.f32.mrf.mxu0
      %v2195 = vadd.f32 %v2147, %v2194
      %2196 = vmatmul.bf16.gmra.mxu0 %v2171
      %v2197 = vpop.f32.mrf.mxu0
      %v2198 = vadd.f32 %v2147, %v2197
      %v2199 = vpop.f32.mrf.mxu0
      %v2200 = vadd.f32 %v2147, %v2199
      %2201 = vdwg.mxu0
      %v2202 = vmax.f32 %v2183, 0.0
      %v2203 = vmax.f32 %v2185, 0.0
      %v2204 = vmax.f32 %v2188, 0.0
      %v2205 = vmax.f32 %v2190, 0.0
      %v2206 = vmax.f32 %v2193, 0.0
      %v2207 = vmax.f32 %v2195, 0.0
      %v2208 = vmax.f32 %v2198, 0.0
      %v2209 = vmax.f32 %v2200, 0.0
      %v2210 = vld [vmem:[%s563] sm:$0xf]
      %v2211 = vld [vmem:[%s563 + $0x4] sm:$0xf]
      %v2212 = vld [vmem:[%s563 + $0x8] sm:$0xf]
      %v2213 = vld [vmem:[%s563 + $0xc] sm:$0xf]
      %v2214 = vld [vmem:[%s563 + $0x10] sm:$0xf]
      %v2215 = vld [vmem:[%s563 + $0x14] sm:$0xf]
      %v2216 = vld [vmem:[%s563 + $0x18] sm:$0xf]
      %v2217 = vld [vmem:[%s563 + $0x1c] sm:$0xf]
      %v2218 = vpack.c.bf16 %v2203, %v2202
      %v2219 = vpack.c.bf16 %v2205, %v2204
      %v2220 = vpack.c.bf16 %v2207, %v2206
      %v2221 = vpack.c.bf16 %v2209, %v2208
      %v2222 = vld [vmem:[%s566] sm:$0x1]
      %v2224 = vperm.slane %v2222, 0
      %v2234 = vunpack.c.l.b16 %v2210
      %v2235 = vunpack.c.l.b16 %v2211
      %v2236 = vunpack.c.l.b16 %v2212
      %v2237 = vunpack.c.l.b16 %v2213
      %v2238 = vunpack.c.l.b16 %v2214
      %v2239 = vunpack.c.l.b16 %v2215
      %v2240 = vunpack.c.l.b16 %v2216
      %v2241 = vunpack.c.l.b16 %v2217
      %v2242 = vpack.c.b16 %v2235, %v2234
      %v2243 = vpack.c.b16 %v2237, %v2236
      %v2244 = vpack.c.b16 %v2239, %v2238
      %v2245 = vpack.c.b16 %v2241, %v2240
      %v2251 = vsel %vm942, %v2218, 0
      %v2254 = vsel %vm942, %v2219, 0
      %v2257 = vsel %vm942, %v2220, 0
      %v2260 = vsel %vm942, %v2221, 0
      %2262 = vmatpush.bf16.msra.mxu0 0
      %2263 = vmatpush.bf16.msra.mxu0 0
      %2264 = vmatpush.bf16.msra.mxu0 0
      %2265 = vmatpush.bf16.msra.mxu0 0
      %2266 = vmatpush.bf16.msra.mxu0 %v2245
      %2267 = vmatpush.bf16.msra.mxu0 %v2244
      %2268 = vmatpush.bf16.msra.mxu0 %v2243
      %2269 = vmatpush.bf16.msra.mxu0 %v2242
      %2270 = vmatmul.bf16.gmra.mxu0 %v2251
      %v2271 = vpop.f32.mrf.mxu0
      %v2272 = vadd.f32 %v2224, %v2271
      %v2273 = vpop.f32.mrf.mxu0
      %v2274 = vadd.f32 %v2224, %v2273
      %2275 = vmatmul.bf16.gmra.mxu0 %v2254
      %v2276 = vpop.f32.mrf.mxu0
      %v2277 = vadd.f32 %v2224, %v2276
      %v2278 = vpop.f32.mrf.mxu0
      %v2279 = vadd.f32 %v2224, %v2278
      %2280 = vmatmul.bf16.gmra.mxu0 %v2257
      %v2281 = vpop.f32.mrf.mxu0
      %v2282 = vadd.f32 %v2224, %v2281
      %v2283 = vpop.f32.mrf.mxu0
      %v2284 = vadd.f32 %v2224, %v2283
      %2285 = vmatmul.bf16.gmra.mxu0 %v2260
      %v2286 = vpop.f32.mrf.mxu0
      %v2287 = vadd.f32 %v2224, %v2286
      %v2288 = vpop.f32.mrf.mxu0
      %v2289 = vadd.f32 %v2224, %v2288
      %2290 = vdwg.mxu0
      %v2291 = vadd.f32 %v2129, %v2272
      %v2292 = vadd.f32 %v2130, %v2274
      %v2293 = vadd.f32 %v2131, %v2277
      %v2294 = vadd.f32 %v2132, %v2279
      %v2295 = vadd.f32 %v2133, %v2282
      %v2296 = vadd.f32 %v2134, %v2284
      %v2297 = vadd.f32 %v2135, %v2287
      %v2298 = vadd.f32 %v2136, %v2289
      %v2299 = vsel %vm662, %v2291, 0.0
      %2300 = vadd.xlane.f32.xlu0 %v2299
      %v2301 = vpop.xlane.xlu0 %2300
      %v2302 = vsel %vm662, %v2292, 0.0
      %2303 = vadd.xlane.f32.xlu0 %v2302
      %v2304 = vpop.xlane.xlu0 %2303
      %v2305 = vsel %vm662, %v2293, 0.0
      %2306 = vadd.xlane.f32.xlu0 %v2305
      %v2307 = vpop.xlane.xlu0 %2306
      %v2308 = vsel %vm662, %v2294, 0.0
      %2309 = vadd.xlane.f32.xlu0 %v2308
      %v2310 = vpop.xlane.xlu0 %2309
      %v2311 = vsel %vm662, %v2295, 0.0
      %2312 = vadd.xlane.f32.xlu0 %v2311
      %v2313 = vpop.xlane.xlu0 %2312
      %v2314 = vsel %vm662, %v2296, 0.0
      %2315 = vadd.xlane.f32.xlu0 %v2314
      %v2316 = vpop.xlane.xlu0 %2315
      %v2317 = vsel %vm662, %v2297, 0.0
      %2318 = vadd.xlane.f32.xlu0 %v2317
      %v2319 = vpop.xlane.xlu0 %2318
      %v2320 = vsel %vm662, %v2298, 0.0
      %2321 = vadd.xlane.f32.xlu0 %v2320
      %v2322 = vpop.xlane.xlu0 %2321
      %v2323 = vmul.f32 %v2301, %v1962
      %v2324 = vmul.f32 %v2304, %v1962
      %v2325 = vmul.f32 %v2307, %v1962
      %v2326 = vmul.f32 %v2310, %v1962
      %v2327 = vmul.f32 %v2313, %v1962
      %v2328 = vmul.f32 %v2316, %v1962
      %v2329 = vmul.f32 %v2319, %v1962
      %v2330 = vmul.f32 %v2322, %v1962
      %v2331 = vsub.f32 %v2291, %v2323
      %v2332 = vsub.f32 %v2292, %v2324
      %v2333 = vsub.f32 %v2293, %v2325
      %v2334 = vsub.f32 %v2294, %v2326
      %v2335 = vsub.f32 %v2295, %v2327
      %v2336 = vsub.f32 %v2296, %v2328
      %v2337 = vsub.f32 %v2297, %v2329
      %v2338 = vsub.f32 %v2298, %v2330
      %v2339 = vmul.f32 %v2331, %v2331
      %v2340 = vmul.f32 %v2332, %v2332
      %v2341 = vmul.f32 %v2333, %v2333
      %v2342 = vmul.f32 %v2334, %v2334
      %v2343 = vmul.f32 %v2335, %v2335
      %v2344 = vmul.f32 %v2336, %v2336
      %v2345 = vmul.f32 %v2337, %v2337
      %v2346 = vmul.f32 %v2338, %v2338
      %v2347 = vsel %vm662, %v2339, 0.0
      %2348 = vadd.xlane.f32.xlu0 %v2347
      %v2349 = vpop.xlane.xlu0 %2348
      %v2350 = vsel %vm662, %v2340, 0.0
      %2351 = vadd.xlane.f32.xlu0 %v2350
      %v2352 = vpop.xlane.xlu0 %2351
      %v2353 = vsel %vm662, %v2341, 0.0
      %2354 = vadd.xlane.f32.xlu0 %v2353
      %v2355 = vpop.xlane.xlu0 %2354
      %v2356 = vsel %vm662, %v2342, 0.0
      %2357 = vadd.xlane.f32.xlu0 %v2356
      %v2358 = vpop.xlane.xlu0 %2357
      %v2359 = vsel %vm662, %v2343, 0.0
      %2360 = vadd.xlane.f32.xlu0 %v2359
      %v2361 = vpop.xlane.xlu0 %2360
      %v2362 = vsel %vm662, %v2344, 0.0
      %2363 = vadd.xlane.f32.xlu0 %v2362
      %v2364 = vpop.xlane.xlu0 %2363
      %v2365 = vsel %vm662, %v2345, 0.0
      %2366 = vadd.xlane.f32.xlu0 %v2365
      %v2367 = vpop.xlane.xlu0 %2366
      %v2368 = vsel %vm662, %v2346, 0.0
      %2369 = vadd.xlane.f32.xlu0 %v2368
      %v2370 = vpop.xlane.xlu0 %2369
      %v2371 = vmul.f32 %v2349, %v1962
      %v2372 = vmul.f32 %v2352, %v1962
      %v2373 = vmul.f32 %v2355, %v1962
      %v2374 = vmul.f32 %v2358, %v1962
      %v2375 = vmul.f32 %v2361, %v1962
      %v2376 = vmul.f32 %v2364, %v1962
      %v2377 = vmul.f32 %v2367, %v1962
      %v2378 = vmul.f32 %v2370, %v1962
      %v2379 = vadd.f32 %v2371, 1e-05
      %v2380 = vadd.f32 %v2372, 1e-05
      %v2381 = vadd.f32 %v2373, 1e-05
      %v2382 = vadd.f32 %v2374, 1e-05
      %v2383 = vadd.f32 %v2375, 1e-05
      %v2384 = vadd.f32 %v2376, 1e-05
      %v2385 = vadd.f32 %v2377, 1e-05
      %v2386 = vadd.f32 %v2378, 1e-05
      %v2387 = vrsqrt.pop %v2379
      %v2388 = vmul.f32 %v2387, %v2379
      %v2389 = vmul.f32 %v2388, %v2387
      %v2390 = vmul.f32 0.5, %v2389
      %v2391 = vsub.f32 1.5, %v2390
      %v2392 = vmul.f32 %v2387, %v2391
      %vm2393 = vweird.f32 %v2379
      %vm2394 = vweird.f32 %v2387
      %vm2395 = vmor %vm2393, %vm2394
      %v2396 = vsel %vm2395, %v2387, %v2392
      %v2397 = vrsqrt.pop %v2380
      %v2398 = vmul.f32 %v2397, %v2380
      %v2399 = vmul.f32 %v2398, %v2397
      %v2400 = vmul.f32 0.5, %v2399
      %v2401 = vsub.f32 1.5, %v2400
      %v2402 = vmul.f32 %v2397, %v2401
      %vm2403 = vweird.f32 %v2380
      %vm2404 = vweird.f32 %v2397
      %vm2405 = vmor %vm2403, %vm2404
      %v2406 = vsel %vm2405, %v2397, %v2402
      %v2407 = vrsqrt.pop %v2381
      %v2408 = vmul.f32 %v2407, %v2381
      %v2409 = vmul.f32 %v2408, %v2407
      %v2410 = vmul.f32 0.5, %v2409
      %v2411 = vsub.f32 1.5, %v2410
      %v2412 = vmul.f32 %v2407, %v2411
      %vm2413 = vweird.f32 %v2381
      %vm2414 = vweird.f32 %v2407
      %vm2415 = vmor %vm2413, %vm2414
      %v2416 = vsel %vm2415, %v2407, %v2412
      %v2417 = vrsqrt.pop %v2382
      %v2418 = vmul.f32 %v2417, %v2382
      %v2419 = vmul.f32 %v2418, %v2417
      %v2420 = vmul.f32 0.5, %v2419
      %v2421 = vsub.f32 1.5, %v2420
      %v2422 = vmul.f32 %v2417, %v2421
      %vm2423 = vweird.f32 %v2382
      %vm2424 = vweird.f32 %v2417
      %vm2425 = vmor %vm2423, %vm2424
      %v2426 = vsel %vm2425, %v2417, %v2422
      %v2427 = vrsqrt.pop %v2383
      %v2428 = vmul.f32 %v2427, %v2383
      %v2429 = vmul.f32 %v2428, %v2427
      %v2430 = vmul.f32 0.5, %v2429
      %v2431 = vsub.f32 1.5, %v2430
      %v2432 = vmul.f32 %v2427, %v2431
      %vm2433 = vweird.f32 %v2383
      %vm2434 = vweird.f32 %v2427
      %vm2435 = vmor %vm2433, %vm2434
      %v2436 = vsel %vm2435, %v2427, %v2432
      %v2437 = vrsqrt.pop %v2384
      %v2438 = vmul.f32 %v2437, %v2384
      %v2439 = vmul.f32 %v2438, %v2437
      %v2440 = vmul.f32 0.5, %v2439
      %v2441 = vsub.f32 1.5, %v2440
      %v2442 = vmul.f32 %v2437, %v2441
      %vm2443 = vweird.f32 %v2384
      %vm2444 = vweird.f32 %v2437
      %vm2445 = vmor %vm2443, %vm2444
      %v2446 = vsel %vm2445, %v2437, %v2442
      %v2447 = vrsqrt.pop %v2385
      %v2448 = vmul.f32 %v2447, %v2385
      %v2449 = vmul.f32 %v2448, %v2447
      %v2450 = vmul.f32 0.5, %v2449
      %v2451 = vsub.f32 1.5, %v2450
      %v2452 = vmul.f32 %v2447, %v2451
      %vm2453 = vweird.f32 %v2385
      %vm2454 = vweird.f32 %v2447
      %vm2455 = vmor %vm2453, %vm2454
      %v2456 = vsel %vm2455, %v2447, %v2452
      %v2457 = vrsqrt.pop %v2386
      %v2458 = vmul.f32 %v2457, %v2386
      %v2459 = vmul.f32 %v2458, %v2457
      %v2460 = vmul.f32 0.5, %v2459
      %v2461 = vsub.f32 1.5, %v2460
      %v2462 = vmul.f32 %v2457, %v2461
      %vm2463 = vweird.f32 %v2386
      %vm2464 = vweird.f32 %v2457
      %vm2465 = vmor %vm2463, %vm2464
      %v2466 = vsel %vm2465, %v2457, %v2462
      %v2467 = vmul.f32 %v2331, %v2396
      %v2468 = vmul.f32 %v2332, %v2406
      %v2469 = vmul.f32 %v2333, %v2416
      %v2470 = vmul.f32 %v2334, %v2426
      %v2471 = vmul.f32 %v2335, %v2436
      %v2472 = vmul.f32 %v2336, %v2446
      %v2473 = vmul.f32 %v2337, %v2456
      %v2474 = vmul.f32 %v2338, %v2466
      %v2476 = vperm.slane %v632, 0
      %v2478 = vmul.f32 %v2467, %v2476
      %v2479 = vmul.f32 %v2468, %v2476
      %v2480 = vmul.f32 %v2469, %v2476
      %v2481 = vmul.f32 %v2470, %v2476
      %v2482 = vmul.f32 %v2471, %v2476
      %v2483 = vmul.f32 %v2472, %v2476
      %v2484 = vmul.f32 %v2473, %v2476
      %v2485 = vmul.f32 %v2474, %v2476
      %v2487 = vperm.slane %v634, 0
      %v2489 = vadd.f32 %v2478, %v2487
      %v2490 = vadd.f32 %v2479, %v2487
      %v2491 = vadd.f32 %v2480, %v2487
      %v2492 = vadd.f32 %v2481, %v2487
      %v2493 = vadd.f32 %v2482, %v2487
      %v2494 = vadd.f32 %v2483, %v2487
      %v2495 = vadd.f32 %v2484, %v2487
      %v2496 = vadd.f32 %v2485, %v2487
      %2497 = vst.msk [vmem:[%s571] sm:$0xff] %vm662, %v2489
      %2498 = vst.msk [vmem:[%s571 + $0x8] sm:$0xff] %vm662, %v2490
      %2499 = vst.msk [vmem:[%s571 + $0x10] sm:$0xff] %vm662, %v2491
      %2500 = vst.msk [vmem:[%s571 + $0x18] sm:$0xff] %vm662, %v2492
      %2501 = vst.msk [vmem:[%s571 + $0x20] sm:$0xff] %vm662, %v2493
      %2502 = vst.msk [vmem:[%s571 + $0x28] sm:$0xff] %vm662, %v2494
      %2503 = vst.msk [vmem:[%s571 + $0x30] sm:$0xff] %vm662, %v2495
      %2504 = vst.msk [vmem:[%s571 + $0x38] sm:$0xff] %vm662, %v2496
      %p2505 = scmp.lt.s32.totalorder %s26, 1
      %s2506 = scalar_select %p2505, %s26, 1
      %s2507 = smul.addr %s2506, 8
      %s2508 = smul.addr %s2507, 8
      %s2509 = scalar_lea.vmem %s11, %s2508
      // Predicated region
      $region69: #{conditional_detr_forward.5} parent=63 // pred_check
        %p2510 = pneg %p338
      $region70: #{conditional_detr_forward.5} parent=63 // pred_check_branch
        %2512 = sbr.rel (%p2510) target = $region72
      $region71: #{conditional_detr_forward.5} parent=63 // pred_region
        _
      $region72: #{conditional_detr_forward.5} parent=63 // pred_fallthru
        _
    $region64: #{conditional_detr_forward.5} parent=5 // pred_fallthru
      _
    %p2513 = scmp.le.s32.totalorder 2, %s17
    // Predicated region
    $region73: #{conditional_detr_forward.5} parent=5 // pred_check
      %p2514 = pneg %p2513
    $region74: #{conditional_detr_forward.5} parent=5 // pred_check_branch
      %2516 = sbr.rel (%p2514) target = $region76
    $region75: #{conditional_detr_forward.5} parent=5 // pred_region
      %s2517 = ssub.s32 %s17, 2
      // Predicated region
      $region77: #{conditional_detr_forward.5} parent=75 // pred_check
        %p2518 = pneg %p344
      $region78: #{conditional_detr_forward.5} parent=75 // pred_check_branch
        %2520 = sbr.rel (%p2518) target = $region80
      $region79: #{conditional_detr_forward.5} parent=75 // pred_region
        %p2521 = scmp.lt.s32.totalorder %s28, 1
        %s2522 = scalar_select %p2521, %s28, 1
        %s2523 = smul.addr %s2522, 8
        %s2524 = smul.addr %s2523, 8
        %s2525 = scalar_lea.vmem %s11, %s2524
      $region80: #{conditional_detr_forward.5} parent=75 // pred_fallthru
        _
    $region76: #{conditional_detr_forward.5} parent=5 // pred_fallthru
      _
  $region6: #{conditional_detr_forward.5} parent=0 // loop_footer
    %s21 = sadd.s32 1, %s17
  $region7: #{conditional_detr_forward.5} parent=0 // loop_footer_branch
    %16 = sbr.rel target = $region3
  $region8: #{conditional_detr_forward.5} parent=0 // loop_exit
    _

</llo_original>
